<compile_context>
chip_gen: v6e
topology: v6e:2x2x1
jax: 0.10.0
libtpu: 0.0.40
codegen_flags: <defaults>
</compile_context>

<pallas_src>
import functools

import jax
import jax.numpy as jnp
from jax import lax
from jax.experimental import pallas as pl
from jax.experimental.pallas import tpu as pltpu

EPS = 1e-5
TAPS = tuple((ki, kj) for ki in range(3) for kj in range(3))


# ----------------------------- fused Pallas kernel ---------------------------

def _basic_block_kernel(*refs, H, W, C, P, OH, OW, stride, has_down):
    """One image per grid step.  Ref layout (in, out, scratch order):

      x_ref  : stride 1 -> (1, H, W, C) bf16 (raw input)
               stride 2 -> (1, 4, Hq, Wq, C) bf16 (parity quadrants of the
                           zero-padded input, Hq = (H+2)//2)
      w1_ref : (9*C, P) bf16      s1/b1_ref : (1, P) f32   (folded BN1)
      w2_ref : (9*P, P) bf16      s2/b2_ref : (1, P) f32   (folded BN2)
      [wd_ref: (C, P) bf16        sd/bd_ref : (1, P) f32]  (1x1 downsample)
      o_ref  : (1, OH, OW, P) bf16
      scratch: [xpad (H+2, W+2, C) bf16 if stride==1], hpad (OH+2, OW+2, P) bf16
    """
    x_ref, w1_ref, s1_ref, b1_ref, w2_ref, s2_ref, b2_ref = refs[:7]
    rest = refs[7:]
    if has_down:
        wd_ref, sd_ref, bd_ref = rest[:3]
        rest = rest[3:]
    o_ref = rest[0]
    if stride == 1:
        xpad_ref, hpad_ref = rest[1], rest[2]
    else:
        hpad_ref = rest[1]

    # ---- conv1 input staging: zero padding handled in VMEM ----
    if stride == 1:
        xpad_ref[...] = jnp.zeros_like(xpad_ref)
        xpad_ref[1:H + 1, 1:W + 1, :] = x_ref[0]

        def tap(ki, kj):
            return xpad_ref[ki:ki + OH, kj:kj + OW, :]
    else:
        # Quadrant q=(ki%2)*2+(kj%2) of the padded input holds every tap as a
        # contiguous window starting at (ki//2, kj//2).
        def tap(ki, kj):
            q = (ki % 2) * 2 + (kj % 2)
            return x_ref[0, q, ki // 2:ki // 2 + OH, kj // 2:kj // 2 + OW, :]

    # ---- conv1: single K = 9*C MXU matmul (im2col assembled in registers) ----
    col1 = jnp.concatenate([tap(ki, kj) for ki, kj in TAPS], axis=-1)
    a1 = jnp.dot(col1.reshape(OH * OW, 9 * C), w1_ref[...],
                 preferred_element_type=jnp.float32)
    h = jnp.maximum(a1 * s1_ref[...] + b1_ref[...], 0.0)        # BN1 + ReLU

    # ---- stage conv1 output (bf16) into padded VMEM scratch for conv2 ----
    hpad_ref[...] = jnp.zeros_like(hpad_ref)
    hpad_ref[1:OH + 1, 1:OW + 1, :] = h.reshape(OH, OW, P).astype(hpad_ref.dtype)

    # ---- conv2: single K = 9*P MXU matmul ----
    col2 = jnp.concatenate(
        [hpad_ref[ki:ki + OH, kj:kj + OW, :] for ki, kj in TAPS], axis=-1)
    a2 = jnp.dot(col2.reshape(OH * OW, 9 * P), w2_ref[...],
                 preferred_element_type=jnp.float32)
    y = a2 * s2_ref[...] + b2_ref[...]                           # BN2

    # ---- identity path (VMEM/register resident, never leaves the kernel) ----
    if has_down:
        if stride == 1:
            xin = x_ref[0].reshape(H * W, C)
        else:
            # x[2i, 2j] == padded-input quadrant (1,1) at (i, j)  -> q = 3
            xin = x_ref[0, 3, 0:OH, 0:OW, :].reshape(OH * OW, C)
        ident = jnp.dot(xin, wd_ref[...], preferred_element_type=jnp.float32)
        ident = ident * sd_ref[...] + bd_ref[...]
    else:
        ident = x_ref[0].reshape(OH * OW, P).astype(jnp.float32)

    out = jnp.maximum(y + ident, 0.0)                            # residual+ReLU
    o_ref[...] = out.reshape(1, OH, OW, P).astype(o_ref.dtype)


# ------------------------------- wrapper --------------------------------------

def basic_block_fused(x, p, *, stride):
    """relu( bn2(conv2(relu(bn1(conv1(x))))) + identity ), NHWC bf16 in/out."""
    N, H, W, C = x.shape
    P = p['w1'].shape[-1]
    has_down = 'dw' in p

    if stride == 1:
        OH, OW = H, W
        x_in = x
        x_spec = pl.BlockSpec((1, H, W, C), lambda n: (n, 0, 0, 0))
    elif stride == 2:
        assert H % 2 == 0 and W % 2 == 0, "stride-2 path needs even H, W"
        OH, OW = H // 2, W // 2
        # One small fused XLA pre-pass: pad + space-to-depth parity split
        # (exactly 1x the padded activation bytes; every kernel tap contiguous).
        xp = jnp.pad(x, ((0, 0), (1, 1), (1, 1), (0, 0)))
        x_in = jnp.stack([xp[:, pi::2, pj::2, :]
                          for pi in range(2) for pj in range(2)], axis=1)
        Hq, Wq = x_in.shape[2], x_in.shape[3]
        x_spec = pl.BlockSpec((1, 4, Hq, Wq, C), lambda n: (n, 0, 0, 0, 0))
    else:
        raise NotImplementedError("stride must be 1 or 2")

    inputs = [x_in, p['w1'], p['s1'], p['b1'], p['w2'], p['s2'], p['b2']]
    in_specs = [
        x_spec,
        pl.BlockSpec((9 * C, P), lambda n: (0, 0)),
        pl.BlockSpec((1, P), lambda n: (0, 0)),
        pl.BlockSpec((1, P), lambda n: (0, 0)),
        pl.BlockSpec((9 * P, P), lambda n: (0, 0)),
        pl.BlockSpec((1, P), lambda n: (0, 0)),
        pl.BlockSpec((1, P), lambda n: (0, 0)),
    ]
    if has_down:
        inputs += [p['dw'], p['ds'], p['db']]
        in_specs += [
            pl.BlockSpec((C, P), lambda n: (0, 0)),
            pl.BlockSpec((1, P), lambda n: (0, 0)),
            pl.BlockSpec((1, P), lambda n: (0, 0)),
        ]

    scratch = []
    if stride == 1:
        scratch.append(pltpu.VMEM((H + 2, W + 2, C), jnp.bfloat16))   # padded x
    scratch.append(pltpu.VMEM((OH + 2, OW + 2, P), jnp.bfloat16))     # padded h

    kernel = functools.partial(_basic_block_kernel, H=H, W=W, C=C, P=P,
                               OH=OH, OW=OW, stride=stride, has_down=has_down)

    flops = N * OH * OW * (2 * 9 * C * P + 2 * 9 * P * P
                           + (2 * C * P if has_down else 0))
    bytes_accessed = (sum(int(a.size) * a.dtype.itemsize for a in inputs)
                      + N * OH * OW * P * 2)

    return pl.pallas_call(
        kernel,
        out_shape=jax.ShapeDtypeStruct((N, OH, OW, P), jnp.bfloat16),
        grid=(N,),
        in_specs=in_specs,
        out_specs=pl.BlockSpec((1, OH, OW, P), lambda n: (n, 0, 0, 0)),
        scratch_shapes=scratch,
        compiler_params=pltpu.CompilerParams(
            dimension_semantics=("parallel",),
            vmem_limit_bytes=32 * 1024 * 1024),
        cost_estimate=pl.CostEstimate(flops=int(flops), transcendentals=0,
                                      bytes_accessed=int(bytes_accessed)),
    )(*inputs)


# ------------------------------ parameters -------------------------------------

def _fold_bn(gamma, beta, mean, var, eps=EPS):
    s = gamma / jnp.sqrt(var + eps)
    return (s.reshape(1, -1).astype(jnp.float32),
            (beta - mean * s).reshape(1, -1).astype(jnp.float32))


def _kaiming_w(key, ksize, cin, cout):
    # kaiming_normal_(fan_out, relu); stored pre-reshaped (k*k*cin, cout), bf16.
    std = (2.0 / (ksize * ksize * cout)) ** 0.5
    w = std * jax.random.normal(key, (ksize, ksize, cin, cout), jnp.float32)
    return w.reshape(ksize * ksize * cin, cout).astype(jnp.bfloat16)


def init_basic_block(key, inplanes, planes, stride):
    k1, k2, k3 = jax.random.split(key, 3)
    ones, zeros = jnp.ones, jnp.zeros
    p = {
        'w1': _kaiming_w(k1, 3, inplanes, planes),
        'w2': _kaiming_w(k2, 3, planes, planes),
    }
    p['s1'], p['b1'] = _fold_bn(ones(planes), zeros(planes), zeros(planes), ones(planes))
    p['s2'], p['b2'] = _fold_bn(ones(planes), zeros(planes), zeros(planes), ones(planes))
    if stride != 1 or inplanes != planes:      # downsample: 1x1 conv(stride) + BN
        p['dw'] = _kaiming_w(k3, 1, inplanes, planes)
        p['ds'], p['db'] = _fold_bn(ones(planes), zeros(planes), zeros(planes), ones(planes))
    return p


def make_forward(cfgs):
    # cfgs (with their strides) stay Python-level constants; only arrays are
    # traced under jit (avoids tracing strides through the params pytree).
    def forward(params, x):
        for cfg, p in zip(cfgs, params):
            x = basic_block_fused(x, p, stride=cfg['stride'])
        return x
    return forward


# -------------------------- pure-JAX reference ----------------------------------

def _ref_conv_bn(x, w_flat, scale, bias, ksize, stride, padding):
    cout = w_flat.shape[-1]
    cin = w_flat.shape[0] // (ksize * ksize)
    w = w_flat.astype(jnp.float32).reshape(ksize, ksize, cin, cout)
    y = lax.conv_general_dilated(x, w, (stride, stride),
                                 [(padding, padding)] * 2,
                                 dimension_numbers=('NHWC', 'HWIO', 'NHWC'))
    return y * scale + bias


def reference_forward(cfgs, params, x):
    x = x.astype(jnp.float32)
    for cfg, p in zip(cfgs, params):
        s = cfg['stride']
        out = jax.nn.relu(_ref_conv_bn(x, p['w1'], p['s1'], p['b1'], 3, s, 1))
        identity = x
        if 'dw' in p:
            identity = _ref_conv_bn(x, p['dw'], p['ds'], p['db'], 1, s, 0)
        x = jax.nn.relu(_ref_conv_bn(out, p['w2'], p['s2'], p['b2'], 3, 1, 1)
                        + identity)
    return x


# ------------------------------ main --------------------------------------------

if __name__ == "__main__":
    key = jax.random.PRNGKey(0)
    kx, k1, k2 = jax.random.split(key, 3)

    N, H, W, CIN = 2, 16, 16, 32
    x_nchw = jax.random.normal(kx, (N, CIN, H, W), jnp.float32)    # PyTorch NCHW

    # Two BasicBlocks: a plain one (stride 1, no downsample) and a
    # downsampling one (stride 2, 1x1-conv+BN downsample) covering both paths.
    cfgs = (
        dict(inplanes=CIN, planes=CIN, stride=1),
        dict(inplanes=CIN, planes=2 * CIN, stride=2),
    )
    params = [init_basic_block(k, c['inplanes'], c['planes'], c['stride'])
              for k, c in zip((k1, k2), cfgs)]

    x_nhwc = jnp.transpose(x_nchw, (0, 2, 3, 1)).astype(jnp.bfloat16)

    fwd = jax.jit(make_forward(cfgs))
    out = fwd(params, x_nhwc)
    jax.block_until_ready(out)
    assert out.shape == (N, H // 2, W // 2, 2 * CIN), out.shape

    # Correctness check against an f32 XLA reference (loose tol: bf16 pipeline).
    ref = reference_forward(cfgs, params, x_nhwc)
    err = float(jnp.max(jnp.abs(out.astype(jnp.float32) - ref)))
    ref_scale = float(jnp.max(jnp.abs(ref))) + 1e-6
    assert err / ref_scale < 0.05, (err, ref_scale)

    print("KERNEL_OK")
</pallas_src>

<mosaic_0001>
module attributes {stable_mosaic.version = 11 : i64} {
  func.func @_basic_block_kernel(%arg0: i32, %arg1: memref<1x16x16x32xbf16, #tpu.memory_space<vmem>>, %arg2: memref<288x32xbf16, #tpu.memory_space<vmem>>, %arg3: memref<1x32xf32, #tpu.memory_space<vmem>>, %arg4: memref<1x32xf32, #tpu.memory_space<vmem>>, %arg5: memref<288x32xbf16, #tpu.memory_space<vmem>>, %arg6: memref<1x32xf32, #tpu.memory_space<vmem>>, %arg7: memref<1x32xf32, #tpu.memory_space<vmem>>, %arg8: memref<1x16x16x32xbf16, #tpu.memory_space<vmem>>, %arg9: memref<18x18x32xbf16, #tpu.memory_space<vmem>>, %arg10: memref<18x18x32xbf16, #tpu.memory_space<vmem>>) attributes {dimension_semantics = [#tpu.dimension_semantics<parallel>], iteration_bounds = array<i64: 2>, scalar_prefetch = 0 : i64, scratch_operands = 2 : i64, tpu.core_type = #tpu.core_type<tc>, window_params = [{transform_indices = @transform_0, window_bounds = array<i64: 1, 16, 16, 32>}, {pipeline_mode = #tpu.pipeline_mode<synchronous>, transform_indices = @transform_1, window_bounds = array<i64: 288, 32>}, {pipeline_mode = #tpu.pipeline_mode<synchronous>, transform_indices = @transform_2, window_bounds = array<i64: 1, 32>}, {pipeline_mode = #tpu.pipeline_mode<synchronous>, transform_indices = @transform_3, window_bounds = array<i64: 1, 32>}, {pipeline_mode = #tpu.pipeline_mode<synchronous>, transform_indices = @transform_4, window_bounds = array<i64: 288, 32>}, {pipeline_mode = #tpu.pipeline_mode<synchronous>, transform_indices = @transform_5, window_bounds = array<i64: 1, 32>}, {pipeline_mode = #tpu.pipeline_mode<synchronous>, transform_indices = @transform_6, window_bounds = array<i64: 1, 32>}, {transform_indices = @transform_7, window_bounds = array<i64: 1, 16, 16, 32>}]} {
    %cst = arith.constant 0.000000e+00 : bf16
    %0 = vector.broadcast %cst : bf16 to vector<18x18x32xbf16>
    %c0 = arith.constant 0 : index
    %c0_0 = arith.constant 0 : index
    %c0_1 = arith.constant 0 : index
    %1 = vector.load %arg9[%c0, %c0_0, %c0_1] : memref<18x18x32xbf16, #tpu.memory_space<vmem>>, vector<18x18x32xbf16>
    tpu.vector_store %arg9[%c0, %c0_0, %c0_1], %0 {strides = array<i32>} : memref<18x18x32xbf16, #tpu.memory_space<vmem>>, vector<18x18x32xbf16>,
    %c0_2 = arith.constant 0 : index
    %c0_3 = arith.constant 0 : index
    %c0_4 = arith.constant 0 : index
    %c0_5 = arith.constant 0 : index
    %2 = vector.load %arg1[%c0_2, %c0_3, %c0_4, %c0_5] : memref<1x16x16x32xbf16, #tpu.memory_space<vmem>>, vector<1x16x16x32xbf16>
    %3 = vector.shape_cast %2 : vector<1x16x16x32xbf16> to vector<16x16x32xbf16>
    %c1 = arith.constant 1 : index
    %c1_6 = arith.constant 1 : index
    %c0_7 = arith.constant 0 : index
    %4 = vector.load %arg9[%c1, %c1_6, %c0_7] : memref<18x18x32xbf16, #tpu.memory_space<vmem>>, vector<16x16x32xbf16>
    tpu.vector_store %arg9[%c1, %c1_6, %c0_7], %3 {strides = array<i32>} : memref<18x18x32xbf16, #tpu.memory_space<vmem>>, vector<16x16x32xbf16>,
    %c0_8 = arith.constant 0 : index
    %c0_9 = arith.constant 0 : index
    %c0_10 = arith.constant 0 : index
    %5 = vector.load %arg9[%c0_8, %c0_9, %c0_10] : memref<18x18x32xbf16, #tpu.memory_space<vmem>>, vector<16x16x32xbf16>
    %c0_11 = arith.constant 0 : index
    %c1_12 = arith.constant 1 : index
    %c0_13 = arith.constant 0 : index
    %6 = vector.load %arg9[%c0_11, %c1_12, %c0_13] : memref<18x18x32xbf16, #tpu.memory_space<vmem>>, vector<16x16x32xbf16>
    %c0_14 = arith.constant 0 : index
    %c2 = arith.constant 2 : index
    %c0_15 = arith.constant 0 : index
    %7 = vector.load %arg9[%c0_14, %c2, %c0_15] : memref<18x18x32xbf16, #tpu.memory_space<vmem>>, vector<16x16x32xbf16>
    %c1_16 = arith.constant 1 : index
    %c0_17 = arith.constant 0 : index
    %c0_18 = arith.constant 0 : index
    %8 = vector.load %arg9[%c1_16, %c0_17, %c0_18] : memref<18x18x32xbf16, #tpu.memory_space<vmem>>, vector<16x16x32xbf16>
    %c1_19 = arith.constant 1 : index
    %c1_20 = arith.constant 1 : index
    %c0_21 = arith.constant 0 : index
    %9 = vector.load %arg9[%c1_19, %c1_20, %c0_21] : memref<18x18x32xbf16, #tpu.memory_space<vmem>>, vector<16x16x32xbf16>
    %c1_22 = arith.constant 1 : index
    %c2_23 = arith.constant 2 : index
    %c0_24 = arith.constant 0 : index
    %10 = vector.load %arg9[%c1_22, %c2_23, %c0_24] : memref<18x18x32xbf16, #tpu.memory_space<vmem>>, vector<16x16x32xbf16>
    %c2_25 = arith.constant 2 : index
    %c0_26 = arith.constant 0 : index
    %c0_27 = arith.constant 0 : index
    %11 = vector.load %arg9[%c2_25, %c0_26, %c0_27] : memref<18x18x32xbf16, #tpu.memory_space<vmem>>, vector<16x16x32xbf16>
    %c2_28 = arith.constant 2 : index
    %c1_29 = arith.constant 1 : index
    %c0_30 = arith.constant 0 : index
    %12 = vector.load %arg9[%c2_28, %c1_29, %c0_30] : memref<18x18x32xbf16, #tpu.memory_space<vmem>>, vector<16x16x32xbf16>
    %c2_31 = arith.constant 2 : index
    %c2_32 = arith.constant 2 : index
    %c0_33 = arith.constant 0 : index
    %13 = vector.load %arg9[%c2_31, %c2_32, %c0_33] : memref<18x18x32xbf16, #tpu.memory_space<vmem>>, vector<16x16x32xbf16>
    %14 = tpu.concatenate %5, %6, %7, %8, %9, %10, %11, %12, %13 in 2 : vector<16x16x32xbf16>, vector<16x16x32xbf16>, vector<16x16x32xbf16>, vector<16x16x32xbf16>, vector<16x16x32xbf16>, vector<16x16x32xbf16>, vector<16x16x32xbf16>, vector<16x16x32xbf16>, vector<16x16x32xbf16> -> vector<16x16x288xbf16>
    %15 = vector.shape_cast %14 : vector<16x16x288xbf16> to vector<256x288xbf16>
    %c0_34 = arith.constant 0 : index
    %c0_35 = arith.constant 0 : index
    %16 = vector.load %arg2[%c0_34, %c0_35] : memref<288x32xbf16, #tpu.memory_space<vmem>>, vector<288x32xbf16>
    %cst_36 = arith.constant dense<0.000000e+00> : vector<256x32xf32>
    %17 = tpu.matmul %15, %16, %cst_36 {dimension_numbers = #tpu.dot_dimension_numbers<[1], [0], [0], [1], [0, 0, 1, 1], [], []>} : vector<256x288xbf16>, vector<288x32xbf16>, vector<256x32xf32> -> vector<256x32xf32>
    %c0_37 = arith.constant 0 : index
    %c0_38 = arith.constant 0 : index
    %18 = vector.load %arg3[%c0_37, %c0_38] : memref<1x32xf32, #tpu.memory_space<vmem>>, vector<1x32xf32>
    %19 = vector.broadcast %18 : vector<1x32xf32> to vector<256x32xf32>
    %20 = arith.mulf %17, %19 : vector<256x32xf32>
    %c0_39 = arith.constant 0 : index
    %c0_40 = arith.constant 0 : index
    %21 = vector.load %arg4[%c0_39, %c0_40] : memref<1x32xf32, #tpu.memory_space<vmem>>, vector<1x32xf32>
    %22 = vector.broadcast %21 : vector<1x32xf32> to vector<256x32xf32>
    %23 = arith.addf %20, %22 : vector<256x32xf32>
    %cst_41 = arith.constant 0.000000e+00 : f32
    %24 = vector.broadcast %cst_41 : f32 to vector<256x32xf32>
    %25 = arith.maximumf %23, %24 : vector<256x32xf32>
    %cst_42 = arith.constant 0.000000e+00 : bf16
    %26 = vector.broadcast %cst_42 : bf16 to vector<18x18x32xbf16>
    %c0_43 = arith.constant 0 : index
    %c0_44 = arith.constant 0 : index
    %c0_45 = arith.constant 0 : index
    %27 = vector.load %arg10[%c0_43, %c0_44, %c0_45] : memref<18x18x32xbf16, #tpu.memory_space<vmem>>, vector<18x18x32xbf16>
    tpu.vector_store %arg10[%c0_43, %c0_44, %c0_45], %26 {strides = array<i32>} : memref<18x18x32xbf16, #tpu.memory_space<vmem>>, vector<18x18x32xbf16>,
    %28 = vector.shape_cast %25 : vector<256x32xf32> to vector<16x16x32xf32>
    %29 = arith.truncf %28 : vector<16x16x32xf32> to vector<16x16x32xbf16>
    %c1_46 = arith.constant 1 : index
    %c1_47 = arith.constant 1 : index
    %c0_48 = arith.constant 0 : index
    %30 = vector.load %arg10[%c1_46, %c1_47, %c0_48] : memref<18x18x32xbf16, #tpu.memory_space<vmem>>, vector<16x16x32xbf16>
    tpu.vector_store %arg10[%c1_46, %c1_47, %c0_48], %29 {strides = array<i32>} : memref<18x18x32xbf16, #tpu.memory_space<vmem>>, vector<16x16x32xbf16>,
    %c0_49 = arith.constant 0 : index
    %c0_50 = arith.constant 0 : index
    %c0_51 = arith.constant 0 : index
    %31 = vector.load %arg10[%c0_49, %c0_50, %c0_51] : memref<18x18x32xbf16, #tpu.memory_space<vmem>>, vector<16x16x32xbf16>
    %c0_52 = arith.constant 0 : index
    %c1_53 = arith.constant 1 : index
    %c0_54 = arith.constant 0 : index
    %32 = vector.load %arg10[%c0_52, %c1_53, %c0_54] : memref<18x18x32xbf16, #tpu.memory_space<vmem>>, vector<16x16x32xbf16>
    %c0_55 = arith.constant 0 : index
    %c2_56 = arith.constant 2 : index
    %c0_57 = arith.constant 0 : index
    %33 = vector.load %arg10[%c0_55, %c2_56, %c0_57] : memref<18x18x32xbf16, #tpu.memory_space<vmem>>, vector<16x16x32xbf16>
    %c1_58 = arith.constant 1 : index
    %c0_59 = arith.constant 0 : index
    %c0_60 = arith.constant 0 : index
    %34 = vector.load %arg10[%c1_58, %c0_59, %c0_60] : memref<18x18x32xbf16, #tpu.memory_space<vmem>>, vector<16x16x32xbf16>
    %c1_61 = arith.constant 1 : index
    %c1_62 = arith.constant 1 : index
    %c0_63 = arith.constant 0 : index
    %35 = vector.load %arg10[%c1_61, %c1_62, %c0_63] : memref<18x18x32xbf16, #tpu.memory_space<vmem>>, vector<16x16x32xbf16>
    %c1_64 = arith.constant 1 : index
    %c2_65 = arith.constant 2 : index
    %c0_66 = arith.constant 0 : index
    %36 = vector.load %arg10[%c1_64, %c2_65, %c0_66] : memref<18x18x32xbf16, #tpu.memory_space<vmem>>, vector<16x16x32xbf16>
    %c2_67 = arith.constant 2 : index
    %c0_68 = arith.constant 0 : index
    %c0_69 = arith.constant 0 : index
    %37 = vector.load %arg10[%c2_67, %c0_68, %c0_69] : memref<18x18x32xbf16, #tpu.memory_space<vmem>>, vector<16x16x32xbf16>
    %c2_70 = arith.constant 2 : index
    %c1_71 = arith.constant 1 : index
    %c0_72 = arith.constant 0 : index
    %38 = vector.load %arg10[%c2_70, %c1_71, %c0_72] : memref<18x18x32xbf16, #tpu.memory_space<vmem>>, vector<16x16x32xbf16>
    %c2_73 = arith.constant 2 : index
    %c2_74 = arith.constant 2 : index
    %c0_75 = arith.constant 0 : index
    %39 = vector.load %arg10[%c2_73, %c2_74, %c0_75] : memref<18x18x32xbf16, #tpu.memory_space<vmem>>, vector<16x16x32xbf16>
    %40 = tpu.concatenate %31, %32, %33, %34, %35, %36, %37, %38, %39 in 2 : vector<16x16x32xbf16>, vector<16x16x32xbf16>, vector<16x16x32xbf16>, vector<16x16x32xbf16>, vector<16x16x32xbf16>, vector<16x16x32xbf16>, vector<16x16x32xbf16>, vector<16x16x32xbf16>, vector<16x16x32xbf16> -> vector<16x16x288xbf16>
    %41 = vector.shape_cast %40 : vector<16x16x288xbf16> to vector<256x288xbf16>
    %c0_76 = arith.constant 0 : index
    %c0_77 = arith.constant 0 : index
    %42 = vector.load %arg5[%c0_76, %c0_77] : memref<288x32xbf16, #tpu.memory_space<vmem>>, vector<288x32xbf16>
    %cst_78 = arith.constant dense<0.000000e+00> : vector<256x32xf32>
    %43 = tpu.matmul %41, %42, %cst_78 {dimension_numbers = #tpu.dot_dimension_numbers<[1], [0], [0], [1], [0, 0, 1, 1], [], []>} : vector<256x288xbf16>, vector<288x32xbf16>, vector<256x32xf32> -> vector<256x32xf32>
    %c0_79 = arith.constant 0 : index
    %c0_80 = arith.constant 0 : index
    %44 = vector.load %arg6[%c0_79, %c0_80] : memref<1x32xf32, #tpu.memory_space<vmem>>, vector<1x32xf32>
    %45 = vector.broadcast %44 : vector<1x32xf32> to vector<256x32xf32>
    %46 = arith.mulf %43, %45 : vector<256x32xf32>
    %c0_81 = arith.constant 0 : index
    %c0_82 = arith.constant 0 : index
    %47 = vector.load %arg7[%c0_81, %c0_82] : memref<1x32xf32, #tpu.memory_space<vmem>>, vector<1x32xf32>
    %48 = vector.broadcast %47 : vector<1x32xf32> to vector<256x32xf32>
    %49 = arith.addf %46, %48 : vector<256x32xf32>
    %c0_83 = arith.constant 0 : index
    %c0_84 = arith.constant 0 : index
    %c0_85 = arith.constant 0 : index
    %c0_86 = arith.constant 0 : index
    %50 = vector.load %arg1[%c0_83, %c0_84, %c0_85, %c0_86] : memref<1x16x16x32xbf16, #tpu.memory_space<vmem>>, vector<1x16x16x32xbf16>
    %51 = vector.shape_cast %50 : vector<1x16x16x32xbf16> to vector<16x16x32xbf16>
    %52 = vector.shape_cast %51 : vector<16x16x32xbf16> to vector<256x32xbf16>
    %53 = arith.extf %52 : vector<256x32xbf16> to vector<256x32xf32>
    %54 = arith.addf %49, %53 : vector<256x32xf32>
    %cst_87 = arith.constant 0.000000e+00 : f32
    %55 = vector.broadcast %cst_87 : f32 to vector<256x32xf32>
    %56 = arith.maximumf %54, %55 : vector<256x32xf32>
    %57 = vector.shape_cast %56 : vector<256x32xf32> to vector<1x16x16x32xf32>
    %58 = arith.truncf %57 : vector<1x16x16x32xf32> to vector<1x16x16x32xbf16>
    %c0_88 = arith.constant 0 : index
    %c0_89 = arith.constant 0 : index
    %c0_90 = arith.constant 0 : index
    %c0_91 = arith.constant 0 : index
    %59 = vector.load %arg8[%c0_88, %c0_89, %c0_90, %c0_91] : memref<1x16x16x32xbf16, #tpu.memory_space<vmem>>, vector<1x16x16x32xbf16>
    tpu.vector_store %arg8[%c0_88, %c0_89, %c0_90, %c0_91], %58 {strides = array<i32>} : memref<1x16x16x32xbf16, #tpu.memory_space<vmem>>, vector<1x16x16x32xbf16>,
    return
  }
  func.func @transform_0(%arg0: i32) -> (i32, i32, i32, i32) {
    %c0_i32 = arith.constant 0 : i32
    %c0_i32_0 = arith.constant 0 : i32
    %c0_i32_1 = arith.constant 0 : i32
    %c0_i32_2 = arith.constant 0 : i32
    return %arg0, %c0_i32, %c0_i32_0, %c0_i32_1 : i32, i32, i32, i32
  }
  func.func @transform_1(%arg0: i32) -> (i32, i32) {
    %c0_i32 = arith.constant 0 : i32
    %c0_i32_0 = arith.constant 0 : i32
    %c0_i32_1 = arith.constant 0 : i32
    return %c0_i32, %c0_i32_0 : i32, i32
  }
  func.func @transform_2(%arg0: i32) -> (i32, i32) {
    %c0_i32 = arith.constant 0 : i32
    %c0_i32_0 = arith.constant 0 : i32
    %c0_i32_1 = arith.constant 0 : i32
    return %c0_i32, %c0_i32_0 : i32, i32
  }
  func.func @transform_3(%arg0: i32) -> (i32, i32) {
    %c0_i32 = arith.constant 0 : i32
    %c0_i32_0 = arith.constant 0 : i32
    %c0_i32_1 = arith.constant 0 : i32
    return %c0_i32, %c0_i32_0 : i32, i32
  }
  func.func @transform_4(%arg0: i32) -> (i32, i32) {
    %c0_i32 = arith.constant 0 : i32
    %c0_i32_0 = arith.constant 0 : i32
    %c0_i32_1 = arith.constant 0 : i32
    return %c0_i32, %c0_i32_0 : i32, i32
  }
  func.func @transform_5(%arg0: i32) -> (i32, i32) {
    %c0_i32 = arith.constant 0 : i32
    %c0_i32_0 = arith.constant 0 : i32
    %c0_i32_1 = arith.constant 0 : i32
    return %c0_i32, %c0_i32_0 : i32, i32
  }
  func.func @transform_6(%arg0: i32) -> (i32, i32) {
    %c0_i32 = arith.constant 0 : i32
    %c0_i32_0 = arith.constant 0 : i32
    %c0_i32_1 = arith.constant 0 : i32
    return %c0_i32, %c0_i32_0 : i32, i32
  }
  func.func @transform_7(%arg0: i32) -> (i32, i32, i32, i32) {
    %c0_i32 = arith.constant 0 : i32
    %c0_i32_0 = arith.constant 0 : i32
    %c0_i32_1 = arith.constant 0 : i32
    %c0_i32_2 = arith.constant 0 : i32
    return %arg0, %c0_i32, %c0_i32_0, %c0_i32_1 : i32, i32, i32, i32
  }
}

module attributes {stable_mosaic.version = 11 : i64} {
  func.func @_basic_block_kernel(%arg0: i32, %arg1: memref<1x4x9x9x32xbf16, #tpu.memory_space<vmem>>, %arg2: memref<288x64xbf16, #tpu.memory_space<vmem>>, %arg3: memref<1x64xf32, #tpu.memory_space<vmem>>, %arg4: memref<1x64xf32, #tpu.memory_space<vmem>>, %arg5: memref<576x64xbf16, #tpu.memory_space<vmem>>, %arg6: memref<1x64xf32, #tpu.memory_space<vmem>>, %arg7: memref<1x64xf32, #tpu.memory_space<vmem>>, %arg8: memref<32x64xbf16, #tpu.memory_space<vmem>>, %arg9: memref<1x64xf32, #tpu.memory_space<vmem>>, %arg10: memref<1x64xf32, #tpu.memory_space<vmem>>, %arg11: memref<1x8x8x64xbf16, #tpu.memory_space<vmem>>, %arg12: memref<10x10x64xbf16, #tpu.memory_space<vmem>>) attributes {dimension_semantics = [#tpu.dimension_semantics<parallel>], iteration_bounds = array<i64: 2>, scalar_prefetch = 0 : i64, scratch_operands = 1 : i64, tpu.core_type = #tpu.core_type<tc>, window_params = [{transform_indices = @transform_0, window_bounds = array<i64: 1, 4, 9, 9, 32>}, {pipeline_mode = #tpu.pipeline_mode<synchronous>, transform_indices = @transform_1, window_bounds = array<i64: 288, 64>}, {pipeline_mode = #tpu.pipeline_mode<synchronous>, transform_indices = @transform_2, window_bounds = array<i64: 1, 64>}, {pipeline_mode = #tpu.pipeline_mode<synchronous>, transform_indices = @transform_3, window_bounds = array<i64: 1, 64>}, {pipeline_mode = #tpu.pipeline_mode<synchronous>, transform_indices = @transform_4, window_bounds = array<i64: 576, 64>}, {pipeline_mode = #tpu.pipeline_mode<synchronous>, transform_indices = @transform_5, window_bounds = array<i64: 1, 64>}, {pipeline_mode = #tpu.pipeline_mode<synchronous>, transform_indices = @transform_6, window_bounds = array<i64: 1, 64>}, {pipeline_mode = #tpu.pipeline_mode<synchronous>, transform_indices = @transform_7, window_bounds = array<i64: 32, 64>}, {pipeline_mode = #tpu.pipeline_mode<synchronous>, transform_indices = @transform_8, window_bounds = array<i64: 1, 64>}, {pipeline_mode = #tpu.pipeline_mode<synchronous>, transform_indices = @transform_9, window_bounds = array<i64: 1, 64>}, {transform_indices = @transform_10, window_bounds = array<i64: 1, 8, 8, 64>}]} {
    %c0 = arith.constant 0 : index
    %c0_0 = arith.constant 0 : index
    %c0_1 = arith.constant 0 : index
    %c0_2 = arith.constant 0 : index
    %c0_3 = arith.constant 0 : index
    %0 = vector.load %arg1[%c0, %c0_0, %c0_1, %c0_2, %c0_3] : memref<1x4x9x9x32xbf16, #tpu.memory_space<vmem>>, vector<1x1x8x8x32xbf16>
    %1 = vector.shape_cast %0 : vector<1x1x8x8x32xbf16> to vector<8x8x32xbf16>
    %c0_4 = arith.constant 0 : index
    %c1 = arith.constant 1 : index
    %c0_5 = arith.constant 0 : index
    %c0_6 = arith.constant 0 : index
    %c0_7 = arith.constant 0 : index
    %2 = vector.load %arg1[%c0_4, %c1, %c0_5, %c0_6, %c0_7] : memref<1x4x9x9x32xbf16, #tpu.memory_space<vmem>>, vector<1x1x8x8x32xbf16>
    %3 = vector.shape_cast %2 : vector<1x1x8x8x32xbf16> to vector<8x8x32xbf16>
    %c0_8 = arith.constant 0 : index
    %c0_9 = arith.constant 0 : index
    %c0_10 = arith.constant 0 : index
    %c1_11 = arith.constant 1 : index
    %c0_12 = arith.constant 0 : index
    %4 = vector.load %arg1[%c0_8, %c0_9, %c0_10, %c1_11, %c0_12] : memref<1x4x9x9x32xbf16, #tpu.memory_space<vmem>>, vector<1x1x8x8x32xbf16>
    %5 = vector.shape_cast %4 : vector<1x1x8x8x32xbf16> to vector<8x8x32xbf16>
    %c0_13 = arith.constant 0 : index
    %c2 = arith.constant 2 : index
    %c0_14 = arith.constant 0 : index
    %c0_15 = arith.constant 0 : index
    %c0_16 = arith.constant 0 : index
    %6 = vector.load %arg1[%c0_13, %c2, %c0_14, %c0_15, %c0_16] : memref<1x4x9x9x32xbf16, #tpu.memory_space<vmem>>, vector<1x1x8x8x32xbf16>
    %7 = vector.shape_cast %6 : vector<1x1x8x8x32xbf16> to vector<8x8x32xbf16>
    %c0_17 = arith.constant 0 : index
    %c3 = arith.constant 3 : index
    %c0_18 = arith.constant 0 : index
    %c0_19 = arith.constant 0 : index
    %c0_20 = arith.constant 0 : index
    %8 = vector.load %arg1[%c0_17, %c3, %c0_18, %c0_19, %c0_20] : memref<1x4x9x9x32xbf16, #tpu.memory_space<vmem>>, vector<1x1x8x8x32xbf16>
    %9 = vector.shape_cast %8 : vector<1x1x8x8x32xbf16> to vector<8x8x32xbf16>
    %c0_21 = arith.constant 0 : index
    %c2_22 = arith.constant 2 : index
    %c0_23 = arith.constant 0 : index
    %c1_24 = arith.constant 1 : index
    %c0_25 = arith.constant 0 : index
    %10 = vector.load %arg1[%c0_21, %c2_22, %c0_23, %c1_24, %c0_25] : memref<1x4x9x9x32xbf16, #tpu.memory_space<vmem>>, vector<1x1x8x8x32xbf16>
    %11 = vector.shape_cast %10 : vector<1x1x8x8x32xbf16> to vector<8x8x32xbf16>
    %c0_26 = arith.constant 0 : index
    %c0_27 = arith.constant 0 : index
    %c1_28 = arith.constant 1 : index
    %c0_29 = arith.constant 0 : index
    %c0_30 = arith.constant 0 : index
    %12 = vector.load %arg1[%c0_26, %c0_27, %c1_28, %c0_29, %c0_30] : memref<1x4x9x9x32xbf16, #tpu.memory_space<vmem>>, vector<1x1x8x8x32xbf16>
    %13 = vector.shape_cast %12 : vector<1x1x8x8x32xbf16> to vector<8x8x32xbf16>
    %c0_31 = arith.constant 0 : index
    %c1_32 = arith.constant 1 : index
    %c1_33 = arith.constant 1 : index
    %c0_34 = arith.constant 0 : index
    %c0_35 = arith.constant 0 : index
    %14 = vector.load %arg1[%c0_31, %c1_32, %c1_33, %c0_34, %c0_35] : memref<1x4x9x9x32xbf16, #tpu.memory_space<vmem>>, vector<1x1x8x8x32xbf16>
    %15 = vector.shape_cast %14 : vector<1x1x8x8x32xbf16> to vector<8x8x32xbf16>
    %c0_36 = arith.constant 0 : index
    %c0_37 = arith.constant 0 : index
    %c1_38 = arith.constant 1 : index
    %c1_39 = arith.constant 1 : index
    %c0_40 = arith.constant 0 : index
    %16 = vector.load %arg1[%c0_36, %c0_37, %c1_38, %c1_39, %c0_40] : memref<1x4x9x9x32xbf16, #tpu.memory_space<vmem>>, vector<1x1x8x8x32xbf16>
    %17 = vector.shape_cast %16 : vector<1x1x8x8x32xbf16> to vector<8x8x32xbf16>
    %18 = tpu.concatenate %1, %3, %5, %7, %9, %11, %13, %15, %17 in 2 : vector<8x8x32xbf16>, vector<8x8x32xbf16>, vector<8x8x32xbf16>, vector<8x8x32xbf16>, vector<8x8x32xbf16>, vector<8x8x32xbf16>, vector<8x8x32xbf16>, vector<8x8x32xbf16>, vector<8x8x32xbf16> -> vector<8x8x288xbf16>
    %19 = vector.shape_cast %18 : vector<8x8x288xbf16> to vector<64x288xbf16>
    %c0_41 = arith.constant 0 : index
    %c0_42 = arith.constant 0 : index
    %20 = vector.load %arg2[%c0_41, %c0_42] : memref<288x64xbf16, #tpu.memory_space<vmem>>, vector<288x64xbf16>
    %cst = arith.constant dense<0.000000e+00> : vector<64x64xf32>
    %21 = tpu.matmul %19, %20, %cst {dimension_numbers = #tpu.dot_dimension_numbers<[1], [0], [0], [1], [0, 0, 1, 1], [], []>} : vector<64x288xbf16>, vector<288x64xbf16>, vector<64x64xf32> -> vector<64x64xf32>
    %c0_43 = arith.constant 0 : index
    %c0_44 = arith.constant 0 : index
    %22 = vector.load %arg3[%c0_43, %c0_44] : memref<1x64xf32, #tpu.memory_space<vmem>>, vector<1x64xf32>
    %23 = vector.broadcast %22 : vector<1x64xf32> to vector<64x64xf32>
    %24 = arith.mulf %21, %23 : vector<64x64xf32>
    %c0_45 = arith.constant 0 : index
    %c0_46 = arith.constant 0 : index
    %25 = vector.load %arg4[%c0_45, %c0_46] : memref<1x64xf32, #tpu.memory_space<vmem>>, vector<1x64xf32>
    %26 = vector.broadcast %25 : vector<1x64xf32> to vector<64x64xf32>
    %27 = arith.addf %24, %26 : vector<64x64xf32>
    %cst_47 = arith.constant 0.000000e+00 : f32
    %28 = vector.broadcast %cst_47 : f32 to vector<64x64xf32>
    %29 = arith.maximumf %27, %28 : vector<64x64xf32>
    %cst_48 = arith.constant 0.000000e+00 : bf16
    %30 = vector.broadcast %cst_48 : bf16 to vector<10x10x64xbf16>
    %c0_49 = arith.constant 0 : index
    %c0_50 = arith.constant 0 : index
    %c0_51 = arith.constant 0 : index
    %31 = vector.load %arg12[%c0_49, %c0_50, %c0_51] : memref<10x10x64xbf16, #tpu.memory_space<vmem>>, vector<10x10x64xbf16>
    tpu.vector_store %arg12[%c0_49, %c0_50, %c0_51], %30 {strides = array<i32>} : memref<10x10x64xbf16, #tpu.memory_space<vmem>>, vector<10x10x64xbf16>,
    %32 = vector.shape_cast %29 : vector<64x64xf32> to vector<8x8x64xf32>
    %33 = arith.truncf %32 : vector<8x8x64xf32> to vector<8x8x64xbf16>
    %c1_52 = arith.constant 1 : index
    %c1_53 = arith.constant 1 : index
    %c0_54 = arith.constant 0 : index
    %34 = vector.load %arg12[%c1_52, %c1_53, %c0_54] : memref<10x10x64xbf16, #tpu.memory_space<vmem>>, vector<8x8x64xbf16>
    tpu.vector_store %arg12[%c1_52, %c1_53, %c0_54], %33 {strides = array<i32>} : memref<10x10x64xbf16, #tpu.memory_space<vmem>>, vector<8x8x64xbf16>,
    %c0_55 = arith.constant 0 : index
    %c0_56 = arith.constant 0 : index
    %c0_57 = arith.constant 0 : index
    %35 = vector.load %arg12[%c0_55, %c0_56, %c0_57] : memref<10x10x64xbf16, #tpu.memory_space<vmem>>, vector<8x8x64xbf16>
    %c0_58 = arith.constant 0 : index
    %c1_59 = arith.constant 1 : index
    %c0_60 = arith.constant 0 : index
    %36 = vector.load %arg12[%c0_58, %c1_59, %c0_60] : memref<10x10x64xbf16, #tpu.memory_space<vmem>>, vector<8x8x64xbf16>
    %c0_61 = arith.constant 0 : index
    %c2_62 = arith.constant 2 : index
    %c0_63 = arith.constant 0 : index
    %37 = vector.load %arg12[%c0_61, %c2_62, %c0_63] : memref<10x10x64xbf16, #tpu.memory_space<vmem>>, vector<8x8x64xbf16>
    %c1_64 = arith.constant 1 : index
    %c0_65 = arith.constant 0 : index
    %c0_66 = arith.constant 0 : index
    %38 = vector.load %arg12[%c1_64, %c0_65, %c0_66] : memref<10x10x64xbf16, #tpu.memory_space<vmem>>, vector<8x8x64xbf16>
    %c1_67 = arith.constant 1 : index
    %c1_68 = arith.constant 1 : index
    %c0_69 = arith.constant 0 : index
    %39 = vector.load %arg12[%c1_67, %c1_68, %c0_69] : memref<10x10x64xbf16, #tpu.memory_space<vmem>>, vector<8x8x64xbf16>
    %c1_70 = arith.constant 1 : index
    %c2_71 = arith.constant 2 : index
    %c0_72 = arith.constant 0 : index
    %40 = vector.load %arg12[%c1_70, %c2_71, %c0_72] : memref<10x10x64xbf16, #tpu.memory_space<vmem>>, vector<8x8x64xbf16>
    %c2_73 = arith.constant 2 : index
    %c0_74 = arith.constant 0 : index
    %c0_75 = arith.constant 0 : index
    %41 = vector.load %arg12[%c2_73, %c0_74, %c0_75] : memref<10x10x64xbf16, #tpu.memory_space<vmem>>, vector<8x8x64xbf16>
    %c2_76 = arith.constant 2 : index
    %c1_77 = arith.constant 1 : index
    %c0_78 = arith.constant 0 : index
    %42 = vector.load %arg12[%c2_76, %c1_77, %c0_78] : memref<10x10x64xbf16, #tpu.memory_space<vmem>>, vector<8x8x64xbf16>
    %c2_79 = arith.constant 2 : index
    %c2_80 = arith.constant 2 : index
    %c0_81 = arith.constant 0 : index
    %43 = vector.load %arg12[%c2_79, %c2_80, %c0_81] : memref<10x10x64xbf16, #tpu.memory_space<vmem>>, vector<8x8x64xbf16>
    %44 = tpu.concatenate %35, %36, %37, %38, %39, %40, %41, %42, %43 in 2 : vector<8x8x64xbf16>, vector<8x8x64xbf16>, vector<8x8x64xbf16>, vector<8x8x64xbf16>, vector<8x8x64xbf16>, vector<8x8x64xbf16>, vector<8x8x64xbf16>, vector<8x8x64xbf16>, vector<8x8x64xbf16> -> vector<8x8x576xbf16>
    %45 = vector.shape_cast %44 : vector<8x8x576xbf16> to vector<64x576xbf16>
    %c0_82 = arith.constant 0 : index
    %c0_83 = arith.constant 0 : index
    %46 = vector.load %arg5[%c0_82, %c0_83] : memref<576x64xbf16, #tpu.memory_space<vmem>>, vector<576x64xbf16>
    %cst_84 = arith.constant dense<0.000000e+00> : vector<64x64xf32>
    %47 = tpu.matmul %45, %46, %cst_84 {dimension_numbers = #tpu.dot_dimension_numbers<[1], [0], [0], [1], [0, 0, 1, 1], [], []>} : vector<64x576xbf16>, vector<576x64xbf16>, vector<64x64xf32> -> vector<64x64xf32>
    %c0_85 = arith.constant 0 : index
    %c0_86 = arith.constant 0 : index
    %48 = vector.load %arg6[%c0_85, %c0_86] : memref<1x64xf32, #tpu.memory_space<vmem>>, vector<1x64xf32>
    %49 = vector.broadcast %48 : vector<1x64xf32> to vector<64x64xf32>
    %50 = arith.mulf %47, %49 : vector<64x64xf32>
    %c0_87 = arith.constant 0 : index
    %c0_88 = arith.constant 0 : index
    %51 = vector.load %arg7[%c0_87, %c0_88] : memref<1x64xf32, #tpu.memory_space<vmem>>, vector<1x64xf32>
    %52 = vector.broadcast %51 : vector<1x64xf32> to vector<64x64xf32>
    %53 = arith.addf %50, %52 : vector<64x64xf32>
    %c0_89 = arith.constant 0 : index
    %c3_90 = arith.constant 3 : index
    %c0_91 = arith.constant 0 : index
    %c0_92 = arith.constant 0 : index
    %c0_93 = arith.constant 0 : index
    %54 = vector.load %arg1[%c0_89, %c3_90, %c0_91, %c0_92, %c0_93] : memref<1x4x9x9x32xbf16, #tpu.memory_space<vmem>>, vector<1x1x8x8x32xbf16>
    %55 = vector.shape_cast %54 : vector<1x1x8x8x32xbf16> to vector<8x8x32xbf16>
    %56 = vector.shape_cast %55 : vector<8x8x32xbf16> to vector<64x32xbf16>
    %c0_94 = arith.constant 0 : index
    %c0_95 = arith.constant 0 : index
    %57 = vector.load %arg8[%c0_94, %c0_95] : memref<32x64xbf16, #tpu.memory_space<vmem>>, vector<32x64xbf16>
    %cst_96 = arith.constant dense<0.000000e+00> : vector<64x64xf32>
    %58 = tpu.matmul %56, %57, %cst_96 {dimension_numbers = #tpu.dot_dimension_numbers<[1], [0], [0], [1], [0, 0, 1, 1], [], []>} : vector<64x32xbf16>, vector<32x64xbf16>, vector<64x64xf32> -> vector<64x64xf32>
    %c0_97 = arith.constant 0 : index
    %c0_98 = arith.constant 0 : index
    %59 = vector.load %arg9[%c0_97, %c0_98] : memref<1x64xf32, #tpu.memory_space<vmem>>, vector<1x64xf32>
    %60 = vector.broadcast %59 : vector<1x64xf32> to vector<64x64xf32>
    %61 = arith.mulf %58, %60 : vector<64x64xf32>
    %c0_99 = arith.constant 0 : index
    %c0_100 = arith.constant 0 : index
    %62 = vector.load %arg10[%c0_99, %c0_100] : memref<1x64xf32, #tpu.memory_space<vmem>>, vector<1x64xf32>
    %63 = vector.broadcast %62 : vector<1x64xf32> to vector<64x64xf32>
    %64 = arith.addf %61, %63 : vector<64x64xf32>
    %65 = arith.addf %53, %64 : vector<64x64xf32>
    %cst_101 = arith.constant 0.000000e+00 : f32
    %66 = vector.broadcast %cst_101 : f32 to vector<64x64xf32>
    %67 = arith.maximumf %65, %66 : vector<64x64xf32>
    %68 = vector.shape_cast %67 : vector<64x64xf32> to vector<1x8x8x64xf32>
    %69 = arith.truncf %68 : vector<1x8x8x64xf32> to vector<1x8x8x64xbf16>
    %c0_102 = arith.constant 0 : index
    %c0_103 = arith.constant 0 : index
    %c0_104 = arith.constant 0 : index
    %c0_105 = arith.constant 0 : index
    %70 = vector.load %arg11[%c0_102, %c0_103, %c0_104, %c0_105] : memref<1x8x8x64xbf16, #tpu.memory_space<vmem>>, vector<1x8x8x64xbf16>
    tpu.vector_store %arg11[%c0_102, %c0_103, %c0_104, %c0_105], %69 {strides = array<i32>} : memref<1x8x8x64xbf16, #tpu.memory_space<vmem>>, vector<1x8x8x64xbf16>,
    return
  }
  func.func @transform_0(%arg0: i32) -> (i32, i32, i32, i32, i32) {
    %c0_i32 = arith.constant 0 : i32
    %c0_i32_0 = arith.constant 0 : i32
    %c0_i32_1 = arith.constant 0 : i32
    %c0_i32_2 = arith.constant 0 : i32
    %c0_i32_3 = arith.constant 0 : i32
    return %arg0, %c0_i32, %c0_i32_0, %c0_i32_1, %c0_i32_2 : i32, i32, i32, i32, i32
  }
  func.func @transform_1(%arg0: i32) -> (i32, i32) {
    %c0_i32 = arith.constant 0 : i32
    %c0_i32_0 = arith.constant 0 : i32
    %c0_i32_1 = arith.constant 0 : i32
    return %c0_i32, %c0_i32_0 : i32, i32
  }
  func.func @transform_2(%arg0: i32) -> (i32, i32) {
    %c0_i32 = arith.constant 0 : i32
    %c0_i32_0 = arith.constant 0 : i32
    %c0_i32_1 = arith.constant 0 : i32
    return %c0_i32, %c0_i32_0 : i32, i32
  }
  func.func @transform_3(%arg0: i32) -> (i32, i32) {
    %c0_i32 = arith.constant 0 : i32
    %c0_i32_0 = arith.constant 0 : i32
    %c0_i32_1 = arith.constant 0 : i32
    return %c0_i32, %c0_i32_0 : i32, i32
  }
  func.func @transform_4(%arg0: i32) -> (i32, i32) {
    %c0_i32 = arith.constant 0 : i32
    %c0_i32_0 = arith.constant 0 : i32
    %c0_i32_1 = arith.constant 0 : i32
    return %c0_i32, %c0_i32_0 : i32, i32
  }
  func.func @transform_5(%arg0: i32) -> (i32, i32) {
    %c0_i32 = arith.constant 0 : i32
    %c0_i32_0 = arith.constant 0 : i32
    %c0_i32_1 = arith.constant 0 : i32
    return %c0_i32, %c0_i32_0 : i32, i32
  }
  func.func @transform_6(%arg0: i32) -> (i32, i32) {
    %c0_i32 = arith.constant 0 : i32
    %c0_i32_0 = arith.constant 0 : i32
    %c0_i32_1 = arith.constant 0 : i32
    return %c0_i32, %c0_i32_0 : i32, i32
  }
  func.func @transform_7(%arg0: i32) -> (i32, i32) {
    %c0_i32 = arith.constant 0 : i32
    %c0_i32_0 = arith.constant 0 : i32
    %c0_i32_1 = arith.constant 0 : i32
    return %c0_i32, %c0_i32_0 : i32, i32
  }
  func.func @transform_8(%arg0: i32) -> (i32, i32) {
    %c0_i32 = arith.constant 0 : i32
    %c0_i32_0 = arith.constant 0 : i32
    %c0_i32_1 = arith.constant 0 : i32
    return %c0_i32, %c0_i32_0 : i32, i32
  }
  func.func @transform_9(%arg0: i32) -> (i32, i32) {
    %c0_i32 = arith.constant 0 : i32
    %c0_i32_0 = arith.constant 0 : i32
    %c0_i32_1 = arith.constant 0 : i32
    return %c0_i32, %c0_i32_0 : i32, i32
  }
  func.func @transform_10(%arg0: i32) -> (i32, i32, i32, i32) {
    %c0_i32 = arith.constant 0 : i32
    %c0_i32_0 = arith.constant 0 : i32
    %c0_i32_1 = arith.constant 0 : i32
    %c0_i32_2 = arith.constant 0 : i32
    return %arg0, %c0_i32, %c0_i32_0, %c0_i32_1 : i32, i32, i32, i32
  }
}

</mosaic_0001>

<llo_original>
// kernel: forward.3
$region0: #{forward.3}
  #allocation0 [shape = 'u32[]', space=smem, size = 0x4, offset = 0x4, fixed_abs, tag = 'smem constant byte address 0x4 - core index']
  #allocation1 [shape = 'u32[144,128]{1,0:T(1,128)}', space=vmem, size = 0x12000, scoped, tag = 'internal scratch']
  #allocation2 [shape = 'bf16[10,10,64]{2,1,0:T(8,128)(2,1)}', space=vmem, size = 0xa000, scoped, tag = 'scratch operand']
  %s0 = inlined_call_operand.vmem [shape: bf16[2,4,9,9,32], index: 0, kind: input, shape index: {}]
  %s1 = inlined_call_operand.vmem [shape: bf16[288,64], index: 1, kind: input, shape index: {}]
  %s2 = inlined_call_operand.vmem [shape: f32[1,64], index: 2, kind: input, shape index: {}]
  %s3 = inlined_call_operand.vmem [shape: f32[1,64], index: 3, kind: input, shape index: {}]
  %s4 = inlined_call_operand.vmem [shape: bf16[576,64], index: 4, kind: input, shape index: {}]
  %s5 = inlined_call_operand.vmem [shape: f32[1,64], index: 5, kind: input, shape index: {}]
  %s6 = inlined_call_operand.vmem [shape: f32[1,64], index: 6, kind: input, shape index: {}]
  %s7 = inlined_call_operand.vmem [shape: bf16[32,64], index: 7, kind: input, shape index: {}]
  %s8 = inlined_call_operand.vmem [shape: f32[1,64], index: 8, kind: input, shape index: {}]
  %s9 = inlined_call_operand.vmem [shape: f32[1,64], index: 9, kind: input, shape index: {}]
  %s10 = inlined_call_operand.hbm [shape: bf16[2,8,8,64], index: 10, kind: output, shape index: {}]
  %s11 = sld [smem:[#allocation0]]
  $region73: #{forward.3} parent=0
    _
  %s13 = ssub.s32 1, %s11
  %s14 = scalar_select 0, %s13, %s11
  $region1: #{forward.3} parent=0
    #allocation3 [shape = 'u8[32768]{0}', space=vmem, size = 0x8000, scoped, tag = 'output window, operand 0']
    #allocation4 [shape = 's32[2]{0}', space=sflag, size = 0x8, scoped, tag = 'scoped memory for forward.3']
    %15 = vsyncpa [#allocation4], 0
    %s16 = scalar_lea.sflag [#allocation4], 1
    %17 = vsyncpa %s16, 0
    loop: start=0, step=1, limit=4
    $region2: #{forward.3} parent=1 // loop_pre_header
      _
    $region3: #{forward.3} parent=1 // loop_header
      %s19 = sphi 0, %s23
      %p20 = scmp.ge.s32.totalorder %s19, 4
      %s29 = sphi 0, %s31
      %s32 = sphi 0, %s29
      %s33 = sphi 0, %s32
      %s49 = sphi 0, %s33
      %s53 = sphi 0, %s53
      %s55 = sphi 0, %s53
      %s56 = sphi 0, %s55
      %s70 = sphi 0, %s56
      %s74 = sphi 0, %s74
      %s76 = sphi 0, %s74
      %s77 = sphi 0, %s76
      %s91 = sphi 0, %s77
      %s95 = sphi 0, %s95
      %s97 = sphi 0, %s95
      %s98 = sphi 0, %s97
      %s112 = sphi 0, %s98
      %s116 = sphi 0, %s116
      %s118 = sphi 0, %s116
      %s119 = sphi 0, %s118
      %s133 = sphi 0, %s119
      %s137 = sphi 0, %s137
      %s139 = sphi 0, %s137
      %s140 = sphi 0, %s139
      %s154 = sphi 0, %s140
      %s158 = sphi 0, %s158
      %s160 = sphi 0, %s158
      %s161 = sphi 0, %s160
      %s175 = sphi 0, %s161
      %s179 = sphi 0, %s179
      %s181 = sphi 0, %s179
      %s182 = sphi 0, %s181
      %s196 = sphi 0, %s182
      %s200 = sphi 0, %s200
      %s202 = sphi 0, %s200
      %s203 = sphi 0, %s202
      %s217 = sphi 0, %s203
      %s221 = sphi 0, %s221
      %s223 = sphi 0, %s221
      %s224 = sphi 0, %s223
      %s238 = sphi 0, %s224
      %s244 = sphi 0, %s246
      %s247 = sphi 0, %s244
      %s248 = sphi 0, %s247
      %s264 = sphi 0, %s248
    $region4: #{forward.3} parent=1 // loop_header_branch
      %22 = sbr.rel (%p20) target = $region8
    $region5: #{forward.3} parent=1 // loop_body
      %s24 = ssub.s32 %s19, 1
      %s25 = ssub.s32 %s19, 2
      %s26 = sadd.s32 %s19, 1
      %s27 = ssub.s32 %s19, %s26
      %p28 = scmp.eq.s32.totalorder %s27, 0
      %s30 = sadd.s32 %s29, 1
      %s31 = scalar_select %p28, %s29, %s30
      %p34 = pneg %p28
      %p35 = scmp.eq.s32.totalorder %s19, 1
      %p36 = por %p34, %p35
      %p37 = scmp.ne.s32.totalorder %s29, %s32
      %p38 = scmp.eq.s32.totalorder %s19, 0
      %p39 = por %p37, %p38
      %p40 = scmp.ne.s32.totalorder %s29, %s32
      %p41 = scmp.eq.s32.totalorder %s24, 1
      %p42 = por %p40, %p41
      %p43 = scmp.ne.s32.totalorder %s32, %s33
      %p44 = scmp.eq.s32.totalorder %s24, 0
      %p45 = por %p43, %p44
      %p46 = scmp.ne.s32.totalorder %s32, %s33
      %p47 = scmp.eq.s32.totalorder %s25, 1
      %p48 = por %p46, %p47
      %p50 = scmp.ne.s32.totalorder %s33, %s49
      %p51 = scmp.eq.s32.totalorder %s25, 0
      %p52 = por %p50, %p51
      %s54 = sadd.s32 %s53, 1
      %p57 = scmp.eq.s32.totalorder %s19, 1
      %p58 = scmp.ne.s32.totalorder %s53, %s55
      %p59 = scmp.eq.s32.totalorder %s19, 0
      %p60 = por %p58, %p59
      %p61 = scmp.ne.s32.totalorder %s53, %s55
      %p62 = scmp.eq.s32.totalorder %s24, 1
      %p63 = por %p61, %p62
      %p64 = scmp.ne.s32.totalorder %s55, %s56
      %p65 = scmp.eq.s32.totalorder %s24, 0
      %p66 = por %p64, %p65
      %p67 = scmp.ne.s32.totalorder %s55, %s56
      %p68 = scmp.eq.s32.totalorder %s25, 1
      %p69 = por %p67, %p68
      %p71 = scmp.ne.s32.totalorder %s56, %s70
      %p72 = scmp.eq.s32.totalorder %s25, 0
      %p73 = por %p71, %p72
      %s75 = sadd.s32 %s74, 1
      %p78 = scmp.eq.s32.totalorder %s19, 1
      %p79 = scmp.ne.s32.totalorder %s74, %s76
      %p80 = scmp.eq.s32.totalorder %s19, 0
      %p81 = por %p79, %p80
      %p82 = scmp.ne.s32.totalorder %s74, %s76
      %p83 = scmp.eq.s32.totalorder %s24, 1
      %p84 = por %p82, %p83
      %p85 = scmp.ne.s32.totalorder %s76, %s77
      %p86 = scmp.eq.s32.totalorder %s24, 0
      %p87 = por %p85, %p86
      %p88 = scmp.ne.s32.totalorder %s76, %s77
      %p89 = scmp.eq.s32.totalorder %s25, 1
      %p90 = por %p88, %p89
      %p92 = scmp.ne.s32.totalorder %s77, %s91
      %p93 = scmp.eq.s32.totalorder %s25, 0
      %p94 = por %p92, %p93
      %s96 = sadd.s32 %s95, 1
      %p99 = scmp.eq.s32.totalorder %s19, 1
      %p100 = scmp.ne.s32.totalorder %s95, %s97
      %p101 = scmp.eq.s32.totalorder %s19, 0
      %p102 = por %p100, %p101
      %p103 = scmp.ne.s32.totalorder %s95, %s97
      %p104 = scmp.eq.s32.totalorder %s24, 1
      %p105 = por %p103, %p104
      %p106 = scmp.ne.s32.totalorder %s97, %s98
      %p107 = scmp.eq.s32.totalorder %s24, 0
      %p108 = por %p106, %p107
      %p109 = scmp.ne.s32.totalorder %s97, %s98
      %p110 = scmp.eq.s32.totalorder %s25, 1
      %p111 = por %p109, %p110
      %p113 = scmp.ne.s32.totalorder %s98, %s112
      %p114 = scmp.eq.s32.totalorder %s25, 0
      %p115 = por %p113, %p114
      %s117 = sadd.s32 %s116, 1
      %p120 = scmp.eq.s32.totalorder %s19, 1
      %p121 = scmp.ne.s32.totalorder %s116, %s118
      %p122 = scmp.eq.s32.totalorder %s19, 0
      %p123 = por %p121, %p122
      %p124 = scmp.ne.s32.totalorder %s116, %s118
      %p125 = scmp.eq.s32.totalorder %s24, 1
      %p126 = por %p124, %p125
      %p127 = scmp.ne.s32.totalorder %s118, %s119
      %p128 = scmp.eq.s32.totalorder %s24, 0
      %p129 = por %p127, %p128
      %p130 = scmp.ne.s32.totalorder %s118, %s119
      %p131 = scmp.eq.s32.totalorder %s25, 1
      %p132 = por %p130, %p131
      %p134 = scmp.ne.s32.totalorder %s119, %s133
      %p135 = scmp.eq.s32.totalorder %s25, 0
      %p136 = por %p134, %p135
      %s138 = sadd.s32 %s137, 1
      %p141 = scmp.eq.s32.totalorder %s19, 1
      %p142 = scmp.ne.s32.totalorder %s137, %s139
      %p143 = scmp.eq.s32.totalorder %s19, 0
      %p144 = por %p142, %p143
      %p145 = scmp.ne.s32.totalorder %s137, %s139
      %p146 = scmp.eq.s32.totalorder %s24, 1
      %p147 = por %p145, %p146
      %p148 = scmp.ne.s32.totalorder %s139, %s140
      %p149 = scmp.eq.s32.totalorder %s24, 0
      %p150 = por %p148, %p149
      %p151 = scmp.ne.s32.totalorder %s139, %s140
      %p152 = scmp.eq.s32.totalorder %s25, 1
      %p153 = por %p151, %p152
      %p155 = scmp.ne.s32.totalorder %s140, %s154
      %p156 = scmp.eq.s32.totalorder %s25, 0
      %p157 = por %p155, %p156
      %s159 = sadd.s32 %s158, 1
      %p162 = scmp.eq.s32.totalorder %s19, 1
      %p163 = scmp.ne.s32.totalorder %s158, %s160
      %p164 = scmp.eq.s32.totalorder %s19, 0
      %p165 = por %p163, %p164
      %p166 = scmp.ne.s32.totalorder %s158, %s160
      %p167 = scmp.eq.s32.totalorder %s24, 1
      %p168 = por %p166, %p167
      %p169 = scmp.ne.s32.totalorder %s160, %s161
      %p170 = scmp.eq.s32.totalorder %s24, 0
      %p171 = por %p169, %p170
      %p172 = scmp.ne.s32.totalorder %s160, %s161
      %p173 = scmp.eq.s32.totalorder %s25, 1
      %p174 = por %p172, %p173
      %p176 = scmp.ne.s32.totalorder %s161, %s175
      %p177 = scmp.eq.s32.totalorder %s25, 0
      %p178 = por %p176, %p177
      %s180 = sadd.s32 %s179, 1
      %p183 = scmp.eq.s32.totalorder %s19, 1
      %p184 = scmp.ne.s32.totalorder %s179, %s181
      %p185 = scmp.eq.s32.totalorder %s19, 0
      %p186 = por %p184, %p185
      %p187 = scmp.ne.s32.totalorder %s179, %s181
      %p188 = scmp.eq.s32.totalorder %s24, 1
      %p189 = por %p187, %p188
      %p190 = scmp.ne.s32.totalorder %s181, %s182
      %p191 = scmp.eq.s32.totalorder %s24, 0
      %p192 = por %p190, %p191
      %p193 = scmp.ne.s32.totalorder %s181, %s182
      %p194 = scmp.eq.s32.totalorder %s25, 1
      %p195 = por %p193, %p194
      %p197 = scmp.ne.s32.totalorder %s182, %s196
      %p198 = scmp.eq.s32.totalorder %s25, 0
      %p199 = por %p197, %p198
      %s201 = sadd.s32 %s200, 1
      %p204 = scmp.eq.s32.totalorder %s19, 1
      %p205 = scmp.ne.s32.totalorder %s200, %s202
      %p206 = scmp.eq.s32.totalorder %s19, 0
      %p207 = por %p205, %p206
      %p208 = scmp.ne.s32.totalorder %s200, %s202
      %p209 = scmp.eq.s32.totalorder %s24, 1
      %p210 = por %p208, %p209
      %p211 = scmp.ne.s32.totalorder %s202, %s203
      %p212 = scmp.eq.s32.totalorder %s24, 0
      %p213 = por %p211, %p212
      %p214 = scmp.ne.s32.totalorder %s202, %s203
      %p215 = scmp.eq.s32.totalorder %s25, 1
      %p216 = por %p214, %p215
      %p218 = scmp.ne.s32.totalorder %s203, %s217
      %p219 = scmp.eq.s32.totalorder %s25, 0
      %p220 = por %p218, %p219
      %s222 = sadd.s32 %s221, 1
      %p225 = scmp.eq.s32.totalorder %s19, 1
      %p226 = scmp.ne.s32.totalorder %s221, %s223
      %p227 = scmp.eq.s32.totalorder %s19, 0
      %p228 = por %p226, %p227
      %p229 = scmp.ne.s32.totalorder %s221, %s223
      %p230 = scmp.eq.s32.totalorder %s24, 1
      %p231 = por %p229, %p230
      %p232 = scmp.ne.s32.totalorder %s223, %s224
      %p233 = scmp.eq.s32.totalorder %s24, 0
      %p234 = por %p232, %p233
      %p235 = scmp.ne.s32.totalorder %s223, %s224
      %p236 = scmp.eq.s32.totalorder %s25, 1
      %p237 = por %p235, %p236
      %p239 = scmp.ne.s32.totalorder %s224, %s238
      %p240 = scmp.eq.s32.totalorder %s25, 0
      %p241 = por %p239, %p240
      %s242 = ssub.s32 %s19, %s26
      %p243 = scmp.eq.s32.totalorder %s242, 0
      %s245 = sadd.s32 %s244, 1
      %s246 = scalar_select %p243, %s244, %s245
      %p249 = pneg %p243
      %p250 = scmp.eq.s32.totalorder %s19, 1
      %p251 = por %p249, %p250
      %p252 = scmp.ne.s32.totalorder %s244, %s247
      %p253 = scmp.eq.s32.totalorder %s19, 0
      %p254 = por %p252, %p253
      %p255 = scmp.ne.s32.totalorder %s244, %s247
      %p256 = scmp.eq.s32.totalorder %s24, 1
      %p257 = por %p255, %p256
      %p258 = scmp.ne.s32.totalorder %s247, %s248
      %p259 = scmp.eq.s32.totalorder %s24, 0
      %p260 = por %p258, %p259
      %p261 = scmp.ne.s32.totalorder %s247, %s248
      %p262 = scmp.eq.s32.totalorder %s25, 1
      %p263 = por %p261, %p262
      %p265 = scmp.ne.s32.totalorder %s248, %s264
      %p266 = scmp.eq.s32.totalorder %s25, 0
      %p267 = por %p265, %p266
      %p268 = scmp.le.s32.totalorder 1, %s19
      %p269 = scmp.lt.s32.totalorder %s19, 3
      %p270 = pnand %p268, %p269
      %p271 = pneg %p270
      // Predicated region
      $region9: #{forward.3} parent=5 // pred_check
        _
      $region10: #{forward.3} parent=5 // pred_check_branch
        %273 = sbr.rel (%p270) target = $region12
      $region11: #{forward.3} parent=5 // pred_region
        %s274 = ssub.s32 %s19, 1
        // Predicated region
        $region13: #{forward.3} parent=11 // pred_check
          %p275 = pneg %p66
        $region14: #{forward.3} parent=11 // pred_check_branch
          %277 = sbr.rel (%p275) target = $region16
        $region15: #{forward.3} parent=11 // pred_region
          _
        $region16: #{forward.3} parent=11 // pred_fallthru
          _
        // Predicated region
        $region17: #{forward.3} parent=11 // pred_check
          %p278 = pneg %p87
        $region18: #{forward.3} parent=11 // pred_check_branch
          %280 = sbr.rel (%p278) target = $region20
        $region19: #{forward.3} parent=11 // pred_region
          _
        $region20: #{forward.3} parent=11 // pred_fallthru
          _
        // Predicated region
        $region21: #{forward.3} parent=11 // pred_check
          %p281 = pneg %p108
        $region22: #{forward.3} parent=11 // pred_check_branch
          %283 = sbr.rel (%p281) target = $region24
        $region23: #{forward.3} parent=11 // pred_region
          _
        $region24: #{forward.3} parent=11 // pred_fallthru
          _
        // Predicated region
        $region25: #{forward.3} parent=11 // pred_check
          %p284 = pneg %p129
        $region26: #{forward.3} parent=11 // pred_check_branch
          %286 = sbr.rel (%p284) target = $region28
        $region27: #{forward.3} parent=11 // pred_region
          _
        $region28: #{forward.3} parent=11 // pred_fallthru
          _
        // Predicated region
        $region29: #{forward.3} parent=11 // pred_check
          %p287 = pneg %p150
        $region30: #{forward.3} parent=11 // pred_check_branch
          %289 = sbr.rel (%p287) target = $region32
        $region31: #{forward.3} parent=11 // pred_region
          _
        $region32: #{forward.3} parent=11 // pred_fallthru
          _
        // Predicated region
        $region33: #{forward.3} parent=11 // pred_check
          %p290 = pneg %p171
        $region34: #{forward.3} parent=11 // pred_check_branch
          %292 = sbr.rel (%p290) target = $region36
        $region35: #{forward.3} parent=11 // pred_region
          _
        $region36: #{forward.3} parent=11 // pred_fallthru
          _
        // Predicated region
        $region37: #{forward.3} parent=11 // pred_check
          %p293 = pneg %p192
        $region38: #{forward.3} parent=11 // pred_check_branch
          %295 = sbr.rel (%p293) target = $region40
        $region39: #{forward.3} parent=11 // pred_region
          _
        $region40: #{forward.3} parent=11 // pred_fallthru
          _
        // Predicated region
        $region41: #{forward.3} parent=11 // pred_check
          %p296 = pneg %p213
        $region42: #{forward.3} parent=11 // pred_check_branch
          %298 = sbr.rel (%p296) target = $region44
        $region43: #{forward.3} parent=11 // pred_region
          _
        $region44: #{forward.3} parent=11 // pred_fallthru
          _
        // Predicated region
        $region45: #{forward.3} parent=11 // pred_check
          %p299 = pneg %p234
        $region46: #{forward.3} parent=11 // pred_check_branch
          %301 = sbr.rel (%p299) target = $region48
        $region47: #{forward.3} parent=11 // pred_region
          _
        $region48: #{forward.3} parent=11 // pred_fallthru
          _
      $region12: #{forward.3} parent=5 // pred_fallthru
        _
      %p302 = scmp.lt.s32.totalorder %s19, 2
      // Predicated region
      $region49: #{forward.3} parent=5 // pred_check
        %p303 = pneg %p302
      $region50: #{forward.3} parent=5 // pred_check_branch
        %305 = sbr.rel (%p303) target = $region52
      $region51: #{forward.3} parent=5 // pred_region
        // Predicated region
        $region53: #{forward.3} parent=51 // pred_check
          %p306 = pneg %p39
        $region54: #{forward.3} parent=51 // pred_check_branch
          %308 = sbr.rel (%p306) target = $region56
        $region55: #{forward.3} parent=51 // pred_region
          %p309 = scmp.lt.s32.totalorder %s19, 1
          %s310 = scalar_select %p309, %s19, 1
          %s311 = smul.addr %s310, 72
          %s312 = smul.addr %s311, 4
          %s313 = scalar_lea.vmem %s0, %s312
        $region56: #{forward.3} parent=51 // pred_fallthru
          _
      $region52: #{forward.3} parent=5 // pred_fallthru
        _
      %p314 = scmp.le.s32.totalorder 1, %s19
      %p315 = scmp.lt.s32.totalorder %s19, 3
      %p316 = pnand %p314, %p315
      %p317 = pneg %p316
      // Predicated region
      $region57: #{forward.3} parent=5 // pred_check
        _
      $region58: #{forward.3} parent=5 // pred_check_branch
        %319 = sbr.rel (%p316) target = $region60
      $region59: #{forward.3} parent=5 // pred_region
        %s320 = ssub.s32 %s19, 1
        %p321 = scmp.lt.s32.totalorder %s24, 1
        %s322 = scalar_select %p321, %s24, 1
        %s323 = smul.addr %s322, 72
        %s324 = smul.addr %s323, 4
        %s325 = scalar_lea.vmem %s0, %s324
        %p326 = pneg %p45
        %p327 = pneg %p42
        %p328 = pneg %p66
        %p329 = pneg %p63
        %p330 = pneg %p87
        %p331 = pneg %p84
        %p332 = pneg %p108
        %p333 = pneg %p105
        %p334 = pneg %p129
        %p335 = pneg %p126
        %p336 = pneg %p150
        %p337 = pneg %p147
        %p338 = pneg %p171
        %p339 = pneg %p168
        %p340 = pneg %p192
        %p341 = pneg %p189
        %p342 = pneg %p213
        %p343 = pneg %p210
        %p344 = pneg %p234
        %p345 = pneg %p231
        %p346 = pneg %p260
        %p347 = pneg %p257
        %s348 = sand.u32 %s247, 1
        %s349 = scalar_lea.sflag [#allocation4], %s348
        %s350 = sand.u32 %s247, 1
        %s351 = smul.addr %s350, 32
        %s352 = scalar_lea.vmem [#allocation3], %s351
        %p353 = scmp.lt.s32.totalorder %s24, 1
        %s354 = scalar_select %p353, %s24, 1
        %s355 = smul.addr %s354, 72
        %s356 = smul.addr %s355, 4
        %s357 = scalar_lea.vmem %s0, %s356
        %v359 = vld [vmem:[%s357] sm:$0xf]
        %v360 = vld [vmem:[%s357 + $0x8] sm:$0xf]
        %v361 = vld [vmem:[%s357 + $0x10] sm:$0xf]
        %v362 = vld [vmem:[%s357 + $0x18] sm:$0xf]
        %v363 = vld [vmem:[%s357 + $0x20] sm:$0xf]
        %v364 = vld [vmem:[%s357 + $0x28] sm:$0xf]
        %v365 = vld [vmem:[%s357 + $0x30] sm:$0xf]
        %v366 = vld [vmem:[%s357 + $0x38] sm:$0xf]
        %s367 = scalar_lea.vmem %s357, 72
        %v368 = vld [vmem:[%s367] sm:$0xf]
        %v369 = vld [vmem:[%s367 + $0x8] sm:$0xf]
        %v370 = vld [vmem:[%s367 + $0x10] sm:$0xf]
        %v371 = vld [vmem:[%s367 + $0x18] sm:$0xf]
        %v372 = vld [vmem:[%s367 + $0x20] sm:$0xf]
        %v373 = vld [vmem:[%s367 + $0x28] sm:$0xf]
        %v374 = vld [vmem:[%s367 + $0x30] sm:$0xf]
        %v375 = vld [vmem:[%s367 + $0x38] sm:$0xf]
        %v376 = vld [vmem:[%s357 + $0x4] sm:$0x1]
        %v377 = vld [vmem:[%s357 + $0xc] sm:$0x1]
        %v378 = vld [vmem:[%s357 + $0x14] sm:$0x1]
        %v379 = vld [vmem:[%s357 + $0x1c] sm:$0x1]
        %v380 = vld [vmem:[%s357 + $0x24] sm:$0x1]
        %v381 = vld [vmem:[%s357 + $0x2c] sm:$0x1]
        %v382 = vld [vmem:[%s357 + $0x34] sm:$0x1]
        %v383 = vld [vmem:[%s357 + $0x3c] sm:$0x1]
        %s384 = scalar_lea.vmem %s357, 144
        %v385 = vld [vmem:[%s384] sm:$0xf]
        %v386 = vld [vmem:[%s384 + $0x8] sm:$0xf]
        %v387 = vld [vmem:[%s384 + $0x10] sm:$0xf]
        %v388 = vld [vmem:[%s384 + $0x18] sm:$0xf]
        %v389 = vld [vmem:[%s384 + $0x20] sm:$0xf]
        %v390 = vld [vmem:[%s384 + $0x28] sm:$0xf]
        %v391 = vld [vmem:[%s384 + $0x30] sm:$0xf]
        %v392 = vld [vmem:[%s384 + $0x38] sm:$0xf]
        %s393 = scalar_lea.vmem %s357, 216
        %v394 = vld [vmem:[%s393] sm:$0xf]
        %v395 = vld [vmem:[%s393 + $0x8] sm:$0xf]
        %v396 = vld [vmem:[%s393 + $0x10] sm:$0xf]
        %v397 = vld [vmem:[%s393 + $0x18] sm:$0xf]
        %v398 = vld [vmem:[%s393 + $0x20] sm:$0xf]
        %v399 = vld [vmem:[%s393 + $0x28] sm:$0xf]
        %v400 = vld [vmem:[%s393 + $0x30] sm:$0xf]
        %v401 = vld [vmem:[%s393 + $0x38] sm:$0xf]
        %v402 = vld [vmem:[%s384 + $0x4] sm:$0x1]
        %v403 = vld [vmem:[%s384 + $0xc] sm:$0x1]
        %v404 = vld [vmem:[%s384 + $0x14] sm:$0x1]
        %v405 = vld [vmem:[%s384 + $0x1c] sm:$0x1]
        %v406 = vld [vmem:[%s384 + $0x24] sm:$0x1]
        %v407 = vld [vmem:[%s384 + $0x2c] sm:$0x1]
        %v408 = vld [vmem:[%s384 + $0x34] sm:$0x1]
        %v409 = vld [vmem:[%s384 + $0x3c] sm:$0x1]
        %s410 = scalar_lea.vmem %s357, 8
        %v411 = vld [vmem:[%s410] sm:$0xf]
        %v412 = vld [vmem:[%s410 + $0x8] sm:$0xf]
        %v413 = vld [vmem:[%s410 + $0x10] sm:$0xf]
        %v414 = vld [vmem:[%s410 + $0x18] sm:$0xf]
        %v415 = vld [vmem:[%s410 + $0x20] sm:$0xf]
        %v416 = vld [vmem:[%s410 + $0x28] sm:$0xf]
        %v417 = vld [vmem:[%s410 + $0x30] sm:$0xf]
        %v418 = vld [vmem:[%s410 + $0x38] sm:$0xf]
        %s419 = scalar_lea.vmem %s357, 80
        %v420 = vld [vmem:[%s419] sm:$0xf]
        %v421 = vld [vmem:[%s419 + $0x8] sm:$0xf]
        %v422 = vld [vmem:[%s419 + $0x10] sm:$0xf]
        %v423 = vld [vmem:[%s419 + $0x18] sm:$0xf]
        %v424 = vld [vmem:[%s419 + $0x20] sm:$0xf]
        %v425 = vld [vmem:[%s419 + $0x28] sm:$0xf]
        %v426 = vld [vmem:[%s419 + $0x30] sm:$0xf]
        %v427 = vld [vmem:[%s419 + $0x38] sm:$0xf]
        %v428 = vld [vmem:[%s410 + $0x4] sm:$0x1]
        %v429 = vld [vmem:[%s410 + $0xc] sm:$0x1]
        %v430 = vld [vmem:[%s410 + $0x14] sm:$0x1]
        %v431 = vld [vmem:[%s410 + $0x1c] sm:$0x1]
        %v432 = vld [vmem:[%s410 + $0x24] sm:$0x1]
        %v433 = vld [vmem:[%s410 + $0x2c] sm:$0x1]
        %v434 = vld [vmem:[%s410 + $0x34] sm:$0x1]
        %v435 = vld [vmem:[%s410 + $0x3c] sm:$0x1]
        %v444 = vunpack.c.l.b16 %v368
        %v445 = vunpack.c.l.b16 %v369
        %v446 = vunpack.c.l.b16 %v370
        %v447 = vunpack.c.l.b16 %v371
        %v448 = vunpack.c.l.b16 %v372
        %v449 = vunpack.c.l.b16 %v373
        %v450 = vunpack.c.l.b16 %v374
        %v451 = vunpack.c.l.b16 %v375
        %v452 = vpack.c.b16 %v444, %v444
        %v453 = vpack.c.b16 %v445, %v445
        %v454 = vpack.c.b16 %v446, %v446
        %v455 = vpack.c.b16 %v447, %v447
        %v456 = vpack.c.b16 %v448, %v448
        %v457 = vpack.c.b16 %v449, %v449
        %v458 = vpack.c.b16 %v450, %v450
        %v459 = vpack.c.b16 %v451, %v451
        %460 = vrot.lane.b32.xlu0 %v452, 32
        %v461 = vpop.permute.xlu0 %460
        %462 = vrot.lane.b32.xlu0 %v453, 32
        %v463 = vpop.permute.xlu0 %462
        %464 = vrot.lane.b32.xlu0 %v454, 32
        %v465 = vpop.permute.xlu0 %464
        %466 = vrot.lane.b32.xlu0 %v455, 32
        %v467 = vpop.permute.xlu0 %466
        %468 = vrot.lane.b32.xlu0 %v456, 32
        %v469 = vpop.permute.xlu0 %468
        %470 = vrot.lane.b32.xlu0 %v457, 32
        %v471 = vpop.permute.xlu0 %470
        %472 = vrot.lane.b32.xlu0 %v458, 32
        %v473 = vpop.permute.xlu0 %472
        %474 = vrot.lane.b32.xlu0 %v459, 32
        %v475 = vpop.permute.xlu0 %474
        %v492 = vunpack.c.l.b16 %v359
        %v493 = vunpack.c.l.b16 %v376
        %v494 = vunpack.c.l.b16 %v360
        %v495 = vunpack.c.l.b16 %v377
        %v496 = vunpack.c.l.b16 %v361
        %v497 = vunpack.c.l.b16 %v378
        %v498 = vunpack.c.l.b16 %v362
        %v499 = vunpack.c.l.b16 %v379
        %v500 = vunpack.c.l.b16 %v363
        %v501 = vunpack.c.l.b16 %v380
        %v502 = vunpack.c.l.b16 %v364
        %v503 = vunpack.c.l.b16 %v381
        %v504 = vunpack.c.l.b16 %v365
        %v505 = vunpack.c.l.b16 %v382
        %v506 = vunpack.c.l.b16 %v366
        %v507 = vunpack.c.l.b16 %v383
        %v508 = vpack.c.b16 %v493, %v492
        %v509 = vpack.c.b16 %v495, %v494
        %v510 = vpack.c.b16 %v497, %v496
        %v511 = vpack.c.b16 %v499, %v498
        %v512 = vpack.c.b16 %v501, %v500
        %v513 = vpack.c.b16 %v503, %v502
        %v514 = vpack.c.b16 %v505, %v504
        %v515 = vpack.c.b16 %v507, %v506
        %v517 = vshrl.u32 %v508, 16
        %v519 = vshll.u32 %v508, 16
        %v521 = vrot.slane %v519, 1
        %v522 = vor.u32 %v517, %v521
        %v524 = vshrl.u32 %v509, 16
        %v526 = vshll.u32 %v509, 16
        %v528 = vrot.slane %v526, 1
        %v529 = vor.u32 %v524, %v528
        %v531 = vshrl.u32 %v510, 16
        %v533 = vshll.u32 %v510, 16
        %v535 = vrot.slane %v533, 1
        %v536 = vor.u32 %v531, %v535
        %v538 = vshrl.u32 %v511, 16
        %v540 = vshll.u32 %v511, 16
        %v542 = vrot.slane %v540, 1
        %v543 = vor.u32 %v538, %v542
        %v545 = vshrl.u32 %v512, 16
        %v547 = vshll.u32 %v512, 16
        %v549 = vrot.slane %v547, 1
        %v550 = vor.u32 %v545, %v549
        %v552 = vshrl.u32 %v513, 16
        %v554 = vshll.u32 %v513, 16
        %v556 = vrot.slane %v554, 1
        %v557 = vor.u32 %v552, %v556
        %v559 = vshrl.u32 %v514, 16
        %v561 = vshll.u32 %v514, 16
        %v563 = vrot.slane %v561, 1
        %v564 = vor.u32 %v559, %v563
        %v566 = vshrl.u32 %v515, 16
        %v568 = vshll.u32 %v515, 16
        %v570 = vrot.slane %v568, 1
        %v571 = vor.u32 %v566, %v570
        %572 = vrot.lane.b32.xlu0 %v522, 64
        %v573 = vpop.permute.xlu0 %572
        %574 = vrot.lane.b32.xlu0 %v529, 64
        %v575 = vpop.permute.xlu0 %574
        %576 = vrot.lane.b32.xlu0 %v536, 64
        %v577 = vpop.permute.xlu0 %576
        %578 = vrot.lane.b32.xlu0 %v543, 64
        %v579 = vpop.permute.xlu0 %578
        %580 = vrot.lane.b32.xlu0 %v550, 64
        %v581 = vpop.permute.xlu0 %580
        %582 = vrot.lane.b32.xlu0 %v557, 64
        %v583 = vpop.permute.xlu0 %582
        %584 = vrot.lane.b32.xlu0 %v564, 64
        %v585 = vpop.permute.xlu0 %584
        %586 = vrot.lane.b32.xlu0 %v571, 64
        %v587 = vpop.permute.xlu0 %586
        %v596 = vunpack.c.l.b16 %v385
        %v597 = vunpack.c.l.b16 %v386
        %v598 = vunpack.c.l.b16 %v387
        %v599 = vunpack.c.l.b16 %v388
        %v600 = vunpack.c.l.b16 %v389
        %v601 = vunpack.c.l.b16 %v390
        %v602 = vunpack.c.l.b16 %v391
        %v603 = vunpack.c.l.b16 %v392
        %v604 = vpack.c.b16 %v596, %v596
        %v605 = vpack.c.b16 %v597, %v597
        %v606 = vpack.c.b16 %v598, %v598
        %v607 = vpack.c.b16 %v599, %v599
        %v608 = vpack.c.b16 %v600, %v600
        %v609 = vpack.c.b16 %v601, %v601
        %v610 = vpack.c.b16 %v602, %v602
        %v611 = vpack.c.b16 %v603, %v603
        %612 = vrot.lane.b32.xlu0 %v604, 96
        %v613 = vpop.permute.xlu0 %612
        %614 = vrot.lane.b32.xlu0 %v605, 96
        %v615 = vpop.permute.xlu0 %614
        %616 = vrot.lane.b32.xlu0 %v606, 96
        %v617 = vpop.permute.xlu0 %616
        %618 = vrot.lane.b32.xlu0 %v607, 96
        %v619 = vpop.permute.xlu0 %618
        %620 = vrot.lane.b32.xlu0 %v608, 96
        %v621 = vpop.permute.xlu0 %620
        %622 = vrot.lane.b32.xlu0 %v609, 96
        %v623 = vpop.permute.xlu0 %622
        %624 = vrot.lane.b32.xlu0 %v610, 96
        %v625 = vpop.permute.xlu0 %624
        %626 = vrot.lane.b32.xlu0 %v611, 96
        %v627 = vpop.permute.xlu0 %626
        %v636 = vunpack.c.l.b16 %v402
        %v637 = vunpack.c.l.b16 %v403
        %v638 = vunpack.c.l.b16 %v404
        %v639 = vunpack.c.l.b16 %v405
        %v640 = vunpack.c.l.b16 %v406
        %v641 = vunpack.c.l.b16 %v407
        %v642 = vunpack.c.l.b16 %v408
        %v643 = vunpack.c.l.b16 %v409
        %v644 = vpack.c.b16 %v636, %v596
        %v645 = vpack.c.b16 %v637, %v597
        %v646 = vpack.c.b16 %v638, %v598
        %v647 = vpack.c.b16 %v639, %v599
        %v648 = vpack.c.b16 %v640, %v600
        %v649 = vpack.c.b16 %v641, %v601
        %v650 = vpack.c.b16 %v642, %v602
        %v651 = vpack.c.b16 %v643, %v603
        %v653 = vshrl.u32 %v644, 16
        %v655 = vshll.u32 %v644, 16
        %v657 = vrot.slane %v655, 1
        %v658 = vor.u32 %v653, %v657
        %v660 = vshrl.u32 %v645, 16
        %v662 = vshll.u32 %v645, 16
        %v664 = vrot.slane %v662, 1
        %v665 = vor.u32 %v660, %v664
        %v667 = vshrl.u32 %v646, 16
        %v669 = vshll.u32 %v646, 16
        %v671 = vrot.slane %v669, 1
        %v672 = vor.u32 %v667, %v671
        %v674 = vshrl.u32 %v647, 16
        %v676 = vshll.u32 %v647, 16
        %v678 = vrot.slane %v676, 1
        %v679 = vor.u32 %v674, %v678
        %v681 = vshrl.u32 %v648, 16
        %v683 = vshll.u32 %v648, 16
        %v685 = vrot.slane %v683, 1
        %v686 = vor.u32 %v681, %v685
        %v688 = vshrl.u32 %v649, 16
        %v690 = vshll.u32 %v649, 16
        %v692 = vrot.slane %v690, 1
        %v693 = vor.u32 %v688, %v692
        %v695 = vshrl.u32 %v650, 16
        %v697 = vshll.u32 %v650, 16
        %v699 = vrot.slane %v697, 1
        %v700 = vor.u32 %v695, %v699
        %v702 = vshrl.u32 %v651, 16
        %v704 = vshll.u32 %v651, 16
        %v706 = vrot.slane %v704, 1
        %v707 = vor.u32 %v702, %v706
        %708 = vrot.lane.b32.xlu0 %v658, 32
        %v709 = vpop.permute.xlu0 %708
        %710 = vrot.lane.b32.xlu0 %v665, 32
        %v711 = vpop.permute.xlu0 %710
        %712 = vrot.lane.b32.xlu0 %v672, 32
        %v713 = vpop.permute.xlu0 %712
        %714 = vrot.lane.b32.xlu0 %v679, 32
        %v715 = vpop.permute.xlu0 %714
        %716 = vrot.lane.b32.xlu0 %v686, 32
        %v717 = vpop.permute.xlu0 %716
        %718 = vrot.lane.b32.xlu0 %v693, 32
        %v719 = vpop.permute.xlu0 %718
        %720 = vrot.lane.b32.xlu0 %v700, 32
        %v721 = vpop.permute.xlu0 %720
        %722 = vrot.lane.b32.xlu0 %v707, 32
        %v723 = vpop.permute.xlu0 %722
        %v732 = vunpack.c.l.b16 %v411
        %v733 = vunpack.c.l.b16 %v412
        %v734 = vunpack.c.l.b16 %v413
        %v735 = vunpack.c.l.b16 %v414
        %v736 = vunpack.c.l.b16 %v415
        %v737 = vunpack.c.l.b16 %v416
        %v738 = vunpack.c.l.b16 %v417
        %v739 = vunpack.c.l.b16 %v418
        %v740 = vpack.c.b16 %v732, %v732
        %v741 = vpack.c.b16 %v733, %v733
        %v742 = vpack.c.b16 %v734, %v734
        %v743 = vpack.c.b16 %v735, %v735
        %v744 = vpack.c.b16 %v736, %v736
        %v745 = vpack.c.b16 %v737, %v737
        %v746 = vpack.c.b16 %v738, %v738
        %v747 = vpack.c.b16 %v739, %v739
        %748 = vrot.lane.b32.xlu0 %v740, 64
        %v749 = vpop.permute.xlu0 %748
        %750 = vrot.lane.b32.xlu0 %v741, 64
        %v751 = vpop.permute.xlu0 %750
        %752 = vrot.lane.b32.xlu0 %v742, 64
        %v753 = vpop.permute.xlu0 %752
        %754 = vrot.lane.b32.xlu0 %v743, 64
        %v755 = vpop.permute.xlu0 %754
        %756 = vrot.lane.b32.xlu0 %v744, 64
        %v757 = vpop.permute.xlu0 %756
        %758 = vrot.lane.b32.xlu0 %v745, 64
        %v759 = vpop.permute.xlu0 %758
        %760 = vrot.lane.b32.xlu0 %v746, 64
        %v761 = vpop.permute.xlu0 %760
        %762 = vrot.lane.b32.xlu0 %v747, 64
        %v763 = vpop.permute.xlu0 %762
        %v772 = vunpack.c.l.b16 %v420
        %v773 = vunpack.c.l.b16 %v421
        %v774 = vunpack.c.l.b16 %v422
        %v775 = vunpack.c.l.b16 %v423
        %v776 = vunpack.c.l.b16 %v424
        %v777 = vunpack.c.l.b16 %v425
        %v778 = vunpack.c.l.b16 %v426
        %v779 = vunpack.c.l.b16 %v427
        %v780 = vpack.c.b16 %v772, %v772
        %v781 = vpack.c.b16 %v773, %v773
        %v782 = vpack.c.b16 %v774, %v774
        %v783 = vpack.c.b16 %v775, %v775
        %v784 = vpack.c.b16 %v776, %v776
        %v785 = vpack.c.b16 %v777, %v777
        %v786 = vpack.c.b16 %v778, %v778
        %v787 = vpack.c.b16 %v779, %v779
        %788 = vrot.lane.b32.xlu0 %v780, 96
        %v789 = vpop.permute.xlu0 %788
        %790 = vrot.lane.b32.xlu0 %v781, 96
        %v791 = vpop.permute.xlu0 %790
        %792 = vrot.lane.b32.xlu0 %v782, 96
        %v793 = vpop.permute.xlu0 %792
        %794 = vrot.lane.b32.xlu0 %v783, 96
        %v795 = vpop.permute.xlu0 %794
        %796 = vrot.lane.b32.xlu0 %v784, 96
        %v797 = vpop.permute.xlu0 %796
        %798 = vrot.lane.b32.xlu0 %v785, 96
        %v799 = vpop.permute.xlu0 %798
        %800 = vrot.lane.b32.xlu0 %v786, 96
        %v801 = vpop.permute.xlu0 %800
        %802 = vrot.lane.b32.xlu0 %v787, 96
        %v803 = vpop.permute.xlu0 %802
        %v812 = vunpack.c.l.b16 %v428
        %v813 = vunpack.c.l.b16 %v429
        %v814 = vunpack.c.l.b16 %v430
        %v815 = vunpack.c.l.b16 %v431
        %v816 = vunpack.c.l.b16 %v432
        %v817 = vunpack.c.l.b16 %v433
        %v818 = vunpack.c.l.b16 %v434
        %v819 = vunpack.c.l.b16 %v435
        %v820 = vpack.c.b16 %v812, %v732
        %v821 = vpack.c.b16 %v813, %v733
        %v822 = vpack.c.b16 %v814, %v734
        %v823 = vpack.c.b16 %v815, %v735
        %v824 = vpack.c.b16 %v816, %v736
        %v825 = vpack.c.b16 %v817, %v737
        %v826 = vpack.c.b16 %v818, %v738
        %v827 = vpack.c.b16 %v819, %v739
        %v829 = vshrl.u32 %v820, 16
        %v831 = vshll.u32 %v820, 16
        %v833 = vrot.slane %v831, 1
        %v834 = vor.u32 %v829, %v833
        %v836 = vshrl.u32 %v821, 16
        %v838 = vshll.u32 %v821, 16
        %v840 = vrot.slane %v838, 1
        %v841 = vor.u32 %v836, %v840
        %v843 = vshrl.u32 %v822, 16
        %v845 = vshll.u32 %v822, 16
        %v847 = vrot.slane %v845, 1
        %v848 = vor.u32 %v843, %v847
        %v850 = vshrl.u32 %v823, 16
        %v852 = vshll.u32 %v823, 16
        %v854 = vrot.slane %v852, 1
        %v855 = vor.u32 %v850, %v854
        %v857 = vshrl.u32 %v824, 16
        %v859 = vshll.u32 %v824, 16
        %v861 = vrot.slane %v859, 1
        %v862 = vor.u32 %v857, %v861
        %v864 = vshrl.u32 %v825, 16
        %v866 = vshll.u32 %v825, 16
        %v868 = vrot.slane %v866, 1
        %v869 = vor.u32 %v864, %v868
        %v871 = vshrl.u32 %v826, 16
        %v873 = vshll.u32 %v826, 16
        %v875 = vrot.slane %v873, 1
        %v876 = vor.u32 %v871, %v875
        %v878 = vshrl.u32 %v827, 16
        %v880 = vshll.u32 %v827, 16
        %v882 = vrot.slane %v880, 1
        %v883 = vor.u32 %v878, %v882
        %vm884 = vcmask 261120
        %v887 = vsel %vm884, %v359, %v461
        %v890 = vsel %vm884, %v360, %v463
        %v893 = vsel %vm884, %v361, %v465
        %v896 = vsel %vm884, %v362, %v467
        %v899 = vsel %vm884, %v363, %v469
        %v902 = vsel %vm884, %v364, %v471
        %v905 = vsel %vm884, %v365, %v473
        %v908 = vsel %vm884, %v366, %v475
        %vm909 = vcmask 523264
        %v911 = vsel %vm909, %v887, %v573
        %v913 = vsel %vm909, %v890, %v575
        %v915 = vsel %vm909, %v893, %v577
        %v917 = vsel %vm909, %v896, %v579
        %v919 = vsel %vm909, %v899, %v581
        %v921 = vsel %vm909, %v902, %v583
        %v923 = vsel %vm909, %v905, %v585
        %v925 = vsel %vm909, %v908, %v587
        %vm926 = vcmask 785408
        %v928 = vsel %vm926, %v911, %v613
        %v930 = vsel %vm926, %v913, %v615
        %v932 = vsel %vm926, %v915, %v617
        %v934 = vsel %vm926, %v917, %v619
        %v936 = vsel %vm926, %v919, %v621
        %v938 = vsel %vm926, %v921, %v623
        %v940 = vsel %vm926, %v923, %v625
        %v942 = vsel %vm926, %v925, %v627
        %v945 = vsel %vm884, %v394, %v709
        %v948 = vsel %vm884, %v395, %v711
        %v951 = vsel %vm884, %v396, %v713
        %v954 = vsel %vm884, %v397, %v715
        %v957 = vsel %vm884, %v398, %v717
        %v960 = vsel %vm884, %v399, %v719
        %v963 = vsel %vm884, %v400, %v721
        %v966 = vsel %vm884, %v401, %v723
        %v968 = vsel %vm909, %v945, %v749
        %v970 = vsel %vm909, %v948, %v751
        %v972 = vsel %vm909, %v951, %v753
        %v974 = vsel %vm909, %v954, %v755
        %v976 = vsel %vm909, %v957, %v757
        %v978 = vsel %vm909, %v960, %v759
        %v980 = vsel %vm909, %v963, %v761
        %v982 = vsel %vm909, %v966, %v763
        %v984 = vsel %vm926, %v968, %v789
        %v986 = vsel %vm926, %v970, %v791
        %v988 = vsel %vm926, %v972, %v793
        %v990 = vsel %vm926, %v974, %v795
        %v992 = vsel %vm926, %v976, %v797
        %v994 = vsel %vm926, %v978, %v799
        %v996 = vsel %vm926, %v980, %v801
        %v998 = vsel %vm926, %v982, %v803
        %v1015 = vunpack.c.l.b16 %v928
        %v1016 = vunpack.c.l.b16 %v984
        %v1017 = vunpack.c.l.b16 %v834
        %v1018 = vunpack.c.l.b16 %v930
        %v1019 = vunpack.c.l.b16 %v986
        %v1020 = vunpack.c.l.b16 %v841
        %v1021 = vunpack.c.l.b16 %v932
        %v1022 = vunpack.c.l.b16 %v988
        %v1023 = vunpack.c.l.b16 %v848
        %v1024 = vunpack.c.l.b16 %v934
        %v1025 = vunpack.c.l.b16 %v990
        %v1026 = vunpack.c.l.b16 %v855
        %v1027 = vunpack.c.l.b16 %v936
        %v1028 = vunpack.c.l.b16 %v992
        %v1029 = vunpack.c.l.b16 %v862
        %v1030 = vunpack.c.l.b16 %v938
        %v1031 = vunpack.c.l.b16 %v994
        %v1032 = vunpack.c.l.b16 %v869
        %v1033 = vunpack.c.l.b16 %v940
        %v1034 = vunpack.c.l.b16 %v996
        %v1035 = vunpack.c.l.b16 %v876
        %v1036 = vunpack.c.l.b16 %v942
        %v1037 = vunpack.c.l.b16 %v998
        %v1038 = vunpack.c.l.b16 %v883
        %v1039 = vld [vmem:[%s1] sm:$0xf]
        %v1040 = vld [vmem:[%s1 + $0x4] sm:$0xf]
        %v1041 = vld [vmem:[%s1 + $0x8] sm:$0xf]
        %v1042 = vld [vmem:[%s1 + $0xc] sm:$0xf]
        %v1043 = vld [vmem:[%s1 + $0x10] sm:$0xf]
        %v1044 = vld [vmem:[%s1 + $0x14] sm:$0xf]
        %v1045 = vld [vmem:[%s1 + $0x18] sm:$0xf]
        %v1046 = vld [vmem:[%s1 + $0x1c] sm:$0xf]
        %v1047 = vld [vmem:[%s1 + $0x20] sm:$0xf]
        %v1048 = vld [vmem:[%s1 + $0x24] sm:$0xf]
        %v1049 = vld [vmem:[%s1 + $0x28] sm:$0xf]
        %v1050 = vld [vmem:[%s1 + $0x2c] sm:$0xf]
        %v1051 = vld [vmem:[%s1 + $0x30] sm:$0xf]
        %v1052 = vld [vmem:[%s1 + $0x34] sm:$0xf]
        %v1053 = vld [vmem:[%s1 + $0x38] sm:$0xf]
        %v1054 = vld [vmem:[%s1 + $0x3c] sm:$0xf]
        %v1055 = vld [vmem:[%s1 + $0x40] sm:$0xf]
        %v1056 = vld [vmem:[%s1 + $0x44] sm:$0xf]
        %v1057 = vld [vmem:[%s1 + $0x48] sm:$0xf]
        %v1058 = vld [vmem:[%s1 + $0x4c] sm:$0xf]
        %v1059 = vld [vmem:[%s1 + $0x50] sm:$0xf]
        %v1060 = vld [vmem:[%s1 + $0x54] sm:$0xf]
        %v1061 = vld [vmem:[%s1 + $0x58] sm:$0xf]
        %v1062 = vld [vmem:[%s1 + $0x5c] sm:$0xf]
        %v1063 = vld [vmem:[%s1 + $0x60] sm:$0xf]
        %v1064 = vld [vmem:[%s1 + $0x64] sm:$0xf]
        %v1065 = vld [vmem:[%s1 + $0x68] sm:$0xf]
        %v1066 = vld [vmem:[%s1 + $0x6c] sm:$0xf]
        %v1067 = vld [vmem:[%s1 + $0x70] sm:$0xf]
        %v1068 = vld [vmem:[%s1 + $0x74] sm:$0xf]
        %v1069 = vld [vmem:[%s1 + $0x78] sm:$0xf]
        %v1070 = vld [vmem:[%s1 + $0x7c] sm:$0xf]
        %v1071 = vld [vmem:[%s1 + $0x80] sm:$0xf]
        %v1072 = vld [vmem:[%s1 + $0x84] sm:$0xf]
        %v1073 = vld [vmem:[%s1 + $0x88] sm:$0xf]
        %v1074 = vld [vmem:[%s1 + $0x8c] sm:$0xf]
        %v1075 = vpack.c.b16 %v1018, %v1015
        %v1076 = vpack.c.b16 %v1019, %v1016
        %v1077 = vpack.c.b16 %v1020, %v1017
        %v1078 = vpack.c.b16 %v1024, %v1021
        %v1079 = vpack.c.b16 %v1025, %v1022
        %v1080 = vpack.c.b16 %v1026, %v1023
        %v1081 = vpack.c.b16 %v1030, %v1027
        %v1082 = vpack.c.b16 %v1031, %v1028
        %v1083 = vpack.c.b16 %v1032, %v1029
        %v1084 = vpack.c.b16 %v1036, %v1033
        %v1085 = vpack.c.b16 %v1037, %v1034
        %v1086 = vpack.c.b16 %v1038, %v1035
        %v1131 = vunpack.c.l.b16 %v1039
        %v1132 = vunpack.c.l.b16 %v1040
        %v1133 = vunpack.c.l.b16 %v1041
        %v1134 = vunpack.c.l.b16 %v1042
        %v1135 = vunpack.c.l.b16 %v1043
        %v1136 = vunpack.c.l.b16 %v1044
        %v1137 = vunpack.c.l.b16 %v1045
        %v1138 = vunpack.c.l.b16 %v1046
        %v1139 = vunpack.c.l.b16 %v1047
        %v1140 = vunpack.c.l.b16 %v1048
        %v1141 = vunpack.c.l.b16 %v1049
        %v1142 = vunpack.c.l.b16 %v1050
        %v1143 = vunpack.c.l.b16 %v1051
        %v1144 = vunpack.c.l.b16 %v1052
        %v1145 = vunpack.c.l.b16 %v1053
        %v1146 = vunpack.c.l.b16 %v1054
        %v1147 = vunpack.c.l.b16 %v1055
        %v1148 = vunpack.c.l.b16 %v1056
        %v1149 = vunpack.c.l.b16 %v1057
        %v1150 = vunpack.c.l.b16 %v1058
        %v1151 = vunpack.c.l.b16 %v1059
        %v1152 = vunpack.c.l.b16 %v1060
        %v1153 = vunpack.c.l.b16 %v1061
        %v1154 = vunpack.c.l.b16 %v1062
        %v1155 = vunpack.c.l.b16 %v1063
        %v1156 = vunpack.c.l.b16 %v1064
        %v1157 = vunpack.c.l.b16 %v1065
        %v1158 = vunpack.c.l.b16 %v1066
        %v1159 = vunpack.c.l.b16 %v1067
        %v1160 = vunpack.c.l.b16 %v1068
        %v1161 = vunpack.c.l.b16 %v1069
        %v1162 = vunpack.c.l.b16 %v1070
        %v1163 = vunpack.c.l.b16 %v1071
        %v1164 = vunpack.c.l.b16 %v1072
        %v1165 = vunpack.c.l.b16 %v1073
        %v1166 = vunpack.c.l.b16 %v1074
        %v1167 = vpack.c.b16 %v1132, %v1131
        %v1168 = vpack.c.b16 %v1134, %v1133
        %v1169 = vpack.c.b16 %v1136, %v1135
        %v1170 = vpack.c.b16 %v1138, %v1137
        %v1171 = vpack.c.b16 %v1140, %v1139
        %v1172 = vpack.c.b16 %v1142, %v1141
        %v1173 = vpack.c.b16 %v1144, %v1143
        %v1174 = vpack.c.b16 %v1146, %v1145
        %v1175 = vpack.c.b16 %v1148, %v1147
        %v1176 = vpack.c.b16 %v1150, %v1149
        %v1177 = vpack.c.b16 %v1152, %v1151
        %v1178 = vpack.c.b16 %v1154, %v1153
        %v1179 = vpack.c.b16 %v1156, %v1155
        %v1180 = vpack.c.b16 %v1158, %v1157
        %v1181 = vpack.c.b16 %v1160, %v1159
        %v1182 = vpack.c.b16 %v1162, %v1161
        %v1183 = vpack.c.b16 %v1164, %v1163
        %v1184 = vpack.c.b16 %v1166, %v1165
        %v1204 = vsel %vm884, %v1077, 0
        %v1207 = vsel %vm884, %v1080, 0
        %v1210 = vsel %vm884, %v1083, 0
        %v1213 = vsel %vm884, %v1086, 0
        %1215 = vmatprep.subr.bf16.mxu0 0
        %1216 = vmatpush1.bf16.msra.mxu0 %v1174
        %1217 = vmatprep.subr.bf16.mxu0 0
        %1218 = vmatpush1.bf16.msra.mxu0 %v1173
        %1219 = vmatprep.subr.bf16.mxu0 0
        %1220 = vmatpush1.bf16.msra.mxu0 %v1172
        %1221 = vmatprep.subr.bf16.mxu0 0
        %1222 = vmatpush1.bf16.msra.mxu0 %v1171
        %1223 = vmatprep.subr.bf16.mxu0 0
        %1224 = vmatpush1.bf16.msra.mxu0 %v1170
        %1225 = vmatprep.subr.bf16.mxu0 0
        %1226 = vmatpush1.bf16.msra.mxu0 %v1169
        %1227 = vmatprep.subr.bf16.mxu0 0
        %1228 = vmatpush1.bf16.msra.mxu0 %v1168
        %1229 = vmatprep.subr.bf16.mxu0 0
        %1230 = vmatpush1.bf16.msra.mxu0 %v1167
        %1231 = vmatprep.subr.bf16.mxu0 0
        %1232 = vmatpush2.bf16.msra.mxu0 %v1182
        %1233 = vmatprep.subr.bf16.mxu0 0
        %1234 = vmatpush2.bf16.msra.mxu0 %v1181
        %1235 = vmatprep.subr.bf16.mxu0 0
        %1236 = vmatpush2.bf16.msra.mxu0 %v1180
        %1237 = vmatprep.subr.bf16.mxu0 0
        %1238 = vmatpush2.bf16.msra.mxu0 %v1179
        %1239 = vmatprep.subr.bf16.mxu0 0
        %1240 = vmatpush2.bf16.msra.mxu0 %v1178
        %1241 = vmatprep.subr.bf16.mxu0 0
        %1242 = vmatpush2.bf16.msra.mxu0 %v1177
        %1243 = vmatprep.subr.bf16.mxu0 0
        %1244 = vmatpush2.bf16.msra.mxu0 %v1176
        %1245 = vmatprep.subr.bf16.mxu0 0
        %1246 = vmatpush2.bf16.msra.mxu0 %v1175
        %1247 = vmatprep.mubr.bf16.mxu0 %v1076
        %1248 = vmatmul.mubr.bf16.gmra.mxu0 %v1075
        %v1249 = vpop.f32.mrf.mxu0
        %v1250 = vadd.f32 0.0, %v1249
        %v1251 = vpop.f32.mrf.mxu0
        %v1252 = vpop.f32.mrf.mxu0
        %v1253 = vadd.f32 0.0, %v1252
        %v1254 = vpop.f32.mrf.mxu0
        %1255 = vmatprep.mubr.bf16.mxu0 %v1079
        %1256 = vmatmul.mubr.bf16.gmra.mxu0 %v1078
        %v1257 = vpop.f32.mrf.mxu0
        %v1258 = vadd.f32 0.0, %v1257
        %v1259 = vpop.f32.mrf.mxu0
        %v1260 = vpop.f32.mrf.mxu0
        %v1261 = vadd.f32 0.0, %v1260
        %v1262 = vpop.f32.mrf.mxu0
        %1263 = vmatprep.mubr.bf16.mxu0 %v1082
        %1264 = vmatmul.mubr.bf16.gmra.mxu0 %v1081
        %v1265 = vpop.f32.mrf.mxu0
        %v1266 = vadd.f32 0.0, %v1265
        %v1267 = vpop.f32.mrf.mxu0
        %v1268 = vpop.f32.mrf.mxu0
        %v1269 = vadd.f32 0.0, %v1268
        %v1270 = vpop.f32.mrf.mxu0
        %1271 = vmatprep.mubr.bf16.mxu0 %v1085
        %1272 = vmatmul.mubr.bf16.gmra.mxu0 %v1084
        %v1273 = vpop.f32.mrf.mxu0
        %v1274 = vadd.f32 0.0, %v1273
        %v1275 = vpop.f32.mrf.mxu0
        %v1276 = vpop.f32.mrf.mxu0
        %v1277 = vadd.f32 0.0, %v1276
        %v1278 = vpop.f32.mrf.mxu0
        %1279 = vdwg.mxu0
        %1280 = vmatprep.subr.bf16.mxu0 0
        %1281 = vmatpush1.bf16.msra.mxu0 0
        %1282 = vmatprep.subr.bf16.mxu0 0
        %1283 = vmatpush1.bf16.msra.mxu0 0
        %1284 = vmatprep.subr.bf16.mxu0 0
        %1285 = vmatpush1.bf16.msra.mxu0 0
        %1286 = vmatprep.subr.bf16.mxu0 0
        %1287 = vmatpush1.bf16.msra.mxu0 0
        %1288 = vmatprep.subr.bf16.mxu0 0
        %1289 = vmatpush1.bf16.msra.mxu0 0
        %1290 = vmatprep.subr.bf16.mxu0 0
        %1291 = vmatpush1.bf16.msra.mxu0 0
        %1292 = vmatprep.subr.bf16.mxu0 0
        %1293 = vmatpush1.bf16.msra.mxu0 %v1184
        %1294 = vmatprep.subr.bf16.mxu0 0
        %1295 = vmatpush1.bf16.msra.mxu0 %v1183
        %1296 = vmatprep.subr.bf16.mxu0 0
        %1297 = vmatpush2.bf16.msra.mxu0 0
        %1298 = vmatprep.subr.bf16.mxu0 0
        %1299 = vmatpush2.bf16.msra.mxu0 0
        %1300 = vmatprep.subr.bf16.mxu0 0
        %1301 = vmatpush2.bf16.msra.mxu0 0
        %1302 = vmatprep.subr.bf16.mxu0 0
        %1303 = vmatpush2.bf16.msra.mxu0 0
        %1304 = vmatprep.subr.bf16.mxu0 0
        %1305 = vmatpush2.bf16.msra.mxu0 0
        %1306 = vmatprep.subr.bf16.mxu0 0
        %1307 = vmatpush2.bf16.msra.mxu0 0
        %1308 = vmatprep.subr.bf16.mxu0 0
        %1309 = vmatpush2.bf16.msra.mxu0 0
        %1310 = vmatprep.subr.bf16.mxu0 0
        %1311 = vmatpush2.bf16.msra.mxu0 0
        %1312 = vmatprep.mubr.bf16.mxu0 0
        %1313 = vmatmul.mubr.bf16.gmra.mxu0 %v1204
        %v1314 = vpop.f32.mrf.mxu0
        %v1315 = vadd.f32 %v1250, %v1314
        %v1316 = vpop.f32.mrf.mxu0
        %v1317 = vpop.f32.mrf.mxu0
        %v1318 = vadd.f32 %v1253, %v1317
        %v1319 = vpop.f32.mrf.mxu0
        %1320 = vmatprep.mubr.bf16.mxu0 0
        %1321 = vmatmul.mubr.bf16.gmra.mxu0 %v1207
        %v1322 = vpop.f32.mrf.mxu0
        %v1323 = vadd.f32 %v1258, %v1322
        %v1324 = vpop.f32.mrf.mxu0
        %v1325 = vpop.f32.mrf.mxu0
        %v1326 = vadd.f32 %v1261, %v1325
        %v1327 = vpop.f32.mrf.mxu0
        %1328 = vmatprep.mubr.bf16.mxu0 0
        %1329 = vmatmul.mubr.bf16.gmra.mxu0 %v1210
        %v1330 = vpop.f32.mrf.mxu0
        %v1331 = vadd.f32 %v1266, %v1330
        %v1332 = vpop.f32.mrf.mxu0
        %v1333 = vpop.f32.mrf.mxu0
        %v1334 = vadd.f32 %v1269, %v1333
        %v1335 = vpop.f32.mrf.mxu0
        %1336 = vmatprep.mubr.bf16.mxu0 0
        %1337 = vmatmul.mubr.bf16.gmra.mxu0 %v1213
        %v1338 = vpop.f32.mrf.mxu0
        %v1339 = vadd.f32 %v1274, %v1338
        %v1340 = vpop.f32.mrf.mxu0
        %v1341 = vpop.f32.mrf.mxu0
        %v1342 = vadd.f32 %v1277, %v1341
        %v1343 = vpop.f32.mrf.mxu0
        %1344 = vdwg.mxu0
        %v1345 = vld [vmem:[%s2] sm:$0x1]
        %v1347 = vlaneseq
        %v1348 = vshrl.u32 %v1347, 7
        %v1349 = vsub.s32 0, %v1348
        %v1350 = vrot.slane %v1345, %v1349
        %v1352 = vmul.f32 %v1315, %v1350
        %v1353 = vmul.f32 %v1318, %v1350
        %v1354 = vmul.f32 %v1323, %v1350
        %v1355 = vmul.f32 %v1326, %v1350
        %v1356 = vmul.f32 %v1331, %v1350
        %v1357 = vmul.f32 %v1334, %v1350
        %v1358 = vmul.f32 %v1339, %v1350
        %v1359 = vmul.f32 %v1342, %v1350
        %v1360 = vld [vmem:[%s3] sm:$0x1]
        %v1362 = vlaneseq
        %v1363 = vshrl.u32 %v1362, 7
        %v1364 = vsub.s32 0, %v1363
        %v1365 = vrot.slane %v1360, %v1364
        %v1367 = vadd.f32 %v1352, %v1365
        %v1368 = vadd.f32 %v1353, %v1365
        %v1369 = vadd.f32 %v1354, %v1365
        %v1370 = vadd.f32 %v1355, %v1365
        %v1371 = vadd.f32 %v1356, %v1365
        %v1372 = vadd.f32 %v1357, %v1365
        %v1373 = vadd.f32 %v1358, %v1365
        %v1374 = vadd.f32 %v1359, %v1365
        %v1375 = vmax.f32 %v1367, 0.0
        %v1376 = vmax.f32 %v1368, 0.0
        %v1377 = vmax.f32 %v1369, 0.0
        %v1378 = vmax.f32 %v1370, 0.0
        %v1379 = vmax.f32 %v1371, 0.0
        %v1380 = vmax.f32 %v1372, 0.0
        %v1381 = vmax.f32 %v1373, 0.0
        %v1382 = vmax.f32 %v1374, 0.0
        %vm1383 = vcmask 519168
        %1384 = vst.msk [vmem:[#allocation2] sm:$0xf] %vm1383, 0
        %vm1385 = vcmask 516096
        %1386 = vst.msk [vmem:[#allocation2 + $0x4] sm:$0x1] %vm1385, 0
        %1387 = vst.msk [vmem:[#allocation2 + $0x8] sm:$0xf] %vm1383, 0
        %1388 = vst.msk [vmem:[#allocation2 + $0xc] sm:$0x1] %vm1385, 0
        %1389 = vst.msk [vmem:[#allocation2 + $0x10] sm:$0xf] %vm1383, 0
        %1390 = vst.msk [vmem:[#allocation2 + $0x14] sm:$0x1] %vm1385, 0
        %1391 = vst.msk [vmem:[#allocation2 + $0x18] sm:$0xf] %vm1383, 0
        %1392 = vst.msk [vmem:[#allocation2 + $0x1c] sm:$0x1] %vm1385, 0
        %1393 = vst.msk [vmem:[#allocation2 + $0x20] sm:$0xf] %vm1383, 0
        %1394 = vst.msk [vmem:[#allocation2 + $0x24] sm:$0x1] %vm1385, 0
        %1395 = vst.msk [vmem:[#allocation2 + $0x28] sm:$0xf] %vm1383, 0
        %1396 = vst.msk [vmem:[#allocation2 + $0x2c] sm:$0x1] %vm1385, 0
        %1397 = vst.msk [vmem:[#allocation2 + $0x30] sm:$0xf] %vm1383, 0
        %1398 = vst.msk [vmem:[#allocation2 + $0x34] sm:$0x1] %vm1385, 0
        %1399 = vst.msk [vmem:[#allocation2 + $0x38] sm:$0xf] %vm1383, 0
        %1400 = vst.msk [vmem:[#allocation2 + $0x3c] sm:$0x1] %vm1385, 0
        %1401 = vst.msk [vmem:[#allocation2 + $0x40] sm:$0xf] %vm1383, 0
        %1402 = vst.msk [vmem:[#allocation2 + $0x44] sm:$0x1] %vm1385, 0
        %1403 = vst.msk [vmem:[#allocation2 + $0x48] sm:$0xf] %vm1383, 0
        %1404 = vst.msk [vmem:[#allocation2 + $0x4c] sm:$0x1] %vm1385, 0
        %v1405 = vpack.c.bf16 %v1375, %v1375
        %v1406 = vpack.c.bf16 %v1376, %v1376
        %v1407 = vpack.c.bf16 %v1377, %v1377
        %v1408 = vpack.c.bf16 %v1378, %v1378
        %v1409 = vpack.c.bf16 %v1379, %v1379
        %v1410 = vpack.c.bf16 %v1380, %v1380
        %v1411 = vpack.c.bf16 %v1381, %v1381
        %v1412 = vpack.c.bf16 %v1382, %v1382
        %v1421 = vunpack.c.l.b16 %v1405
        %v1422 = vunpack.c.l.b16 %v1406
        %v1423 = vunpack.c.l.b16 %v1407
        %v1424 = vunpack.c.l.b16 %v1408
        %v1425 = vunpack.c.l.b16 %v1409
        %v1426 = vunpack.c.l.b16 %v1410
        %v1427 = vunpack.c.l.b16 %v1411
        %v1428 = vunpack.c.l.b16 %v1412
        %v1429 = vpack.c.b16 %v1421, %v1421
        %v1430 = vpack.c.b16 %v1422, %v1422
        %v1431 = vpack.c.b16 %v1423, %v1423
        %v1432 = vpack.c.b16 %v1424, %v1424
        %v1433 = vpack.c.b16 %v1425, %v1425
        %v1434 = vpack.c.b16 %v1426, %v1426
        %v1435 = vpack.c.b16 %v1427, %v1427
        %v1436 = vpack.c.b16 %v1428, %v1428
        %v1438 = vshrl.u32 %v1429, 16
        %v1440 = vrot.slane %v1438, 7
        %v1441 = vshll.u32 %v1429, 16
        %v1443 = vor.u32 %v1440, %v1441
        %v1444 = vrot.slane %v1440, 4
        %v1446 = vshrl.u32 %v1430, 16
        %v1448 = vrot.slane %v1446, 7
        %v1449 = vshll.u32 %v1430, 16
        %v1451 = vor.u32 %v1448, %v1449
        %v1452 = vrot.slane %v1448, 4
        %v1454 = vshrl.u32 %v1431, 16
        %v1456 = vrot.slane %v1454, 7
        %v1457 = vshll.u32 %v1431, 16
        %v1459 = vor.u32 %v1456, %v1457
        %v1460 = vrot.slane %v1456, 4
        %v1462 = vshrl.u32 %v1432, 16
        %v1464 = vrot.slane %v1462, 7
        %v1465 = vshll.u32 %v1432, 16
        %v1467 = vor.u32 %v1464, %v1465
        %v1468 = vrot.slane %v1464, 4
        %v1470 = vshrl.u32 %v1433, 16
        %v1472 = vrot.slane %v1470, 7
        %v1473 = vshll.u32 %v1433, 16
        %v1475 = vor.u32 %v1472, %v1473
        %v1476 = vrot.slane %v1472, 4
        %v1478 = vshrl.u32 %v1434, 16
        %v1480 = vrot.slane %v1478, 7
        %v1481 = vshll.u32 %v1434, 16
        %v1483 = vor.u32 %v1480, %v1481
        %v1484 = vrot.slane %v1480, 4
        %v1486 = vshrl.u32 %v1435, 16
        %v1488 = vrot.slane %v1486, 7
        %v1489 = vshll.u32 %v1435, 16
        %v1491 = vor.u32 %v1488, %v1489
        %v1492 = vrot.slane %v1488, 4
        %v1494 = vshrl.u32 %v1436, 16
        %v1496 = vrot.slane %v1494, 7
        %v1497 = vshll.u32 %v1436, 16
        %v1499 = vor.u32 %v1496, %v1497
        %v1500 = vrot.slane %v1496, 4
        %s1517 = scalar_lea.vmem [#allocation2], 8
        %vm1518 = vcmask 519168
        %vm1519 = vsmask.f32 7938
        %vm1520 = vmand %vm1518, %vm1519
        %v1521 = vld [vmem:[%s1517] sm:$0xf]
        %v1522 = vsel %vm1520, %v1443, %v1521
        %1523 = vst [vmem:[%s1517] sm:$0xf] %v1522
        %vm1524 = vcmask 516096
        %vm1525 = vsmask.f32 256
        %vm1526 = vmand %vm1524, %vm1525
        %v1527 = vld [vmem:[%s1517 + $0x4] sm:$0x1]
        %v1528 = vsel %vm1526, %v1444, %v1527
        %1529 = vst [vmem:[%s1517 + $0x4] sm:$0x1] %v1528
        %v1530 = vld [vmem:[%s1517 + $0x8] sm:$0xf]
        %v1531 = vsel %vm1520, %v1451, %v1530
        %1532 = vst [vmem:[%s1517 + $0x8] sm:$0xf] %v1531
        %v1533 = vld [vmem:[%s1517 + $0xc] sm:$0x1]
        %v1534 = vsel %vm1526, %v1452, %v1533
        %1535 = vst [vmem:[%s1517 + $0xc] sm:$0x1] %v1534
        %v1536 = vld [vmem:[%s1517 + $0x10] sm:$0xf]
        %v1537 = vsel %vm1520, %v1459, %v1536
        %1538 = vst [vmem:[%s1517 + $0x10] sm:$0xf] %v1537
        %v1539 = vld [vmem:[%s1517 + $0x14] sm:$0x1]
        %v1540 = vsel %vm1526, %v1460, %v1539
        %1541 = vst [vmem:[%s1517 + $0x14] sm:$0x1] %v1540
        %v1542 = vld [vmem:[%s1517 + $0x18] sm:$0xf]
        %v1543 = vsel %vm1520, %v1467, %v1542
        %1544 = vst [vmem:[%s1517 + $0x18] sm:$0xf] %v1543
        %v1545 = vld [vmem:[%s1517 + $0x1c] sm:$0x1]
        %v1546 = vsel %vm1526, %v1468, %v1545
        %1547 = vst [vmem:[%s1517 + $0x1c] sm:$0x1] %v1546
        %v1548 = vld [vmem:[%s1517 + $0x20] sm:$0xf]
        %v1549 = vsel %vm1520, %v1475, %v1548
        %1550 = vst [vmem:[%s1517 + $0x20] sm:$0xf] %v1549
        %v1551 = vld [vmem:[%s1517 + $0x24] sm:$0x1]
        %v1552 = vsel %vm1526, %v1476, %v1551
        %1553 = vst [vmem:[%s1517 + $0x24] sm:$0x1] %v1552
        %v1554 = vld [vmem:[%s1517 + $0x28] sm:$0xf]
        %v1555 = vsel %vm1520, %v1483, %v1554
        %1556 = vst [vmem:[%s1517 + $0x28] sm:$0xf] %v1555
        %v1557 = vld [vmem:[%s1517 + $0x2c] sm:$0x1]
        %v1558 = vsel %vm1526, %v1484, %v1557
        %1559 = vst [vmem:[%s1517 + $0x2c] sm:$0x1] %v1558
        %v1560 = vld [vmem:[%s1517 + $0x30] sm:$0xf]
        %v1561 = vsel %vm1520, %v1491, %v1560
        %1562 = vst [vmem:[%s1517 + $0x30] sm:$0xf] %v1561
        %v1563 = vld [vmem:[%s1517 + $0x34] sm:$0x1]
        %v1564 = vsel %vm1526, %v1492, %v1563
        %1565 = vst [vmem:[%s1517 + $0x34] sm:$0x1] %v1564
        %v1566 = vld [vmem:[%s1517 + $0x38] sm:$0xf]
        %v1567 = vsel %vm1520, %v1499, %v1566
        %1568 = vst [vmem:[%s1517 + $0x38] sm:$0xf] %v1567
        %v1569 = vld [vmem:[%s1517 + $0x3c] sm:$0x1]
        %v1570 = vsel %vm1526, %v1500, %v1569
        %1571 = vst [vmem:[%s1517 + $0x3c] sm:$0x1] %v1570
        %v1572 = vld [vmem:[#allocation2] sm:$0xf]
        %v1573 = vld [vmem:[#allocation2 + $0x8] sm:$0xf]
        %v1574 = vld [vmem:[#allocation2 + $0x10] sm:$0xf]
        %v1575 = vld [vmem:[#allocation2 + $0x18] sm:$0xf]
        %v1576 = vld [vmem:[#allocation2 + $0x20] sm:$0xf]
        %v1577 = vld [vmem:[#allocation2 + $0x28] sm:$0xf]
        %v1578 = vld [vmem:[#allocation2 + $0x30] sm:$0xf]
        %v1579 = vld [vmem:[#allocation2 + $0x38] sm:$0xf]
        %v1580 = vld [vmem:[#allocation2 + $0x4] sm:$0x1]
        %v1581 = vld [vmem:[#allocation2 + $0xc] sm:$0x1]
        %v1582 = vld [vmem:[#allocation2 + $0x14] sm:$0x1]
        %v1583 = vld [vmem:[#allocation2 + $0x1c] sm:$0x1]
        %v1584 = vld [vmem:[#allocation2 + $0x24] sm:$0x1]
        %v1585 = vld [vmem:[#allocation2 + $0x2c] sm:$0x1]
        %v1586 = vld [vmem:[#allocation2 + $0x34] sm:$0x1]
        %v1587 = vld [vmem:[#allocation2 + $0x3c] sm:$0x1]
        %v1588 = vld [vmem:[#allocation2] sm:$0xe]
        %v1589 = vld [vmem:[#allocation2 + $0x8] sm:$0xe]
        %v1590 = vld [vmem:[#allocation2 + $0x10] sm:$0xe]
        %v1591 = vld [vmem:[#allocation2 + $0x18] sm:$0xe]
        %v1592 = vld [vmem:[#allocation2 + $0x20] sm:$0xe]
        %v1593 = vld [vmem:[#allocation2 + $0x28] sm:$0xe]
        %v1594 = vld [vmem:[#allocation2 + $0x30] sm:$0xe]
        %v1595 = vld [vmem:[#allocation2 + $0x38] sm:$0xe]
        %v1596 = vld [vmem:[%s1517] sm:$0xf]
        %v1597 = vld [vmem:[%s1517 + $0x8] sm:$0xf]
        %v1598 = vld [vmem:[%s1517 + $0x10] sm:$0xf]
        %v1599 = vld [vmem:[%s1517 + $0x18] sm:$0xf]
        %v1600 = vld [vmem:[%s1517 + $0x20] sm:$0xf]
        %v1601 = vld [vmem:[%s1517 + $0x28] sm:$0xf]
        %v1602 = vld [vmem:[%s1517 + $0x30] sm:$0xf]
        %v1603 = vld [vmem:[%s1517 + $0x38] sm:$0xf]
        %v1604 = vld [vmem:[%s1517 + $0x4] sm:$0x1]
        %v1605 = vld [vmem:[%s1517 + $0xc] sm:$0x1]
        %v1606 = vld [vmem:[%s1517 + $0x14] sm:$0x1]
        %v1607 = vld [vmem:[%s1517 + $0x1c] sm:$0x1]
        %v1608 = vld [vmem:[%s1517 + $0x24] sm:$0x1]
        %v1609 = vld [vmem:[%s1517 + $0x2c] sm:$0x1]
        %v1610 = vld [vmem:[%s1517 + $0x34] sm:$0x1]
        %v1611 = vld [vmem:[%s1517 + $0x3c] sm:$0x1]
        %v1612 = vld [vmem:[%s1517] sm:$0xe]
        %v1613 = vld [vmem:[%s1517 + $0x8] sm:$0xe]
        %v1614 = vld [vmem:[%s1517 + $0x10] sm:$0xe]
        %v1615 = vld [vmem:[%s1517 + $0x18] sm:$0xe]
        %v1616 = vld [vmem:[%s1517 + $0x20] sm:$0xe]
        %v1617 = vld [vmem:[%s1517 + $0x28] sm:$0xe]
        %v1618 = vld [vmem:[%s1517 + $0x30] sm:$0xe]
        %v1619 = vld [vmem:[%s1517 + $0x38] sm:$0xe]
        %s1620 = scalar_lea.vmem [#allocation2], 16
        %v1621 = vld [vmem:[%s1620] sm:$0xf]
        %v1622 = vld [vmem:[%s1620 + $0x8] sm:$0xf]
        %v1623 = vld [vmem:[%s1620 + $0x10] sm:$0xf]
        %v1624 = vld [vmem:[%s1620 + $0x18] sm:$0xf]
        %v1625 = vld [vmem:[%s1620 + $0x20] sm:$0xf]
        %v1626 = vld [vmem:[%s1620 + $0x28] sm:$0xf]
        %v1627 = vld [vmem:[%s1620 + $0x30] sm:$0xf]
        %v1628 = vld [vmem:[%s1620 + $0x38] sm:$0xf]
        %v1629 = vld [vmem:[%s1620 + $0x4] sm:$0x1]
        %v1630 = vld [vmem:[%s1620 + $0xc] sm:$0x1]
        %v1631 = vld [vmem:[%s1620 + $0x14] sm:$0x1]
        %v1632 = vld [vmem:[%s1620 + $0x1c] sm:$0x1]
        %v1633 = vld [vmem:[%s1620 + $0x24] sm:$0x1]
        %v1634 = vld [vmem:[%s1620 + $0x2c] sm:$0x1]
        %v1635 = vld [vmem:[%s1620 + $0x34] sm:$0x1]
        %v1636 = vld [vmem:[%s1620 + $0x3c] sm:$0x1]
        %v1637 = vld [vmem:[%s1620] sm:$0xe]
        %v1638 = vld [vmem:[%s1620 + $0x8] sm:$0xe]
        %v1639 = vld [vmem:[%s1620 + $0x10] sm:$0xe]
        %v1640 = vld [vmem:[%s1620 + $0x18] sm:$0xe]
        %v1641 = vld [vmem:[%s1620 + $0x20] sm:$0xe]
        %v1642 = vld [vmem:[%s1620 + $0x28] sm:$0xe]
        %v1643 = vld [vmem:[%s1620 + $0x30] sm:$0xe]
        %v1644 = vld [vmem:[%s1620 + $0x38] sm:$0xe]
        %v1661 = vunpack.c.l.b16 %v1572
        %v1662 = vunpack.c.l.b16 %v1580
        %v1663 = vunpack.c.l.b16 %v1573
        %v1664 = vunpack.c.l.b16 %v1581
        %v1665 = vunpack.c.l.b16 %v1574
        %v1666 = vunpack.c.l.b16 %v1582
        %v1667 = vunpack.c.l.b16 %v1575
        %v1668 = vunpack.c.l.b16 %v1583
        %v1669 = vunpack.c.l.b16 %v1576
        %v1670 = vunpack.c.l.b16 %v1584
        %v1671 = vunpack.c.l.b16 %v1577
        %v1672 = vunpack.c.l.b16 %v1585
        %v1673 = vunpack.c.l.b16 %v1578
        %v1674 = vunpack.c.l.b16 %v1586
        %v1675 = vunpack.c.l.b16 %v1579
        %v1676 = vunpack.c.l.b16 %v1587
        %v1677 = vpack.c.b16 %v1662, %v1661
        %v1678 = vpack.c.b16 %v1664, %v1663
        %v1679 = vpack.c.b16 %v1666, %v1665
        %v1680 = vpack.c.b16 %v1668, %v1667
        %v1681 = vpack.c.b16 %v1670, %v1669
        %v1682 = vpack.c.b16 %v1672, %v1671
        %v1683 = vpack.c.b16 %v1674, %v1673
        %v1684 = vpack.c.b16 %v1676, %v1675
        %v1686 = vshrl.u32 %v1677, 16
        %v1688 = vshll.u32 %v1677, 16
        %v1690 = vrot.slane %v1688, 1
        %v1691 = vor.u32 %v1686, %v1690
        %v1693 = vshrl.u32 %v1678, 16
        %v1695 = vshll.u32 %v1678, 16
        %v1697 = vrot.slane %v1695, 1
        %v1698 = vor.u32 %v1693, %v1697
        %v1700 = vshrl.u32 %v1679, 16
        %v1702 = vshll.u32 %v1679, 16
        %v1704 = vrot.slane %v1702, 1
        %v1705 = vor.u32 %v1700, %v1704
        %v1707 = vshrl.u32 %v1680, 16
        %v1709 = vshll.u32 %v1680, 16
        %v1711 = vrot.slane %v1709, 1
        %v1712 = vor.u32 %v1707, %v1711
        %v1714 = vshrl.u32 %v1681, 16
        %v1716 = vshll.u32 %v1681, 16
        %v1718 = vrot.slane %v1716, 1
        %v1719 = vor.u32 %v1714, %v1718
        %v1721 = vshrl.u32 %v1682, 16
        %v1723 = vshll.u32 %v1682, 16
        %v1725 = vrot.slane %v1723, 1
        %v1726 = vor.u32 %v1721, %v1725
        %v1728 = vshrl.u32 %v1683, 16
        %v1730 = vshll.u32 %v1683, 16
        %v1732 = vrot.slane %v1730, 1
        %v1733 = vor.u32 %v1728, %v1732
        %v1735 = vshrl.u32 %v1684, 16
        %v1737 = vshll.u32 %v1684, 16
        %v1739 = vrot.slane %v1737, 1
        %v1740 = vor.u32 %v1735, %v1739
        %1741 = vrot.lane.b32.xlu0 %v1691, 64
        %v1742 = vpop.permute.xlu0 %1741
        %1743 = vrot.lane.b32.xlu0 %v1698, 64
        %v1744 = vpop.permute.xlu0 %1743
        %1745 = vrot.lane.b32.xlu0 %v1705, 64
        %v1746 = vpop.permute.xlu0 %1745
        %1747 = vrot.lane.b32.xlu0 %v1712, 64
        %v1748 = vpop.permute.xlu0 %1747
        %1749 = vrot.lane.b32.xlu0 %v1719, 64
        %v1750 = vpop.permute.xlu0 %1749
        %1751 = vrot.lane.b32.xlu0 %v1726, 64
        %v1752 = vpop.permute.xlu0 %1751
        %1753 = vrot.lane.b32.xlu0 %v1733, 64
        %v1754 = vpop.permute.xlu0 %1753
        %1755 = vrot.lane.b32.xlu0 %v1740, 64
        %v1756 = vpop.permute.xlu0 %1755
        %v1765 = vunpack.c.l.b16 %v1588
        %v1766 = vunpack.c.l.b16 %v1589
        %v1767 = vunpack.c.l.b16 %v1590
        %v1768 = vunpack.c.l.b16 %v1591
        %v1769 = vunpack.c.l.b16 %v1592
        %v1770 = vunpack.c.l.b16 %v1593
        %v1771 = vunpack.c.l.b16 %v1594
        %v1772 = vunpack.c.l.b16 %v1595
        %v1773 = vpack.c.b16 %v1662, %v1765
        %v1774 = vpack.c.b16 %v1664, %v1766
        %v1775 = vpack.c.b16 %v1666, %v1767
        %v1776 = vpack.c.b16 %v1668, %v1768
        %v1777 = vpack.c.b16 %v1670, %v1769
        %v1778 = vpack.c.b16 %v1672, %v1770
        %v1779 = vpack.c.b16 %v1674, %v1771
        %v1780 = vpack.c.b16 %v1676, %v1772
        %v1781 = vrot.slane %v1773, 1
        %v1782 = vrot.slane %v1774, 1
        %v1783 = vrot.slane %v1775, 1
        %v1784 = vrot.slane %v1776, 1
        %v1785 = vrot.slane %v1777, 1
        %v1786 = vrot.slane %v1778, 1
        %v1787 = vrot.slane %v1779, 1
        %v1788 = vrot.slane %v1780, 1
        %v1797 = vunpack.c.l.b16 %v1596
        %v1798 = vunpack.c.l.b16 %v1597
        %v1799 = vunpack.c.l.b16 %v1598
        %v1800 = vunpack.c.l.b16 %v1599
        %v1801 = vunpack.c.l.b16 %v1600
        %v1802 = vunpack.c.l.b16 %v1601
        %v1803 = vunpack.c.l.b16 %v1602
        %v1804 = vunpack.c.l.b16 %v1603
        %v1805 = vpack.c.b16 %v1797, %v1797
        %v1806 = vpack.c.b16 %v1798, %v1798
        %v1807 = vpack.c.b16 %v1799, %v1799
        %v1808 = vpack.c.b16 %v1800, %v1800
        %v1809 = vpack.c.b16 %v1801, %v1801
        %v1810 = vpack.c.b16 %v1802, %v1802
        %v1811 = vpack.c.b16 %v1803, %v1803
        %v1812 = vpack.c.b16 %v1804, %v1804
        %1813 = vrot.lane.b32.xlu0 %v1805, 64
        %v1814 = vpop.permute.xlu0 %1813
        %1815 = vrot.lane.b32.xlu0 %v1806, 64
        %v1816 = vpop.permute.xlu0 %1815
        %1817 = vrot.lane.b32.xlu0 %v1807, 64
        %v1818 = vpop.permute.xlu0 %1817
        %1819 = vrot.lane.b32.xlu0 %v1808, 64
        %v1820 = vpop.permute.xlu0 %1819
        %1821 = vrot.lane.b32.xlu0 %v1809, 64
        %v1822 = vpop.permute.xlu0 %1821
        %1823 = vrot.lane.b32.xlu0 %v1810, 64
        %v1824 = vpop.permute.xlu0 %1823
        %1825 = vrot.lane.b32.xlu0 %v1811, 64
        %v1826 = vpop.permute.xlu0 %1825
        %1827 = vrot.lane.b32.xlu0 %v1812, 64
        %v1828 = vpop.permute.xlu0 %1827
        %v1837 = vunpack.c.l.b16 %v1604
        %v1838 = vunpack.c.l.b16 %v1605
        %v1839 = vunpack.c.l.b16 %v1606
        %v1840 = vunpack.c.l.b16 %v1607
        %v1841 = vunpack.c.l.b16 %v1608
        %v1842 = vunpack.c.l.b16 %v1609
        %v1843 = vunpack.c.l.b16 %v1610
        %v1844 = vunpack.c.l.b16 %v1611
        %v1845 = vpack.c.b16 %v1837, %v1797
        %v1846 = vpack.c.b16 %v1838, %v1798
        %v1847 = vpack.c.b16 %v1839, %v1799
        %v1848 = vpack.c.b16 %v1840, %v1800
        %v1849 = vpack.c.b16 %v1841, %v1801
        %v1850 = vpack.c.b16 %v1842, %v1802
        %v1851 = vpack.c.b16 %v1843, %v1803
        %v1852 = vpack.c.b16 %v1844, %v1804
        %v1854 = vshrl.u32 %v1845, 16
        %v1856 = vshll.u32 %v1845, 16
        %v1858 = vrot.slane %v1856, 1
        %v1859 = vor.u32 %v1854, %v1858
        %v1861 = vshrl.u32 %v1846, 16
        %v1863 = vshll.u32 %v1846, 16
        %v1865 = vrot.slane %v1863, 1
        %v1866 = vor.u32 %v1861, %v1865
        %v1868 = vshrl.u32 %v1847, 16
        %v1870 = vshll.u32 %v1847, 16
        %v1872 = vrot.slane %v1870, 1
        %v1873 = vor.u32 %v1868, %v1872
        %v1875 = vshrl.u32 %v1848, 16
        %v1877 = vshll.u32 %v1848, 16
        %v1879 = vrot.slane %v1877, 1
        %v1880 = vor.u32 %v1875, %v1879
        %v1882 = vshrl.u32 %v1849, 16
        %v1884 = vshll.u32 %v1849, 16
        %v1886 = vrot.slane %v1884, 1
        %v1887 = vor.u32 %v1882, %v1886
        %v1889 = vshrl.u32 %v1850, 16
        %v1891 = vshll.u32 %v1850, 16
        %v1893 = vrot.slane %v1891, 1
        %v1894 = vor.u32 %v1889, %v1893
        %v1896 = vshrl.u32 %v1851, 16
        %v1898 = vshll.u32 %v1851, 16
        %v1900 = vrot.slane %v1898, 1
        %v1901 = vor.u32 %v1896, %v1900
        %v1903 = vshrl.u32 %v1852, 16
        %v1905 = vshll.u32 %v1852, 16
        %v1907 = vrot.slane %v1905, 1
        %v1908 = vor.u32 %v1903, %v1907
        %v1917 = vunpack.c.l.b16 %v1612
        %v1918 = vunpack.c.l.b16 %v1613
        %v1919 = vunpack.c.l.b16 %v1614
        %v1920 = vunpack.c.l.b16 %v1615
        %v1921 = vunpack.c.l.b16 %v1616
        %v1922 = vunpack.c.l.b16 %v1617
        %v1923 = vunpack.c.l.b16 %v1618
        %v1924 = vunpack.c.l.b16 %v1619
        %v1925 = vpack.c.b16 %v1837, %v1917
        %v1926 = vpack.c.b16 %v1838, %v1918
        %v1927 = vpack.c.b16 %v1839, %v1919
        %v1928 = vpack.c.b16 %v1840, %v1920
        %v1929 = vpack.c.b16 %v1841, %v1921
        %v1930 = vpack.c.b16 %v1842, %v1922
        %v1931 = vpack.c.b16 %v1843, %v1923
        %v1932 = vpack.c.b16 %v1844, %v1924
        %v1933 = vrot.slane %v1925, 1
        %v1934 = vrot.slane %v1926, 1
        %v1935 = vrot.slane %v1927, 1
        %v1936 = vrot.slane %v1928, 1
        %v1937 = vrot.slane %v1929, 1
        %v1938 = vrot.slane %v1930, 1
        %v1939 = vrot.slane %v1931, 1
        %v1940 = vrot.slane %v1932, 1
        %1941 = vrot.lane.b32.xlu0 %v1933, 64
        %v1942 = vpop.permute.xlu0 %1941
        %1943 = vrot.lane.b32.xlu0 %v1934, 64
        %v1944 = vpop.permute.xlu0 %1943
        %1945 = vrot.lane.b32.xlu0 %v1935, 64
        %v1946 = vpop.permute.xlu0 %1945
        %1947 = vrot.lane.b32.xlu0 %v1936, 64
        %v1948 = vpop.permute.xlu0 %1947
        %1949 = vrot.lane.b32.xlu0 %v1937, 64
        %v1950 = vpop.permute.xlu0 %1949
        %1951 = vrot.lane.b32.xlu0 %v1938, 64
        %v1952 = vpop.permute.xlu0 %1951
        %1953 = vrot.lane.b32.xlu0 %v1939, 64
        %v1954 = vpop.permute.xlu0 %1953
        %1955 = vrot.lane.b32.xlu0 %v1940, 64
        %v1956 = vpop.permute.xlu0 %1955
        %v1973 = vunpack.c.l.b16 %v1621
        %v1974 = vunpack.c.l.b16 %v1629
        %v1975 = vunpack.c.l.b16 %v1622
        %v1976 = vunpack.c.l.b16 %v1630
        %v1977 = vunpack.c.l.b16 %v1623
        %v1978 = vunpack.c.l.b16 %v1631
        %v1979 = vunpack.c.l.b16 %v1624
        %v1980 = vunpack.c.l.b16 %v1632
        %v1981 = vunpack.c.l.b16 %v1625
        %v1982 = vunpack.c.l.b16 %v1633
        %v1983 = vunpack.c.l.b16 %v1626
        %v1984 = vunpack.c.l.b16 %v1634
        %v1985 = vunpack.c.l.b16 %v1627
        %v1986 = vunpack.c.l.b16 %v1635
        %v1987 = vunpack.c.l.b16 %v1628
        %v1988 = vunpack.c.l.b16 %v1636
        %v1989 = vpack.c.b16 %v1974, %v1973
        %v1990 = vpack.c.b16 %v1976, %v1975
        %v1991 = vpack.c.b16 %v1978, %v1977
        %v1992 = vpack.c.b16 %v1980, %v1979
        %v1993 = vpack.c.b16 %v1982, %v1981
        %v1994 = vpack.c.b16 %v1984, %v1983
        %v1995 = vpack.c.b16 %v1986, %v1985
        %v1996 = vpack.c.b16 %v1988, %v1987
        %v1998 = vshrl.u32 %v1989, 16
        %v2000 = vshll.u32 %v1989, 16
        %v2002 = vrot.slane %v2000, 1
        %v2003 = vor.u32 %v1998, %v2002
        %v2005 = vshrl.u32 %v1990, 16
        %v2007 = vshll.u32 %v1990, 16
        %v2009 = vrot.slane %v2007, 1
        %v2010 = vor.u32 %v2005, %v2009
        %v2012 = vshrl.u32 %v1991, 16
        %v2014 = vshll.u32 %v1991, 16
        %v2016 = vrot.slane %v2014, 1
        %v2017 = vor.u32 %v2012, %v2016
        %v2019 = vshrl.u32 %v1992, 16
        %v2021 = vshll.u32 %v1992, 16
        %v2023 = vrot.slane %v2021, 1
        %v2024 = vor.u32 %v2019, %v2023
        %v2026 = vshrl.u32 %v1993, 16
        %v2028 = vshll.u32 %v1993, 16
        %v2030 = vrot.slane %v2028, 1
        %v2031 = vor.u32 %v2026, %v2030
        %v2033 = vshrl.u32 %v1994, 16
        %v2035 = vshll.u32 %v1994, 16
        %v2037 = vrot.slane %v2035, 1
        %v2038 = vor.u32 %v2033, %v2037
        %v2040 = vshrl.u32 %v1995, 16
        %v2042 = vshll.u32 %v1995, 16
        %v2044 = vrot.slane %v2042, 1
        %v2045 = vor.u32 %v2040, %v2044
        %v2047 = vshrl.u32 %v1996, 16
        %v2049 = vshll.u32 %v1996, 16
        %v2051 = vrot.slane %v2049, 1
        %v2052 = vor.u32 %v2047, %v2051
        %2053 = vrot.lane.b32.xlu0 %v2003, 64
        %v2054 = vpop.permute.xlu0 %2053
        %2055 = vrot.lane.b32.xlu0 %v2010, 64
        %v2056 = vpop.permute.xlu0 %2055
        %2057 = vrot.lane.b32.xlu0 %v2017, 64
        %v2058 = vpop.permute.xlu0 %2057
        %2059 = vrot.lane.b32.xlu0 %v2024, 64
        %v2060 = vpop.permute.xlu0 %2059
        %2061 = vrot.lane.b32.xlu0 %v2031, 64
        %v2062 = vpop.permute.xlu0 %2061
        %2063 = vrot.lane.b32.xlu0 %v2038, 64
        %v2064 = vpop.permute.xlu0 %2063
        %2065 = vrot.lane.b32.xlu0 %v2045, 64
        %v2066 = vpop.permute.xlu0 %2065
        %2067 = vrot.lane.b32.xlu0 %v2052, 64
        %v2068 = vpop.permute.xlu0 %2067
        %v2077 = vunpack.c.l.b16 %v1637
        %v2078 = vunpack.c.l.b16 %v1638
        %v2079 = vunpack.c.l.b16 %v1639
        %v2080 = vunpack.c.l.b16 %v1640
        %v2081 = vunpack.c.l.b16 %v1641
        %v2082 = vunpack.c.l.b16 %v1642
        %v2083 = vunpack.c.l.b16 %v1643
        %v2084 = vunpack.c.l.b16 %v1644
        %v2085 = vpack.c.b16 %v1974, %v2077
        %v2086 = vpack.c.b16 %v1976, %v2078
        %v2087 = vpack.c.b16 %v1978, %v2079
        %v2088 = vpack.c.b16 %v1980, %v2080
        %v2089 = vpack.c.b16 %v1982, %v2081
        %v2090 = vpack.c.b16 %v1984, %v2082
        %v2091 = vpack.c.b16 %v1986, %v2083
        %v2092 = vpack.c.b16 %v1988, %v2084
        %v2093 = vrot.slane %v2085, 1
        %v2094 = vrot.slane %v2086, 1
        %v2095 = vrot.slane %v2087, 1
        %v2096 = vrot.slane %v2088, 1
        %v2097 = vrot.slane %v2089, 1
        %v2098 = vrot.slane %v2090, 1
        %v2099 = vrot.slane %v2091, 1
        %v2100 = vrot.slane %v2092, 1
        %v2103 = vsel %vm909, %v1572, %v1742
        %v2106 = vsel %vm909, %v1573, %v1744
        %v2109 = vsel %vm909, %v1574, %v1746
        %v2112 = vsel %vm909, %v1575, %v1748
        %v2115 = vsel %vm909, %v1576, %v1750
        %v2118 = vsel %vm909, %v1577, %v1752
        %v2121 = vsel %vm909, %v1578, %v1754
        %v2124 = vsel %vm909, %v1579, %v1756
        %v2127 = vsel %vm909, %v1781, %v1814
        %v2130 = vsel %vm909, %v1782, %v1816
        %v2133 = vsel %vm909, %v1783, %v1818
        %v2136 = vsel %vm909, %v1784, %v1820
        %v2139 = vsel %vm909, %v1785, %v1822
        %v2142 = vsel %vm909, %v1786, %v1824
        %v2145 = vsel %vm909, %v1787, %v1826
        %v2148 = vsel %vm909, %v1788, %v1828
        %v2151 = vsel %vm909, %v1859, %v1942
        %v2154 = vsel %vm909, %v1866, %v1944
        %v2157 = vsel %vm909, %v1873, %v1946
        %v2160 = vsel %vm909, %v1880, %v1948
        %v2163 = vsel %vm909, %v1887, %v1950
        %v2166 = vsel %vm909, %v1894, %v1952
        %v2169 = vsel %vm909, %v1901, %v1954
        %v2172 = vsel %vm909, %v1908, %v1956
        %v2175 = vsel %vm909, %v1621, %v2054
        %v2178 = vsel %vm909, %v1622, %v2056
        %v2181 = vsel %vm909, %v1623, %v2058
        %v2184 = vsel %vm909, %v1624, %v2060
        %v2187 = vsel %vm909, %v1625, %v2062
        %v2190 = vsel %vm909, %v1626, %v2064
        %v2193 = vsel %vm909, %v1627, %v2066
        %v2196 = vsel %vm909, %v1628, %v2068
        %v2229 = vunpack.c.l.b16 %v2103
        %v2230 = vunpack.c.l.b16 %v2127
        %v2231 = vunpack.c.l.b16 %v2151
        %v2232 = vunpack.c.l.b16 %v2175
        %v2233 = vunpack.c.l.b16 %v2093
        %v2234 = vunpack.c.l.b16 %v2106
        %v2235 = vunpack.c.l.b16 %v2130
        %v2236 = vunpack.c.l.b16 %v2154
        %v2237 = vunpack.c.l.b16 %v2178
        %v2238 = vunpack.c.l.b16 %v2094
        %v2239 = vunpack.c.l.b16 %v2109
        %v2240 = vunpack.c.l.b16 %v2133
        %v2241 = vunpack.c.l.b16 %v2157
        %v2242 = vunpack.c.l.b16 %v2181
        %v2243 = vunpack.c.l.b16 %v2095
        %v2244 = vunpack.c.l.b16 %v2112
        %v2245 = vunpack.c.l.b16 %v2136
        %v2246 = vunpack.c.l.b16 %v2160
        %v2247 = vunpack.c.l.b16 %v2184
        %v2248 = vunpack.c.l.b16 %v2096
        %v2249 = vunpack.c.l.b16 %v2115
        %v2250 = vunpack.c.l.b16 %v2139
        %v2251 = vunpack.c.l.b16 %v2163
        %v2252 = vunpack.c.l.b16 %v2187
        %v2253 = vunpack.c.l.b16 %v2097
        %v2254 = vunpack.c.l.b16 %v2118
        %v2255 = vunpack.c.l.b16 %v2142
        %v2256 = vunpack.c.l.b16 %v2166
        %v2257 = vunpack.c.l.b16 %v2190
        %v2258 = vunpack.c.l.b16 %v2098
        %v2259 = vunpack.c.l.b16 %v2121
        %v2260 = vunpack.c.l.b16 %v2145
        %v2261 = vunpack.c.l.b16 %v2169
        %v2262 = vunpack.c.l.b16 %v2193
        %v2263 = vunpack.c.l.b16 %v2099
        %v2264 = vunpack.c.l.b16 %v2124
        %v2265 = vunpack.c.l.b16 %v2148
        %v2266 = vunpack.c.l.b16 %v2172
        %v2267 = vunpack.c.l.b16 %v2196
        %v2268 = vunpack.c.l.b16 %v2100
        %v2269 = vld [vmem:[%s4] sm:$0xf]
        %v2270 = vld [vmem:[%s4 + $0x4] sm:$0xf]
        %v2271 = vld [vmem:[%s4 + $0x8] sm:$0xf]
        %v2272 = vld [vmem:[%s4 + $0xc] sm:$0xf]
        %v2273 = vld [vmem:[%s4 + $0x10] sm:$0xf]
        %v2274 = vld [vmem:[%s4 + $0x14] sm:$0xf]
        %v2275 = vld [vmem:[%s4 + $0x18] sm:$0xf]
        %v2276 = vld [vmem:[%s4 + $0x1c] sm:$0xf]
        %v2277 = vld [vmem:[%s4 + $0x20] sm:$0xf]
        %v2278 = vld [vmem:[%s4 + $0x24] sm:$0xf]
        %v2279 = vld [vmem:[%s4 + $0x28] sm:$0xf]
        %v2280 = vld [vmem:[%s4 + $0x2c] sm:$0xf]
        %v2281 = vld [vmem:[%s4 + $0x30] sm:$0xf]
        %v2282 = vld [vmem:[%s4 + $0x34] sm:$0xf]
        %v2283 = vld [vmem:[%s4 + $0x38] sm:$0xf]
        %v2284 = vld [vmem:[%s4 + $0x3c] sm:$0xf]
        %v2285 = vld [vmem:[%s4 + $0x40] sm:$0xf]
        %v2286 = vld [vmem:[%s4 + $0x44] sm:$0xf]
        %v2287 = vld [vmem:[%s4 + $0x48] sm:$0xf]
        %v2288 = vld [vmem:[%s4 + $0x4c] sm:$0xf]
        %v2289 = vld [vmem:[%s4 + $0x50] sm:$0xf]
        %v2290 = vld [vmem:[%s4 + $0x54] sm:$0xf]
        %v2291 = vld [vmem:[%s4 + $0x58] sm:$0xf]
        %v2292 = vld [vmem:[%s4 + $0x5c] sm:$0xf]
        %v2293 = vld [vmem:[%s4 + $0x60] sm:$0xf]
        %v2294 = vld [vmem:[%s4 + $0x64] sm:$0xf]
        %v2295 = vld [vmem:[%s4 + $0x68] sm:$0xf]
        %v2296 = vld [vmem:[%s4 + $0x6c] sm:$0xf]
        %v2297 = vld [vmem:[%s4 + $0x70] sm:$0xf]
        %v2298 = vld [vmem:[%s4 + $0x74] sm:$0xf]
        %v2299 = vld [vmem:[%s4 + $0x78] sm:$0xf]
        %v2300 = vld [vmem:[%s4 + $0x7c] sm:$0xf]
        %v2301 = vld [vmem:[%s4 + $0x80] sm:$0xf]
        %v2302 = vld [vmem:[%s4 + $0x84] sm:$0xf]
        %v2303 = vld [vmem:[%s4 + $0x88] sm:$0xf]
        %v2304 = vld [vmem:[%s4 + $0x8c] sm:$0xf]
        %v2305 = vld [vmem:[%s4 + $0x90] sm:$0xf]
        %v2306 = vld [vmem:[%s4 + $0x94] sm:$0xf]
        %v2307 = vld [vmem:[%s4 + $0x98] sm:$0xf]
        %v2308 = vld [vmem:[%s4 + $0x9c] sm:$0xf]
        %v2309 = vld [vmem:[%s4 + $0xa0] sm:$0xf]
        %v2310 = vld [vmem:[%s4 + $0xa4] sm:$0xf]
        %v2311 = vld [vmem:[%s4 + $0xa8] sm:$0xf]
        %v2312 = vld [vmem:[%s4 + $0xac] sm:$0xf]
        %v2313 = vld [vmem:[%s4 + $0xb0] sm:$0xf]
        %v2314 = vld [vmem:[%s4 + $0xb4] sm:$0xf]
        %v2315 = vld [vmem:[%s4 + $0xb8] sm:$0xf]
        %v2316 = vld [vmem:[%s4 + $0xbc] sm:$0xf]
        %v2317 = vld [vmem:[%s4 + $0xc0] sm:$0xf]
        %v2318 = vld [vmem:[%s4 + $0xc4] sm:$0xf]
        %v2319 = vld [vmem:[%s4 + $0xc8] sm:$0xf]
        %v2320 = vld [vmem:[%s4 + $0xcc] sm:$0xf]
        %v2321 = vld [vmem:[%s4 + $0xd0] sm:$0xf]
        %v2322 = vld [vmem:[%s4 + $0xd4] sm:$0xf]
        %v2323 = vld [vmem:[%s4 + $0xd8] sm:$0xf]
        %v2324 = vld [vmem:[%s4 + $0xdc] sm:$0xf]
        %v2325 = vld [vmem:[%s4 + $0xe0] sm:$0xf]
        %v2326 = vld [vmem:[%s4 + $0xe4] sm:$0xf]
        %v2327 = vld [vmem:[%s4 + $0xe8] sm:$0xf]
        %v2328 = vld [vmem:[%s4 + $0xec] sm:$0xf]
        %v2329 = vld [vmem:[%s4 + $0xf0] sm:$0xf]
        %v2330 = vld [vmem:[%s4 + $0xf4] sm:$0xf]
        %v2331 = vld [vmem:[%s4 + $0xf8] sm:$0xf]
        %v2332 = vld [vmem:[%s4 + $0xfc] sm:$0xf]
        %v2333 = vld [vmem:[%s4 + $0x100] sm:$0xf]
        %v2334 = vld [vmem:[%s4 + $0x104] sm:$0xf]
        %v2335 = vld [vmem:[%s4 + $0x108] sm:$0xf]
        %v2336 = vld [vmem:[%s4 + $0x10c] sm:$0xf]
        %v2337 = vld [vmem:[%s4 + $0x110] sm:$0xf]
        %v2338 = vld [vmem:[%s4 + $0x114] sm:$0xf]
        %v2339 = vld [vmem:[%s4 + $0x118] sm:$0xf]
        %v2340 = vld [vmem:[%s4 + $0x11c] sm:$0xf]
        %v2341 = vpack.c.b16 %v2234, %v2229
        %v2342 = vpack.c.b16 %v2235, %v2230
        %v2343 = vpack.c.b16 %v2236, %v2231
        %v2344 = vpack.c.b16 %v2237, %v2232
        %v2345 = vpack.c.b16 %v2238, %v2233
        %v2346 = vpack.c.b16 %v2244, %v2239
        %v2347 = vpack.c.b16 %v2245, %v2240
        %v2348 = vpack.c.b16 %v2246, %v2241
        %v2349 = vpack.c.b16 %v2247, %v2242
        %v2350 = vpack.c.b16 %v2248, %v2243
        %v2351 = vpack.c.b16 %v2254, %v2249
        %v2352 = vpack.c.b16 %v2255, %v2250
        %v2353 = vpack.c.b16 %v2256, %v2251
        %v2354 = vpack.c.b16 %v2257, %v2252
        %v2355 = vpack.c.b16 %v2258, %v2253
        %v2356 = vpack.c.b16 %v2264, %v2259
        %v2357 = vpack.c.b16 %v2265, %v2260
        %v2358 = vpack.c.b16 %v2266, %v2261
        %v2359 = vpack.c.b16 %v2267, %v2262
        %v2360 = vpack.c.b16 %v2268, %v2263
        %v2449 = vunpack.c.l.b16 %v2269
        %v2450 = vunpack.c.l.b16 %v2270
        %v2451 = vunpack.c.l.b16 %v2271
        %v2452 = vunpack.c.l.b16 %v2272
        %v2453 = vunpack.c.l.b16 %v2273
        %v2454 = vunpack.c.l.b16 %v2274
        %v2455 = vunpack.c.l.b16 %v2275
        %v2456 = vunpack.c.l.b16 %v2276
        %v2457 = vunpack.c.l.b16 %v2277
        %v2458 = vunpack.c.l.b16 %v2278
        %v2459 = vunpack.c.l.b16 %v2279
        %v2460 = vunpack.c.l.b16 %v2280
        %v2461 = vunpack.c.l.b16 %v2281
        %v2462 = vunpack.c.l.b16 %v2282
        %v2463 = vunpack.c.l.b16 %v2283
        %v2464 = vunpack.c.l.b16 %v2284
        %v2465 = vunpack.c.l.b16 %v2285
        %v2466 = vunpack.c.l.b16 %v2286
        %v2467 = vunpack.c.l.b16 %v2287
        %v2468 = vunpack.c.l.b16 %v2288
        %v2469 = vunpack.c.l.b16 %v2289
        %v2470 = vunpack.c.l.b16 %v2290
        %v2471 = vunpack.c.l.b16 %v2291
        %v2472 = vunpack.c.l.b16 %v2292
        %v2473 = vunpack.c.l.b16 %v2293
        %v2474 = vunpack.c.l.b16 %v2294
        %v2475 = vunpack.c.l.b16 %v2295
        %v2476 = vunpack.c.l.b16 %v2296
        %v2477 = vunpack.c.l.b16 %v2297
        %v2478 = vunpack.c.l.b16 %v2298
        %v2479 = vunpack.c.l.b16 %v2299
        %v2480 = vunpack.c.l.b16 %v2300
        %v2481 = vunpack.c.l.b16 %v2301
        %v2482 = vunpack.c.l.b16 %v2302
        %v2483 = vunpack.c.l.b16 %v2303
        %v2484 = vunpack.c.l.b16 %v2304
        %v2485 = vunpack.c.l.b16 %v2305
        %v2486 = vunpack.c.l.b16 %v2306
        %v2487 = vunpack.c.l.b16 %v2307
        %v2488 = vunpack.c.l.b16 %v2308
        %v2489 = vunpack.c.l.b16 %v2309
        %v2490 = vunpack.c.l.b16 %v2310
        %v2491 = vunpack.c.l.b16 %v2311
        %v2492 = vunpack.c.l.b16 %v2312
        %v2493 = vunpack.c.l.b16 %v2313
        %v2494 = vunpack.c.l.b16 %v2314
        %v2495 = vunpack.c.l.b16 %v2315
        %v2496 = vunpack.c.l.b16 %v2316
        %v2497 = vunpack.c.l.b16 %v2317
        %v2498 = vunpack.c.l.b16 %v2318
        %v2499 = vunpack.c.l.b16 %v2319
        %v2500 = vunpack.c.l.b16 %v2320
        %v2501 = vunpack.c.l.b16 %v2321
        %v2502 = vunpack.c.l.b16 %v2322
        %v2503 = vunpack.c.l.b16 %v2323
        %v2504 = vunpack.c.l.b16 %v2324
        %v2505 = vunpack.c.l.b16 %v2325
        %v2506 = vunpack.c.l.b16 %v2326
        %v2507 = vunpack.c.l.b16 %v2327
        %v2508 = vunpack.c.l.b16 %v2328
        %v2509 = vunpack.c.l.b16 %v2329
        %v2510 = vunpack.c.l.b16 %v2330
        %v2511 = vunpack.c.l.b16 %v2331
        %v2512 = vunpack.c.l.b16 %v2332
        %v2513 = vunpack.c.l.b16 %v2333
        %v2514 = vunpack.c.l.b16 %v2334
        %v2515 = vunpack.c.l.b16 %v2335
        %v2516 = vunpack.c.l.b16 %v2336
        %v2517 = vunpack.c.l.b16 %v2337
        %v2518 = vunpack.c.l.b16 %v2338
        %v2519 = vunpack.c.l.b16 %v2339
        %v2520 = vunpack.c.l.b16 %v2340
        %v2521 = vpack.c.b16 %v2450, %v2449
        %v2522 = vpack.c.b16 %v2452, %v2451
        %v2523 = vpack.c.b16 %v2454, %v2453
        %v2524 = vpack.c.b16 %v2456, %v2455
        %v2525 = vpack.c.b16 %v2458, %v2457
        %v2526 = vpack.c.b16 %v2460, %v2459
        %v2527 = vpack.c.b16 %v2462, %v2461
        %v2528 = vpack.c.b16 %v2464, %v2463
        %v2529 = vpack.c.b16 %v2466, %v2465
        %v2530 = vpack.c.b16 %v2468, %v2467
        %v2531 = vpack.c.b16 %v2470, %v2469
        %v2532 = vpack.c.b16 %v2472, %v2471
        %v2533 = vpack.c.b16 %v2474, %v2473
        %v2534 = vpack.c.b16 %v2476, %v2475
        %v2535 = vpack.c.b16 %v2478, %v2477
        %v2536 = vpack.c.b16 %v2480, %v2479
        %v2537 = vpack.c.b16 %v2482, %v2481
        %v2538 = vpack.c.b16 %v2484, %v2483
        %v2539 = vpack.c.b16 %v2486, %v2485
        %v2540 = vpack.c.b16 %v2488, %v2487
        %v2541 = vpack.c.b16 %v2490, %v2489
        %v2542 = vpack.c.b16 %v2492, %v2491
        %v2543 = vpack.c.b16 %v2494, %v2493
        %v2544 = vpack.c.b16 %v2496, %v2495
        %v2545 = vpack.c.b16 %v2498, %v2497
        %v2546 = vpack.c.b16 %v2500, %v2499
        %v2547 = vpack.c.b16 %v2502, %v2501
        %v2548 = vpack.c.b16 %v2504, %v2503
        %v2549 = vpack.c.b16 %v2506, %v2505
        %v2550 = vpack.c.b16 %v2508, %v2507
        %v2551 = vpack.c.b16 %v2510, %v2509
        %v2552 = vpack.c.b16 %v2512, %v2511
        %v2553 = vpack.c.b16 %v2514, %v2513
        %v2554 = vpack.c.b16 %v2516, %v2515
        %v2555 = vpack.c.b16 %v2518, %v2517
        %v2556 = vpack.c.b16 %v2520, %v2519
        %v2594 = vsel %vm909, %v2345, 0
        %v2597 = vsel %vm909, %v2350, 0
        %v2600 = vsel %vm909, %v2355, 0
        %v2603 = vsel %vm909, %v2360, 0
        %2605 = vmatprep.subr.bf16.mxu0 0
        %2606 = vmatpush1.bf16.msra.mxu0 %v2528
        %2607 = vmatprep.subr.bf16.mxu0 0
        %2608 = vmatpush1.bf16.msra.mxu0 %v2527
        %2609 = vmatprep.subr.bf16.mxu0 0
        %2610 = vmatpush1.bf16.msra.mxu0 %v2526
        %2611 = vmatprep.subr.bf16.mxu0 0
        %2612 = vmatpush1.bf16.msra.mxu0 %v2525
        %2613 = vmatprep.subr.bf16.mxu0 0
        %2614 = vmatpush1.bf16.msra.mxu0 %v2524
        %2615 = vmatprep.subr.bf16.mxu0 0
        %2616 = vmatpush1.bf16.msra.mxu0 %v2523
        %2617 = vmatprep.subr.bf16.mxu0 0
        %2618 = vmatpush1.bf16.msra.mxu0 %v2522
        %2619 = vmatprep.subr.bf16.mxu0 0
        %2620 = vmatpush1.bf16.msra.mxu0 %v2521
        %2621 = vmatprep.subr.bf16.mxu0 0
        %2622 = vmatpush2.bf16.msra.mxu0 %v2536
        %2623 = vmatprep.subr.bf16.mxu0 0
        %2624 = vmatpush2.bf16.msra.mxu0 %v2535
        %2625 = vmatprep.subr.bf16.mxu0 0
        %2626 = vmatpush2.bf16.msra.mxu0 %v2534
        %2627 = vmatprep.subr.bf16.mxu0 0
        %2628 = vmatpush2.bf16.msra.mxu0 %v2533
        %2629 = vmatprep.subr.bf16.mxu0 0
        %2630 = vmatpush2.bf16.msra.mxu0 %v2532
        %2631 = vmatprep.subr.bf16.mxu0 0
        %2632 = vmatpush2.bf16.msra.mxu0 %v2531
        %2633 = vmatprep.subr.bf16.mxu0 0
        %2634 = vmatpush2.bf16.msra.mxu0 %v2530
        %2635 = vmatprep.subr.bf16.mxu0 0
        %2636 = vmatpush2.bf16.msra.mxu0 %v2529
        %2637 = vmatprep.mubr.bf16.mxu0 %v2342
        %2638 = vmatmul.mubr.bf16.gmra.mxu0 %v2341
        %v2639 = vpop.f32.mrf.mxu0
        %v2640 = vadd.f32 0.0, %v2639
        %v2641 = vpop.f32.mrf.mxu0
        %v2642 = vpop.f32.mrf.mxu0
        %v2643 = vadd.f32 0.0, %v2642
        %v2644 = vpop.f32.mrf.mxu0
        %2645 = vmatprep.mubr.bf16.mxu0 %v2347
        %2646 = vmatmul.mubr.bf16.gmra.mxu0 %v2346
        %v2647 = vpop.f32.mrf.mxu0
        %v2648 = vadd.f32 0.0, %v2647
        %v2649 = vpop.f32.mrf.mxu0
        %v2650 = vpop.f32.mrf.mxu0
        %v2651 = vadd.f32 0.0, %v2650
        %v2652 = vpop.f32.mrf.mxu0
        %2653 = vmatprep.mubr.bf16.mxu0 %v2352
        %2654 = vmatmul.mubr.bf16.gmra.mxu0 %v2351
        %v2655 = vpop.f32.mrf.mxu0
        %v2656 = vadd.f32 0.0, %v2655
        %v2657 = vpop.f32.mrf.mxu0
        %v2658 = vpop.f32.mrf.mxu0
        %v2659 = vadd.f32 0.0, %v2658
        %v2660 = vpop.f32.mrf.mxu0
        %2661 = vmatprep.mubr.bf16.mxu0 %v2357
        %2662 = vmatmul.mubr.bf16.gmra.mxu0 %v2356
        %v2663 = vpop.f32.mrf.mxu0
        %v2664 = vadd.f32 0.0, %v2663
        %v2665 = vpop.f32.mrf.mxu0
        %v2666 = vpop.f32.mrf.mxu0
        %v2667 = vadd.f32 0.0, %v2666
        %v2668 = vpop.f32.mrf.mxu0
        %2669 = vdwg.mxu0
        %2670 = vmatprep.subr.bf16.mxu0 0
        %2671 = vmatpush1.bf16.msra.mxu0 %v2544
        %2672 = vmatprep.subr.bf16.mxu0 0
        %2673 = vmatpush1.bf16.msra.mxu0 %v2543
        %2674 = vmatprep.subr.bf16.mxu0 0
        %2675 = vmatpush1.bf16.msra.mxu0 %v2542
        %2676 = vmatprep.subr.bf16.mxu0 0
        %2677 = vmatpush1.bf16.msra.mxu0 %v2541
        %2678 = vmatprep.subr.bf16.mxu0 0
        %2679 = vmatpush1.bf16.msra.mxu0 %v2540
        %2680 = vmatprep.subr.bf16.mxu0 0
        %2681 = vmatpush1.bf16.msra.mxu0 %v2539
        %2682 = vmatprep.subr.bf16.mxu0 0
        %2683 = vmatpush1.bf16.msra.mxu0 %v2538
        %2684 = vmatprep.subr.bf16.mxu0 0
        %2685 = vmatpush1.bf16.msra.mxu0 %v2537
        %2686 = vmatprep.subr.bf16.mxu0 0
        %2687 = vmatpush2.bf16.msra.mxu0 %v2552
        %2688 = vmatprep.subr.bf16.mxu0 0
        %2689 = vmatpush2.bf16.msra.mxu0 %v2551
        %2690 = vmatprep.subr.bf16.mxu0 0
        %2691 = vmatpush2.bf16.msra.mxu0 %v2550
        %2692 = vmatprep.subr.bf16.mxu0 0
        %2693 = vmatpush2.bf16.msra.mxu0 %v2549
        %2694 = vmatprep.subr.bf16.mxu0 0
        %2695 = vmatpush2.bf16.msra.mxu0 %v2548
        %2696 = vmatprep.subr.bf16.mxu0 0
        %2697 = vmatpush2.bf16.msra.mxu0 %v2547
        %2698 = vmatprep.subr.bf16.mxu0 0
        %2699 = vmatpush2.bf16.msra.mxu0 %v2546
        %2700 = vmatprep.subr.bf16.mxu0 0
        %2701 = vmatpush2.bf16.msra.mxu0 %v2545
        %2702 = vmatprep.mubr.bf16.mxu0 %v2344
        %2703 = vmatmul.mubr.bf16.gmra.mxu0 %v2343
        %v2704 = vpop.f32.mrf.mxu0
        %v2705 = vadd.f32 %v2640, %v2704
        %v2706 = vpop.f32.mrf.mxu0
        %v2707 = vpop.f32.mrf.mxu0
        %v2708 = vadd.f32 %v2643, %v2707
        %v2709 = vpop.f32.mrf.mxu0
        %2710 = vmatprep.mubr.bf16.mxu0 %v2349
        %2711 = vmatmul.mubr.bf16.gmra.mxu0 %v2348
        %v2712 = vpop.f32.mrf.mxu0
        %v2713 = vadd.f32 %v2648, %v2712
        %v2714 = vpop.f32.mrf.mxu0
        %v2715 = vpop.f32.mrf.mxu0
        %v2716 = vadd.f32 %v2651, %v2715
        %v2717 = vpop.f32.mrf.mxu0
        %2718 = vmatprep.mubr.bf16.mxu0 %v2354
        %2719 = vmatmul.mubr.bf16.gmra.mxu0 %v2353
        %v2720 = vpop.f32.mrf.mxu0
        %v2721 = vadd.f32 %v2656, %v2720
        %v2722 = vpop.f32.mrf.mxu0
        %v2723 = vpop.f32.mrf.mxu0
        %v2724 = vadd.f32 %v2659, %v2723
        %v2725 = vpop.f32.mrf.mxu0
        %2726 = vmatprep.mubr.bf16.mxu0 %v2359
        %2727 = vmatmul.mubr.bf16.gmra.mxu0 %v2358
        %v2728 = vpop.f32.mrf.mxu0
        %v2729 = vadd.f32 %v2664, %v2728
        %v2730 = vpop.f32.mrf.mxu0
        %v2731 = vpop.f32.mrf.mxu0
        %v2732 = vadd.f32 %v2667, %v2731
        %v2733 = vpop.f32.mrf.mxu0
        %2734 = vdwg.mxu0
        %2735 = vmatprep.subr.bf16.mxu0 0
        %2736 = vmatpush1.bf16.msra.mxu0 0
        %2737 = vmatprep.subr.bf16.mxu0 0
        %2738 = vmatpush1.bf16.msra.mxu0 0
        %2739 = vmatprep.subr.bf16.mxu0 0
        %2740 = vmatpush1.bf16.msra.mxu0 0
        %2741 = vmatprep.subr.bf16.mxu0 0
        %2742 = vmatpush1.bf16.msra.mxu0 0
        %2743 = vmatprep.subr.bf16.mxu0 0
        %2744 = vmatpush1.bf16.msra.mxu0 %v2556
        %2745 = vmatprep.subr.bf16.mxu0 0
        %2746 = vmatpush1.bf16.msra.mxu0 %v2555
        %2747 = vmatprep.subr.bf16.mxu0 0
        %2748 = vmatpush1.bf16.msra.mxu0 %v2554
        %2749 = vmatprep.subr.bf16.mxu0 0
        %2750 = vmatpush1.bf16.msra.mxu0 %v2553
        %2751 = vmatprep.subr.bf16.mxu0 0
        %2752 = vmatpush2.bf16.msra.mxu0 0
        %2753 = vmatprep.subr.bf16.mxu0 0
        %2754 = vmatpush2.bf16.msra.mxu0 0
        %2755 = vmatprep.subr.bf16.mxu0 0
        %2756 = vmatpush2.bf16.msra.mxu0 0
        %2757 = vmatprep.subr.bf16.mxu0 0
        %2758 = vmatpush2.bf16.msra.mxu0 0
        %2759 = vmatprep.subr.bf16.mxu0 0
        %2760 = vmatpush2.bf16.msra.mxu0 0
        %2761 = vmatprep.subr.bf16.mxu0 0
        %2762 = vmatpush2.bf16.msra.mxu0 0
        %2763 = vmatprep.subr.bf16.mxu0 0
        %2764 = vmatpush2.bf16.msra.mxu0 0
        %2765 = vmatprep.subr.bf16.mxu0 0
        %2766 = vmatpush2.bf16.msra.mxu0 0
        %2767 = vmatprep.mubr.bf16.mxu0 0
        %2768 = vmatmul.mubr.bf16.gmra.mxu0 %v2594
        %v2769 = vpop.f32.mrf.mxu0
        %v2770 = vadd.f32 %v2705, %v2769
        %v2771 = vpop.f32.mrf.mxu0
        %v2772 = vpop.f32.mrf.mxu0
        %v2773 = vadd.f32 %v2708, %v2772
        %v2774 = vpop.f32.mrf.mxu0
        %2775 = vmatprep.mubr.bf16.mxu0 0
        %2776 = vmatmul.mubr.bf16.gmra.mxu0 %v2597
        %v2777 = vpop.f32.mrf.mxu0
        %v2778 = vadd.f32 %v2713, %v2777
        %v2779 = vpop.f32.mrf.mxu0
        %v2780 = vpop.f32.mrf.mxu0
        %v2781 = vadd.f32 %v2716, %v2780
        %v2782 = vpop.f32.mrf.mxu0
        %2783 = vmatprep.mubr.bf16.mxu0 0
        %2784 = vmatmul.mubr.bf16.gmra.mxu0 %v2600
        %v2785 = vpop.f32.mrf.mxu0
        %v2786 = vadd.f32 %v2721, %v2785
        %v2787 = vpop.f32.mrf.mxu0
        %v2788 = vpop.f32.mrf.mxu0
        %v2789 = vadd.f32 %v2724, %v2788
        %v2790 = vpop.f32.mrf.mxu0
        %2791 = vmatprep.mubr.bf16.mxu0 0
        %2792 = vmatmul.mubr.bf16.gmra.mxu0 %v2603
        %v2793 = vpop.f32.mrf.mxu0
        %v2794 = vadd.f32 %v2729, %v2793
        %v2795 = vpop.f32.mrf.mxu0
        %v2796 = vpop.f32.mrf.mxu0
        %v2797 = vadd.f32 %v2732, %v2796
        %v2798 = vpop.f32.mrf.mxu0
        %2799 = vdwg.mxu0
        %v2800 = vld [vmem:[%s5] sm:$0x1]
        %v2802 = vlaneseq
        %v2803 = vshrl.u32 %v2802, 7
        %v2804 = vsub.s32 0, %v2803
        %v2805 = vrot.slane %v2800, %v2804
        %v2807 = vmul.f32 %v2770, %v2805
        %v2808 = vmul.f32 %v2773, %v2805
        %v2809 = vmul.f32 %v2778, %v2805
        %v2810 = vmul.f32 %v2781, %v2805
        %v2811 = vmul.f32 %v2786, %v2805
        %v2812 = vmul.f32 %v2789, %v2805
        %v2813 = vmul.f32 %v2794, %v2805
        %v2814 = vmul.f32 %v2797, %v2805
        %v2815 = vld [vmem:[%s6] sm:$0x1]
        %v2817 = vlaneseq
        %v2818 = vshrl.u32 %v2817, 7
        %v2819 = vsub.s32 0, %v2818
        %v2820 = vrot.slane %v2815, %v2819
        %v2822 = vadd.f32 %v2807, %v2820
        %v2823 = vadd.f32 %v2808, %v2820
        %v2824 = vadd.f32 %v2809, %v2820
        %v2825 = vadd.f32 %v2810, %v2820
        %v2826 = vadd.f32 %v2811, %v2820
        %v2827 = vadd.f32 %v2812, %v2820
        %v2828 = vadd.f32 %v2813, %v2820
        %v2829 = vadd.f32 %v2814, %v2820
        %v2830 = vld [vmem:[%s393] sm:$0xf]
        %v2831 = vld [vmem:[%s393 + $0x8] sm:$0xf]
        %v2832 = vld [vmem:[%s393 + $0x10] sm:$0xf]
        %v2833 = vld [vmem:[%s393 + $0x18] sm:$0xf]
        %v2834 = vld [vmem:[%s393 + $0x20] sm:$0xf]
        %v2835 = vld [vmem:[%s393 + $0x28] sm:$0xf]
        %v2836 = vld [vmem:[%s393 + $0x30] sm:$0xf]
        %v2837 = vld [vmem:[%s393 + $0x38] sm:$0xf]
        %v2838 = vld [vmem:[%s7] sm:$0xf]
        %v2839 = vld [vmem:[%s7 + $0x4] sm:$0xf]
        %v2840 = vld [vmem:[%s7 + $0x8] sm:$0xf]
        %v2841 = vld [vmem:[%s7 + $0xc] sm:$0xf]
        %v2850 = vunpack.c.l.b16 %v2830
        %v2851 = vunpack.c.l.b16 %v2831
        %v2852 = vunpack.c.l.b16 %v2832
        %v2853 = vunpack.c.l.b16 %v2833
        %v2854 = vunpack.c.l.b16 %v2834
        %v2855 = vunpack.c.l.b16 %v2835
        %v2856 = vunpack.c.l.b16 %v2836
        %v2857 = vunpack.c.l.b16 %v2837
        %v2858 = vpack.c.b16 %v2851, %v2850
        %v2859 = vpack.c.b16 %v2853, %v2852
        %v2860 = vpack.c.b16 %v2855, %v2854
        %v2861 = vpack.c.b16 %v2857, %v2856
        %v2866 = vunpack.c.l.b16 %v2838
        %v2867 = vunpack.c.l.b16 %v2839
        %v2868 = vunpack.c.l.b16 %v2840
        %v2869 = vunpack.c.l.b16 %v2841
        %v2870 = vpack.c.b16 %v2867, %v2866
        %v2871 = vpack.c.b16 %v2869, %v2868
        %v2875 = vsel %vm884, %v2858, 0
        %v2878 = vsel %vm884, %v2859, 0
        %v2881 = vsel %vm884, %v2860, 0
        %v2884 = vsel %vm884, %v2861, 0
        %2886 = vmatprep.subr.bf16.mxu0 0
        %2887 = vmatpush1.bf16.msra.mxu0 0
        %2888 = vmatprep.subr.bf16.mxu0 0
        %2889 = vmatpush1.bf16.msra.mxu0 0
        %2890 = vmatprep.subr.bf16.mxu0 0
        %2891 = vmatpush1.bf16.msra.mxu0 0
        %2892 = vmatprep.subr.bf16.mxu0 0
        %2893 = vmatpush1.bf16.msra.mxu0 0
        %2894 = vmatprep.subr.bf16.mxu0 0
        %2895 = vmatpush1.bf16.msra.mxu0 0
        %2896 = vmatprep.subr.bf16.mxu0 0
        %2897 = vmatpush1.bf16.msra.mxu0 0
        %2898 = vmatprep.subr.bf16.mxu0 0
        %2899 = vmatpush1.bf16.msra.mxu0 %v2871
        %2900 = vmatprep.subr.bf16.mxu0 0
        %2901 = vmatpush1.bf16.msra.mxu0 %v2870
        %2902 = vmatprep.subr.bf16.mxu0 0
        %2903 = vmatpush2.bf16.msra.mxu0 0
        %2904 = vmatprep.subr.bf16.mxu0 0
        %2905 = vmatpush2.bf16.msra.mxu0 0
        %2906 = vmatprep.subr.bf16.mxu0 0
        %2907 = vmatpush2.bf16.msra.mxu0 0
        %2908 = vmatprep.subr.bf16.mxu0 0
        %2909 = vmatpush2.bf16.msra.mxu0 0
        %2910 = vmatprep.subr.bf16.mxu0 0
        %2911 = vmatpush2.bf16.msra.mxu0 0
        %2912 = vmatprep.subr.bf16.mxu0 0
        %2913 = vmatpush2.bf16.msra.mxu0 0
        %2914 = vmatprep.subr.bf16.mxu0 0
        %2915 = vmatpush2.bf16.msra.mxu0 0
        %2916 = vmatprep.subr.bf16.mxu0 0
        %2917 = vmatpush2.bf16.msra.mxu0 0
        %2918 = vmatprep.mubr.bf16.mxu0 0
        %2919 = vmatmul.mubr.bf16.gmra.mxu0 %v2875
        %v2920 = vpop.f32.mrf.mxu0
        %v2921 = vadd.f32 0.0, %v2920
        %v2922 = vpop.f32.mrf.mxu0
        %v2923 = vpop.f32.mrf.mxu0
        %v2924 = vadd.f32 0.0, %v2923
        %v2925 = vpop.f32.mrf.mxu0
        %2926 = vmatprep.mubr.bf16.mxu0 0
        %2927 = vmatmul.mubr.bf16.gmra.mxu0 %v2878
        %v2928 = vpop.f32.mrf.mxu0
        %v2929 = vadd.f32 0.0, %v2928
        %v2930 = vpop.f32.mrf.mxu0
        %v2931 = vpop.f32.mrf.mxu0
        %v2932 = vadd.f32 0.0, %v2931
        %v2933 = vpop.f32.mrf.mxu0
        %2934 = vmatprep.mubr.bf16.mxu0 0
        %2935 = vmatmul.mubr.bf16.gmra.mxu0 %v2881
        %v2936 = vpop.f32.mrf.mxu0
        %v2937 = vadd.f32 0.0, %v2936
        %v2938 = vpop.f32.mrf.mxu0
        %v2939 = vpop.f32.mrf.mxu0
        %v2940 = vadd.f32 0.0, %v2939
        %v2941 = vpop.f32.mrf.mxu0
        %2942 = vmatprep.mubr.bf16.mxu0 0
        %2943 = vmatmul.mubr.bf16.gmra.mxu0 %v2884
        %v2944 = vpop.f32.mrf.mxu0
        %v2945 = vadd.f32 0.0, %v2944
        %v2946 = vpop.f32.mrf.mxu0
        %v2947 = vpop.f32.mrf.mxu0
        %v2948 = vadd.f32 0.0, %v2947
        %v2949 = vpop.f32.mrf.mxu0
        %2950 = vdwg.mxu0
        %v2951 = vld [vmem:[%s8] sm:$0x1]
        %v2953 = vlaneseq
        %v2954 = vshrl.u32 %v2953, 7
        %v2955 = vsub.s32 0, %v2954
        %v2956 = vrot.slane %v2951, %v2955
        %v2958 = vmul.f32 %v2921, %v2956
        %v2959 = vmul.f32 %v2924, %v2956
        %v2960 = vmul.f32 %v2929, %v2956
        %v2961 = vmul.f32 %v2932, %v2956
        %v2962 = vmul.f32 %v2937, %v2956
        %v2963 = vmul.f32 %v2940, %v2956
        %v2964 = vmul.f32 %v2945, %v2956
        %v2965 = vmul.f32 %v2948, %v2956
        %v2966 = vld [vmem:[%s9] sm:$0x1]
        %v2968 = vlaneseq
        %v2969 = vshrl.u32 %v2968, 7
        %v2970 = vsub.s32 0, %v2969
        %v2971 = vrot.slane %v2966, %v2970
        %v2973 = vadd.f32 %v2958, %v2971
        %v2974 = vadd.f32 %v2959, %v2971
        %v2975 = vadd.f32 %v2960, %v2971
        %v2976 = vadd.f32 %v2961, %v2971
        %v2977 = vadd.f32 %v2962, %v2971
        %v2978 = vadd.f32 %v2963, %v2971
        %v2979 = vadd.f32 %v2964, %v2971
        %v2980 = vadd.f32 %v2965, %v2971
        %v2981 = vadd.f32 %v2822, %v2973
        %v2982 = vadd.f32 %v2823, %v2974
        %v2983 = vadd.f32 %v2824, %v2975
        %v2984 = vadd.f32 %v2825, %v2976
        %v2985 = vadd.f32 %v2826, %v2977
        %v2986 = vadd.f32 %v2827, %v2978
        %v2987 = vadd.f32 %v2828, %v2979
        %v2988 = vadd.f32 %v2829, %v2980
        %v2989 = vmax.f32 %v2981, 0.0
        %v2990 = vmax.f32 %v2982, 0.0
        %v2991 = vmax.f32 %v2983, 0.0
        %v2992 = vmax.f32 %v2984, 0.0
        %v2993 = vmax.f32 %v2985, 0.0
        %v2994 = vmax.f32 %v2986, 0.0
        %v2995 = vmax.f32 %v2987, 0.0
        %v2996 = vmax.f32 %v2988, 0.0
        %v2997 = vpack.c.bf16 %v2989, %v2989
        %v2998 = vpack.c.bf16 %v2990, %v2990
        %v2999 = vpack.c.bf16 %v2991, %v2991
        %v3000 = vpack.c.bf16 %v2992, %v2992
        %v3001 = vpack.c.bf16 %v2993, %v2993
        %v3002 = vpack.c.bf16 %v2994, %v2994
        %v3003 = vpack.c.bf16 %v2995, %v2995
        %v3004 = vpack.c.bf16 %v2996, %v2996
        %3005 = vst.msk [vmem:[%s352] sm:$0xf] %vm1383, %v2997
        %3006 = vst.msk [vmem:[%s352 + $0x4] sm:$0xf] %vm1383, %v2998
        %3007 = vst.msk [vmem:[%s352 + $0x8] sm:$0xf] %vm1383, %v2999
        %3008 = vst.msk [vmem:[%s352 + $0xc] sm:$0xf] %vm1383, %v3000
        %3009 = vst.msk [vmem:[%s352 + $0x10] sm:$0xf] %vm1383, %v3001
        %3010 = vst.msk [vmem:[%s352 + $0x14] sm:$0xf] %vm1383, %v3002
        %3011 = vst.msk [vmem:[%s352 + $0x18] sm:$0xf] %vm1383, %v3003
        %3012 = vst.msk [vmem:[%s352 + $0x1c] sm:$0xf] %vm1383, %v3004
        %s3013 = sand.u32 %s247, 1
        %s3014 = scalar_lea.sflag [#allocation4], %s3013
        %s3015 = sand.u32 %s247, 1
        %s3016 = smul.addr %s3015, 32
        %s3017 = scalar_lea.vmem [#allocation3], %s3016
        // Predicated region
        $region61: #{forward.3} parent=59 // pred_check
          %p3018 = pneg %p257
        $region62: #{forward.3} parent=59 // pred_check_branch
          %3020 = sbr.rel (%p3018) target = $region64
        $region63: #{forward.3} parent=59 // pred_region
          %s3022 = ssub.s32 512, 512
          %3023 = vsyncadd %s3014, %s3022
          %s3024 = smul.addr %s24, 8
          %s3025 = smul.addr %s3024, 64
          %s3026 = scalar_lea.hbm %s10, %s3025
          %s3027 = sshll.u32 %s3017, 4
          %s3028 = int_to_ptr.vmem [resolvable:$true] %s3027
          %3033 = dma.vmem_to_hbm [thread:$0]  %s3028, 512, %s3026, %s3014, 64, 64, 4
        $region64: #{forward.3} parent=59 // pred_fallthru
          _
      $region60: #{forward.3} parent=5 // pred_fallthru
        _
      %p3034 = scmp.le.s32.totalorder 2, %s19
      // Predicated region
      $region65: #{forward.3} parent=5 // pred_check
        %p3035 = pneg %p3034
      $region66: #{forward.3} parent=5 // pred_check_branch
        %3037 = sbr.rel (%p3035) target = $region68
      $region67: #{forward.3} parent=5 // pred_region
        %s3038 = ssub.s32 %s19, 2
        // Predicated region
        $region69: #{forward.3} parent=67 // pred_check
          %p3039 = pneg %p263
        $region70: #{forward.3} parent=67 // pred_check_branch
          %3041 = sbr.rel (%p3039) target = $region72
        $region71: #{forward.3} parent=67 // pred_region
          %s3042 = sand.u32 %s248, 1
          %s3043 = scalar_lea.sflag [#allocation4], %s3042
          %s3044 = sand.u32 %s248, 1
          %s3045 = smul.addr %s3044, 32
          %s3046 = scalar_lea.vmem [#allocation3], %s3045
          %3047 = dma.done %s3043, 512
        $region72: #{forward.3} parent=67 // pred_fallthru
          _
      $region68: #{forward.3} parent=5 // pred_fallthru
        _
    $region6: #{forward.3} parent=1 // loop_footer
      %s23 = sadd.s32 1, %s19
    $region7: #{forward.3} parent=1 // loop_footer_branch
      %18 = sbr.rel target = $region3
    $region8: #{forward.3} parent=1 // loop_exit
      _
    %3048 = vsyncpa [#allocation4], 1
    %s3049 = scalar_lea.sflag [#allocation4], 1
    %3050 = vsyncpa %s3049, 1

// kernel: forward.2
$region0: #{forward.2}
  #allocation0 [shape = 'u32[]', space=smem, size = 0x4, offset = 0x4, fixed_abs, tag = 'smem constant byte address 0x4 - core index']
  #allocation1 [shape = 'u32[144,128]{1,0:T(1,128)}', space=vmem, size = 0x12000, scoped, tag = 'internal scratch']
  #allocation2 [shape = 'bf16[18,18,32]{2,1,0:T(8,128)(2,1)}', space=vmem, size = 0x1b000, scoped, tag = 'scratch operand']
  #allocation3 [shape = 'bf16[18,18,32]{2,1,0:T(8,128)(2,1)}', space=vmem, size = 0x1b000, scoped, tag = 'scratch operand']
  %s0 = inlined_call_operand.vmem [shape: bf16[2,16,16,32], index: 0, kind: input, shape index: {}]
  %s1 = inlined_call_operand.vmem [shape: bf16[288,32], index: 1, kind: input, shape index: {}]
  %s2 = inlined_call_operand.vmem [shape: f32[1,32], index: 2, kind: input, shape index: {}]
  %s3 = inlined_call_operand.vmem [shape: f32[1,32], index: 3, kind: input, shape index: {}]
  %s4 = inlined_call_operand.vmem [shape: bf16[288,32], index: 4, kind: input, shape index: {}]
  %s5 = inlined_call_operand.vmem [shape: f32[1,32], index: 5, kind: input, shape index: {}]
  %s6 = inlined_call_operand.vmem [shape: f32[1,32], index: 6, kind: input, shape index: {}]
  %s7 = inlined_call_operand.vmem [shape: bf16[2,16,16,32], index: 7, kind: output, shape index: {}]
  %s8 = sld [smem:[#allocation0]]
  $region61: #{forward.2} parent=0
    _
  %s10 = ssub.s32 1, %s8
  %s11 = scalar_select 0, %s10, %s8
  loop: start=0, step=1, limit=4
  $region2: #{forward.2} parent=0 // loop_pre_header
    _
  $region3: #{forward.2} parent=0 // loop_header
    %s13 = sphi 0, %s17
    %p14 = scmp.ge.s32.totalorder %s13, 4
    %s23 = sphi 0, %s25
    %s26 = sphi 0, %s23
    %s27 = sphi 0, %s26
    %s43 = sphi 0, %s27
    %s47 = sphi 0, %s47
    %s49 = sphi 0, %s47
    %s50 = sphi 0, %s49
    %s64 = sphi 0, %s50
    %s68 = sphi 0, %s68
    %s70 = sphi 0, %s68
    %s71 = sphi 0, %s70
    %s85 = sphi 0, %s71
    %s89 = sphi 0, %s89
    %s91 = sphi 0, %s89
    %s92 = sphi 0, %s91
    %s106 = sphi 0, %s92
    %s110 = sphi 0, %s110
    %s112 = sphi 0, %s110
    %s113 = sphi 0, %s112
    %s127 = sphi 0, %s113
    %s131 = sphi 0, %s131
    %s133 = sphi 0, %s131
    %s134 = sphi 0, %s133
    %s148 = sphi 0, %s134
    %s152 = sphi 0, %s152
    %s154 = sphi 0, %s152
    %s155 = sphi 0, %s154
    %s169 = sphi 0, %s155
    %s175 = sphi 0, %s177
    %s178 = sphi 0, %s175
    %s179 = sphi 0, %s178
    %s195 = sphi 0, %s179
  $region4: #{forward.2} parent=0 // loop_header_branch
    %16 = sbr.rel (%p14) target = $region8
  $region5: #{forward.2} parent=0 // loop_body
    %s18 = ssub.s32 %s13, 1
    %s19 = ssub.s32 %s13, 2
    %s20 = sadd.s32 %s13, 1
    %s21 = ssub.s32 %s13, %s20
    %p22 = scmp.eq.s32.totalorder %s21, 0
    %s24 = sadd.s32 %s23, 1
    %s25 = scalar_select %p22, %s23, %s24
    %p28 = pneg %p22
    %p29 = scmp.eq.s32.totalorder %s13, 1
    %p30 = por %p28, %p29
    %p31 = scmp.ne.s32.totalorder %s23, %s26
    %p32 = scmp.eq.s32.totalorder %s13, 0
    %p33 = por %p31, %p32
    %p34 = scmp.ne.s32.totalorder %s23, %s26
    %p35 = scmp.eq.s32.totalorder %s18, 1
    %p36 = por %p34, %p35
    %p37 = scmp.ne.s32.totalorder %s26, %s27
    %p38 = scmp.eq.s32.totalorder %s18, 0
    %p39 = por %p37, %p38
    %p40 = scmp.ne.s32.totalorder %s26, %s27
    %p41 = scmp.eq.s32.totalorder %s19, 1
    %p42 = por %p40, %p41
    %p44 = scmp.ne.s32.totalorder %s27, %s43
    %p45 = scmp.eq.s32.totalorder %s19, 0
    %p46 = por %p44, %p45
    %s48 = sadd.s32 %s47, 1
    %p51 = scmp.eq.s32.totalorder %s13, 1
    %p52 = scmp.ne.s32.totalorder %s47, %s49
    %p53 = scmp.eq.s32.totalorder %s13, 0
    %p54 = por %p52, %p53
    %p55 = scmp.ne.s32.totalorder %s47, %s49
    %p56 = scmp.eq.s32.totalorder %s18, 1
    %p57 = por %p55, %p56
    %p58 = scmp.ne.s32.totalorder %s49, %s50
    %p59 = scmp.eq.s32.totalorder %s18, 0
    %p60 = por %p58, %p59
    %p61 = scmp.ne.s32.totalorder %s49, %s50
    %p62 = scmp.eq.s32.totalorder %s19, 1
    %p63 = por %p61, %p62
    %p65 = scmp.ne.s32.totalorder %s50, %s64
    %p66 = scmp.eq.s32.totalorder %s19, 0
    %p67 = por %p65, %p66
    %s69 = sadd.s32 %s68, 1
    %p72 = scmp.eq.s32.totalorder %s13, 1
    %p73 = scmp.ne.s32.totalorder %s68, %s70
    %p74 = scmp.eq.s32.totalorder %s13, 0
    %p75 = por %p73, %p74
    %p76 = scmp.ne.s32.totalorder %s68, %s70
    %p77 = scmp.eq.s32.totalorder %s18, 1
    %p78 = por %p76, %p77
    %p79 = scmp.ne.s32.totalorder %s70, %s71
    %p80 = scmp.eq.s32.totalorder %s18, 0
    %p81 = por %p79, %p80
    %p82 = scmp.ne.s32.totalorder %s70, %s71
    %p83 = scmp.eq.s32.totalorder %s19, 1
    %p84 = por %p82, %p83
    %p86 = scmp.ne.s32.totalorder %s71, %s85
    %p87 = scmp.eq.s32.totalorder %s19, 0
    %p88 = por %p86, %p87
    %s90 = sadd.s32 %s89, 1
    %p93 = scmp.eq.s32.totalorder %s13, 1
    %p94 = scmp.ne.s32.totalorder %s89, %s91
    %p95 = scmp.eq.s32.totalorder %s13, 0
    %p96 = por %p94, %p95
    %p97 = scmp.ne.s32.totalorder %s89, %s91
    %p98 = scmp.eq.s32.totalorder %s18, 1
    %p99 = por %p97, %p98
    %p100 = scmp.ne.s32.totalorder %s91, %s92
    %p101 = scmp.eq.s32.totalorder %s18, 0
    %p102 = por %p100, %p101
    %p103 = scmp.ne.s32.totalorder %s91, %s92
    %p104 = scmp.eq.s32.totalorder %s19, 1
    %p105 = por %p103, %p104
    %p107 = scmp.ne.s32.totalorder %s92, %s106
    %p108 = scmp.eq.s32.totalorder %s19, 0
    %p109 = por %p107, %p108
    %s111 = sadd.s32 %s110, 1
    %p114 = scmp.eq.s32.totalorder %s13, 1
    %p115 = scmp.ne.s32.totalorder %s110, %s112
    %p116 = scmp.eq.s32.totalorder %s13, 0
    %p117 = por %p115, %p116
    %p118 = scmp.ne.s32.totalorder %s110, %s112
    %p119 = scmp.eq.s32.totalorder %s18, 1
    %p120 = por %p118, %p119
    %p121 = scmp.ne.s32.totalorder %s112, %s113
    %p122 = scmp.eq.s32.totalorder %s18, 0
    %p123 = por %p121, %p122
    %p124 = scmp.ne.s32.totalorder %s112, %s113
    %p125 = scmp.eq.s32.totalorder %s19, 1
    %p126 = por %p124, %p125
    %p128 = scmp.ne.s32.totalorder %s113, %s127
    %p129 = scmp.eq.s32.totalorder %s19, 0
    %p130 = por %p128, %p129
    %s132 = sadd.s32 %s131, 1
    %p135 = scmp.eq.s32.totalorder %s13, 1
    %p136 = scmp.ne.s32.totalorder %s131, %s133
    %p137 = scmp.eq.s32.totalorder %s13, 0
    %p138 = por %p136, %p137
    %p139 = scmp.ne.s32.totalorder %s131, %s133
    %p140 = scmp.eq.s32.totalorder %s18, 1
    %p141 = por %p139, %p140
    %p142 = scmp.ne.s32.totalorder %s133, %s134
    %p143 = scmp.eq.s32.totalorder %s18, 0
    %p144 = por %p142, %p143
    %p145 = scmp.ne.s32.totalorder %s133, %s134
    %p146 = scmp.eq.s32.totalorder %s19, 1
    %p147 = por %p145, %p146
    %p149 = scmp.ne.s32.totalorder %s134, %s148
    %p150 = scmp.eq.s32.totalorder %s19, 0
    %p151 = por %p149, %p150
    %s153 = sadd.s32 %s152, 1
    %p156 = scmp.eq.s32.totalorder %s13, 1
    %p157 = scmp.ne.s32.totalorder %s152, %s154
    %p158 = scmp.eq.s32.totalorder %s13, 0
    %p159 = por %p157, %p158
    %p160 = scmp.ne.s32.totalorder %s152, %s154
    %p161 = scmp.eq.s32.totalorder %s18, 1
    %p162 = por %p160, %p161
    %p163 = scmp.ne.s32.totalorder %s154, %s155
    %p164 = scmp.eq.s32.totalorder %s18, 0
    %p165 = por %p163, %p164
    %p166 = scmp.ne.s32.totalorder %s154, %s155
    %p167 = scmp.eq.s32.totalorder %s19, 1
    %p168 = por %p166, %p167
    %p170 = scmp.ne.s32.totalorder %s155, %s169
    %p171 = scmp.eq.s32.totalorder %s19, 0
    %p172 = por %p170, %p171
    %s173 = ssub.s32 %s13, %s20
    %p174 = scmp.eq.s32.totalorder %s173, 0
    %s176 = sadd.s32 %s175, 1
    %s177 = scalar_select %p174, %s175, %s176
    %p180 = pneg %p174
    %p181 = scmp.eq.s32.totalorder %s13, 1
    %p182 = por %p180, %p181
    %p183 = scmp.ne.s32.totalorder %s175, %s178
    %p184 = scmp.eq.s32.totalorder %s13, 0
    %p185 = por %p183, %p184
    %p186 = scmp.ne.s32.totalorder %s175, %s178
    %p187 = scmp.eq.s32.totalorder %s18, 1
    %p188 = por %p186, %p187
    %p189 = scmp.ne.s32.totalorder %s178, %s179
    %p190 = scmp.eq.s32.totalorder %s18, 0
    %p191 = por %p189, %p190
    %p192 = scmp.ne.s32.totalorder %s178, %s179
    %p193 = scmp.eq.s32.totalorder %s19, 1
    %p194 = por %p192, %p193
    %p196 = scmp.ne.s32.totalorder %s179, %s195
    %p197 = scmp.eq.s32.totalorder %s19, 0
    %p198 = por %p196, %p197
    %p199 = scmp.le.s32.totalorder 1, %s13
    %p200 = scmp.lt.s32.totalorder %s13, 3
    %p201 = pnand %p199, %p200
    %p202 = pneg %p201
    // Predicated region
    $region9: #{forward.2} parent=5 // pred_check
      _
    $region10: #{forward.2} parent=5 // pred_check_branch
      %204 = sbr.rel (%p201) target = $region12
    $region11: #{forward.2} parent=5 // pred_region
      %s205 = ssub.s32 %s13, 1
      // Predicated region
      $region13: #{forward.2} parent=11 // pred_check
        %p206 = pneg %p60
      $region14: #{forward.2} parent=11 // pred_check_branch
        %208 = sbr.rel (%p206) target = $region16
      $region15: #{forward.2} parent=11 // pred_region
        _
      $region16: #{forward.2} parent=11 // pred_fallthru
        _
      // Predicated region
      $region17: #{forward.2} parent=11 // pred_check
        %p209 = pneg %p81
      $region18: #{forward.2} parent=11 // pred_check_branch
        %211 = sbr.rel (%p209) target = $region20
      $region19: #{forward.2} parent=11 // pred_region
        _
      $region20: #{forward.2} parent=11 // pred_fallthru
        _
      // Predicated region
      $region21: #{forward.2} parent=11 // pred_check
        %p212 = pneg %p102
      $region22: #{forward.2} parent=11 // pred_check_branch
        %214 = sbr.rel (%p212) target = $region24
      $region23: #{forward.2} parent=11 // pred_region
        _
      $region24: #{forward.2} parent=11 // pred_fallthru
        _
      // Predicated region
      $region25: #{forward.2} parent=11 // pred_check
        %p215 = pneg %p123
      $region26: #{forward.2} parent=11 // pred_check_branch
        %217 = sbr.rel (%p215) target = $region28
      $region27: #{forward.2} parent=11 // pred_region
        _
      $region28: #{forward.2} parent=11 // pred_fallthru
        _
      // Predicated region
      $region29: #{forward.2} parent=11 // pred_check
        %p218 = pneg %p144
      $region30: #{forward.2} parent=11 // pred_check_branch
        %220 = sbr.rel (%p218) target = $region32
      $region31: #{forward.2} parent=11 // pred_region
        _
      $region32: #{forward.2} parent=11 // pred_fallthru
        _
      // Predicated region
      $region33: #{forward.2} parent=11 // pred_check
        %p221 = pneg %p165
      $region34: #{forward.2} parent=11 // pred_check_branch
        %223 = sbr.rel (%p221) target = $region36
      $region35: #{forward.2} parent=11 // pred_region
        _
      $region36: #{forward.2} parent=11 // pred_fallthru
        _
    $region12: #{forward.2} parent=5 // pred_fallthru
      _
    %p224 = scmp.lt.s32.totalorder %s13, 2
    // Predicated region
    $region37: #{forward.2} parent=5 // pred_check
      %p225 = pneg %p224
    $region38: #{forward.2} parent=5 // pred_check_branch
      %227 = sbr.rel (%p225) target = $region40
    $region39: #{forward.2} parent=5 // pred_region
      // Predicated region
      $region41: #{forward.2} parent=39 // pred_check
        %p228 = pneg %p33
      $region42: #{forward.2} parent=39 // pred_check_branch
        %230 = sbr.rel (%p228) target = $region44
      $region43: #{forward.2} parent=39 // pred_region
        %p231 = scmp.lt.s32.totalorder %s13, 1
        %s232 = scalar_select %p231, %s13, 1
        %s233 = smul.addr %s232, 32
        %s234 = smul.addr %s233, 4
        %s235 = scalar_lea.vmem %s0, %s234
      $region44: #{forward.2} parent=39 // pred_fallthru
        _
    $region40: #{forward.2} parent=5 // pred_fallthru
      _
    %p236 = scmp.le.s32.totalorder 1, %s13
    %p237 = scmp.lt.s32.totalorder %s13, 3
    %p238 = pnand %p236, %p237
    %p239 = pneg %p238
    // Predicated region
    $region45: #{forward.2} parent=5 // pred_check
      _
    $region46: #{forward.2} parent=5 // pred_check_branch
      %241 = sbr.rel (%p238) target = $region48
    $region47: #{forward.2} parent=5 // pred_region
      %s242 = ssub.s32 %s13, 1
      %p243 = scmp.lt.s32.totalorder %s18, 1
      %s244 = scalar_select %p243, %s18, 1
      %s245 = smul.addr %s244, 32
      %s246 = smul.addr %s245, 4
      %s247 = scalar_lea.vmem %s0, %s246
      %p248 = pneg %p39
      %p249 = pneg %p36
      %p250 = pneg %p60
      %p251 = pneg %p57
      %p252 = pneg %p81
      %p253 = pneg %p78
      %p254 = pneg %p102
      %p255 = pneg %p99
      %p256 = pneg %p123
      %p257 = pneg %p120
      %p258 = pneg %p144
      %p259 = pneg %p141
      %p260 = pneg %p165
      %p261 = pneg %p162
      %p262 = pneg %p191
      %p263 = pneg %p188
      %p264 = scmp.lt.s32.totalorder %s18, 1
      %s265 = scalar_select %p264, %s18, 1
      %s266 = smul.addr %s265, 32
      %s267 = smul.addr %s266, 4
      %s268 = scalar_lea.vmem %s7, %s267
      %p269 = scmp.lt.s32.totalorder %s18, 1
      %s270 = scalar_select %p269, %s18, 1
      %s271 = smul.addr %s270, 32
      %s272 = smul.addr %s271, 4
      %s273 = scalar_lea.vmem %s0, %s272
      %p274 = scmp.lt.s32.totalorder %s18, 1
      %s275 = scalar_select %p274, %s18, 1
      %s276 = smul.addr %s275, 32
      %s277 = smul.addr %s276, 4
      %s278 = scalar_lea.vmem %s7, %s277
      %vm280 = vcmask 257024
      %281 = vst.msk [vmem:[#allocation2] sm:$0xf] %vm280, 0
      %282 = vst.msk [vmem:[#allocation2 + $0x4] sm:$0xf] %vm280, 0
      %vm283 = vcmask 253952
      %284 = vst.msk [vmem:[#allocation2 + $0x8] sm:$0x1] %vm283, 0
      %285 = vst.msk [vmem:[#allocation2 + $0xc] sm:$0xf] %vm280, 0
      %286 = vst.msk [vmem:[#allocation2 + $0x10] sm:$0xf] %vm280, 0
      %287 = vst.msk [vmem:[#allocation2 + $0x14] sm:$0x1] %vm283, 0
      %288 = vst.msk [vmem:[#allocation2 + $0x18] sm:$0xf] %vm280, 0
      %289 = vst.msk [vmem:[#allocation2 + $0x1c] sm:$0xf] %vm280, 0
      %290 = vst.msk [vmem:[#allocation2 + $0x20] sm:$0x1] %vm283, 0
      %291 = vst.msk [vmem:[#allocation2 + $0x24] sm:$0xf] %vm280, 0
      %292 = vst.msk [vmem:[#allocation2 + $0x28] sm:$0xf] %vm280, 0
      %293 = vst.msk [vmem:[#allocation2 + $0x2c] sm:$0x1] %vm283, 0
      %294 = vst.msk [vmem:[#allocation2 + $0x30] sm:$0xf] %vm280, 0
      %295 = vst.msk [vmem:[#allocation2 + $0x34] sm:$0xf] %vm280, 0
      %296 = vst.msk [vmem:[#allocation2 + $0x38] sm:$0x1] %vm283, 0
      %297 = vst.msk [vmem:[#allocation2 + $0x3c] sm:$0xf] %vm280, 0
      %298 = vst.msk [vmem:[#allocation2 + $0x40] sm:$0xf] %vm280, 0
      %299 = vst.msk [vmem:[#allocation2 + $0x44] sm:$0x1] %vm283, 0
      %300 = vst.msk [vmem:[#allocation2 + $0x48] sm:$0xf] %vm280, 0
      %301 = vst.msk [vmem:[#allocation2 + $0x4c] sm:$0xf] %vm280, 0
      %302 = vst.msk [vmem:[#allocation2 + $0x50] sm:$0x1] %vm283, 0
      %303 = vst.msk [vmem:[#allocation2 + $0x54] sm:$0xf] %vm280, 0
      %304 = vst.msk [vmem:[#allocation2 + $0x58] sm:$0xf] %vm280, 0
      %305 = vst.msk [vmem:[#allocation2 + $0x5c] sm:$0x1] %vm283, 0
      %306 = vst.msk [vmem:[#allocation2 + $0x60] sm:$0xf] %vm280, 0
      %307 = vst.msk [vmem:[#allocation2 + $0x64] sm:$0xf] %vm280, 0
      %308 = vst.msk [vmem:[#allocation2 + $0x68] sm:$0x1] %vm283, 0
      %309 = vst.msk [vmem:[#allocation2 + $0x6c] sm:$0xf] %vm280, 0
      %310 = vst.msk [vmem:[#allocation2 + $0x70] sm:$0xf] %vm280, 0
      %311 = vst.msk [vmem:[#allocation2 + $0x74] sm:$0x1] %vm283, 0
      %312 = vst.msk [vmem:[#allocation2 + $0x78] sm:$0xf] %vm280, 0
      %313 = vst.msk [vmem:[#allocation2 + $0x7c] sm:$0xf] %vm280, 0
      %314 = vst.msk [vmem:[#allocation2 + $0x80] sm:$0x1] %vm283, 0
      %315 = vst.msk [vmem:[#allocation2 + $0x84] sm:$0xf] %vm280, 0
      %316 = vst.msk [vmem:[#allocation2 + $0x88] sm:$0xf] %vm280, 0
      %317 = vst.msk [vmem:[#allocation2 + $0x8c] sm:$0x1] %vm283, 0
      %318 = vst.msk [vmem:[#allocation2 + $0x90] sm:$0xf] %vm280, 0
      %319 = vst.msk [vmem:[#allocation2 + $0x94] sm:$0xf] %vm280, 0
      %320 = vst.msk [vmem:[#allocation2 + $0x98] sm:$0x1] %vm283, 0
      %321 = vst.msk [vmem:[#allocation2 + $0x9c] sm:$0xf] %vm280, 0
      %322 = vst.msk [vmem:[#allocation2 + $0xa0] sm:$0xf] %vm280, 0
      %323 = vst.msk [vmem:[#allocation2 + $0xa4] sm:$0x1] %vm283, 0
      %324 = vst.msk [vmem:[#allocation2 + $0xa8] sm:$0xf] %vm280, 0
      %325 = vst.msk [vmem:[#allocation2 + $0xac] sm:$0xf] %vm280, 0
      %326 = vst.msk [vmem:[#allocation2 + $0xb0] sm:$0x1] %vm283, 0
      %327 = vst.msk [vmem:[#allocation2 + $0xb4] sm:$0xf] %vm280, 0
      %328 = vst.msk [vmem:[#allocation2 + $0xb8] sm:$0xf] %vm280, 0
      %329 = vst.msk [vmem:[#allocation2 + $0xbc] sm:$0x1] %vm283, 0
      %330 = vst.msk [vmem:[#allocation2 + $0xc0] sm:$0xf] %vm280, 0
      %331 = vst.msk [vmem:[#allocation2 + $0xc4] sm:$0xf] %vm280, 0
      %332 = vst.msk [vmem:[#allocation2 + $0xc8] sm:$0x1] %vm283, 0
      %333 = vst.msk [vmem:[#allocation2 + $0xcc] sm:$0xf] %vm280, 0
      %334 = vst.msk [vmem:[#allocation2 + $0xd0] sm:$0xf] %vm280, 0
      %335 = vst.msk [vmem:[#allocation2 + $0xd4] sm:$0x1] %vm283, 0
      %v336 = vld [vmem:[%s273] sm:$0xf]
      %v337 = vld [vmem:[%s273 + $0x4] sm:$0xf]
      %v338 = vld [vmem:[%s273 + $0x8] sm:$0xf]
      %v339 = vld [vmem:[%s273 + $0xc] sm:$0xf]
      %v340 = vld [vmem:[%s273 + $0x10] sm:$0xf]
      %v341 = vld [vmem:[%s273 + $0x14] sm:$0xf]
      %v342 = vld [vmem:[%s273 + $0x18] sm:$0xf]
      %v343 = vld [vmem:[%s273 + $0x1c] sm:$0xf]
      %v344 = vld [vmem:[%s273 + $0x20] sm:$0xf]
      %v345 = vld [vmem:[%s273 + $0x24] sm:$0xf]
      %v346 = vld [vmem:[%s273 + $0x28] sm:$0xf]
      %v347 = vld [vmem:[%s273 + $0x2c] sm:$0xf]
      %v348 = vld [vmem:[%s273 + $0x30] sm:$0xf]
      %v349 = vld [vmem:[%s273 + $0x34] sm:$0xf]
      %v350 = vld [vmem:[%s273 + $0x38] sm:$0xf]
      %v351 = vld [vmem:[%s273 + $0x3c] sm:$0xf]
      %v352 = vld [vmem:[%s273 + $0x40] sm:$0xf]
      %v353 = vld [vmem:[%s273 + $0x44] sm:$0xf]
      %v354 = vld [vmem:[%s273 + $0x48] sm:$0xf]
      %v355 = vld [vmem:[%s273 + $0x4c] sm:$0xf]
      %v356 = vld [vmem:[%s273 + $0x50] sm:$0xf]
      %v357 = vld [vmem:[%s273 + $0x54] sm:$0xf]
      %v358 = vld [vmem:[%s273 + $0x58] sm:$0xf]
      %v359 = vld [vmem:[%s273 + $0x5c] sm:$0xf]
      %v360 = vld [vmem:[%s273 + $0x60] sm:$0xf]
      %v361 = vld [vmem:[%s273 + $0x64] sm:$0xf]
      %v362 = vld [vmem:[%s273 + $0x68] sm:$0xf]
      %v363 = vld [vmem:[%s273 + $0x6c] sm:$0xf]
      %v364 = vld [vmem:[%s273 + $0x70] sm:$0xf]
      %v365 = vld [vmem:[%s273 + $0x74] sm:$0xf]
      %v366 = vld [vmem:[%s273 + $0x78] sm:$0xf]
      %v367 = vld [vmem:[%s273 + $0x7c] sm:$0xf]
      %vm368 = vsmask.f32 256
      %vm369 = vsmask.f32 4368
      %vm370 = vmor %vm368, %vm369
      %v372 = vshrl.u32 %v336, 16
      %v374 = vrot.slane %v372, 7
      %v375 = vshll.u32 %v336, 16
      %v377 = vor.u32 %v374, %v375
      %v378 = vrot.slane %v374, 4
      %v380 = vshrl.u32 %v337, 16
      %v382 = vrot.slane %v380, 7
      %v383 = vshll.u32 %v337, 16
      %v385 = vor.u32 %v382, %v383
      %v386 = vsel %vm370, %v378, %v385
      %v387 = vrot.slane %v382, 4
      %v389 = vshrl.u32 %v338, 16
      %v391 = vrot.slane %v389, 7
      %v392 = vshll.u32 %v338, 16
      %v394 = vor.u32 %v391, %v392
      %v395 = vrot.slane %v391, 4
      %v397 = vshrl.u32 %v339, 16
      %v399 = vrot.slane %v397, 7
      %v400 = vshll.u32 %v339, 16
      %v402 = vor.u32 %v399, %v400
      %v403 = vsel %vm370, %v395, %v402
      %v404 = vrot.slane %v399, 4
      %v406 = vshrl.u32 %v340, 16
      %v408 = vrot.slane %v406, 7
      %v409 = vshll.u32 %v340, 16
      %v411 = vor.u32 %v408, %v409
      %v412 = vrot.slane %v408, 4
      %v414 = vshrl.u32 %v341, 16
      %v416 = vrot.slane %v414, 7
      %v417 = vshll.u32 %v341, 16
      %v419 = vor.u32 %v416, %v417
      %v420 = vsel %vm370, %v412, %v419
      %v421 = vrot.slane %v416, 4
      %v423 = vshrl.u32 %v342, 16
      %v425 = vrot.slane %v423, 7
      %v426 = vshll.u32 %v342, 16
      %v428 = vor.u32 %v425, %v426
      %v429 = vrot.slane %v425, 4
      %v431 = vshrl.u32 %v343, 16
      %v433 = vrot.slane %v431, 7
      %v434 = vshll.u32 %v343, 16
      %v436 = vor.u32 %v433, %v434
      %v437 = vsel %vm370, %v429, %v436
      %v438 = vrot.slane %v433, 4
      %v440 = vshrl.u32 %v344, 16
      %v442 = vrot.slane %v440, 7
      %v443 = vshll.u32 %v344, 16
      %v445 = vor.u32 %v442, %v443
      %v446 = vrot.slane %v442, 4
      %v448 = vshrl.u32 %v345, 16
      %v450 = vrot.slane %v448, 7
      %v451 = vshll.u32 %v345, 16
      %v453 = vor.u32 %v450, %v451
      %v454 = vsel %vm370, %v446, %v453
      %v455 = vrot.slane %v450, 4
      %v457 = vshrl.u32 %v346, 16
      %v459 = vrot.slane %v457, 7
      %v460 = vshll.u32 %v346, 16
      %v462 = vor.u32 %v459, %v460
      %v463 = vrot.slane %v459, 4
      %v465 = vshrl.u32 %v347, 16
      %v467 = vrot.slane %v465, 7
      %v468 = vshll.u32 %v347, 16
      %v470 = vor.u32 %v467, %v468
      %v471 = vsel %vm370, %v463, %v470
      %v472 = vrot.slane %v467, 4
      %v474 = vshrl.u32 %v348, 16
      %v476 = vrot.slane %v474, 7
      %v477 = vshll.u32 %v348, 16
      %v479 = vor.u32 %v476, %v477
      %v480 = vrot.slane %v476, 4
      %v482 = vshrl.u32 %v349, 16
      %v484 = vrot.slane %v482, 7
      %v485 = vshll.u32 %v349, 16
      %v487 = vor.u32 %v484, %v485
      %v488 = vsel %vm370, %v480, %v487
      %v489 = vrot.slane %v484, 4
      %v491 = vshrl.u32 %v350, 16
      %v493 = vrot.slane %v491, 7
      %v494 = vshll.u32 %v350, 16
      %v496 = vor.u32 %v493, %v494
      %v497 = vrot.slane %v493, 4
      %v499 = vshrl.u32 %v351, 16
      %v501 = vrot.slane %v499, 7
      %v502 = vshll.u32 %v351, 16
      %v504 = vor.u32 %v501, %v502
      %v505 = vsel %vm370, %v497, %v504
      %v506 = vrot.slane %v501, 4
      %v508 = vshrl.u32 %v352, 16
      %v510 = vrot.slane %v508, 7
      %v511 = vshll.u32 %v352, 16
      %v513 = vor.u32 %v510, %v511
      %v514 = vrot.slane %v510, 4
      %v516 = vshrl.u32 %v353, 16
      %v518 = vrot.slane %v516, 7
      %v519 = vshll.u32 %v353, 16
      %v521 = vor.u32 %v518, %v519
      %v522 = vsel %vm370, %v514, %v521
      %v523 = vrot.slane %v518, 4
      %v525 = vshrl.u32 %v354, 16
      %v527 = vrot.slane %v525, 7
      %v528 = vshll.u32 %v354, 16
      %v530 = vor.u32 %v527, %v528
      %v531 = vrot.slane %v527, 4
      %v533 = vshrl.u32 %v355, 16
      %v535 = vrot.slane %v533, 7
      %v536 = vshll.u32 %v355, 16
      %v538 = vor.u32 %v535, %v536
      %v539 = vsel %vm370, %v531, %v538
      %v540 = vrot.slane %v535, 4
      %v542 = vshrl.u32 %v356, 16
      %v544 = vrot.slane %v542, 7
      %v545 = vshll.u32 %v356, 16
      %v547 = vor.u32 %v544, %v545
      %v548 = vrot.slane %v544, 4
      %v550 = vshrl.u32 %v357, 16
      %v552 = vrot.slane %v550, 7
      %v553 = vshll.u32 %v357, 16
      %v555 = vor.u32 %v552, %v553
      %v556 = vsel %vm370, %v548, %v555
      %v557 = vrot.slane %v552, 4
      %v559 = vshrl.u32 %v358, 16
      %v561 = vrot.slane %v559, 7
      %v562 = vshll.u32 %v358, 16
      %v564 = vor.u32 %v561, %v562
      %v565 = vrot.slane %v561, 4
      %v567 = vshrl.u32 %v359, 16
      %v569 = vrot.slane %v567, 7
      %v570 = vshll.u32 %v359, 16
      %v572 = vor.u32 %v569, %v570
      %v573 = vsel %vm370, %v565, %v572
      %v574 = vrot.slane %v569, 4
      %v576 = vshrl.u32 %v360, 16
      %v578 = vrot.slane %v576, 7
      %v579 = vshll.u32 %v360, 16
      %v581 = vor.u32 %v578, %v579
      %v582 = vrot.slane %v578, 4
      %v584 = vshrl.u32 %v361, 16
      %v586 = vrot.slane %v584, 7
      %v587 = vshll.u32 %v361, 16
      %v589 = vor.u32 %v586, %v587
      %v590 = vsel %vm370, %v582, %v589
      %v591 = vrot.slane %v586, 4
      %v593 = vshrl.u32 %v362, 16
      %v595 = vrot.slane %v593, 7
      %v596 = vshll.u32 %v362, 16
      %v598 = vor.u32 %v595, %v596
      %v599 = vrot.slane %v595, 4
      %v601 = vshrl.u32 %v363, 16
      %v603 = vrot.slane %v601, 7
      %v604 = vshll.u32 %v363, 16
      %v606 = vor.u32 %v603, %v604
      %v607 = vsel %vm370, %v599, %v606
      %v608 = vrot.slane %v603, 4
      %v610 = vshrl.u32 %v364, 16
      %v612 = vrot.slane %v610, 7
      %v613 = vshll.u32 %v364, 16
      %v615 = vor.u32 %v612, %v613
      %v616 = vrot.slane %v612, 4
      %v618 = vshrl.u32 %v365, 16
      %v620 = vrot.slane %v618, 7
      %v621 = vshll.u32 %v365, 16
      %v623 = vor.u32 %v620, %v621
      %v624 = vsel %vm370, %v616, %v623
      %v625 = vrot.slane %v620, 4
      %v627 = vshrl.u32 %v366, 16
      %v629 = vrot.slane %v627, 7
      %v630 = vshll.u32 %v366, 16
      %v632 = vor.u32 %v629, %v630
      %v633 = vrot.slane %v629, 4
      %v635 = vshrl.u32 %v367, 16
      %v637 = vrot.slane %v635, 7
      %v638 = vshll.u32 %v367, 16
      %v640 = vor.u32 %v637, %v638
      %v641 = vsel %vm370, %v633, %v640
      %v642 = vrot.slane %v637, 4
      %s691 = scalar_lea.vmem [#allocation2], 12
      %vm692 = vcmask 257024
      %vm693 = vsmask.f32 7938
      %vm694 = vmand %vm692, %vm693
      %v695 = vld [vmem:[%s691] sm:$0xf]
      %v696 = vsel %vm694, %v377, %v695
      %697 = vst [vmem:[%s691] sm:$0xf] %v696
      %698 = vst.msk [vmem:[%s691 + $0x4] sm:$0xf] %vm280, %v386
      %vm699 = vcmask 253952
      %vm700 = vmand %vm699, %vm368
      %v701 = vld [vmem:[%s691 + $0x8] sm:$0x1]
      %v702 = vsel %vm700, %v387, %v701
      %703 = vst [vmem:[%s691 + $0x8] sm:$0x1] %v702
      %v704 = vld [vmem:[%s691 + $0xc] sm:$0xf]
      %v705 = vsel %vm694, %v394, %v704
      %706 = vst [vmem:[%s691 + $0xc] sm:$0xf] %v705
      %707 = vst.msk [vmem:[%s691 + $0x10] sm:$0xf] %vm280, %v403
      %v708 = vld [vmem:[%s691 + $0x14] sm:$0x1]
      %v709 = vsel %vm700, %v404, %v708
      %710 = vst [vmem:[%s691 + $0x14] sm:$0x1] %v709
      %v711 = vld [vmem:[%s691 + $0x18] sm:$0xf]
      %v712 = vsel %vm694, %v411, %v711
      %713 = vst [vmem:[%s691 + $0x18] sm:$0xf] %v712
      %714 = vst.msk [vmem:[%s691 + $0x1c] sm:$0xf] %vm280, %v420
      %v715 = vld [vmem:[%s691 + $0x20] sm:$0x1]
      %v716 = vsel %vm700, %v421, %v715
      %717 = vst [vmem:[%s691 + $0x20] sm:$0x1] %v716
      %v718 = vld [vmem:[%s691 + $0x24] sm:$0xf]
      %v719 = vsel %vm694, %v428, %v718
      %720 = vst [vmem:[%s691 + $0x24] sm:$0xf] %v719
      %721 = vst.msk [vmem:[%s691 + $0x28] sm:$0xf] %vm280, %v437
      %v722 = vld [vmem:[%s691 + $0x2c] sm:$0x1]
      %v723 = vsel %vm700, %v438, %v722
      %724 = vst [vmem:[%s691 + $0x2c] sm:$0x1] %v723
      %v725 = vld [vmem:[%s691 + $0x30] sm:$0xf]
      %v726 = vsel %vm694, %v445, %v725
      %727 = vst [vmem:[%s691 + $0x30] sm:$0xf] %v726
      %728 = vst.msk [vmem:[%s691 + $0x34] sm:$0xf] %vm280, %v454
      %v729 = vld [vmem:[%s691 + $0x38] sm:$0x1]
      %v730 = vsel %vm700, %v455, %v729
      %731 = vst [vmem:[%s691 + $0x38] sm:$0x1] %v730
      %v732 = vld [vmem:[%s691 + $0x3c] sm:$0xf]
      %v733 = vsel %vm694, %v462, %v732
      %734 = vst [vmem:[%s691 + $0x3c] sm:$0xf] %v733
      %735 = vst.msk [vmem:[%s691 + $0x40] sm:$0xf] %vm280, %v471
      %v736 = vld [vmem:[%s691 + $0x44] sm:$0x1]
      %v737 = vsel %vm700, %v472, %v736
      %738 = vst [vmem:[%s691 + $0x44] sm:$0x1] %v737
      %v739 = vld [vmem:[%s691 + $0x48] sm:$0xf]
      %v740 = vsel %vm694, %v479, %v739
      %741 = vst [vmem:[%s691 + $0x48] sm:$0xf] %v740
      %742 = vst.msk [vmem:[%s691 + $0x4c] sm:$0xf] %vm280, %v488
      %v743 = vld [vmem:[%s691 + $0x50] sm:$0x1]
      %v744 = vsel %vm700, %v489, %v743
      %745 = vst [vmem:[%s691 + $0x50] sm:$0x1] %v744
      %v746 = vld [vmem:[%s691 + $0x54] sm:$0xf]
      %v747 = vsel %vm694, %v496, %v746
      %748 = vst [vmem:[%s691 + $0x54] sm:$0xf] %v747
      %749 = vst.msk [vmem:[%s691 + $0x58] sm:$0xf] %vm280, %v505
      %v750 = vld [vmem:[%s691 + $0x5c] sm:$0x1]
      %v751 = vsel %vm700, %v506, %v750
      %752 = vst [vmem:[%s691 + $0x5c] sm:$0x1] %v751
      %v753 = vld [vmem:[%s691 + $0x60] sm:$0xf]
      %v754 = vsel %vm694, %v513, %v753
      %755 = vst [vmem:[%s691 + $0x60] sm:$0xf] %v754
      %756 = vst.msk [vmem:[%s691 + $0x64] sm:$0xf] %vm280, %v522
      %v757 = vld [vmem:[%s691 + $0x68] sm:$0x1]
      %v758 = vsel %vm700, %v523, %v757
      %759 = vst [vmem:[%s691 + $0x68] sm:$0x1] %v758
      %v760 = vld [vmem:[%s691 + $0x6c] sm:$0xf]
      %v761 = vsel %vm694, %v530, %v760
      %762 = vst [vmem:[%s691 + $0x6c] sm:$0xf] %v761
      %763 = vst.msk [vmem:[%s691 + $0x70] sm:$0xf] %vm280, %v539
      %v764 = vld [vmem:[%s691 + $0x74] sm:$0x1]
      %v765 = vsel %vm700, %v540, %v764
      %766 = vst [vmem:[%s691 + $0x74] sm:$0x1] %v765
      %v767 = vld [vmem:[%s691 + $0x78] sm:$0xf]
      %v768 = vsel %vm694, %v547, %v767
      %769 = vst [vmem:[%s691 + $0x78] sm:$0xf] %v768
      %770 = vst.msk [vmem:[%s691 + $0x7c] sm:$0xf] %vm280, %v556
      %v771 = vld [vmem:[%s691 + $0x80] sm:$0x1]
      %v772 = vsel %vm700, %v557, %v771
      %773 = vst [vmem:[%s691 + $0x80] sm:$0x1] %v772
      %v774 = vld [vmem:[%s691 + $0x84] sm:$0xf]
      %v775 = vsel %vm694, %v564, %v774
      %776 = vst [vmem:[%s691 + $0x84] sm:$0xf] %v775
      %777 = vst.msk [vmem:[%s691 + $0x88] sm:$0xf] %vm280, %v573
      %v778 = vld [vmem:[%s691 + $0x8c] sm:$0x1]
      %v779 = vsel %vm700, %v574, %v778
      %780 = vst [vmem:[%s691 + $0x8c] sm:$0x1] %v779
      %v781 = vld [vmem:[%s691 + $0x90] sm:$0xf]
      %v782 = vsel %vm694, %v581, %v781
      %783 = vst [vmem:[%s691 + $0x90] sm:$0xf] %v782
      %784 = vst.msk [vmem:[%s691 + $0x94] sm:$0xf] %vm280, %v590
      %v785 = vld [vmem:[%s691 + $0x98] sm:$0x1]
      %v786 = vsel %vm700, %v591, %v785
      %787 = vst [vmem:[%s691 + $0x98] sm:$0x1] %v786
      %v788 = vld [vmem:[%s691 + $0x9c] sm:$0xf]
      %v789 = vsel %vm694, %v598, %v788
      %790 = vst [vmem:[%s691 + $0x9c] sm:$0xf] %v789
      %791 = vst.msk [vmem:[%s691 + $0xa0] sm:$0xf] %vm280, %v607
      %v792 = vld [vmem:[%s691 + $0xa4] sm:$0x1]
      %v793 = vsel %vm700, %v608, %v792
      %794 = vst [vmem:[%s691 + $0xa4] sm:$0x1] %v793
      %v795 = vld [vmem:[%s691 + $0xa8] sm:$0xf]
      %v796 = vsel %vm694, %v615, %v795
      %797 = vst [vmem:[%s691 + $0xa8] sm:$0xf] %v796
      %798 = vst.msk [vmem:[%s691 + $0xac] sm:$0xf] %vm280, %v624
      %v799 = vld [vmem:[%s691 + $0xb0] sm:$0x1]
      %v800 = vsel %vm700, %v625, %v799
      %801 = vst [vmem:[%s691 + $0xb0] sm:$0x1] %v800
      %v802 = vld [vmem:[%s691 + $0xb4] sm:$0xf]
      %v803 = vsel %vm694, %v632, %v802
      %804 = vst [vmem:[%s691 + $0xb4] sm:$0xf] %v803
      %805 = vst.msk [vmem:[%s691 + $0xb8] sm:$0xf] %vm280, %v641
      %v806 = vld [vmem:[%s691 + $0xbc] sm:$0x1]
      %v807 = vsel %vm700, %v642, %v806
      %808 = vst [vmem:[%s691 + $0xbc] sm:$0x1] %v807
      %v809 = vld [vmem:[#allocation2] sm:$0xf]
      %v810 = vld [vmem:[#allocation2 + $0x4] sm:$0xf]
      %v811 = vld [vmem:[#allocation2 + $0xc] sm:$0xf]
      %v812 = vld [vmem:[#allocation2 + $0x10] sm:$0xf]
      %v813 = vld [vmem:[#allocation2 + $0x18] sm:$0xf]
      %v814 = vld [vmem:[#allocation2 + $0x1c] sm:$0xf]
      %v815 = vld [vmem:[#allocation2 + $0x24] sm:$0xf]
      %v816 = vld [vmem:[#allocation2 + $0x28] sm:$0xf]
      %v817 = vld [vmem:[#allocation2 + $0x30] sm:$0xf]
      %v818 = vld [vmem:[#allocation2 + $0x34] sm:$0xf]
      %v819 = vld [vmem:[#allocation2 + $0x3c] sm:$0xf]
      %v820 = vld [vmem:[#allocation2 + $0x40] sm:$0xf]
      %v821 = vld [vmem:[#allocation2 + $0x48] sm:$0xf]
      %v822 = vld [vmem:[#allocation2 + $0x4c] sm:$0xf]
      %v823 = vld [vmem:[#allocation2 + $0x54] sm:$0xf]
      %v824 = vld [vmem:[#allocation2 + $0x58] sm:$0xf]
      %v825 = vld [vmem:[#allocation2 + $0x60] sm:$0xf]
      %v826 = vld [vmem:[#allocation2 + $0x64] sm:$0xf]
      %v827 = vld [vmem:[#allocation2 + $0x6c] sm:$0xf]
      %v828 = vld [vmem:[#allocation2 + $0x70] sm:$0xf]
      %v829 = vld [vmem:[#allocation2 + $0x78] sm:$0xf]
      %v830 = vld [vmem:[#allocation2 + $0x7c] sm:$0xf]
      %v831 = vld [vmem:[#allocation2 + $0x84] sm:$0xf]
      %v832 = vld [vmem:[#allocation2 + $0x88] sm:$0xf]
      %v833 = vld [vmem:[#allocation2 + $0x90] sm:$0xf]
      %v834 = vld [vmem:[#allocation2 + $0x94] sm:$0xf]
      %v835 = vld [vmem:[#allocation2 + $0x9c] sm:$0xf]
      %v836 = vld [vmem:[#allocation2 + $0xa0] sm:$0xf]
      %v837 = vld [vmem:[#allocation2 + $0xa8] sm:$0xf]
      %v838 = vld [vmem:[#allocation2 + $0xac] sm:$0xf]
      %v839 = vld [vmem:[#allocation2 + $0xb4] sm:$0xf]
      %v840 = vld [vmem:[#allocation2 + $0xb8] sm:$0xf]
      %v841 = vld [vmem:[#allocation2 + $0x8] sm:$0x1]
      %v842 = vld [vmem:[#allocation2 + $0x14] sm:$0x1]
      %v843 = vld [vmem:[#allocation2 + $0x20] sm:$0x1]
      %v844 = vld [vmem:[#allocation2 + $0x2c] sm:$0x1]
      %v845 = vld [vmem:[#allocation2 + $0x38] sm:$0x1]
      %v846 = vld [vmem:[#allocation2 + $0x44] sm:$0x1]
      %v847 = vld [vmem:[#allocation2 + $0x50] sm:$0x1]
      %v848 = vld [vmem:[#allocation2 + $0x5c] sm:$0x1]
      %v849 = vld [vmem:[#allocation2 + $0x68] sm:$0x1]
      %v850 = vld [vmem:[#allocation2 + $0x74] sm:$0x1]
      %v851 = vld [vmem:[#allocation2 + $0x80] sm:$0x1]
      %v852 = vld [vmem:[#allocation2 + $0x8c] sm:$0x1]
      %v853 = vld [vmem:[#allocation2 + $0x98] sm:$0x1]
      %v854 = vld [vmem:[#allocation2 + $0xa4] sm:$0x1]
      %v855 = vld [vmem:[#allocation2 + $0xb0] sm:$0x1]
      %v856 = vld [vmem:[#allocation2 + $0xbc] sm:$0x1]
      %v857 = vld [vmem:[#allocation2] sm:$0xe]
      %v858 = vld [vmem:[#allocation2 + $0xc] sm:$0xe]
      %v859 = vld [vmem:[#allocation2 + $0x18] sm:$0xe]
      %v860 = vld [vmem:[#allocation2 + $0x24] sm:$0xe]
      %v861 = vld [vmem:[#allocation2 + $0x30] sm:$0xe]
      %v862 = vld [vmem:[#allocation2 + $0x3c] sm:$0xe]
      %v863 = vld [vmem:[#allocation2 + $0x48] sm:$0xe]
      %v864 = vld [vmem:[#allocation2 + $0x54] sm:$0xe]
      %v865 = vld [vmem:[#allocation2 + $0x60] sm:$0xe]
      %v866 = vld [vmem:[#allocation2 + $0x6c] sm:$0xe]
      %v867 = vld [vmem:[#allocation2 + $0x78] sm:$0xe]
      %v868 = vld [vmem:[#allocation2 + $0x84] sm:$0xe]
      %v869 = vld [vmem:[#allocation2 + $0x90] sm:$0xe]
      %v870 = vld [vmem:[#allocation2 + $0x9c] sm:$0xe]
      %v871 = vld [vmem:[#allocation2 + $0xa8] sm:$0xe]
      %v872 = vld [vmem:[#allocation2 + $0xb4] sm:$0xe]
      %v873 = vld [vmem:[%s691] sm:$0xf]
      %v874 = vld [vmem:[%s691 + $0x4] sm:$0xf]
      %v875 = vld [vmem:[%s691 + $0xc] sm:$0xf]
      %v876 = vld [vmem:[%s691 + $0x10] sm:$0xf]
      %v877 = vld [vmem:[%s691 + $0x18] sm:$0xf]
      %v878 = vld [vmem:[%s691 + $0x1c] sm:$0xf]
      %v879 = vld [vmem:[%s691 + $0x24] sm:$0xf]
      %v880 = vld [vmem:[%s691 + $0x28] sm:$0xf]
      %v881 = vld [vmem:[%s691 + $0x30] sm:$0xf]
      %v882 = vld [vmem:[%s691 + $0x34] sm:$0xf]
      %v883 = vld [vmem:[%s691 + $0x3c] sm:$0xf]
      %v884 = vld [vmem:[%s691 + $0x40] sm:$0xf]
      %v885 = vld [vmem:[%s691 + $0x48] sm:$0xf]
      %v886 = vld [vmem:[%s691 + $0x4c] sm:$0xf]
      %v887 = vld [vmem:[%s691 + $0x54] sm:$0xf]
      %v888 = vld [vmem:[%s691 + $0x58] sm:$0xf]
      %v889 = vld [vmem:[%s691 + $0x60] sm:$0xf]
      %v890 = vld [vmem:[%s691 + $0x64] sm:$0xf]
      %v891 = vld [vmem:[%s691 + $0x6c] sm:$0xf]
      %v892 = vld [vmem:[%s691 + $0x70] sm:$0xf]
      %v893 = vld [vmem:[%s691 + $0x78] sm:$0xf]
      %v894 = vld [vmem:[%s691 + $0x7c] sm:$0xf]
      %v895 = vld [vmem:[%s691 + $0x84] sm:$0xf]
      %v896 = vld [vmem:[%s691 + $0x88] sm:$0xf]
      %v897 = vld [vmem:[%s691 + $0x90] sm:$0xf]
      %v898 = vld [vmem:[%s691 + $0x94] sm:$0xf]
      %v899 = vld [vmem:[%s691 + $0x9c] sm:$0xf]
      %v900 = vld [vmem:[%s691 + $0xa0] sm:$0xf]
      %v901 = vld [vmem:[%s691 + $0xa8] sm:$0xf]
      %v902 = vld [vmem:[%s691 + $0xac] sm:$0xf]
      %v903 = vld [vmem:[%s691 + $0xb4] sm:$0xf]
      %v904 = vld [vmem:[%s691 + $0xb8] sm:$0xf]
      %v905 = vld [vmem:[%s691 + $0x8] sm:$0x1]
      %v906 = vld [vmem:[%s691 + $0x14] sm:$0x1]
      %v907 = vld [vmem:[%s691 + $0x20] sm:$0x1]
      %v908 = vld [vmem:[%s691 + $0x2c] sm:$0x1]
      %v909 = vld [vmem:[%s691 + $0x38] sm:$0x1]
      %v910 = vld [vmem:[%s691 + $0x44] sm:$0x1]
      %v911 = vld [vmem:[%s691 + $0x50] sm:$0x1]
      %v912 = vld [vmem:[%s691 + $0x5c] sm:$0x1]
      %v913 = vld [vmem:[%s691 + $0x68] sm:$0x1]
      %v914 = vld [vmem:[%s691 + $0x74] sm:$0x1]
      %v915 = vld [vmem:[%s691 + $0x80] sm:$0x1]
      %v916 = vld [vmem:[%s691 + $0x8c] sm:$0x1]
      %v917 = vld [vmem:[%s691 + $0x98] sm:$0x1]
      %v918 = vld [vmem:[%s691 + $0xa4] sm:$0x1]
      %v919 = vld [vmem:[%s691 + $0xb0] sm:$0x1]
      %v920 = vld [vmem:[%s691 + $0xbc] sm:$0x1]
      %v921 = vld [vmem:[%s691] sm:$0xe]
      %v922 = vld [vmem:[%s691 + $0xc] sm:$0xe]
      %v923 = vld [vmem:[%s691 + $0x18] sm:$0xe]
      %v924 = vld [vmem:[%s691 + $0x24] sm:$0xe]
      %v925 = vld [vmem:[%s691 + $0x30] sm:$0xe]
      %v926 = vld [vmem:[%s691 + $0x3c] sm:$0xe]
      %v927 = vld [vmem:[%s691 + $0x48] sm:$0xe]
      %v928 = vld [vmem:[%s691 + $0x54] sm:$0xe]
      %v929 = vld [vmem:[%s691 + $0x60] sm:$0xe]
      %v930 = vld [vmem:[%s691 + $0x6c] sm:$0xe]
      %v931 = vld [vmem:[%s691 + $0x78] sm:$0xe]
      %v932 = vld [vmem:[%s691 + $0x84] sm:$0xe]
      %v933 = vld [vmem:[%s691 + $0x90] sm:$0xe]
      %v934 = vld [vmem:[%s691 + $0x9c] sm:$0xe]
      %v935 = vld [vmem:[%s691 + $0xa8] sm:$0xe]
      %v936 = vld [vmem:[%s691 + $0xb4] sm:$0xe]
      %s937 = scalar_lea.vmem [#allocation2], 24
      %v938 = vld [vmem:[%s937] sm:$0xf]
      %v939 = vld [vmem:[%s937 + $0x4] sm:$0xf]
      %v940 = vld [vmem:[%s937 + $0xc] sm:$0xf]
      %v941 = vld [vmem:[%s937 + $0x10] sm:$0xf]
      %v942 = vld [vmem:[%s937 + $0x18] sm:$0xf]
      %v943 = vld [vmem:[%s937 + $0x1c] sm:$0xf]
      %v944 = vld [vmem:[%s937 + $0x24] sm:$0xf]
      %v945 = vld [vmem:[%s937 + $0x28] sm:$0xf]
      %v946 = vld [vmem:[%s937 + $0x30] sm:$0xf]
      %v947 = vld [vmem:[%s937 + $0x34] sm:$0xf]
      %v948 = vld [vmem:[%s937 + $0x3c] sm:$0xf]
      %v949 = vld [vmem:[%s937 + $0x40] sm:$0xf]
      %v950 = vld [vmem:[%s937 + $0x48] sm:$0xf]
      %v951 = vld [vmem:[%s937 + $0x4c] sm:$0xf]
      %v952 = vld [vmem:[%s937 + $0x54] sm:$0xf]
      %v953 = vld [vmem:[%s937 + $0x58] sm:$0xf]
      %v954 = vld [vmem:[%s937 + $0x60] sm:$0xf]
      %v955 = vld [vmem:[%s937 + $0x64] sm:$0xf]
      %v956 = vld [vmem:[%s937 + $0x6c] sm:$0xf]
      %v957 = vld [vmem:[%s937 + $0x70] sm:$0xf]
      %v958 = vld [vmem:[%s937 + $0x78] sm:$0xf]
      %v959 = vld [vmem:[%s937 + $0x7c] sm:$0xf]
      %v960 = vld [vmem:[%s937 + $0x84] sm:$0xf]
      %v961 = vld [vmem:[%s937 + $0x88] sm:$0xf]
      %v962 = vld [vmem:[%s937 + $0x90] sm:$0xf]
      %v963 = vld [vmem:[%s937 + $0x94] sm:$0xf]
      %v964 = vld [vmem:[%s937 + $0x9c] sm:$0xf]
      %v965 = vld [vmem:[%s937 + $0xa0] sm:$0xf]
      %v966 = vld [vmem:[%s937 + $0xa8] sm:$0xf]
      %v967 = vld [vmem:[%s937 + $0xac] sm:$0xf]
      %v968 = vld [vmem:[%s937 + $0xb4] sm:$0xf]
      %v969 = vld [vmem:[%s937 + $0xb8] sm:$0xf]
      %v970 = vld [vmem:[%s937 + $0x8] sm:$0x1]
      %v971 = vld [vmem:[%s937 + $0x14] sm:$0x1]
      %v972 = vld [vmem:[%s937 + $0x20] sm:$0x1]
      %v973 = vld [vmem:[%s937 + $0x2c] sm:$0x1]
      %v974 = vld [vmem:[%s937 + $0x38] sm:$0x1]
      %v975 = vld [vmem:[%s937 + $0x44] sm:$0x1]
      %v976 = vld [vmem:[%s937 + $0x50] sm:$0x1]
      %v977 = vld [vmem:[%s937 + $0x5c] sm:$0x1]
      %v978 = vld [vmem:[%s937 + $0x68] sm:$0x1]
      %v979 = vld [vmem:[%s937 + $0x74] sm:$0x1]
      %v980 = vld [vmem:[%s937 + $0x80] sm:$0x1]
      %v981 = vld [vmem:[%s937 + $0x8c] sm:$0x1]
      %v982 = vld [vmem:[%s937 + $0x98] sm:$0x1]
      %v983 = vld [vmem:[%s937 + $0xa4] sm:$0x1]
      %v984 = vld [vmem:[%s937 + $0xb0] sm:$0x1]
      %v985 = vld [vmem:[%s937 + $0xbc] sm:$0x1]
      %v986 = vld [vmem:[%s937] sm:$0xe]
      %v987 = vld [vmem:[%s937 + $0xc] sm:$0xe]
      %v988 = vld [vmem:[%s937 + $0x18] sm:$0xe]
      %v989 = vld [vmem:[%s937 + $0x24] sm:$0xe]
      %v990 = vld [vmem:[%s937 + $0x30] sm:$0xe]
      %v991 = vld [vmem:[%s937 + $0x3c] sm:$0xe]
      %v992 = vld [vmem:[%s937 + $0x48] sm:$0xe]
      %v993 = vld [vmem:[%s937 + $0x54] sm:$0xe]
      %v994 = vld [vmem:[%s937 + $0x60] sm:$0xe]
      %v995 = vld [vmem:[%s937 + $0x6c] sm:$0xe]
      %v996 = vld [vmem:[%s937 + $0x78] sm:$0xe]
      %v997 = vld [vmem:[%s937 + $0x84] sm:$0xe]
      %v998 = vld [vmem:[%s937 + $0x90] sm:$0xe]
      %v999 = vld [vmem:[%s937 + $0x9c] sm:$0xe]
      %v1000 = vld [vmem:[%s937 + $0xa8] sm:$0xe]
      %v1001 = vld [vmem:[%s937 + $0xb4] sm:$0xe]
      %v1034 = vunpack.c.l.b16 %v809
      %v1035 = vunpack.c.l.b16 %v810
      %v1036 = vunpack.c.l.b16 %v811
      %v1037 = vunpack.c.l.b16 %v812
      %v1038 = vunpack.c.l.b16 %v813
      %v1039 = vunpack.c.l.b16 %v814
      %v1040 = vunpack.c.l.b16 %v815
      %v1041 = vunpack.c.l.b16 %v816
      %v1042 = vunpack.c.l.b16 %v817
      %v1043 = vunpack.c.l.b16 %v818
      %v1044 = vunpack.c.l.b16 %v819
      %v1045 = vunpack.c.l.b16 %v820
      %v1046 = vunpack.c.l.b16 %v821
      %v1047 = vunpack.c.l.b16 %v822
      %v1048 = vunpack.c.l.b16 %v823
      %v1049 = vunpack.c.l.b16 %v824
      %v1050 = vunpack.c.l.b16 %v825
      %v1051 = vunpack.c.l.b16 %v826
      %v1052 = vunpack.c.l.b16 %v827
      %v1053 = vunpack.c.l.b16 %v828
      %v1054 = vunpack.c.l.b16 %v829
      %v1055 = vunpack.c.l.b16 %v830
      %v1056 = vunpack.c.l.b16 %v831
      %v1057 = vunpack.c.l.b16 %v832
      %v1058 = vunpack.c.l.b16 %v833
      %v1059 = vunpack.c.l.b16 %v834
      %v1060 = vunpack.c.l.b16 %v835
      %v1061 = vunpack.c.l.b16 %v836
      %v1062 = vunpack.c.l.b16 %v837
      %v1063 = vunpack.c.l.b16 %v838
      %v1064 = vunpack.c.l.b16 %v839
      %v1065 = vunpack.c.l.b16 %v840
      %v1066 = vpack.c.b16 %v1035, %v1034
      %v1067 = vpack.c.b16 %v1037, %v1036
      %v1068 = vpack.c.b16 %v1039, %v1038
      %v1069 = vpack.c.b16 %v1041, %v1040
      %v1070 = vpack.c.b16 %v1043, %v1042
      %v1071 = vpack.c.b16 %v1045, %v1044
      %v1072 = vpack.c.b16 %v1047, %v1046
      %v1073 = vpack.c.b16 %v1049, %v1048
      %v1074 = vpack.c.b16 %v1051, %v1050
      %v1075 = vpack.c.b16 %v1053, %v1052
      %v1076 = vpack.c.b16 %v1055, %v1054
      %v1077 = vpack.c.b16 %v1057, %v1056
      %v1078 = vpack.c.b16 %v1059, %v1058
      %v1079 = vpack.c.b16 %v1061, %v1060
      %v1080 = vpack.c.b16 %v1063, %v1062
      %v1081 = vpack.c.b16 %v1065, %v1064
      %v1098 = vunpack.c.l.b16 %v841
      %v1099 = vunpack.c.l.b16 %v842
      %v1100 = vunpack.c.l.b16 %v843
      %v1101 = vunpack.c.l.b16 %v844
      %v1102 = vunpack.c.l.b16 %v845
      %v1103 = vunpack.c.l.b16 %v846
      %v1104 = vunpack.c.l.b16 %v847
      %v1105 = vunpack.c.l.b16 %v848
      %v1106 = vunpack.c.l.b16 %v849
      %v1107 = vunpack.c.l.b16 %v850
      %v1108 = vunpack.c.l.b16 %v851
      %v1109 = vunpack.c.l.b16 %v852
      %v1110 = vunpack.c.l.b16 %v853
      %v1111 = vunpack.c.l.b16 %v854
      %v1112 = vunpack.c.l.b16 %v855
      %v1113 = vunpack.c.l.b16 %v856
      %v1114 = vpack.c.b16 %v1098, %v1098
      %v1115 = vpack.c.b16 %v1099, %v1099
      %v1116 = vpack.c.b16 %v1100, %v1100
      %v1117 = vpack.c.b16 %v1101, %v1101
      %v1118 = vpack.c.b16 %v1102, %v1102
      %v1119 = vpack.c.b16 %v1103, %v1103
      %v1120 = vpack.c.b16 %v1104, %v1104
      %v1121 = vpack.c.b16 %v1105, %v1105
      %v1122 = vpack.c.b16 %v1106, %v1106
      %v1123 = vpack.c.b16 %v1107, %v1107
      %v1124 = vpack.c.b16 %v1108, %v1108
      %v1125 = vpack.c.b16 %v1109, %v1109
      %v1126 = vpack.c.b16 %v1110, %v1110
      %v1127 = vpack.c.b16 %v1111, %v1111
      %v1128 = vpack.c.b16 %v1112, %v1112
      %v1129 = vpack.c.b16 %v1113, %v1113
      %vm1130 = vsmask.f32 7424
      %v1132 = vshrl.u32 %v1066, 16
      %v1134 = vshll.u32 %v1066, 16
      %v1136 = vrot.slane %v1134, 1
      %v1137 = vor.u32 %v1132, %v1136
      %v1139 = vshll.u32 %v1114, 16
      %v1141 = vrot.slane %v1139, 1
      %v1142 = vsel %vm1130, %v1137, %v1141
      %v1144 = vshrl.u32 %v1067, 16
      %v1146 = vshll.u32 %v1067, 16
      %v1148 = vrot.slane %v1146, 1
      %v1149 = vor.u32 %v1144, %v1148
      %v1151 = vshll.u32 %v1115, 16
      %v1153 = vrot.slane %v1151, 1
      %v1154 = vsel %vm1130, %v1149, %v1153
      %v1156 = vshrl.u32 %v1068, 16
      %v1158 = vshll.u32 %v1068, 16
      %v1160 = vrot.slane %v1158, 1
      %v1161 = vor.u32 %v1156, %v1160
      %v1163 = vshll.u32 %v1116, 16
      %v1165 = vrot.slane %v1163, 1
      %v1166 = vsel %vm1130, %v1161, %v1165
      %v1168 = vshrl.u32 %v1069, 16
      %v1170 = vshll.u32 %v1069, 16
      %v1172 = vrot.slane %v1170, 1
      %v1173 = vor.u32 %v1168, %v1172
      %v1175 = vshll.u32 %v1117, 16
      %v1177 = vrot.slane %v1175, 1
      %v1178 = vsel %vm1130, %v1173, %v1177
      %v1180 = vshrl.u32 %v1070, 16
      %v1182 = vshll.u32 %v1070, 16
      %v1184 = vrot.slane %v1182, 1
      %v1185 = vor.u32 %v1180, %v1184
      %v1187 = vshll.u32 %v1118, 16
      %v1189 = vrot.slane %v1187, 1
      %v1190 = vsel %vm1130, %v1185, %v1189
      %v1192 = vshrl.u32 %v1071, 16
      %v1194 = vshll.u32 %v1071, 16
      %v1196 = vrot.slane %v1194, 1
      %v1197 = vor.u32 %v1192, %v1196
      %v1199 = vshll.u32 %v1119, 16
      %v1201 = vrot.slane %v1199, 1
      %v1202 = vsel %vm1130, %v1197, %v1201
      %v1204 = vshrl.u32 %v1072, 16
      %v1206 = vshll.u32 %v1072, 16
      %v1208 = vrot.slane %v1206, 1
      %v1209 = vor.u32 %v1204, %v1208
      %v1211 = vshll.u32 %v1120, 16
      %v1213 = vrot.slane %v1211, 1
      %v1214 = vsel %vm1130, %v1209, %v1213
      %v1216 = vshrl.u32 %v1073, 16
      %v1218 = vshll.u32 %v1073, 16
      %v1220 = vrot.slane %v1218, 1
      %v1221 = vor.u32 %v1216, %v1220
      %v1223 = vshll.u32 %v1121, 16
      %v1225 = vrot.slane %v1223, 1
      %v1226 = vsel %vm1130, %v1221, %v1225
      %v1228 = vshrl.u32 %v1074, 16
      %v1230 = vshll.u32 %v1074, 16
      %v1232 = vrot.slane %v1230, 1
      %v1233 = vor.u32 %v1228, %v1232
      %v1235 = vshll.u32 %v1122, 16
      %v1237 = vrot.slane %v1235, 1
      %v1238 = vsel %vm1130, %v1233, %v1237
      %v1240 = vshrl.u32 %v1075, 16
      %v1242 = vshll.u32 %v1075, 16
      %v1244 = vrot.slane %v1242, 1
      %v1245 = vor.u32 %v1240, %v1244
      %v1247 = vshll.u32 %v1123, 16
      %v1249 = vrot.slane %v1247, 1
      %v1250 = vsel %vm1130, %v1245, %v1249
      %v1252 = vshrl.u32 %v1076, 16
      %v1254 = vshll.u32 %v1076, 16
      %v1256 = vrot.slane %v1254, 1
      %v1257 = vor.u32 %v1252, %v1256
      %v1259 = vshll.u32 %v1124, 16
      %v1261 = vrot.slane %v1259, 1
      %v1262 = vsel %vm1130, %v1257, %v1261
      %v1264 = vshrl.u32 %v1077, 16
      %v1266 = vshll.u32 %v1077, 16
      %v1268 = vrot.slane %v1266, 1
      %v1269 = vor.u32 %v1264, %v1268
      %v1271 = vshll.u32 %v1125, 16
      %v1273 = vrot.slane %v1271, 1
      %v1274 = vsel %vm1130, %v1269, %v1273
      %v1276 = vshrl.u32 %v1078, 16
      %v1278 = vshll.u32 %v1078, 16
      %v1280 = vrot.slane %v1278, 1
      %v1281 = vor.u32 %v1276, %v1280
      %v1283 = vshll.u32 %v1126, 16
      %v1285 = vrot.slane %v1283, 1
      %v1286 = vsel %vm1130, %v1281, %v1285
      %v1288 = vshrl.u32 %v1079, 16
      %v1290 = vshll.u32 %v1079, 16
      %v1292 = vrot.slane %v1290, 1
      %v1293 = vor.u32 %v1288, %v1292
      %v1295 = vshll.u32 %v1127, 16
      %v1297 = vrot.slane %v1295, 1
      %v1298 = vsel %vm1130, %v1293, %v1297
      %v1300 = vshrl.u32 %v1080, 16
      %v1302 = vshll.u32 %v1080, 16
      %v1304 = vrot.slane %v1302, 1
      %v1305 = vor.u32 %v1300, %v1304
      %v1307 = vshll.u32 %v1128, 16
      %v1309 = vrot.slane %v1307, 1
      %v1310 = vsel %vm1130, %v1305, %v1309
      %v1312 = vshrl.u32 %v1081, 16
      %v1314 = vshll.u32 %v1081, 16
      %v1316 = vrot.slane %v1314, 1
      %v1317 = vor.u32 %v1312, %v1316
      %v1319 = vshll.u32 %v1129, 16
      %v1321 = vrot.slane %v1319, 1
      %v1322 = vsel %vm1130, %v1317, %v1321
      %1323 = vrot.lane.b32.xlu0 %v1142, 32
      %v1324 = vpop.permute.xlu0 %1323
      %1325 = vrot.lane.b32.xlu0 %v1154, 32
      %v1326 = vpop.permute.xlu0 %1325
      %1327 = vrot.lane.b32.xlu0 %v1166, 32
      %v1328 = vpop.permute.xlu0 %1327
      %1329 = vrot.lane.b32.xlu0 %v1178, 32
      %v1330 = vpop.permute.xlu0 %1329
      %1331 = vrot.lane.b32.xlu0 %v1190, 32
      %v1332 = vpop.permute.xlu0 %1331
      %1333 = vrot.lane.b32.xlu0 %v1202, 32
      %v1334 = vpop.permute.xlu0 %1333
      %1335 = vrot.lane.b32.xlu0 %v1214, 32
      %v1336 = vpop.permute.xlu0 %1335
      %1337 = vrot.lane.b32.xlu0 %v1226, 32
      %v1338 = vpop.permute.xlu0 %1337
      %1339 = vrot.lane.b32.xlu0 %v1238, 32
      %v1340 = vpop.permute.xlu0 %1339
      %1341 = vrot.lane.b32.xlu0 %v1250, 32
      %v1342 = vpop.permute.xlu0 %1341
      %1343 = vrot.lane.b32.xlu0 %v1262, 32
      %v1344 = vpop.permute.xlu0 %1343
      %1345 = vrot.lane.b32.xlu0 %v1274, 32
      %v1346 = vpop.permute.xlu0 %1345
      %1347 = vrot.lane.b32.xlu0 %v1286, 32
      %v1348 = vpop.permute.xlu0 %1347
      %1349 = vrot.lane.b32.xlu0 %v1298, 32
      %v1350 = vpop.permute.xlu0 %1349
      %1351 = vrot.lane.b32.xlu0 %v1310, 32
      %v1352 = vpop.permute.xlu0 %1351
      %1353 = vrot.lane.b32.xlu0 %v1322, 32
      %v1354 = vpop.permute.xlu0 %1353
      %v1371 = vunpack.c.l.b16 %v857
      %v1372 = vunpack.c.l.b16 %v858
      %v1373 = vunpack.c.l.b16 %v859
      %v1374 = vunpack.c.l.b16 %v860
      %v1375 = vunpack.c.l.b16 %v861
      %v1376 = vunpack.c.l.b16 %v862
      %v1377 = vunpack.c.l.b16 %v863
      %v1378 = vunpack.c.l.b16 %v864
      %v1379 = vunpack.c.l.b16 %v865
      %v1380 = vunpack.c.l.b16 %v866
      %v1381 = vunpack.c.l.b16 %v867
      %v1382 = vunpack.c.l.b16 %v868
      %v1383 = vunpack.c.l.b16 %v869
      %v1384 = vunpack.c.l.b16 %v870
      %v1385 = vunpack.c.l.b16 %v871
      %v1386 = vunpack.c.l.b16 %v872
      %v1387 = vpack.c.b16 %v1035, %v1371
      %v1388 = vpack.c.b16 %v1037, %v1372
      %v1389 = vpack.c.b16 %v1039, %v1373
      %v1390 = vpack.c.b16 %v1041, %v1374
      %v1391 = vpack.c.b16 %v1043, %v1375
      %v1392 = vpack.c.b16 %v1045, %v1376
      %v1393 = vpack.c.b16 %v1047, %v1377
      %v1394 = vpack.c.b16 %v1049, %v1378
      %v1395 = vpack.c.b16 %v1051, %v1379
      %v1396 = vpack.c.b16 %v1053, %v1380
      %v1397 = vpack.c.b16 %v1055, %v1381
      %v1398 = vpack.c.b16 %v1057, %v1382
      %v1399 = vpack.c.b16 %v1059, %v1383
      %v1400 = vpack.c.b16 %v1061, %v1384
      %v1401 = vpack.c.b16 %v1063, %v1385
      %v1402 = vpack.c.b16 %v1065, %v1386
      %vm1403 = vcmask 1046528
      %v1404 = vrot.slane %v1387, 1
      %v1405 = vrot.slane %v1114, 1
      %v1406 = vsel %vm1403, %v1404, %v1405
      %v1407 = vrot.slane %v1388, 1
      %v1408 = vrot.slane %v1115, 1
      %v1409 = vsel %vm1403, %v1407, %v1408
      %v1410 = vrot.slane %v1389, 1
      %v1411 = vrot.slane %v1116, 1
      %v1412 = vsel %vm1403, %v1410, %v1411
      %v1413 = vrot.slane %v1390, 1
      %v1414 = vrot.slane %v1117, 1
      %v1415 = vsel %vm1403, %v1413, %v1414
      %v1416 = vrot.slane %v1391, 1
      %v1417 = vrot.slane %v1118, 1
      %v1418 = vsel %vm1403, %v1416, %v1417
      %v1419 = vrot.slane %v1392, 1
      %v1420 = vrot.slane %v1119, 1
      %v1421 = vsel %vm1403, %v1419, %v1420
      %v1422 = vrot.slane %v1393, 1
      %v1423 = vrot.slane %v1120, 1
      %v1424 = vsel %vm1403, %v1422, %v1423
      %v1425 = vrot.slane %v1394, 1
      %v1426 = vrot.slane %v1121, 1
      %v1427 = vsel %vm1403, %v1425, %v1426
      %v1428 = vrot.slane %v1395, 1
      %v1429 = vrot.slane %v1122, 1
      %v1430 = vsel %vm1403, %v1428, %v1429
      %v1431 = vrot.slane %v1396, 1
      %v1432 = vrot.slane %v1123, 1
      %v1433 = vsel %vm1403, %v1431, %v1432
      %v1434 = vrot.slane %v1397, 1
      %v1435 = vrot.slane %v1124, 1
      %v1436 = vsel %vm1403, %v1434, %v1435
      %v1437 = vrot.slane %v1398, 1
      %v1438 = vrot.slane %v1125, 1
      %v1439 = vsel %vm1403, %v1437, %v1438
      %v1440 = vrot.slane %v1399, 1
      %v1441 = vrot.slane %v1126, 1
      %v1442 = vsel %vm1403, %v1440, %v1441
      %v1443 = vrot.slane %v1400, 1
      %v1444 = vrot.slane %v1127, 1
      %v1445 = vsel %vm1403, %v1443, %v1444
      %v1446 = vrot.slane %v1401, 1
      %v1447 = vrot.slane %v1128, 1
      %v1448 = vsel %vm1403, %v1446, %v1447
      %v1449 = vrot.slane %v1402, 1
      %v1450 = vrot.slane %v1129, 1
      %v1451 = vsel %vm1403, %v1449, %v1450
      %1452 = vrot.lane.b32.xlu0 %v1406, 64
      %v1453 = vpop.permute.xlu0 %1452
      %1454 = vrot.lane.b32.xlu0 %v1409, 64
      %v1455 = vpop.permute.xlu0 %1454
      %1456 = vrot.lane.b32.xlu0 %v1412, 64
      %v1457 = vpop.permute.xlu0 %1456
      %1458 = vrot.lane.b32.xlu0 %v1415, 64
      %v1459 = vpop.permute.xlu0 %1458
      %1460 = vrot.lane.b32.xlu0 %v1418, 64
      %v1461 = vpop.permute.xlu0 %1460
      %1462 = vrot.lane.b32.xlu0 %v1421, 64
      %v1463 = vpop.permute.xlu0 %1462
      %1464 = vrot.lane.b32.xlu0 %v1424, 64
      %v1465 = vpop.permute.xlu0 %1464
      %1466 = vrot.lane.b32.xlu0 %v1427, 64
      %v1467 = vpop.permute.xlu0 %1466
      %1468 = vrot.lane.b32.xlu0 %v1430, 64
      %v1469 = vpop.permute.xlu0 %1468
      %1470 = vrot.lane.b32.xlu0 %v1433, 64
      %v1471 = vpop.permute.xlu0 %1470
      %1472 = vrot.lane.b32.xlu0 %v1436, 64
      %v1473 = vpop.permute.xlu0 %1472
      %1474 = vrot.lane.b32.xlu0 %v1439, 64
      %v1475 = vpop.permute.xlu0 %1474
      %1476 = vrot.lane.b32.xlu0 %v1442, 64
      %v1477 = vpop.permute.xlu0 %1476
      %1478 = vrot.lane.b32.xlu0 %v1445, 64
      %v1479 = vpop.permute.xlu0 %1478
      %1480 = vrot.lane.b32.xlu0 %v1448, 64
      %v1481 = vpop.permute.xlu0 %1480
      %1482 = vrot.lane.b32.xlu0 %v1451, 64
      %v1483 = vpop.permute.xlu0 %1482
      %v1516 = vunpack.c.l.b16 %v873
      %v1517 = vunpack.c.l.b16 %v874
      %v1518 = vunpack.c.l.b16 %v875
      %v1519 = vunpack.c.l.b16 %v876
      %v1520 = vunpack.c.l.b16 %v877
      %v1521 = vunpack.c.l.b16 %v878
      %v1522 = vunpack.c.l.b16 %v879
      %v1523 = vunpack.c.l.b16 %v880
      %v1524 = vunpack.c.l.b16 %v881
      %v1525 = vunpack.c.l.b16 %v882
      %v1526 = vunpack.c.l.b16 %v883
      %v1527 = vunpack.c.l.b16 %v884
      %v1528 = vunpack.c.l.b16 %v885
      %v1529 = vunpack.c.l.b16 %v886
      %v1530 = vunpack.c.l.b16 %v887
      %v1531 = vunpack.c.l.b16 %v888
      %v1532 = vunpack.c.l.b16 %v889
      %v1533 = vunpack.c.l.b16 %v890
      %v1534 = vunpack.c.l.b16 %v891
      %v1535 = vunpack.c.l.b16 %v892
      %v1536 = vunpack.c.l.b16 %v893
      %v1537 = vunpack.c.l.b16 %v894
      %v1538 = vunpack.c.l.b16 %v895
      %v1539 = vunpack.c.l.b16 %v896
      %v1540 = vunpack.c.l.b16 %v897
      %v1541 = vunpack.c.l.b16 %v898
      %v1542 = vunpack.c.l.b16 %v899
      %v1543 = vunpack.c.l.b16 %v900
      %v1544 = vunpack.c.l.b16 %v901
      %v1545 = vunpack.c.l.b16 %v902
      %v1546 = vunpack.c.l.b16 %v903
      %v1547 = vunpack.c.l.b16 %v904
      %v1548 = vpack.c.b16 %v1517, %v1516
      %v1549 = vpack.c.b16 %v1519, %v1518
      %v1550 = vpack.c.b16 %v1521, %v1520
      %v1551 = vpack.c.b16 %v1523, %v1522
      %v1552 = vpack.c.b16 %v1525, %v1524
      %v1553 = vpack.c.b16 %v1527, %v1526
      %v1554 = vpack.c.b16 %v1529, %v1528
      %v1555 = vpack.c.b16 %v1531, %v1530
      %v1556 = vpack.c.b16 %v1533, %v1532
      %v1557 = vpack.c.b16 %v1535, %v1534
      %v1558 = vpack.c.b16 %v1537, %v1536
      %v1559 = vpack.c.b16 %v1539, %v1538
      %v1560 = vpack.c.b16 %v1541, %v1540
      %v1561 = vpack.c.b16 %v1543, %v1542
      %v1562 = vpack.c.b16 %v1545, %v1544
      %v1563 = vpack.c.b16 %v1547, %v1546
      %1564 = vrot.lane.b32.xlu0 %v1548, 96
      %v1565 = vpop.permute.xlu0 %1564
      %1566 = vrot.lane.b32.xlu0 %v1549, 96
      %v1567 = vpop.permute.xlu0 %1566
      %1568 = vrot.lane.b32.xlu0 %v1550, 96
      %v1569 = vpop.permute.xlu0 %1568
      %1570 = vrot.lane.b32.xlu0 %v1551, 96
      %v1571 = vpop.permute.xlu0 %1570
      %1572 = vrot.lane.b32.xlu0 %v1552, 96
      %v1573 = vpop.permute.xlu0 %1572
      %1574 = vrot.lane.b32.xlu0 %v1553, 96
      %v1575 = vpop.permute.xlu0 %1574
      %1576 = vrot.lane.b32.xlu0 %v1554, 96
      %v1577 = vpop.permute.xlu0 %1576
      %1578 = vrot.lane.b32.xlu0 %v1555, 96
      %v1579 = vpop.permute.xlu0 %1578
      %1580 = vrot.lane.b32.xlu0 %v1556, 96
      %v1581 = vpop.permute.xlu0 %1580
      %1582 = vrot.lane.b32.xlu0 %v1557, 96
      %v1583 = vpop.permute.xlu0 %1582
      %1584 = vrot.lane.b32.xlu0 %v1558, 96
      %v1585 = vpop.permute.xlu0 %1584
      %1586 = vrot.lane.b32.xlu0 %v1559, 96
      %v1587 = vpop.permute.xlu0 %1586
      %1588 = vrot.lane.b32.xlu0 %v1560, 96
      %v1589 = vpop.permute.xlu0 %1588
      %1590 = vrot.lane.b32.xlu0 %v1561, 96
      %v1591 = vpop.permute.xlu0 %1590
      %1592 = vrot.lane.b32.xlu0 %v1562, 96
      %v1593 = vpop.permute.xlu0 %1592
      %1594 = vrot.lane.b32.xlu0 %v1563, 96
      %v1595 = vpop.permute.xlu0 %1594
      %v1612 = vunpack.c.l.b16 %v905
      %v1613 = vunpack.c.l.b16 %v906
      %v1614 = vunpack.c.l.b16 %v907
      %v1615 = vunpack.c.l.b16 %v908
      %v1616 = vunpack.c.l.b16 %v909
      %v1617 = vunpack.c.l.b16 %v910
      %v1618 = vunpack.c.l.b16 %v911
      %v1619 = vunpack.c.l.b16 %v912
      %v1620 = vunpack.c.l.b16 %v913
      %v1621 = vunpack.c.l.b16 %v914
      %v1622 = vunpack.c.l.b16 %v915
      %v1623 = vunpack.c.l.b16 %v916
      %v1624 = vunpack.c.l.b16 %v917
      %v1625 = vunpack.c.l.b16 %v918
      %v1626 = vunpack.c.l.b16 %v919
      %v1627 = vunpack.c.l.b16 %v920
      %v1628 = vpack.c.b16 %v1612, %v1612
      %v1629 = vpack.c.b16 %v1613, %v1613
      %v1630 = vpack.c.b16 %v1614, %v1614
      %v1631 = vpack.c.b16 %v1615, %v1615
      %v1632 = vpack.c.b16 %v1616, %v1616
      %v1633 = vpack.c.b16 %v1617, %v1617
      %v1634 = vpack.c.b16 %v1618, %v1618
      %v1635 = vpack.c.b16 %v1619, %v1619
      %v1636 = vpack.c.b16 %v1620, %v1620
      %v1637 = vpack.c.b16 %v1621, %v1621
      %v1638 = vpack.c.b16 %v1622, %v1622
      %v1639 = vpack.c.b16 %v1623, %v1623
      %v1640 = vpack.c.b16 %v1624, %v1624
      %v1641 = vpack.c.b16 %v1625, %v1625
      %v1642 = vpack.c.b16 %v1626, %v1626
      %v1643 = vpack.c.b16 %v1627, %v1627
      %v1645 = vshrl.u32 %v1548, 16
      %v1647 = vshll.u32 %v1548, 16
      %v1649 = vrot.slane %v1647, 1
      %v1650 = vor.u32 %v1645, %v1649
      %v1652 = vshll.u32 %v1628, 16
      %v1654 = vrot.slane %v1652, 1
      %v1655 = vsel %vm1130, %v1650, %v1654
      %v1657 = vshrl.u32 %v1549, 16
      %v1659 = vshll.u32 %v1549, 16
      %v1661 = vrot.slane %v1659, 1
      %v1662 = vor.u32 %v1657, %v1661
      %v1664 = vshll.u32 %v1629, 16
      %v1666 = vrot.slane %v1664, 1
      %v1667 = vsel %vm1130, %v1662, %v1666
      %v1669 = vshrl.u32 %v1550, 16
      %v1671 = vshll.u32 %v1550, 16
      %v1673 = vrot.slane %v1671, 1
      %v1674 = vor.u32 %v1669, %v1673
      %v1676 = vshll.u32 %v1630, 16
      %v1678 = vrot.slane %v1676, 1
      %v1679 = vsel %vm1130, %v1674, %v1678
      %v1681 = vshrl.u32 %v1551, 16
      %v1683 = vshll.u32 %v1551, 16
      %v1685 = vrot.slane %v1683, 1
      %v1686 = vor.u32 %v1681, %v1685
      %v1688 = vshll.u32 %v1631, 16
      %v1690 = vrot.slane %v1688, 1
      %v1691 = vsel %vm1130, %v1686, %v1690
      %v1693 = vshrl.u32 %v1552, 16
      %v1695 = vshll.u32 %v1552, 16
      %v1697 = vrot.slane %v1695, 1
      %v1698 = vor.u32 %v1693, %v1697
      %v1700 = vshll.u32 %v1632, 16
      %v1702 = vrot.slane %v1700, 1
      %v1703 = vsel %vm1130, %v1698, %v1702
      %v1705 = vshrl.u32 %v1553, 16
      %v1707 = vshll.u32 %v1553, 16
      %v1709 = vrot.slane %v1707, 1
      %v1710 = vor.u32 %v1705, %v1709
      %v1712 = vshll.u32 %v1633, 16
      %v1714 = vrot.slane %v1712, 1
      %v1715 = vsel %vm1130, %v1710, %v1714
      %v1717 = vshrl.u32 %v1554, 16
      %v1719 = vshll.u32 %v1554, 16
      %v1721 = vrot.slane %v1719, 1
      %v1722 = vor.u32 %v1717, %v1721
      %v1724 = vshll.u32 %v1634, 16
      %v1726 = vrot.slane %v1724, 1
      %v1727 = vsel %vm1130, %v1722, %v1726
      %v1729 = vshrl.u32 %v1555, 16
      %v1731 = vshll.u32 %v1555, 16
      %v1733 = vrot.slane %v1731, 1
      %v1734 = vor.u32 %v1729, %v1733
      %v1736 = vshll.u32 %v1635, 16
      %v1738 = vrot.slane %v1736, 1
      %v1739 = vsel %vm1130, %v1734, %v1738
      %v1741 = vshrl.u32 %v1556, 16
      %v1743 = vshll.u32 %v1556, 16
      %v1745 = vrot.slane %v1743, 1
      %v1746 = vor.u32 %v1741, %v1745
      %v1748 = vshll.u32 %v1636, 16
      %v1750 = vrot.slane %v1748, 1
      %v1751 = vsel %vm1130, %v1746, %v1750
      %v1753 = vshrl.u32 %v1557, 16
      %v1755 = vshll.u32 %v1557, 16
      %v1757 = vrot.slane %v1755, 1
      %v1758 = vor.u32 %v1753, %v1757
      %v1760 = vshll.u32 %v1637, 16
      %v1762 = vrot.slane %v1760, 1
      %v1763 = vsel %vm1130, %v1758, %v1762
      %v1765 = vshrl.u32 %v1558, 16
      %v1767 = vshll.u32 %v1558, 16
      %v1769 = vrot.slane %v1767, 1
      %v1770 = vor.u32 %v1765, %v1769
      %v1772 = vshll.u32 %v1638, 16
      %v1774 = vrot.slane %v1772, 1
      %v1775 = vsel %vm1130, %v1770, %v1774
      %v1777 = vshrl.u32 %v1559, 16
      %v1779 = vshll.u32 %v1559, 16
      %v1781 = vrot.slane %v1779, 1
      %v1782 = vor.u32 %v1777, %v1781
      %v1784 = vshll.u32 %v1639, 16
      %v1786 = vrot.slane %v1784, 1
      %v1787 = vsel %vm1130, %v1782, %v1786
      %v1789 = vshrl.u32 %v1560, 16
      %v1791 = vshll.u32 %v1560, 16
      %v1793 = vrot.slane %v1791, 1
      %v1794 = vor.u32 %v1789, %v1793
      %v1796 = vshll.u32 %v1640, 16
      %v1798 = vrot.slane %v1796, 1
      %v1799 = vsel %vm1130, %v1794, %v1798
      %v1801 = vshrl.u32 %v1561, 16
      %v1803 = vshll.u32 %v1561, 16
      %v1805 = vrot.slane %v1803, 1
      %v1806 = vor.u32 %v1801, %v1805
      %v1808 = vshll.u32 %v1641, 16
      %v1810 = vrot.slane %v1808, 1
      %v1811 = vsel %vm1130, %v1806, %v1810
      %v1813 = vshrl.u32 %v1562, 16
      %v1815 = vshll.u32 %v1562, 16
      %v1817 = vrot.slane %v1815, 1
      %v1818 = vor.u32 %v1813, %v1817
      %v1820 = vshll.u32 %v1642, 16
      %v1822 = vrot.slane %v1820, 1
      %v1823 = vsel %vm1130, %v1818, %v1822
      %v1825 = vshrl.u32 %v1563, 16
      %v1827 = vshll.u32 %v1563, 16
      %v1829 = vrot.slane %v1827, 1
      %v1830 = vor.u32 %v1825, %v1829
      %v1832 = vshll.u32 %v1643, 16
      %v1834 = vrot.slane %v1832, 1
      %v1835 = vsel %vm1130, %v1830, %v1834
      %v1852 = vunpack.c.l.b16 %v921
      %v1853 = vunpack.c.l.b16 %v922
      %v1854 = vunpack.c.l.b16 %v923
      %v1855 = vunpack.c.l.b16 %v924
      %v1856 = vunpack.c.l.b16 %v925
      %v1857 = vunpack.c.l.b16 %v926
      %v1858 = vunpack.c.l.b16 %v927
      %v1859 = vunpack.c.l.b16 %v928
      %v1860 = vunpack.c.l.b16 %v929
      %v1861 = vunpack.c.l.b16 %v930
      %v1862 = vunpack.c.l.b16 %v931
      %v1863 = vunpack.c.l.b16 %v932
      %v1864 = vunpack.c.l.b16 %v933
      %v1865 = vunpack.c.l.b16 %v934
      %v1866 = vunpack.c.l.b16 %v935
      %v1867 = vunpack.c.l.b16 %v936
      %v1868 = vpack.c.b16 %v1517, %v1852
      %v1869 = vpack.c.b16 %v1519, %v1853
      %v1870 = vpack.c.b16 %v1521, %v1854
      %v1871 = vpack.c.b16 %v1523, %v1855
      %v1872 = vpack.c.b16 %v1525, %v1856
      %v1873 = vpack.c.b16 %v1527, %v1857
      %v1874 = vpack.c.b16 %v1529, %v1858
      %v1875 = vpack.c.b16 %v1531, %v1859
      %v1876 = vpack.c.b16 %v1533, %v1860
      %v1877 = vpack.c.b16 %v1535, %v1861
      %v1878 = vpack.c.b16 %v1537, %v1862
      %v1879 = vpack.c.b16 %v1539, %v1863
      %v1880 = vpack.c.b16 %v1541, %v1864
      %v1881 = vpack.c.b16 %v1543, %v1865
      %v1882 = vpack.c.b16 %v1545, %v1866
      %v1883 = vpack.c.b16 %v1547, %v1867
      %v1884 = vrot.slane %v1868, 1
      %v1885 = vrot.slane %v1628, 1
      %v1886 = vsel %vm1403, %v1884, %v1885
      %v1887 = vrot.slane %v1869, 1
      %v1888 = vrot.slane %v1629, 1
      %v1889 = vsel %vm1403, %v1887, %v1888
      %v1890 = vrot.slane %v1870, 1
      %v1891 = vrot.slane %v1630, 1
      %v1892 = vsel %vm1403, %v1890, %v1891
      %v1893 = vrot.slane %v1871, 1
      %v1894 = vrot.slane %v1631, 1
      %v1895 = vsel %vm1403, %v1893, %v1894
      %v1896 = vrot.slane %v1872, 1
      %v1897 = vrot.slane %v1632, 1
      %v1898 = vsel %vm1403, %v1896, %v1897
      %v1899 = vrot.slane %v1873, 1
      %v1900 = vrot.slane %v1633, 1
      %v1901 = vsel %vm1403, %v1899, %v1900
      %v1902 = vrot.slane %v1874, 1
      %v1903 = vrot.slane %v1634, 1
      %v1904 = vsel %vm1403, %v1902, %v1903
      %v1905 = vrot.slane %v1875, 1
      %v1906 = vrot.slane %v1635, 1
      %v1907 = vsel %vm1403, %v1905, %v1906
      %v1908 = vrot.slane %v1876, 1
      %v1909 = vrot.slane %v1636, 1
      %v1910 = vsel %vm1403, %v1908, %v1909
      %v1911 = vrot.slane %v1877, 1
      %v1912 = vrot.slane %v1637, 1
      %v1913 = vsel %vm1403, %v1911, %v1912
      %v1914 = vrot.slane %v1878, 1
      %v1915 = vrot.slane %v1638, 1
      %v1916 = vsel %vm1403, %v1914, %v1915
      %v1917 = vrot.slane %v1879, 1
      %v1918 = vrot.slane %v1639, 1
      %v1919 = vsel %vm1403, %v1917, %v1918
      %v1920 = vrot.slane %v1880, 1
      %v1921 = vrot.slane %v1640, 1
      %v1922 = vsel %vm1403, %v1920, %v1921
      %v1923 = vrot.slane %v1881, 1
      %v1924 = vrot.slane %v1641, 1
      %v1925 = vsel %vm1403, %v1923, %v1924
      %v1926 = vrot.slane %v1882, 1
      %v1927 = vrot.slane %v1642, 1
      %v1928 = vsel %vm1403, %v1926, %v1927
      %v1929 = vrot.slane %v1883, 1
      %v1930 = vrot.slane %v1643, 1
      %v1931 = vsel %vm1403, %v1929, %v1930
      %1932 = vrot.lane.b32.xlu0 %v1886, 32
      %v1933 = vpop.permute.xlu0 %1932
      %1934 = vrot.lane.b32.xlu0 %v1889, 32
      %v1935 = vpop.permute.xlu0 %1934
      %1936 = vrot.lane.b32.xlu0 %v1892, 32
      %v1937 = vpop.permute.xlu0 %1936
      %1938 = vrot.lane.b32.xlu0 %v1895, 32
      %v1939 = vpop.permute.xlu0 %1938
      %1940 = vrot.lane.b32.xlu0 %v1898, 32
      %v1941 = vpop.permute.xlu0 %1940
      %1942 = vrot.lane.b32.xlu0 %v1901, 32
      %v1943 = vpop.permute.xlu0 %1942
      %1944 = vrot.lane.b32.xlu0 %v1904, 32
      %v1945 = vpop.permute.xlu0 %1944
      %1946 = vrot.lane.b32.xlu0 %v1907, 32
      %v1947 = vpop.permute.xlu0 %1946
      %1948 = vrot.lane.b32.xlu0 %v1910, 32
      %v1949 = vpop.permute.xlu0 %1948
      %1950 = vrot.lane.b32.xlu0 %v1913, 32
      %v1951 = vpop.permute.xlu0 %1950
      %1952 = vrot.lane.b32.xlu0 %v1916, 32
      %v1953 = vpop.permute.xlu0 %1952
      %1954 = vrot.lane.b32.xlu0 %v1919, 32
      %v1955 = vpop.permute.xlu0 %1954
      %1956 = vrot.lane.b32.xlu0 %v1922, 32
      %v1957 = vpop.permute.xlu0 %1956
      %1958 = vrot.lane.b32.xlu0 %v1925, 32
      %v1959 = vpop.permute.xlu0 %1958
      %1960 = vrot.lane.b32.xlu0 %v1928, 32
      %v1961 = vpop.permute.xlu0 %1960
      %1962 = vrot.lane.b32.xlu0 %v1931, 32
      %v1963 = vpop.permute.xlu0 %1962
      %v1996 = vunpack.c.l.b16 %v938
      %v1997 = vunpack.c.l.b16 %v939
      %v1998 = vunpack.c.l.b16 %v940
      %v1999 = vunpack.c.l.b16 %v941
      %v2000 = vunpack.c.l.b16 %v942
      %v2001 = vunpack.c.l.b16 %v943
      %v2002 = vunpack.c.l.b16 %v944
      %v2003 = vunpack.c.l.b16 %v945
      %v2004 = vunpack.c.l.b16 %v946
      %v2005 = vunpack.c.l.b16 %v947
      %v2006 = vunpack.c.l.b16 %v948
      %v2007 = vunpack.c.l.b16 %v949
      %v2008 = vunpack.c.l.b16 %v950
      %v2009 = vunpack.c.l.b16 %v951
      %v2010 = vunpack.c.l.b16 %v952
      %v2011 = vunpack.c.l.b16 %v953
      %v2012 = vunpack.c.l.b16 %v954
      %v2013 = vunpack.c.l.b16 %v955
      %v2014 = vunpack.c.l.b16 %v956
      %v2015 = vunpack.c.l.b16 %v957
      %v2016 = vunpack.c.l.b16 %v958
      %v2017 = vunpack.c.l.b16 %v959
      %v2018 = vunpack.c.l.b16 %v960
      %v2019 = vunpack.c.l.b16 %v961
      %v2020 = vunpack.c.l.b16 %v962
      %v2021 = vunpack.c.l.b16 %v963
      %v2022 = vunpack.c.l.b16 %v964
      %v2023 = vunpack.c.l.b16 %v965
      %v2024 = vunpack.c.l.b16 %v966
      %v2025 = vunpack.c.l.b16 %v967
      %v2026 = vunpack.c.l.b16 %v968
      %v2027 = vunpack.c.l.b16 %v969
      %v2028 = vpack.c.b16 %v1997, %v1996
      %v2029 = vpack.c.b16 %v1999, %v1998
      %v2030 = vpack.c.b16 %v2001, %v2000
      %v2031 = vpack.c.b16 %v2003, %v2002
      %v2032 = vpack.c.b16 %v2005, %v2004
      %v2033 = vpack.c.b16 %v2007, %v2006
      %v2034 = vpack.c.b16 %v2009, %v2008
      %v2035 = vpack.c.b16 %v2011, %v2010
      %v2036 = vpack.c.b16 %v2013, %v2012
      %v2037 = vpack.c.b16 %v2015, %v2014
      %v2038 = vpack.c.b16 %v2017, %v2016
      %v2039 = vpack.c.b16 %v2019, %v2018
      %v2040 = vpack.c.b16 %v2021, %v2020
      %v2041 = vpack.c.b16 %v2023, %v2022
      %v2042 = vpack.c.b16 %v2025, %v2024
      %v2043 = vpack.c.b16 %v2027, %v2026
      %2044 = vrot.lane.b32.xlu0 %v2028, 64
      %v2045 = vpop.permute.xlu0 %2044
      %2046 = vrot.lane.b32.xlu0 %v2029, 64
      %v2047 = vpop.permute.xlu0 %2046
      %2048 = vrot.lane.b32.xlu0 %v2030, 64
      %v2049 = vpop.permute.xlu0 %2048
      %2050 = vrot.lane.b32.xlu0 %v2031, 64
      %v2051 = vpop.permute.xlu0 %2050
      %2052 = vrot.lane.b32.xlu0 %v2032, 64
      %v2053 = vpop.permute.xlu0 %2052
      %2054 = vrot.lane.b32.xlu0 %v2033, 64
      %v2055 = vpop.permute.xlu0 %2054
      %2056 = vrot.lane.b32.xlu0 %v2034, 64
      %v2057 = vpop.permute.xlu0 %2056
      %2058 = vrot.lane.b32.xlu0 %v2035, 64
      %v2059 = vpop.permute.xlu0 %2058
      %2060 = vrot.lane.b32.xlu0 %v2036, 64
      %v2061 = vpop.permute.xlu0 %2060
      %2062 = vrot.lane.b32.xlu0 %v2037, 64
      %v2063 = vpop.permute.xlu0 %2062
      %2064 = vrot.lane.b32.xlu0 %v2038, 64
      %v2065 = vpop.permute.xlu0 %2064
      %2066 = vrot.lane.b32.xlu0 %v2039, 64
      %v2067 = vpop.permute.xlu0 %2066
      %2068 = vrot.lane.b32.xlu0 %v2040, 64
      %v2069 = vpop.permute.xlu0 %2068
      %2070 = vrot.lane.b32.xlu0 %v2041, 64
      %v2071 = vpop.permute.xlu0 %2070
      %2072 = vrot.lane.b32.xlu0 %v2042, 64
      %v2073 = vpop.permute.xlu0 %2072
      %2074 = vrot.lane.b32.xlu0 %v2043, 64
      %v2075 = vpop.permute.xlu0 %2074
      %v2092 = vunpack.c.l.b16 %v970
      %v2093 = vunpack.c.l.b16 %v971
      %v2094 = vunpack.c.l.b16 %v972
      %v2095 = vunpack.c.l.b16 %v973
      %v2096 = vunpack.c.l.b16 %v974
      %v2097 = vunpack.c.l.b16 %v975
      %v2098 = vunpack.c.l.b16 %v976
      %v2099 = vunpack.c.l.b16 %v977
      %v2100 = vunpack.c.l.b16 %v978
      %v2101 = vunpack.c.l.b16 %v979
      %v2102 = vunpack.c.l.b16 %v980
      %v2103 = vunpack.c.l.b16 %v981
      %v2104 = vunpack.c.l.b16 %v982
      %v2105 = vunpack.c.l.b16 %v983
      %v2106 = vunpack.c.l.b16 %v984
      %v2107 = vunpack.c.l.b16 %v985
      %v2108 = vpack.c.b16 %v2092, %v2092
      %v2109 = vpack.c.b16 %v2093, %v2093
      %v2110 = vpack.c.b16 %v2094, %v2094
      %v2111 = vpack.c.b16 %v2095, %v2095
      %v2112 = vpack.c.b16 %v2096, %v2096
      %v2113 = vpack.c.b16 %v2097, %v2097
      %v2114 = vpack.c.b16 %v2098, %v2098
      %v2115 = vpack.c.b16 %v2099, %v2099
      %v2116 = vpack.c.b16 %v2100, %v2100
      %v2117 = vpack.c.b16 %v2101, %v2101
      %v2118 = vpack.c.b16 %v2102, %v2102
      %v2119 = vpack.c.b16 %v2103, %v2103
      %v2120 = vpack.c.b16 %v2104, %v2104
      %v2121 = vpack.c.b16 %v2105, %v2105
      %v2122 = vpack.c.b16 %v2106, %v2106
      %v2123 = vpack.c.b16 %v2107, %v2107
      %v2125 = vshrl.u32 %v2028, 16
      %v2127 = vshll.u32 %v2028, 16
      %v2129 = vrot.slane %v2127, 1
      %v2130 = vor.u32 %v2125, %v2129
      %v2132 = vshll.u32 %v2108, 16
      %v2134 = vrot.slane %v2132, 1
      %v2135 = vsel %vm1130, %v2130, %v2134
      %v2137 = vshrl.u32 %v2029, 16
      %v2139 = vshll.u32 %v2029, 16
      %v2141 = vrot.slane %v2139, 1
      %v2142 = vor.u32 %v2137, %v2141
      %v2144 = vshll.u32 %v2109, 16
      %v2146 = vrot.slane %v2144, 1
      %v2147 = vsel %vm1130, %v2142, %v2146
      %v2149 = vshrl.u32 %v2030, 16
      %v2151 = vshll.u32 %v2030, 16
      %v2153 = vrot.slane %v2151, 1
      %v2154 = vor.u32 %v2149, %v2153
      %v2156 = vshll.u32 %v2110, 16
      %v2158 = vrot.slane %v2156, 1
      %v2159 = vsel %vm1130, %v2154, %v2158
      %v2161 = vshrl.u32 %v2031, 16
      %v2163 = vshll.u32 %v2031, 16
      %v2165 = vrot.slane %v2163, 1
      %v2166 = vor.u32 %v2161, %v2165
      %v2168 = vshll.u32 %v2111, 16
      %v2170 = vrot.slane %v2168, 1
      %v2171 = vsel %vm1130, %v2166, %v2170
      %v2173 = vshrl.u32 %v2032, 16
      %v2175 = vshll.u32 %v2032, 16
      %v2177 = vrot.slane %v2175, 1
      %v2178 = vor.u32 %v2173, %v2177
      %v2180 = vshll.u32 %v2112, 16
      %v2182 = vrot.slane %v2180, 1
      %v2183 = vsel %vm1130, %v2178, %v2182
      %v2185 = vshrl.u32 %v2033, 16
      %v2187 = vshll.u32 %v2033, 16
      %v2189 = vrot.slane %v2187, 1
      %v2190 = vor.u32 %v2185, %v2189
      %v2192 = vshll.u32 %v2113, 16
      %v2194 = vrot.slane %v2192, 1
      %v2195 = vsel %vm1130, %v2190, %v2194
      %v2197 = vshrl.u32 %v2034, 16
      %v2199 = vshll.u32 %v2034, 16
      %v2201 = vrot.slane %v2199, 1
      %v2202 = vor.u32 %v2197, %v2201
      %v2204 = vshll.u32 %v2114, 16
      %v2206 = vrot.slane %v2204, 1
      %v2207 = vsel %vm1130, %v2202, %v2206
      %v2209 = vshrl.u32 %v2035, 16
      %v2211 = vshll.u32 %v2035, 16
      %v2213 = vrot.slane %v2211, 1
      %v2214 = vor.u32 %v2209, %v2213
      %v2216 = vshll.u32 %v2115, 16
      %v2218 = vrot.slane %v2216, 1
      %v2219 = vsel %vm1130, %v2214, %v2218
      %v2221 = vshrl.u32 %v2036, 16
      %v2223 = vshll.u32 %v2036, 16
      %v2225 = vrot.slane %v2223, 1
      %v2226 = vor.u32 %v2221, %v2225
      %v2228 = vshll.u32 %v2116, 16
      %v2230 = vrot.slane %v2228, 1
      %v2231 = vsel %vm1130, %v2226, %v2230
      %v2233 = vshrl.u32 %v2037, 16
      %v2235 = vshll.u32 %v2037, 16
      %v2237 = vrot.slane %v2235, 1
      %v2238 = vor.u32 %v2233, %v2237
      %v2240 = vshll.u32 %v2117, 16
      %v2242 = vrot.slane %v2240, 1
      %v2243 = vsel %vm1130, %v2238, %v2242
      %v2245 = vshrl.u32 %v2038, 16
      %v2247 = vshll.u32 %v2038, 16
      %v2249 = vrot.slane %v2247, 1
      %v2250 = vor.u32 %v2245, %v2249
      %v2252 = vshll.u32 %v2118, 16
      %v2254 = vrot.slane %v2252, 1
      %v2255 = vsel %vm1130, %v2250, %v2254
      %v2257 = vshrl.u32 %v2039, 16
      %v2259 = vshll.u32 %v2039, 16
      %v2261 = vrot.slane %v2259, 1
      %v2262 = vor.u32 %v2257, %v2261
      %v2264 = vshll.u32 %v2119, 16
      %v2266 = vrot.slane %v2264, 1
      %v2267 = vsel %vm1130, %v2262, %v2266
      %v2269 = vshrl.u32 %v2040, 16
      %v2271 = vshll.u32 %v2040, 16
      %v2273 = vrot.slane %v2271, 1
      %v2274 = vor.u32 %v2269, %v2273
      %v2276 = vshll.u32 %v2120, 16
      %v2278 = vrot.slane %v2276, 1
      %v2279 = vsel %vm1130, %v2274, %v2278
      %v2281 = vshrl.u32 %v2041, 16
      %v2283 = vshll.u32 %v2041, 16
      %v2285 = vrot.slane %v2283, 1
      %v2286 = vor.u32 %v2281, %v2285
      %v2288 = vshll.u32 %v2121, 16
      %v2290 = vrot.slane %v2288, 1
      %v2291 = vsel %vm1130, %v2286, %v2290
      %v2293 = vshrl.u32 %v2042, 16
      %v2295 = vshll.u32 %v2042, 16
      %v2297 = vrot.slane %v2295, 1
      %v2298 = vor.u32 %v2293, %v2297
      %v2300 = vshll.u32 %v2122, 16
      %v2302 = vrot.slane %v2300, 1
      %v2303 = vsel %vm1130, %v2298, %v2302
      %v2305 = vshrl.u32 %v2043, 16
      %v2307 = vshll.u32 %v2043, 16
      %v2309 = vrot.slane %v2307, 1
      %v2310 = vor.u32 %v2305, %v2309
      %v2312 = vshll.u32 %v2123, 16
      %v2314 = vrot.slane %v2312, 1
      %v2315 = vsel %vm1130, %v2310, %v2314
      %2316 = vrot.lane.b32.xlu0 %v2135, 96
      %v2317 = vpop.permute.xlu0 %2316
      %2318 = vrot.lane.b32.xlu0 %v2147, 96
      %v2319 = vpop.permute.xlu0 %2318
      %2320 = vrot.lane.b32.xlu0 %v2159, 96
      %v2321 = vpop.permute.xlu0 %2320
      %2322 = vrot.lane.b32.xlu0 %v2171, 96
      %v2323 = vpop.permute.xlu0 %2322
      %2324 = vrot.lane.b32.xlu0 %v2183, 96
      %v2325 = vpop.permute.xlu0 %2324
      %2326 = vrot.lane.b32.xlu0 %v2195, 96
      %v2327 = vpop.permute.xlu0 %2326
      %2328 = vrot.lane.b32.xlu0 %v2207, 96
      %v2329 = vpop.permute.xlu0 %2328
      %2330 = vrot.lane.b32.xlu0 %v2219, 96
      %v2331 = vpop.permute.xlu0 %2330
      %2332 = vrot.lane.b32.xlu0 %v2231, 96
      %v2333 = vpop.permute.xlu0 %2332
      %2334 = vrot.lane.b32.xlu0 %v2243, 96
      %v2335 = vpop.permute.xlu0 %2334
      %2336 = vrot.lane.b32.xlu0 %v2255, 96
      %v2337 = vpop.permute.xlu0 %2336
      %2338 = vrot.lane.b32.xlu0 %v2267, 96
      %v2339 = vpop.permute.xlu0 %2338
      %2340 = vrot.lane.b32.xlu0 %v2279, 96
      %v2341 = vpop.permute.xlu0 %2340
      %2342 = vrot.lane.b32.xlu0 %v2291, 96
      %v2343 = vpop.permute.xlu0 %2342
      %2344 = vrot.lane.b32.xlu0 %v2303, 96
      %v2345 = vpop.permute.xlu0 %2344
      %2346 = vrot.lane.b32.xlu0 %v2315, 96
      %v2347 = vpop.permute.xlu0 %2346
      %v2364 = vunpack.c.l.b16 %v986
      %v2365 = vunpack.c.l.b16 %v987
      %v2366 = vunpack.c.l.b16 %v988
      %v2367 = vunpack.c.l.b16 %v989
      %v2368 = vunpack.c.l.b16 %v990
      %v2369 = vunpack.c.l.b16 %v991
      %v2370 = vunpack.c.l.b16 %v992
      %v2371 = vunpack.c.l.b16 %v993
      %v2372 = vunpack.c.l.b16 %v994
      %v2373 = vunpack.c.l.b16 %v995
      %v2374 = vunpack.c.l.b16 %v996
      %v2375 = vunpack.c.l.b16 %v997
      %v2376 = vunpack.c.l.b16 %v998
      %v2377 = vunpack.c.l.b16 %v999
      %v2378 = vunpack.c.l.b16 %v1000
      %v2379 = vunpack.c.l.b16 %v1001
      %v2380 = vpack.c.b16 %v1997, %v2364
      %v2381 = vpack.c.b16 %v1999, %v2365
      %v2382 = vpack.c.b16 %v2001, %v2366
      %v2383 = vpack.c.b16 %v2003, %v2367
      %v2384 = vpack.c.b16 %v2005, %v2368
      %v2385 = vpack.c.b16 %v2007, %v2369
      %v2386 = vpack.c.b16 %v2009, %v2370
      %v2387 = vpack.c.b16 %v2011, %v2371
      %v2388 = vpack.c.b16 %v2013, %v2372
      %v2389 = vpack.c.b16 %v2015, %v2373
      %v2390 = vpack.c.b16 %v2017, %v2374
      %v2391 = vpack.c.b16 %v2019, %v2375
      %v2392 = vpack.c.b16 %v2021, %v2376
      %v2393 = vpack.c.b16 %v2023, %v2377
      %v2394 = vpack.c.b16 %v2025, %v2378
      %v2395 = vpack.c.b16 %v2027, %v2379
      %v2396 = vrot.slane %v2380, 1
      %v2397 = vrot.slane %v2108, 1
      %v2398 = vsel %vm1403, %v2396, %v2397
      %v2399 = vrot.slane %v2381, 1
      %v2400 = vrot.slane %v2109, 1
      %v2401 = vsel %vm1403, %v2399, %v2400
      %v2402 = vrot.slane %v2382, 1
      %v2403 = vrot.slane %v2110, 1
      %v2404 = vsel %vm1403, %v2402, %v2403
      %v2405 = vrot.slane %v2383, 1
      %v2406 = vrot.slane %v2111, 1
      %v2407 = vsel %vm1403, %v2405, %v2406
      %v2408 = vrot.slane %v2384, 1
      %v2409 = vrot.slane %v2112, 1
      %v2410 = vsel %vm1403, %v2408, %v2409
      %v2411 = vrot.slane %v2385, 1
      %v2412 = vrot.slane %v2113, 1
      %v2413 = vsel %vm1403, %v2411, %v2412
      %v2414 = vrot.slane %v2386, 1
      %v2415 = vrot.slane %v2114, 1
      %v2416 = vsel %vm1403, %v2414, %v2415
      %v2417 = vrot.slane %v2387, 1
      %v2418 = vrot.slane %v2115, 1
      %v2419 = vsel %vm1403, %v2417, %v2418
      %v2420 = vrot.slane %v2388, 1
      %v2421 = vrot.slane %v2116, 1
      %v2422 = vsel %vm1403, %v2420, %v2421
      %v2423 = vrot.slane %v2389, 1
      %v2424 = vrot.slane %v2117, 1
      %v2425 = vsel %vm1403, %v2423, %v2424
      %v2426 = vrot.slane %v2390, 1
      %v2427 = vrot.slane %v2118, 1
      %v2428 = vsel %vm1403, %v2426, %v2427
      %v2429 = vrot.slane %v2391, 1
      %v2430 = vrot.slane %v2119, 1
      %v2431 = vsel %vm1403, %v2429, %v2430
      %v2432 = vrot.slane %v2392, 1
      %v2433 = vrot.slane %v2120, 1
      %v2434 = vsel %vm1403, %v2432, %v2433
      %v2435 = vrot.slane %v2393, 1
      %v2436 = vrot.slane %v2121, 1
      %v2437 = vsel %vm1403, %v2435, %v2436
      %v2438 = vrot.slane %v2394, 1
      %v2439 = vrot.slane %v2122, 1
      %v2440 = vsel %vm1403, %v2438, %v2439
      %v2441 = vrot.slane %v2395, 1
      %v2442 = vrot.slane %v2123, 1
      %v2443 = vsel %vm1403, %v2441, %v2442
      %vm2444 = vcmask 261120
      %v2446 = vsel %vm2444, %v1066, %v1324
      %v2448 = vsel %vm2444, %v1067, %v1326
      %v2450 = vsel %vm2444, %v1068, %v1328
      %v2452 = vsel %vm2444, %v1069, %v1330
      %v2454 = vsel %vm2444, %v1070, %v1332
      %v2456 = vsel %vm2444, %v1071, %v1334
      %v2458 = vsel %vm2444, %v1072, %v1336
      %v2460 = vsel %vm2444, %v1073, %v1338
      %v2462 = vsel %vm2444, %v1074, %v1340
      %v2464 = vsel %vm2444, %v1075, %v1342
      %v2466 = vsel %vm2444, %v1076, %v1344
      %v2468 = vsel %vm2444, %v1077, %v1346
      %v2470 = vsel %vm2444, %v1078, %v1348
      %v2472 = vsel %vm2444, %v1079, %v1350
      %v2474 = vsel %vm2444, %v1080, %v1352
      %v2476 = vsel %vm2444, %v1081, %v1354
      %vm2477 = vcmask 523264
      %v2479 = vsel %vm2477, %v2446, %v1453
      %v2481 = vsel %vm2477, %v2448, %v1455
      %v2483 = vsel %vm2477, %v2450, %v1457
      %v2485 = vsel %vm2477, %v2452, %v1459
      %v2487 = vsel %vm2477, %v2454, %v1461
      %v2489 = vsel %vm2477, %v2456, %v1463
      %v2491 = vsel %vm2477, %v2458, %v1465
      %v2493 = vsel %vm2477, %v2460, %v1467
      %v2495 = vsel %vm2477, %v2462, %v1469
      %v2497 = vsel %vm2477, %v2464, %v1471
      %v2499 = vsel %vm2477, %v2466, %v1473
      %v2501 = vsel %vm2477, %v2468, %v1475
      %v2503 = vsel %vm2477, %v2470, %v1477
      %v2505 = vsel %vm2477, %v2472, %v1479
      %v2507 = vsel %vm2477, %v2474, %v1481
      %v2509 = vsel %vm2477, %v2476, %v1483
      %vm2510 = vcmask 785408
      %v2512 = vsel %vm2510, %v2479, %v1565
      %v2515 = vsel %vm2510, %v2481, %v1567
      %v2518 = vsel %vm2510, %v2483, %v1569
      %v2521 = vsel %vm2510, %v2485, %v1571
      %v2524 = vsel %vm2510, %v2487, %v1573
      %v2527 = vsel %vm2510, %v2489, %v1575
      %v2530 = vsel %vm2510, %v2491, %v1577
      %v2533 = vsel %vm2510, %v2493, %v1579
      %v2536 = vsel %vm2510, %v2495, %v1581
      %v2539 = vsel %vm2510, %v2497, %v1583
      %v2542 = vsel %vm2510, %v2499, %v1585
      %v2545 = vsel %vm2510, %v2501, %v1587
      %v2548 = vsel %vm2510, %v2503, %v1589
      %v2551 = vsel %vm2510, %v2505, %v1591
      %v2554 = vsel %vm2510, %v2507, %v1593
      %v2557 = vsel %vm2510, %v2509, %v1595
      %v2561 = vsel %vm2444, %v1655, %v1933
      %v2564 = vsel %vm2444, %v1667, %v1935
      %v2567 = vsel %vm2444, %v1679, %v1937
      %v2570 = vsel %vm2444, %v1691, %v1939
      %v2573 = vsel %vm2444, %v1703, %v1941
      %v2576 = vsel %vm2444, %v1715, %v1943
      %v2579 = vsel %vm2444, %v1727, %v1945
      %v2582 = vsel %vm2444, %v1739, %v1947
      %v2585 = vsel %vm2444, %v1751, %v1949
      %v2588 = vsel %vm2444, %v1763, %v1951
      %v2591 = vsel %vm2444, %v1775, %v1953
      %v2594 = vsel %vm2444, %v1787, %v1955
      %v2597 = vsel %vm2444, %v1799, %v1957
      %v2600 = vsel %vm2444, %v1811, %v1959
      %v2603 = vsel %vm2444, %v1823, %v1961
      %v2606 = vsel %vm2444, %v1835, %v1963
      %v2608 = vsel %vm2477, %v2561, %v2045
      %v2610 = vsel %vm2477, %v2564, %v2047
      %v2612 = vsel %vm2477, %v2567, %v2049
      %v2614 = vsel %vm2477, %v2570, %v2051
      %v2616 = vsel %vm2477, %v2573, %v2053
      %v2618 = vsel %vm2477, %v2576, %v2055
      %v2620 = vsel %vm2477, %v2579, %v2057
      %v2622 = vsel %vm2477, %v2582, %v2059
      %v2624 = vsel %vm2477, %v2585, %v2061
      %v2626 = vsel %vm2477, %v2588, %v2063
      %v2628 = vsel %vm2477, %v2591, %v2065
      %v2630 = vsel %vm2477, %v2594, %v2067
      %v2632 = vsel %vm2477, %v2597, %v2069
      %v2634 = vsel %vm2477, %v2600, %v2071
      %v2636 = vsel %vm2477, %v2603, %v2073
      %v2638 = vsel %vm2477, %v2606, %v2075
      %v2640 = vsel %vm2510, %v2608, %v2317
      %v2643 = vsel %vm2510, %v2610, %v2319
      %v2646 = vsel %vm2510, %v2612, %v2321
      %v2649 = vsel %vm2510, %v2614, %v2323
      %v2652 = vsel %vm2510, %v2616, %v2325
      %v2655 = vsel %vm2510, %v2618, %v2327
      %v2658 = vsel %vm2510, %v2620, %v2329
      %v2661 = vsel %vm2510, %v2622, %v2331
      %v2664 = vsel %vm2510, %v2624, %v2333
      %v2667 = vsel %vm2510, %v2626, %v2335
      %v2670 = vsel %vm2510, %v2628, %v2337
      %v2673 = vsel %vm2510, %v2630, %v2339
      %v2676 = vsel %vm2510, %v2632, %v2341
      %v2679 = vsel %vm2510, %v2634, %v2343
      %v2682 = vsel %vm2510, %v2636, %v2345
      %v2685 = vsel %vm2510, %v2638, %v2347
      %v2687 = vld [vmem:[%s1] sm:$0xf]
      %v2688 = vld [vmem:[%s1 + $0x4] sm:$0xf]
      %v2689 = vld [vmem:[%s1 + $0x8] sm:$0xf]
      %v2690 = vld [vmem:[%s1 + $0xc] sm:$0xf]
      %v2691 = vld [vmem:[%s1 + $0x10] sm:$0xf]
      %v2692 = vld [vmem:[%s1 + $0x14] sm:$0xf]
      %v2693 = vld [vmem:[%s1 + $0x18] sm:$0xf]
      %v2694 = vld [vmem:[%s1 + $0x1c] sm:$0xf]
      %v2695 = vld [vmem:[%s1 + $0x20] sm:$0xf]
      %v2696 = vld [vmem:[%s1 + $0x24] sm:$0xf]
      %v2697 = vld [vmem:[%s1 + $0x28] sm:$0xf]
      %v2698 = vld [vmem:[%s1 + $0x2c] sm:$0xf]
      %v2699 = vld [vmem:[%s1 + $0x30] sm:$0xf]
      %v2700 = vld [vmem:[%s1 + $0x34] sm:$0xf]
      %v2701 = vld [vmem:[%s1 + $0x38] sm:$0xf]
      %v2702 = vld [vmem:[%s1 + $0x3c] sm:$0xf]
      %v2703 = vld [vmem:[%s1 + $0x40] sm:$0xf]
      %v2704 = vld [vmem:[%s1 + $0x44] sm:$0xf]
      %v2705 = vld [vmem:[%s1 + $0x48] sm:$0xf]
      %v2706 = vld [vmem:[%s1 + $0x4c] sm:$0xf]
      %v2707 = vld [vmem:[%s1 + $0x50] sm:$0xf]
      %v2708 = vld [vmem:[%s1 + $0x54] sm:$0xf]
      %v2709 = vld [vmem:[%s1 + $0x58] sm:$0xf]
      %v2710 = vld [vmem:[%s1 + $0x5c] sm:$0xf]
      %v2711 = vld [vmem:[%s1 + $0x60] sm:$0xf]
      %v2712 = vld [vmem:[%s1 + $0x64] sm:$0xf]
      %v2713 = vld [vmem:[%s1 + $0x68] sm:$0xf]
      %v2714 = vld [vmem:[%s1 + $0x6c] sm:$0xf]
      %v2715 = vld [vmem:[%s1 + $0x70] sm:$0xf]
      %v2716 = vld [vmem:[%s1 + $0x74] sm:$0xf]
      %v2717 = vld [vmem:[%s1 + $0x78] sm:$0xf]
      %v2718 = vld [vmem:[%s1 + $0x7c] sm:$0xf]
      %v2719 = vld [vmem:[%s1 + $0x80] sm:$0xf]
      %v2720 = vld [vmem:[%s1 + $0x84] sm:$0xf]
      %v2721 = vld [vmem:[%s1 + $0x88] sm:$0xf]
      %v2722 = vld [vmem:[%s1 + $0x8c] sm:$0xf]
      %v2759 = vunpack.c.l.b16 %v2687
      %v2760 = vunpack.c.l.b16 %v2688
      %v2761 = vunpack.c.l.b16 %v2689
      %v2762 = vunpack.c.l.b16 %v2690
      %v2763 = vunpack.c.l.b16 %v2691
      %v2764 = vunpack.c.l.b16 %v2692
      %v2765 = vunpack.c.l.b16 %v2693
      %v2766 = vunpack.c.l.b16 %v2694
      %v2767 = vunpack.c.l.b16 %v2695
      %v2768 = vunpack.c.l.b16 %v2696
      %v2769 = vunpack.c.l.b16 %v2697
      %v2770 = vunpack.c.l.b16 %v2698
      %v2771 = vunpack.c.l.b16 %v2699
      %v2772 = vunpack.c.l.b16 %v2700
      %v2773 = vunpack.c.l.b16 %v2701
      %v2774 = vunpack.c.l.b16 %v2702
      %v2775 = vunpack.c.l.b16 %v2703
      %v2776 = vunpack.c.l.b16 %v2704
      %v2777 = vunpack.c.l.b16 %v2705
      %v2778 = vunpack.c.l.b16 %v2706
      %v2779 = vunpack.c.l.b16 %v2707
      %v2780 = vunpack.c.l.b16 %v2708
      %v2781 = vunpack.c.l.b16 %v2709
      %v2782 = vunpack.c.l.b16 %v2710
      %v2783 = vunpack.c.l.b16 %v2711
      %v2784 = vunpack.c.l.b16 %v2712
      %v2785 = vunpack.c.l.b16 %v2713
      %v2786 = vunpack.c.l.b16 %v2714
      %v2787 = vunpack.c.l.b16 %v2715
      %v2788 = vunpack.c.l.b16 %v2716
      %v2789 = vunpack.c.l.b16 %v2717
      %v2790 = vunpack.c.l.b16 %v2718
      %v2791 = vunpack.c.l.b16 %v2719
      %v2792 = vunpack.c.l.b16 %v2720
      %v2793 = vunpack.c.l.b16 %v2721
      %v2794 = vunpack.c.l.b16 %v2722
      %v2795 = vpack.c.b16 %v2760, %v2759
      %v2796 = vpack.c.b16 %v2762, %v2761
      %v2797 = vpack.c.b16 %v2764, %v2763
      %v2798 = vpack.c.b16 %v2766, %v2765
      %v2799 = vpack.c.b16 %v2768, %v2767
      %v2800 = vpack.c.b16 %v2770, %v2769
      %v2801 = vpack.c.b16 %v2772, %v2771
      %v2802 = vpack.c.b16 %v2774, %v2773
      %v2803 = vpack.c.b16 %v2776, %v2775
      %v2804 = vpack.c.b16 %v2778, %v2777
      %v2805 = vpack.c.b16 %v2780, %v2779
      %v2806 = vpack.c.b16 %v2782, %v2781
      %v2807 = vpack.c.b16 %v2784, %v2783
      %v2808 = vpack.c.b16 %v2786, %v2785
      %v2809 = vpack.c.b16 %v2788, %v2787
      %v2810 = vpack.c.b16 %v2790, %v2789
      %v2811 = vpack.c.b16 %v2792, %v2791
      %v2812 = vpack.c.b16 %v2794, %v2793
      %v2832 = vsel %vm2444, %v2398, 0
      %v2835 = vsel %vm2444, %v2401, 0
      %v2838 = vsel %vm2444, %v2404, 0
      %v2841 = vsel %vm2444, %v2407, 0
      %v2844 = vsel %vm2444, %v2410, 0
      %v2847 = vsel %vm2444, %v2413, 0
      %v2850 = vsel %vm2444, %v2416, 0
      %v2853 = vsel %vm2444, %v2419, 0
      %v2856 = vsel %vm2444, %v2422, 0
      %v2859 = vsel %vm2444, %v2425, 0
      %v2862 = vsel %vm2444, %v2428, 0
      %v2865 = vsel %vm2444, %v2431, 0
      %v2868 = vsel %vm2444, %v2434, 0
      %v2871 = vsel %vm2444, %v2437, 0
      %v2874 = vsel %vm2444, %v2440, 0
      %v2877 = vsel %vm2444, %v2443, 0
      %2879 = vmatprep.subr.bf16.mxu0 0
      %2880 = vmatpush1.bf16.msra.mxu0 %v2802
      %2881 = vmatprep.subr.bf16.mxu0 0
      %2882 = vmatpush1.bf16.msra.mxu0 %v2801
      %2883 = vmatprep.subr.bf16.mxu0 0
      %2884 = vmatpush1.bf16.msra.mxu0 %v2800
      %2885 = vmatprep.subr.bf16.mxu0 0
      %2886 = vmatpush1.bf16.msra.mxu0 %v2799
      %2887 = vmatprep.subr.bf16.mxu0 0
      %2888 = vmatpush1.bf16.msra.mxu0 %v2798
      %2889 = vmatprep.subr.bf16.mxu0 0
      %2890 = vmatpush1.bf16.msra.mxu0 %v2797
      %2891 = vmatprep.subr.bf16.mxu0 0
      %2892 = vmatpush1.bf16.msra.mxu0 %v2796
      %2893 = vmatprep.subr.bf16.mxu0 0
      %2894 = vmatpush1.bf16.msra.mxu0 %v2795
      %2895 = vmatprep.subr.bf16.mxu0 0
      %2896 = vmatpush2.bf16.msra.mxu0 %v2810
      %2897 = vmatprep.subr.bf16.mxu0 0
      %2898 = vmatpush2.bf16.msra.mxu0 %v2809
      %2899 = vmatprep.subr.bf16.mxu0 0
      %2900 = vmatpush2.bf16.msra.mxu0 %v2808
      %2901 = vmatprep.subr.bf16.mxu0 0
      %2902 = vmatpush2.bf16.msra.mxu0 %v2807
      %2903 = vmatprep.subr.bf16.mxu0 0
      %2904 = vmatpush2.bf16.msra.mxu0 %v2806
      %2905 = vmatprep.subr.bf16.mxu0 0
      %2906 = vmatpush2.bf16.msra.mxu0 %v2805
      %2907 = vmatprep.subr.bf16.mxu0 0
      %2908 = vmatpush2.bf16.msra.mxu0 %v2804
      %2909 = vmatprep.subr.bf16.mxu0 0
      %2910 = vmatpush2.bf16.msra.mxu0 %v2803
      %2911 = vmatprep.mubr.bf16.mxu0 %v2640
      %2912 = vmatmul.mubr.bf16.gmra.mxu0 %v2512
      %v2913 = vpop.f32.mrf.mxu0
      %v2914 = vadd.f32 0.0, %v2913
      %v2915 = vpop.f32.mrf.mxu0
      %v2916 = vpop.f32.mrf.mxu0
      %v2917 = vadd.f32 0.0, %v2916
      %v2918 = vpop.f32.mrf.mxu0
      %2919 = vmatprep.mubr.bf16.mxu0 %v2643
      %2920 = vmatmul.mubr.bf16.gmra.mxu0 %v2515
      %v2921 = vpop.f32.mrf.mxu0
      %v2922 = vadd.f32 0.0, %v2921
      %v2923 = vpop.f32.mrf.mxu0
      %v2924 = vpop.f32.mrf.mxu0
      %v2925 = vadd.f32 0.0, %v2924
      %v2926 = vpop.f32.mrf.mxu0
      %2927 = vmatprep.mubr.bf16.mxu0 %v2646
      %2928 = vmatmul.mubr.bf16.gmra.mxu0 %v2518
      %v2929 = vpop.f32.mrf.mxu0
      %v2930 = vadd.f32 0.0, %v2929
      %v2931 = vpop.f32.mrf.mxu0
      %v2932 = vpop.f32.mrf.mxu0
      %v2933 = vadd.f32 0.0, %v2932
      %v2934 = vpop.f32.mrf.mxu0
      %2935 = vmatprep.mubr.bf16.mxu0 %v2649
      %2936 = vmatmul.mubr.bf16.gmra.mxu0 %v2521
      %v2937 = vpop.f32.mrf.mxu0
      %v2938 = vadd.f32 0.0, %v2937
      %v2939 = vpop.f32.mrf.mxu0
      %v2940 = vpop.f32.mrf.mxu0
      %v2941 = vadd.f32 0.0, %v2940
      %v2942 = vpop.f32.mrf.mxu0
      %2943 = vmatprep.mubr.bf16.mxu0 %v2652
      %2944 = vmatmul.mubr.bf16.gmra.mxu0 %v2524
      %v2945 = vpop.f32.mrf.mxu0
      %v2946 = vadd.f32 0.0, %v2945
      %v2947 = vpop.f32.mrf.mxu0
      %v2948 = vpop.f32.mrf.mxu0
      %v2949 = vadd.f32 0.0, %v2948
      %v2950 = vpop.f32.mrf.mxu0
      %2951 = vmatprep.mubr.bf16.mxu0 %v2655
      %2952 = vmatmul.mubr.bf16.gmra.mxu0 %v2527
      %v2953 = vpop.f32.mrf.mxu0
      %v2954 = vadd.f32 0.0, %v2953
      %v2955 = vpop.f32.mrf.mxu0
      %v2956 = vpop.f32.mrf.mxu0
      %v2957 = vadd.f32 0.0, %v2956
      %v2958 = vpop.f32.mrf.mxu0
      %2959 = vmatprep.mubr.bf16.mxu0 %v2658
      %2960 = vmatmul.mubr.bf16.gmra.mxu0 %v2530
      %v2961 = vpop.f32.mrf.mxu0
      %v2962 = vadd.f32 0.0, %v2961
      %v2963 = vpop.f32.mrf.mxu0
      %v2964 = vpop.f32.mrf.mxu0
      %v2965 = vadd.f32 0.0, %v2964
      %v2966 = vpop.f32.mrf.mxu0
      %2967 = vmatprep.mubr.bf16.mxu0 %v2661
      %2968 = vmatmul.mubr.bf16.gmra.mxu0 %v2533
      %v2969 = vpop.f32.mrf.mxu0
      %v2970 = vadd.f32 0.0, %v2969
      %v2971 = vpop.f32.mrf.mxu0
      %v2972 = vpop.f32.mrf.mxu0
      %v2973 = vadd.f32 0.0, %v2972
      %v2974 = vpop.f32.mrf.mxu0
      %2975 = vmatprep.mubr.bf16.mxu0 %v2664
      %2976 = vmatmul.mubr.bf16.gmra.mxu0 %v2536
      %v2977 = vpop.f32.mrf.mxu0
      %v2978 = vadd.f32 0.0, %v2977
      %v2979 = vpop.f32.mrf.mxu0
      %v2980 = vpop.f32.mrf.mxu0
      %v2981 = vadd.f32 0.0, %v2980
      %v2982 = vpop.f32.mrf.mxu0
      %2983 = vmatprep.mubr.bf16.mxu0 %v2667
      %2984 = vmatmul.mubr.bf16.gmra.mxu0 %v2539
      %v2985 = vpop.f32.mrf.mxu0
      %v2986 = vadd.f32 0.0, %v2985
      %v2987 = vpop.f32.mrf.mxu0
      %v2988 = vpop.f32.mrf.mxu0
      %v2989 = vadd.f32 0.0, %v2988
      %v2990 = vpop.f32.mrf.mxu0
      %2991 = vmatprep.mubr.bf16.mxu0 %v2670
      %2992 = vmatmul.mubr.bf16.gmra.mxu0 %v2542
      %v2993 = vpop.f32.mrf.mxu0
      %v2994 = vadd.f32 0.0, %v2993
      %v2995 = vpop.f32.mrf.mxu0
      %v2996 = vpop.f32.mrf.mxu0
      %v2997 = vadd.f32 0.0, %v2996
      %v2998 = vpop.f32.mrf.mxu0
      %2999 = vmatprep.mubr.bf16.mxu0 %v2673
      %3000 = vmatmul.mubr.bf16.gmra.mxu0 %v2545
      %v3001 = vpop.f32.mrf.mxu0
      %v3002 = vadd.f32 0.0, %v3001
      %v3003 = vpop.f32.mrf.mxu0
      %v3004 = vpop.f32.mrf.mxu0
      %v3005 = vadd.f32 0.0, %v3004
      %v3006 = vpop.f32.mrf.mxu0
      %3007 = vmatprep.mubr.bf16.mxu0 %v2676
      %3008 = vmatmul.mubr.bf16.gmra.mxu0 %v2548
      %v3009 = vpop.f32.mrf.mxu0
      %v3010 = vadd.f32 0.0, %v3009
      %v3011 = vpop.f32.mrf.mxu0
      %v3012 = vpop.f32.mrf.mxu0
      %v3013 = vadd.f32 0.0, %v3012
      %v3014 = vpop.f32.mrf.mxu0
      %3015 = vmatprep.mubr.bf16.mxu0 %v2679
      %3016 = vmatmul.mubr.bf16.gmra.mxu0 %v2551
      %v3017 = vpop.f32.mrf.mxu0
      %v3018 = vadd.f32 0.0, %v3017
      %v3019 = vpop.f32.mrf.mxu0
      %v3020 = vpop.f32.mrf.mxu0
      %v3021 = vadd.f32 0.0, %v3020
      %v3022 = vpop.f32.mrf.mxu0
      %3023 = vmatprep.mubr.bf16.mxu0 %v2682
      %3024 = vmatmul.mubr.bf16.gmra.mxu0 %v2554
      %v3025 = vpop.f32.mrf.mxu0
      %v3026 = vadd.f32 0.0, %v3025
      %v3027 = vpop.f32.mrf.mxu0
      %v3028 = vpop.f32.mrf.mxu0
      %v3029 = vadd.f32 0.0, %v3028
      %v3030 = vpop.f32.mrf.mxu0
      %3031 = vmatprep.mubr.bf16.mxu0 %v2685
      %3032 = vmatmul.mubr.bf16.gmra.mxu0 %v2557
      %v3033 = vpop.f32.mrf.mxu0
      %v3034 = vadd.f32 0.0, %v3033
      %v3035 = vpop.f32.mrf.mxu0
      %v3036 = vpop.f32.mrf.mxu0
      %v3037 = vadd.f32 0.0, %v3036
      %v3038 = vpop.f32.mrf.mxu0
      %3039 = vdwg.mxu0
      %3040 = vmatprep.subr.bf16.mxu0 0
      %3041 = vmatpush1.bf16.msra.mxu0 0
      %3042 = vmatprep.subr.bf16.mxu0 0
      %3043 = vmatpush1.bf16.msra.mxu0 0
      %3044 = vmatprep.subr.bf16.mxu0 0
      %3045 = vmatpush1.bf16.msra.mxu0 0
      %3046 = vmatprep.subr.bf16.mxu0 0
      %3047 = vmatpush1.bf16.msra.mxu0 0
      %3048 = vmatprep.subr.bf16.mxu0 0
      %3049 = vmatpush1.bf16.msra.mxu0 0
      %3050 = vmatprep.subr.bf16.mxu0 0
      %3051 = vmatpush1.bf16.msra.mxu0 0
      %3052 = vmatprep.subr.bf16.mxu0 0
      %3053 = vmatpush1.bf16.msra.mxu0 %v2812
      %3054 = vmatprep.subr.bf16.mxu0 0
      %3055 = vmatpush1.bf16.msra.mxu0 %v2811
      %3056 = vmatprep.subr.bf16.mxu0 0
      %3057 = vmatpush2.bf16.msra.mxu0 0
      %3058 = vmatprep.subr.bf16.mxu0 0
      %3059 = vmatpush2.bf16.msra.mxu0 0
      %3060 = vmatprep.subr.bf16.mxu0 0
      %3061 = vmatpush2.bf16.msra.mxu0 0
      %3062 = vmatprep.subr.bf16.mxu0 0
      %3063 = vmatpush2.bf16.msra.mxu0 0
      %3064 = vmatprep.subr.bf16.mxu0 0
      %3065 = vmatpush2.bf16.msra.mxu0 0
      %3066 = vmatprep.subr.bf16.mxu0 0
      %3067 = vmatpush2.bf16.msra.mxu0 0
      %3068 = vmatprep.subr.bf16.mxu0 0
      %3069 = vmatpush2.bf16.msra.mxu0 0
      %3070 = vmatprep.subr.bf16.mxu0 0
      %3071 = vmatpush2.bf16.msra.mxu0 0
      %3072 = vmatprep.mubr.bf16.mxu0 0
      %3073 = vmatmul.mubr.bf16.gmra.mxu0 %v2832
      %v3074 = vpop.f32.mrf.mxu0
      %v3075 = vadd.f32 %v2914, %v3074
      %v3076 = vpop.f32.mrf.mxu0
      %v3077 = vpop.f32.mrf.mxu0
      %v3078 = vadd.f32 %v2917, %v3077
      %v3079 = vpop.f32.mrf.mxu0
      %3080 = vmatprep.mubr.bf16.mxu0 0
      %3081 = vmatmul.mubr.bf16.gmra.mxu0 %v2835
      %v3082 = vpop.f32.mrf.mxu0
      %v3083 = vadd.f32 %v2922, %v3082
      %v3084 = vpop.f32.mrf.mxu0
      %v3085 = vpop.f32.mrf.mxu0
      %v3086 = vadd.f32 %v2925, %v3085
      %v3087 = vpop.f32.mrf.mxu0
      %3088 = vmatprep.mubr.bf16.mxu0 0
      %3089 = vmatmul.mubr.bf16.gmra.mxu0 %v2838
      %v3090 = vpop.f32.mrf.mxu0
      %v3091 = vadd.f32 %v2930, %v3090
      %v3092 = vpop.f32.mrf.mxu0
      %v3093 = vpop.f32.mrf.mxu0
      %v3094 = vadd.f32 %v2933, %v3093
      %v3095 = vpop.f32.mrf.mxu0
      %3096 = vmatprep.mubr.bf16.mxu0 0
      %3097 = vmatmul.mubr.bf16.gmra.mxu0 %v2841
      %v3098 = vpop.f32.mrf.mxu0
      %v3099 = vadd.f32 %v2938, %v3098
      %v3100 = vpop.f32.mrf.mxu0
      %v3101 = vpop.f32.mrf.mxu0
      %v3102 = vadd.f32 %v2941, %v3101
      %v3103 = vpop.f32.mrf.mxu0
      %3104 = vmatprep.mubr.bf16.mxu0 0
      %3105 = vmatmul.mubr.bf16.gmra.mxu0 %v2844
      %v3106 = vpop.f32.mrf.mxu0
      %v3107 = vadd.f32 %v2946, %v3106
      %v3108 = vpop.f32.mrf.mxu0
      %v3109 = vpop.f32.mrf.mxu0
      %v3110 = vadd.f32 %v2949, %v3109
      %v3111 = vpop.f32.mrf.mxu0
      %3112 = vmatprep.mubr.bf16.mxu0 0
      %3113 = vmatmul.mubr.bf16.gmra.mxu0 %v2847
      %v3114 = vpop.f32.mrf.mxu0
      %v3115 = vadd.f32 %v2954, %v3114
      %v3116 = vpop.f32.mrf.mxu0
      %v3117 = vpop.f32.mrf.mxu0
      %v3118 = vadd.f32 %v2957, %v3117
      %v3119 = vpop.f32.mrf.mxu0
      %3120 = vmatprep.mubr.bf16.mxu0 0
      %3121 = vmatmul.mubr.bf16.gmra.mxu0 %v2850
      %v3122 = vpop.f32.mrf.mxu0
      %v3123 = vadd.f32 %v2962, %v3122
      %v3124 = vpop.f32.mrf.mxu0
      %v3125 = vpop.f32.mrf.mxu0
      %v3126 = vadd.f32 %v2965, %v3125
      %v3127 = vpop.f32.mrf.mxu0
      %3128 = vmatprep.mubr.bf16.mxu0 0
      %3129 = vmatmul.mubr.bf16.gmra.mxu0 %v2853
      %v3130 = vpop.f32.mrf.mxu0
      %v3131 = vadd.f32 %v2970, %v3130
      %v3132 = vpop.f32.mrf.mxu0
      %v3133 = vpop.f32.mrf.mxu0
      %v3134 = vadd.f32 %v2973, %v3133
      %v3135 = vpop.f32.mrf.mxu0
      %3136 = vmatprep.mubr.bf16.mxu0 0
      %3137 = vmatmul.mubr.bf16.gmra.mxu0 %v2856
      %v3138 = vpop.f32.mrf.mxu0
      %v3139 = vadd.f32 %v2978, %v3138
      %v3140 = vpop.f32.mrf.mxu0
      %v3141 = vpop.f32.mrf.mxu0
      %v3142 = vadd.f32 %v2981, %v3141
      %v3143 = vpop.f32.mrf.mxu0
      %3144 = vmatprep.mubr.bf16.mxu0 0
      %3145 = vmatmul.mubr.bf16.gmra.mxu0 %v2859
      %v3146 = vpop.f32.mrf.mxu0
      %v3147 = vadd.f32 %v2986, %v3146
      %v3148 = vpop.f32.mrf.mxu0
      %v3149 = vpop.f32.mrf.mxu0
      %v3150 = vadd.f32 %v2989, %v3149
      %v3151 = vpop.f32.mrf.mxu0
      %3152 = vmatprep.mubr.bf16.mxu0 0
      %3153 = vmatmul.mubr.bf16.gmra.mxu0 %v2862
      %v3154 = vpop.f32.mrf.mxu0
      %v3155 = vadd.f32 %v2994, %v3154
      %v3156 = vpop.f32.mrf.mxu0
      %v3157 = vpop.f32.mrf.mxu0
      %v3158 = vadd.f32 %v2997, %v3157
      %v3159 = vpop.f32.mrf.mxu0
      %3160 = vmatprep.mubr.bf16.mxu0 0
      %3161 = vmatmul.mubr.bf16.gmra.mxu0 %v2865
      %v3162 = vpop.f32.mrf.mxu0
      %v3163 = vadd.f32 %v3002, %v3162
      %v3164 = vpop.f32.mrf.mxu0
      %v3165 = vpop.f32.mrf.mxu0
      %v3166 = vadd.f32 %v3005, %v3165
      %v3167 = vpop.f32.mrf.mxu0
      %3168 = vmatprep.mubr.bf16.mxu0 0
      %3169 = vmatmul.mubr.bf16.gmra.mxu0 %v2868
      %v3170 = vpop.f32.mrf.mxu0
      %v3171 = vadd.f32 %v3010, %v3170
      %v3172 = vpop.f32.mrf.mxu0
      %v3173 = vpop.f32.mrf.mxu0
      %v3174 = vadd.f32 %v3013, %v3173
      %v3175 = vpop.f32.mrf.mxu0
      %3176 = vmatprep.mubr.bf16.mxu0 0
      %3177 = vmatmul.mubr.bf16.gmra.mxu0 %v2871
      %v3178 = vpop.f32.mrf.mxu0
      %v3179 = vadd.f32 %v3018, %v3178
      %v3180 = vpop.f32.mrf.mxu0
      %v3181 = vpop.f32.mrf.mxu0
      %v3182 = vadd.f32 %v3021, %v3181
      %v3183 = vpop.f32.mrf.mxu0
      %3184 = vmatprep.mubr.bf16.mxu0 0
      %3185 = vmatmul.mubr.bf16.gmra.mxu0 %v2874
      %v3186 = vpop.f32.mrf.mxu0
      %v3187 = vadd.f32 %v3026, %v3186
      %v3188 = vpop.f32.mrf.mxu0
      %v3189 = vpop.f32.mrf.mxu0
      %v3190 = vadd.f32 %v3029, %v3189
      %v3191 = vpop.f32.mrf.mxu0
      %3192 = vmatprep.mubr.bf16.mxu0 0
      %3193 = vmatmul.mubr.bf16.gmra.mxu0 %v2877
      %v3194 = vpop.f32.mrf.mxu0
      %v3195 = vadd.f32 %v3034, %v3194
      %v3196 = vpop.f32.mrf.mxu0
      %v3197 = vpop.f32.mrf.mxu0
      %v3198 = vadd.f32 %v3037, %v3197
      %v3199 = vpop.f32.mrf.mxu0
      %3200 = vdwg.mxu0
      %v3201 = vld [vmem:[%s2] sm:$0x1]
      %v3203 = vlaneseq
      %v3204 = vshrl.u32 %v3203, 7
      %v3205 = vsub.s32 0, %v3204
      %v3206 = vrot.slane %v3201, %v3205
      %v3208 = vmul.f32 %v3075, %v3206
      %v3209 = vmul.f32 %v3078, %v3206
      %v3210 = vmul.f32 %v3083, %v3206
      %v3211 = vmul.f32 %v3086, %v3206
      %v3212 = vmul.f32 %v3091, %v3206
      %v3213 = vmul.f32 %v3094, %v3206
      %v3214 = vmul.f32 %v3099, %v3206
      %v3215 = vmul.f32 %v3102, %v3206
      %v3216 = vmul.f32 %v3107, %v3206
      %v3217 = vmul.f32 %v3110, %v3206
      %v3218 = vmul.f32 %v3115, %v3206
      %v3219 = vmul.f32 %v3118, %v3206
      %v3220 = vmul.f32 %v3123, %v3206
      %v3221 = vmul.f32 %v3126, %v3206
      %v3222 = vmul.f32 %v3131, %v3206
      %v3223 = vmul.f32 %v3134, %v3206
      %v3224 = vmul.f32 %v3139, %v3206
      %v3225 = vmul.f32 %v3142, %v3206
      %v3226 = vmul.f32 %v3147, %v3206
      %v3227 = vmul.f32 %v3150, %v3206
      %v3228 = vmul.f32 %v3155, %v3206
      %v3229 = vmul.f32 %v3158, %v3206
      %v3230 = vmul.f32 %v3163, %v3206
      %v3231 = vmul.f32 %v3166, %v3206
      %v3232 = vmul.f32 %v3171, %v3206
      %v3233 = vmul.f32 %v3174, %v3206
      %v3234 = vmul.f32 %v3179, %v3206
      %v3235 = vmul.f32 %v3182, %v3206
      %v3236 = vmul.f32 %v3187, %v3206
      %v3237 = vmul.f32 %v3190, %v3206
      %v3238 = vmul.f32 %v3195, %v3206
      %v3239 = vmul.f32 %v3198, %v3206
      %v3240 = vld [vmem:[%s3] sm:$0x1]
      %v3242 = vlaneseq
      %v3243 = vshrl.u32 %v3242, 7
      %v3244 = vsub.s32 0, %v3243
      %v3245 = vrot.slane %v3240, %v3244
      %v3247 = vadd.f32 %v3208, %v3245
      %v3248 = vadd.f32 %v3209, %v3245
      %v3249 = vadd.f32 %v3210, %v3245
      %v3250 = vadd.f32 %v3211, %v3245
      %v3251 = vadd.f32 %v3212, %v3245
      %v3252 = vadd.f32 %v3213, %v3245
      %v3253 = vadd.f32 %v3214, %v3245
      %v3254 = vadd.f32 %v3215, %v3245
      %v3255 = vadd.f32 %v3216, %v3245
      %v3256 = vadd.f32 %v3217, %v3245
      %v3257 = vadd.f32 %v3218, %v3245
      %v3258 = vadd.f32 %v3219, %v3245
      %v3259 = vadd.f32 %v3220, %v3245
      %v3260 = vadd.f32 %v3221, %v3245
      %v3261 = vadd.f32 %v3222, %v3245
      %v3262 = vadd.f32 %v3223, %v3245
      %v3263 = vadd.f32 %v3224, %v3245
      %v3264 = vadd.f32 %v3225, %v3245
      %v3265 = vadd.f32 %v3226, %v3245
      %v3266 = vadd.f32 %v3227, %v3245
      %v3267 = vadd.f32 %v3228, %v3245
      %v3268 = vadd.f32 %v3229, %v3245
      %v3269 = vadd.f32 %v3230, %v3245
      %v3270 = vadd.f32 %v3231, %v3245
      %v3271 = vadd.f32 %v3232, %v3245
      %v3272 = vadd.f32 %v3233, %v3245
      %v3273 = vadd.f32 %v3234, %v3245
      %v3274 = vadd.f32 %v3235, %v3245
      %v3275 = vadd.f32 %v3236, %v3245
      %v3276 = vadd.f32 %v3237, %v3245
      %v3277 = vadd.f32 %v3238, %v3245
      %v3278 = vadd.f32 %v3239, %v3245
      %v3279 = vmax.f32 %v3247, 0.0
      %v3280 = vmax.f32 %v3248, 0.0
      %v3281 = vmax.f32 %v3249, 0.0
      %v3282 = vmax.f32 %v3250, 0.0
      %v3283 = vmax.f32 %v3251, 0.0
      %v3284 = vmax.f32 %v3252, 0.0
      %v3285 = vmax.f32 %v3253, 0.0
      %v3286 = vmax.f32 %v3254, 0.0
      %v3287 = vmax.f32 %v3255, 0.0
      %v3288 = vmax.f32 %v3256, 0.0
      %v3289 = vmax.f32 %v3257, 0.0
      %v3290 = vmax.f32 %v3258, 0.0
      %v3291 = vmax.f32 %v3259, 0.0
      %v3292 = vmax.f32 %v3260, 0.0
      %v3293 = vmax.f32 %v3261, 0.0
      %v3294 = vmax.f32 %v3262, 0.0
      %v3295 = vmax.f32 %v3263, 0.0
      %v3296 = vmax.f32 %v3264, 0.0
      %v3297 = vmax.f32 %v3265, 0.0
      %v3298 = vmax.f32 %v3266, 0.0
      %v3299 = vmax.f32 %v3267, 0.0
      %v3300 = vmax.f32 %v3268, 0.0
      %v3301 = vmax.f32 %v3269, 0.0
      %v3302 = vmax.f32 %v3270, 0.0
      %v3303 = vmax.f32 %v3271, 0.0
      %v3304 = vmax.f32 %v3272, 0.0
      %v3305 = vmax.f32 %v3273, 0.0
      %v3306 = vmax.f32 %v3274, 0.0
      %v3307 = vmax.f32 %v3275, 0.0
      %v3308 = vmax.f32 %v3276, 0.0
      %v3309 = vmax.f32 %v3277, 0.0
      %v3310 = vmax.f32 %v3278, 0.0
      %3311 = vst.msk [vmem:[#allocation3] sm:$0xf] %vm280, 0
      %3312 = vst.msk [vmem:[#allocation3 + $0x4] sm:$0xf] %vm280, 0
      %3313 = vst.msk [vmem:[#allocation3 + $0x8] sm:$0x1] %vm283, 0
      %3314 = vst.msk [vmem:[#allocation3 + $0xc] sm:$0xf] %vm280, 0
      %3315 = vst.msk [vmem:[#allocation3 + $0x10] sm:$0xf] %vm280, 0
      %3316 = vst.msk [vmem:[#allocation3 + $0x14] sm:$0x1] %vm283, 0
      %3317 = vst.msk [vmem:[#allocation3 + $0x18] sm:$0xf] %vm280, 0
      %3318 = vst.msk [vmem:[#allocation3 + $0x1c] sm:$0xf] %vm280, 0
      %3319 = vst.msk [vmem:[#allocation3 + $0x20] sm:$0x1] %vm283, 0
      %3320 = vst.msk [vmem:[#allocation3 + $0x24] sm:$0xf] %vm280, 0
      %3321 = vst.msk [vmem:[#allocation3 + $0x28] sm:$0xf] %vm280, 0
      %3322 = vst.msk [vmem:[#allocation3 + $0x2c] sm:$0x1] %vm283, 0
      %3323 = vst.msk [vmem:[#allocation3 + $0x30] sm:$0xf] %vm280, 0
      %3324 = vst.msk [vmem:[#allocation3 + $0x34] sm:$0xf] %vm280, 0
      %3325 = vst.msk [vmem:[#allocation3 + $0x38] sm:$0x1] %vm283, 0
      %3326 = vst.msk [vmem:[#allocation3 + $0x3c] sm:$0xf] %vm280, 0
      %3327 = vst.msk [vmem:[#allocation3 + $0x40] sm:$0xf] %vm280, 0
      %3328 = vst.msk [vmem:[#allocation3 + $0x44] sm:$0x1] %vm283, 0
      %3329 = vst.msk [vmem:[#allocation3 + $0x48] sm:$0xf] %vm280, 0
      %3330 = vst.msk [vmem:[#allocation3 + $0x4c] sm:$0xf] %vm280, 0
      %3331 = vst.msk [vmem:[#allocation3 + $0x50] sm:$0x1] %vm283, 0
      %3332 = vst.msk [vmem:[#allocation3 + $0x54] sm:$0xf] %vm280, 0
      %3333 = vst.msk [vmem:[#allocation3 + $0x58] sm:$0xf] %vm280, 0
      %3334 = vst.msk [vmem:[#allocation3 + $0x5c] sm:$0x1] %vm283, 0
      %3335 = vst.msk [vmem:[#allocation3 + $0x60] sm:$0xf] %vm280, 0
      %3336 = vst.msk [vmem:[#allocation3 + $0x64] sm:$0xf] %vm280, 0
      %3337 = vst.msk [vmem:[#allocation3 + $0x68] sm:$0x1] %vm283, 0
      %3338 = vst.msk [vmem:[#allocation3 + $0x6c] sm:$0xf] %vm280, 0
      %3339 = vst.msk [vmem:[#allocation3 + $0x70] sm:$0xf] %vm280, 0
      %3340 = vst.msk [vmem:[#allocation3 + $0x74] sm:$0x1] %vm283, 0
      %3341 = vst.msk [vmem:[#allocation3 + $0x78] sm:$0xf] %vm280, 0
      %3342 = vst.msk [vmem:[#allocation3 + $0x7c] sm:$0xf] %vm280, 0
      %3343 = vst.msk [vmem:[#allocation3 + $0x80] sm:$0x1] %vm283, 0
      %3344 = vst.msk [vmem:[#allocation3 + $0x84] sm:$0xf] %vm280, 0
      %3345 = vst.msk [vmem:[#allocation3 + $0x88] sm:$0xf] %vm280, 0
      %3346 = vst.msk [vmem:[#allocation3 + $0x8c] sm:$0x1] %vm283, 0
      %3347 = vst.msk [vmem:[#allocation3 + $0x90] sm:$0xf] %vm280, 0
      %3348 = vst.msk [vmem:[#allocation3 + $0x94] sm:$0xf] %vm280, 0
      %3349 = vst.msk [vmem:[#allocation3 + $0x98] sm:$0x1] %vm283, 0
      %3350 = vst.msk [vmem:[#allocation3 + $0x9c] sm:$0xf] %vm280, 0
      %3351 = vst.msk [vmem:[#allocation3 + $0xa0] sm:$0xf] %vm280, 0
      %3352 = vst.msk [vmem:[#allocation3 + $0xa4] sm:$0x1] %vm283, 0
      %3353 = vst.msk [vmem:[#allocation3 + $0xa8] sm:$0xf] %vm280, 0
      %3354 = vst.msk [vmem:[#allocation3 + $0xac] sm:$0xf] %vm280, 0
      %3355 = vst.msk [vmem:[#allocation3 + $0xb0] sm:$0x1] %vm283, 0
      %3356 = vst.msk [vmem:[#allocation3 + $0xb4] sm:$0xf] %vm280, 0
      %3357 = vst.msk [vmem:[#allocation3 + $0xb8] sm:$0xf] %vm280, 0
      %3358 = vst.msk [vmem:[#allocation3 + $0xbc] sm:$0x1] %vm283, 0
      %3359 = vst.msk [vmem:[#allocation3 + $0xc0] sm:$0xf] %vm280, 0
      %3360 = vst.msk [vmem:[#allocation3 + $0xc4] sm:$0xf] %vm280, 0
      %3361 = vst.msk [vmem:[#allocation3 + $0xc8] sm:$0x1] %vm283, 0
      %3362 = vst.msk [vmem:[#allocation3 + $0xcc] sm:$0xf] %vm280, 0
      %3363 = vst.msk [vmem:[#allocation3 + $0xd0] sm:$0xf] %vm280, 0
      %3364 = vst.msk [vmem:[#allocation3 + $0xd4] sm:$0x1] %vm283, 0
      %v3365 = vpack.c.bf16 %v3280, %v3279
      %v3366 = vpack.c.bf16 %v3282, %v3281
      %v3367 = vpack.c.bf16 %v3284, %v3283
      %v3368 = vpack.c.bf16 %v3286, %v3285
      %v3369 = vpack.c.bf16 %v3288, %v3287
      %v3370 = vpack.c.bf16 %v3290, %v3289
      %v3371 = vpack.c.bf16 %v3292, %v3291
      %v3372 = vpack.c.bf16 %v3294, %v3293
      %v3373 = vpack.c.bf16 %v3296, %v3295
      %v3374 = vpack.c.bf16 %v3298, %v3297
      %v3375 = vpack.c.bf16 %v3300, %v3299
      %v3376 = vpack.c.bf16 %v3302, %v3301
      %v3377 = vpack.c.bf16 %v3304, %v3303
      %v3378 = vpack.c.bf16 %v3306, %v3305
      %v3379 = vpack.c.bf16 %v3308, %v3307
      %v3380 = vpack.c.bf16 %v3310, %v3309
      %v3397 = vunpack.c.l.b16 %v3365
      %v3398 = vunpack.c.h.b16 %v3365
      %v3399 = vunpack.c.l.b16 %v3366
      %v3400 = vunpack.c.h.b16 %v3366
      %v3401 = vunpack.c.l.b16 %v3367
      %v3402 = vunpack.c.h.b16 %v3367
      %v3403 = vunpack.c.l.b16 %v3368
      %v3404 = vunpack.c.h.b16 %v3368
      %v3405 = vunpack.c.l.b16 %v3369
      %v3406 = vunpack.c.h.b16 %v3369
      %v3407 = vunpack.c.l.b16 %v3370
      %v3408 = vunpack.c.h.b16 %v3370
      %v3409 = vunpack.c.l.b16 %v3371
      %v3410 = vunpack.c.h.b16 %v3371
      %v3411 = vunpack.c.l.b16 %v3372
      %v3412 = vunpack.c.h.b16 %v3372
      %v3413 = vunpack.c.l.b16 %v3373
      %v3414 = vunpack.c.h.b16 %v3373
      %v3415 = vunpack.c.l.b16 %v3374
      %v3416 = vunpack.c.h.b16 %v3374
      %v3417 = vunpack.c.l.b16 %v3375
      %v3418 = vunpack.c.h.b16 %v3375
      %v3419 = vunpack.c.l.b16 %v3376
      %v3420 = vunpack.c.h.b16 %v3376
      %v3421 = vunpack.c.l.b16 %v3377
      %v3422 = vunpack.c.h.b16 %v3377
      %v3423 = vunpack.c.l.b16 %v3378
      %v3424 = vunpack.c.h.b16 %v3378
      %v3425 = vunpack.c.l.b16 %v3379
      %v3426 = vunpack.c.h.b16 %v3379
      %v3427 = vunpack.c.l.b16 %v3380
      %v3428 = vunpack.c.h.b16 %v3380
      %v3429 = vpack.c.b16 %v3397, %v3397
      %v3430 = vpack.c.b16 %v3398, %v3398
      %v3431 = vpack.c.b16 %v3399, %v3399
      %v3432 = vpack.c.b16 %v3400, %v3400
      %v3433 = vpack.c.b16 %v3401, %v3401
      %v3434 = vpack.c.b16 %v3402, %v3402
      %v3435 = vpack.c.b16 %v3403, %v3403
      %v3436 = vpack.c.b16 %v3404, %v3404
      %v3437 = vpack.c.b16 %v3405, %v3405
      %v3438 = vpack.c.b16 %v3406, %v3406
      %v3439 = vpack.c.b16 %v3407, %v3407
      %v3440 = vpack.c.b16 %v3408, %v3408
      %v3441 = vpack.c.b16 %v3409, %v3409
      %v3442 = vpack.c.b16 %v3410, %v3410
      %v3443 = vpack.c.b16 %v3411, %v3411
      %v3444 = vpack.c.b16 %v3412, %v3412
      %v3445 = vpack.c.b16 %v3413, %v3413
      %v3446 = vpack.c.b16 %v3414, %v3414
      %v3447 = vpack.c.b16 %v3415, %v3415
      %v3448 = vpack.c.b16 %v3416, %v3416
      %v3449 = vpack.c.b16 %v3417, %v3417
      %v3450 = vpack.c.b16 %v3418, %v3418
      %v3451 = vpack.c.b16 %v3419, %v3419
      %v3452 = vpack.c.b16 %v3420, %v3420
      %v3453 = vpack.c.b16 %v3421, %v3421
      %v3454 = vpack.c.b16 %v3422, %v3422
      %v3455 = vpack.c.b16 %v3423, %v3423
      %v3456 = vpack.c.b16 %v3424, %v3424
      %v3457 = vpack.c.b16 %v3425, %v3425
      %v3458 = vpack.c.b16 %v3426, %v3426
      %v3459 = vpack.c.b16 %v3427, %v3427
      %v3460 = vpack.c.b16 %v3428, %v3428
      %v3462 = vshrl.u32 %v3429, 16
      %v3464 = vrot.slane %v3462, 7
      %v3465 = vshll.u32 %v3429, 16
      %v3467 = vor.u32 %v3464, %v3465
      %v3468 = vrot.slane %v3464, 4
      %v3470 = vshrl.u32 %v3430, 16
      %v3472 = vrot.slane %v3470, 7
      %v3473 = vshll.u32 %v3430, 16
      %v3475 = vor.u32 %v3472, %v3473
      %v3476 = vsel %vm370, %v3468, %v3475
      %v3477 = vrot.slane %v3472, 4
      %v3479 = vshrl.u32 %v3431, 16
      %v3481 = vrot.slane %v3479, 7
      %v3482 = vshll.u32 %v3431, 16
      %v3484 = vor.u32 %v3481, %v3482
      %v3485 = vrot.slane %v3481, 4
      %v3487 = vshrl.u32 %v3432, 16
      %v3489 = vrot.slane %v3487, 7
      %v3490 = vshll.u32 %v3432, 16
      %v3492 = vor.u32 %v3489, %v3490
      %v3493 = vsel %vm370, %v3485, %v3492
      %v3494 = vrot.slane %v3489, 4
      %v3496 = vshrl.u32 %v3433, 16
      %v3498 = vrot.slane %v3496, 7
      %v3499 = vshll.u32 %v3433, 16
      %v3501 = vor.u32 %v3498, %v3499
      %v3502 = vrot.slane %v3498, 4
      %v3504 = vshrl.u32 %v3434, 16
      %v3506 = vrot.slane %v3504, 7
      %v3507 = vshll.u32 %v3434, 16
      %v3509 = vor.u32 %v3506, %v3507
      %v3510 = vsel %vm370, %v3502, %v3509
      %v3511 = vrot.slane %v3506, 4
      %v3513 = vshrl.u32 %v3435, 16
      %v3515 = vrot.slane %v3513, 7
      %v3516 = vshll.u32 %v3435, 16
      %v3518 = vor.u32 %v3515, %v3516
      %v3519 = vrot.slane %v3515, 4
      %v3521 = vshrl.u32 %v3436, 16
      %v3523 = vrot.slane %v3521, 7
      %v3524 = vshll.u32 %v3436, 16
      %v3526 = vor.u32 %v3523, %v3524
      %v3527 = vsel %vm370, %v3519, %v3526
      %v3528 = vrot.slane %v3523, 4
      %v3530 = vshrl.u32 %v3437, 16
      %v3532 = vrot.slane %v3530, 7
      %v3533 = vshll.u32 %v3437, 16
      %v3535 = vor.u32 %v3532, %v3533
      %v3536 = vrot.slane %v3532, 4
      %v3538 = vshrl.u32 %v3438, 16
      %v3540 = vrot.slane %v3538, 7
      %v3541 = vshll.u32 %v3438, 16
      %v3543 = vor.u32 %v3540, %v3541
      %v3544 = vsel %vm370, %v3536, %v3543
      %v3545 = vrot.slane %v3540, 4
      %v3547 = vshrl.u32 %v3439, 16
      %v3549 = vrot.slane %v3547, 7
      %v3550 = vshll.u32 %v3439, 16
      %v3552 = vor.u32 %v3549, %v3550
      %v3553 = vrot.slane %v3549, 4
      %v3555 = vshrl.u32 %v3440, 16
      %v3557 = vrot.slane %v3555, 7
      %v3558 = vshll.u32 %v3440, 16
      %v3560 = vor.u32 %v3557, %v3558
      %v3561 = vsel %vm370, %v3553, %v3560
      %v3562 = vrot.slane %v3557, 4
      %v3564 = vshrl.u32 %v3441, 16
      %v3566 = vrot.slane %v3564, 7
      %v3567 = vshll.u32 %v3441, 16
      %v3569 = vor.u32 %v3566, %v3567
      %v3570 = vrot.slane %v3566, 4
      %v3572 = vshrl.u32 %v3442, 16
      %v3574 = vrot.slane %v3572, 7
      %v3575 = vshll.u32 %v3442, 16
      %v3577 = vor.u32 %v3574, %v3575
      %v3578 = vsel %vm370, %v3570, %v3577
      %v3579 = vrot.slane %v3574, 4
      %v3581 = vshrl.u32 %v3443, 16
      %v3583 = vrot.slane %v3581, 7
      %v3584 = vshll.u32 %v3443, 16
      %v3586 = vor.u32 %v3583, %v3584
      %v3587 = vrot.slane %v3583, 4
      %v3589 = vshrl.u32 %v3444, 16
      %v3591 = vrot.slane %v3589, 7
      %v3592 = vshll.u32 %v3444, 16
      %v3594 = vor.u32 %v3591, %v3592
      %v3595 = vsel %vm370, %v3587, %v3594
      %v3596 = vrot.slane %v3591, 4
      %v3598 = vshrl.u32 %v3445, 16
      %v3600 = vrot.slane %v3598, 7
      %v3601 = vshll.u32 %v3445, 16
      %v3603 = vor.u32 %v3600, %v3601
      %v3604 = vrot.slane %v3600, 4
      %v3606 = vshrl.u32 %v3446, 16
      %v3608 = vrot.slane %v3606, 7
      %v3609 = vshll.u32 %v3446, 16
      %v3611 = vor.u32 %v3608, %v3609
      %v3612 = vsel %vm370, %v3604, %v3611
      %v3613 = vrot.slane %v3608, 4
      %v3615 = vshrl.u32 %v3447, 16
      %v3617 = vrot.slane %v3615, 7
      %v3618 = vshll.u32 %v3447, 16
      %v3620 = vor.u32 %v3617, %v3618
      %v3621 = vrot.slane %v3617, 4
      %v3623 = vshrl.u32 %v3448, 16
      %v3625 = vrot.slane %v3623, 7
      %v3626 = vshll.u32 %v3448, 16
      %v3628 = vor.u32 %v3625, %v3626
      %v3629 = vsel %vm370, %v3621, %v3628
      %v3630 = vrot.slane %v3625, 4
      %v3632 = vshrl.u32 %v3449, 16
      %v3634 = vrot.slane %v3632, 7
      %v3635 = vshll.u32 %v3449, 16
      %v3637 = vor.u32 %v3634, %v3635
      %v3638 = vrot.slane %v3634, 4
      %v3640 = vshrl.u32 %v3450, 16
      %v3642 = vrot.slane %v3640, 7
      %v3643 = vshll.u32 %v3450, 16
      %v3645 = vor.u32 %v3642, %v3643
      %v3646 = vsel %vm370, %v3638, %v3645
      %v3647 = vrot.slane %v3642, 4
      %v3649 = vshrl.u32 %v3451, 16
      %v3651 = vrot.slane %v3649, 7
      %v3652 = vshll.u32 %v3451, 16
      %v3654 = vor.u32 %v3651, %v3652
      %v3655 = vrot.slane %v3651, 4
      %v3657 = vshrl.u32 %v3452, 16
      %v3659 = vrot.slane %v3657, 7
      %v3660 = vshll.u32 %v3452, 16
      %v3662 = vor.u32 %v3659, %v3660
      %v3663 = vsel %vm370, %v3655, %v3662
      %v3664 = vrot.slane %v3659, 4
      %v3666 = vshrl.u32 %v3453, 16
      %v3668 = vrot.slane %v3666, 7
      %v3669 = vshll.u32 %v3453, 16
      %v3671 = vor.u32 %v3668, %v3669
      %v3672 = vrot.slane %v3668, 4
      %v3674 = vshrl.u32 %v3454, 16
      %v3676 = vrot.slane %v3674, 7
      %v3677 = vshll.u32 %v3454, 16
      %v3679 = vor.u32 %v3676, %v3677
      %v3680 = vsel %vm370, %v3672, %v3679
      %v3681 = vrot.slane %v3676, 4
      %v3683 = vshrl.u32 %v3455, 16
      %v3685 = vrot.slane %v3683, 7
      %v3686 = vshll.u32 %v3455, 16
      %v3688 = vor.u32 %v3685, %v3686
      %v3689 = vrot.slane %v3685, 4
      %v3691 = vshrl.u32 %v3456, 16
      %v3693 = vrot.slane %v3691, 7
      %v3694 = vshll.u32 %v3456, 16
      %v3696 = vor.u32 %v3693, %v3694
      %v3697 = vsel %vm370, %v3689, %v3696
      %v3698 = vrot.slane %v3693, 4
      %v3700 = vshrl.u32 %v3457, 16
      %v3702 = vrot.slane %v3700, 7
      %v3703 = vshll.u32 %v3457, 16
      %v3705 = vor.u32 %v3702, %v3703
      %v3706 = vrot.slane %v3702, 4
      %v3708 = vshrl.u32 %v3458, 16
      %v3710 = vrot.slane %v3708, 7
      %v3711 = vshll.u32 %v3458, 16
      %v3713 = vor.u32 %v3710, %v3711
      %v3714 = vsel %vm370, %v3706, %v3713
      %v3715 = vrot.slane %v3710, 4
      %v3717 = vshrl.u32 %v3459, 16
      %v3719 = vrot.slane %v3717, 7
      %v3720 = vshll.u32 %v3459, 16
      %v3722 = vor.u32 %v3719, %v3720
      %v3723 = vrot.slane %v3719, 4
      %v3725 = vshrl.u32 %v3460, 16
      %v3727 = vrot.slane %v3725, 7
      %v3728 = vshll.u32 %v3460, 16
      %v3730 = vor.u32 %v3727, %v3728
      %v3731 = vsel %vm370, %v3723, %v3730
      %v3732 = vrot.slane %v3727, 4
      %s3781 = scalar_lea.vmem [#allocation3], 12
      %v3782 = vld [vmem:[%s3781] sm:$0xf]
      %v3783 = vsel %vm694, %v3467, %v3782
      %3784 = vst [vmem:[%s3781] sm:$0xf] %v3783
      %3785 = vst.msk [vmem:[%s3781 + $0x4] sm:$0xf] %vm280, %v3476
      %v3786 = vld [vmem:[%s3781 + $0x8] sm:$0x1]
      %v3787 = vsel %vm700, %v3477, %v3786
      %3788 = vst [vmem:[%s3781 + $0x8] sm:$0x1] %v3787
      %v3789 = vld [vmem:[%s3781 + $0xc] sm:$0xf]
      %v3790 = vsel %vm694, %v3484, %v3789
      %3791 = vst [vmem:[%s3781 + $0xc] sm:$0xf] %v3790
      %3792 = vst.msk [vmem:[%s3781 + $0x10] sm:$0xf] %vm280, %v3493
      %v3793 = vld [vmem:[%s3781 + $0x14] sm:$0x1]
      %v3794 = vsel %vm700, %v3494, %v3793
      %3795 = vst [vmem:[%s3781 + $0x14] sm:$0x1] %v3794
      %v3796 = vld [vmem:[%s3781 + $0x18] sm:$0xf]
      %v3797 = vsel %vm694, %v3501, %v3796
      %3798 = vst [vmem:[%s3781 + $0x18] sm:$0xf] %v3797
      %3799 = vst.msk [vmem:[%s3781 + $0x1c] sm:$0xf] %vm280, %v3510
      %v3800 = vld [vmem:[%s3781 + $0x20] sm:$0x1]
      %v3801 = vsel %vm700, %v3511, %v3800
      %3802 = vst [vmem:[%s3781 + $0x20] sm:$0x1] %v3801
      %v3803 = vld [vmem:[%s3781 + $0x24] sm:$0xf]
      %v3804 = vsel %vm694, %v3518, %v3803
      %3805 = vst [vmem:[%s3781 + $0x24] sm:$0xf] %v3804
      %3806 = vst.msk [vmem:[%s3781 + $0x28] sm:$0xf] %vm280, %v3527
      %v3807 = vld [vmem:[%s3781 + $0x2c] sm:$0x1]
      %v3808 = vsel %vm700, %v3528, %v3807
      %3809 = vst [vmem:[%s3781 + $0x2c] sm:$0x1] %v3808
      %v3810 = vld [vmem:[%s3781 + $0x30] sm:$0xf]
      %v3811 = vsel %vm694, %v3535, %v3810
      %3812 = vst [vmem:[%s3781 + $0x30] sm:$0xf] %v3811
      %3813 = vst.msk [vmem:[%s3781 + $0x34] sm:$0xf] %vm280, %v3544
      %v3814 = vld [vmem:[%s3781 + $0x38] sm:$0x1]
      %v3815 = vsel %vm700, %v3545, %v3814
      %3816 = vst [vmem:[%s3781 + $0x38] sm:$0x1] %v3815
      %v3817 = vld [vmem:[%s3781 + $0x3c] sm:$0xf]
      %v3818 = vsel %vm694, %v3552, %v3817
      %3819 = vst [vmem:[%s3781 + $0x3c] sm:$0xf] %v3818
      %3820 = vst.msk [vmem:[%s3781 + $0x40] sm:$0xf] %vm280, %v3561
      %v3821 = vld [vmem:[%s3781 + $0x44] sm:$0x1]
      %v3822 = vsel %vm700, %v3562, %v3821
      %3823 = vst [vmem:[%s3781 + $0x44] sm:$0x1] %v3822
      %v3824 = vld [vmem:[%s3781 + $0x48] sm:$0xf]
      %v3825 = vsel %vm694, %v3569, %v3824
      %3826 = vst [vmem:[%s3781 + $0x48] sm:$0xf] %v3825
      %3827 = vst.msk [vmem:[%s3781 + $0x4c] sm:$0xf] %vm280, %v3578
      %v3828 = vld [vmem:[%s3781 + $0x50] sm:$0x1]
      %v3829 = vsel %vm700, %v3579, %v3828
      %3830 = vst [vmem:[%s3781 + $0x50] sm:$0x1] %v3829
      %v3831 = vld [vmem:[%s3781 + $0x54] sm:$0xf]
      %v3832 = vsel %vm694, %v3586, %v3831
      %3833 = vst [vmem:[%s3781 + $0x54] sm:$0xf] %v3832
      %3834 = vst.msk [vmem:[%s3781 + $0x58] sm:$0xf] %vm280, %v3595
      %v3835 = vld [vmem:[%s3781 + $0x5c] sm:$0x1]
      %v3836 = vsel %vm700, %v3596, %v3835
      %3837 = vst [vmem:[%s3781 + $0x5c] sm:$0x1] %v3836
      %v3838 = vld [vmem:[%s3781 + $0x60] sm:$0xf]
      %v3839 = vsel %vm694, %v3603, %v3838
      %3840 = vst [vmem:[%s3781 + $0x60] sm:$0xf] %v3839
      %3841 = vst.msk [vmem:[%s3781 + $0x64] sm:$0xf] %vm280, %v3612
      %v3842 = vld [vmem:[%s3781 + $0x68] sm:$0x1]
      %v3843 = vsel %vm700, %v3613, %v3842
      %3844 = vst [vmem:[%s3781 + $0x68] sm:$0x1] %v3843
      %v3845 = vld [vmem:[%s3781 + $0x6c] sm:$0xf]
      %v3846 = vsel %vm694, %v3620, %v3845
      %3847 = vst [vmem:[%s3781 + $0x6c] sm:$0xf] %v3846
      %3848 = vst.msk [vmem:[%s3781 + $0x70] sm:$0xf] %vm280, %v3629
      %v3849 = vld [vmem:[%s3781 + $0x74] sm:$0x1]
      %v3850 = vsel %vm700, %v3630, %v3849
      %3851 = vst [vmem:[%s3781 + $0x74] sm:$0x1] %v3850
      %v3852 = vld [vmem:[%s3781 + $0x78] sm:$0xf]
      %v3853 = vsel %vm694, %v3637, %v3852
      %3854 = vst [vmem:[%s3781 + $0x78] sm:$0xf] %v3853
      %3855 = vst.msk [vmem:[%s3781 + $0x7c] sm:$0xf] %vm280, %v3646
      %v3856 = vld [vmem:[%s3781 + $0x80] sm:$0x1]
      %v3857 = vsel %vm700, %v3647, %v3856
      %3858 = vst [vmem:[%s3781 + $0x80] sm:$0x1] %v3857
      %v3859 = vld [vmem:[%s3781 + $0x84] sm:$0xf]
      %v3860 = vsel %vm694, %v3654, %v3859
      %3861 = vst [vmem:[%s3781 + $0x84] sm:$0xf] %v3860
      %3862 = vst.msk [vmem:[%s3781 + $0x88] sm:$0xf] %vm280, %v3663
      %v3863 = vld [vmem:[%s3781 + $0x8c] sm:$0x1]
      %v3864 = vsel %vm700, %v3664, %v3863
      %3865 = vst [vmem:[%s3781 + $0x8c] sm:$0x1] %v3864
      %v3866 = vld [vmem:[%s3781 + $0x90] sm:$0xf]
      %v3867 = vsel %vm694, %v3671, %v3866
      %3868 = vst [vmem:[%s3781 + $0x90] sm:$0xf] %v3867
      %3869 = vst.msk [vmem:[%s3781 + $0x94] sm:$0xf] %vm280, %v3680
      %v3870 = vld [vmem:[%s3781 + $0x98] sm:$0x1]
      %v3871 = vsel %vm700, %v3681, %v3870
      %3872 = vst [vmem:[%s3781 + $0x98] sm:$0x1] %v3871
      %v3873 = vld [vmem:[%s3781 + $0x9c] sm:$0xf]
      %v3874 = vsel %vm694, %v3688, %v3873
      %3875 = vst [vmem:[%s3781 + $0x9c] sm:$0xf] %v3874
      %3876 = vst.msk [vmem:[%s3781 + $0xa0] sm:$0xf] %vm280, %v3697
      %v3877 = vld [vmem:[%s3781 + $0xa4] sm:$0x1]
      %v3878 = vsel %vm700, %v3698, %v3877
      %3879 = vst [vmem:[%s3781 + $0xa4] sm:$0x1] %v3878
      %v3880 = vld [vmem:[%s3781 + $0xa8] sm:$0xf]
      %v3881 = vsel %vm694, %v3705, %v3880
      %3882 = vst [vmem:[%s3781 + $0xa8] sm:$0xf] %v3881
      %3883 = vst.msk [vmem:[%s3781 + $0xac] sm:$0xf] %vm280, %v3714
      %v3884 = vld [vmem:[%s3781 + $0xb0] sm:$0x1]
      %v3885 = vsel %vm700, %v3715, %v3884
      %3886 = vst [vmem:[%s3781 + $0xb0] sm:$0x1] %v3885
      %v3887 = vld [vmem:[%s3781 + $0xb4] sm:$0xf]
      %v3888 = vsel %vm694, %v3722, %v3887
      %3889 = vst [vmem:[%s3781 + $0xb4] sm:$0xf] %v3888
      %3890 = vst.msk [vmem:[%s3781 + $0xb8] sm:$0xf] %vm280, %v3731
      %v3891 = vld [vmem:[%s3781 + $0xbc] sm:$0x1]
      %v3892 = vsel %vm700, %v3732, %v3891
      %3893 = vst [vmem:[%s3781 + $0xbc] sm:$0x1] %v3892
      %v3894 = vld [vmem:[#allocation3] sm:$0xf]
      %v3895 = vld [vmem:[#allocation3 + $0x4] sm:$0xf]
      %v3896 = vld [vmem:[#allocation3 + $0xc] sm:$0xf]
      %v3897 = vld [vmem:[#allocation3 + $0x10] sm:$0xf]
      %v3898 = vld [vmem:[#allocation3 + $0x18] sm:$0xf]
      %v3899 = vld [vmem:[#allocation3 + $0x1c] sm:$0xf]
      %v3900 = vld [vmem:[#allocation3 + $0x24] sm:$0xf]
      %v3901 = vld [vmem:[#allocation3 + $0x28] sm:$0xf]
      %v3902 = vld [vmem:[#allocation3 + $0x30] sm:$0xf]
      %v3903 = vld [vmem:[#allocation3 + $0x34] sm:$0xf]
      %v3904 = vld [vmem:[#allocation3 + $0x3c] sm:$0xf]
      %v3905 = vld [vmem:[#allocation3 + $0x40] sm:$0xf]
      %v3906 = vld [vmem:[#allocation3 + $0x48] sm:$0xf]
      %v3907 = vld [vmem:[#allocation3 + $0x4c] sm:$0xf]
      %v3908 = vld [vmem:[#allocation3 + $0x54] sm:$0xf]
      %v3909 = vld [vmem:[#allocation3 + $0x58] sm:$0xf]
      %v3910 = vld [vmem:[#allocation3 + $0x60] sm:$0xf]
      %v3911 = vld [vmem:[#allocation3 + $0x64] sm:$0xf]
      %v3912 = vld [vmem:[#allocation3 + $0x6c] sm:$0xf]
      %v3913 = vld [vmem:[#allocation3 + $0x70] sm:$0xf]
      %v3914 = vld [vmem:[#allocation3 + $0x78] sm:$0xf]
      %v3915 = vld [vmem:[#allocation3 + $0x7c] sm:$0xf]
      %v3916 = vld [vmem:[#allocation3 + $0x84] sm:$0xf]
      %v3917 = vld [vmem:[#allocation3 + $0x88] sm:$0xf]
      %v3918 = vld [vmem:[#allocation3 + $0x90] sm:$0xf]
      %v3919 = vld [vmem:[#allocation3 + $0x94] sm:$0xf]
      %v3920 = vld [vmem:[#allocation3 + $0x9c] sm:$0xf]
      %v3921 = vld [vmem:[#allocation3 + $0xa0] sm:$0xf]
      %v3922 = vld [vmem:[#allocation3 + $0xa8] sm:$0xf]
      %v3923 = vld [vmem:[#allocation3 + $0xac] sm:$0xf]
      %v3924 = vld [vmem:[#allocation3 + $0xb4] sm:$0xf]
      %v3925 = vld [vmem:[#allocation3 + $0xb8] sm:$0xf]
      %v3926 = vld [vmem:[#allocation3 + $0x8] sm:$0x1]
      %v3927 = vld [vmem:[#allocation3 + $0x14] sm:$0x1]
      %v3928 = vld [vmem:[#allocation3 + $0x20] sm:$0x1]
      %v3929 = vld [vmem:[#allocation3 + $0x2c] sm:$0x1]
      %v3930 = vld [vmem:[#allocation3 + $0x38] sm:$0x1]
      %v3931 = vld [vmem:[#allocation3 + $0x44] sm:$0x1]
      %v3932 = vld [vmem:[#allocation3 + $0x50] sm:$0x1]
      %v3933 = vld [vmem:[#allocation3 + $0x5c] sm:$0x1]
      %v3934 = vld [vmem:[#allocation3 + $0x68] sm:$0x1]
      %v3935 = vld [vmem:[#allocation3 + $0x74] sm:$0x1]
      %v3936 = vld [vmem:[#allocation3 + $0x80] sm:$0x1]
      %v3937 = vld [vmem:[#allocation3 + $0x8c] sm:$0x1]
      %v3938 = vld [vmem:[#allocation3 + $0x98] sm:$0x1]
      %v3939 = vld [vmem:[#allocation3 + $0xa4] sm:$0x1]
      %v3940 = vld [vmem:[#allocation3 + $0xb0] sm:$0x1]
      %v3941 = vld [vmem:[#allocation3 + $0xbc] sm:$0x1]
      %v3942 = vld [vmem:[#allocation3] sm:$0xe]
      %v3943 = vld [vmem:[#allocation3 + $0xc] sm:$0xe]
      %v3944 = vld [vmem:[#allocation3 + $0x18] sm:$0xe]
      %v3945 = vld [vmem:[#allocation3 + $0x24] sm:$0xe]
      %v3946 = vld [vmem:[#allocation3 + $0x30] sm:$0xe]
      %v3947 = vld [vmem:[#allocation3 + $0x3c] sm:$0xe]
      %v3948 = vld [vmem:[#allocation3 + $0x48] sm:$0xe]
      %v3949 = vld [vmem:[#allocation3 + $0x54] sm:$0xe]
      %v3950 = vld [vmem:[#allocation3 + $0x60] sm:$0xe]
      %v3951 = vld [vmem:[#allocation3 + $0x6c] sm:$0xe]
      %v3952 = vld [vmem:[#allocation3 + $0x78] sm:$0xe]
      %v3953 = vld [vmem:[#allocation3 + $0x84] sm:$0xe]
      %v3954 = vld [vmem:[#allocation3 + $0x90] sm:$0xe]
      %v3955 = vld [vmem:[#allocation3 + $0x9c] sm:$0xe]
      %v3956 = vld [vmem:[#allocation3 + $0xa8] sm:$0xe]
      %v3957 = vld [vmem:[#allocation3 + $0xb4] sm:$0xe]
      %v3958 = vld [vmem:[%s3781] sm:$0xf]
      %v3959 = vld [vmem:[%s3781 + $0x4] sm:$0xf]
      %v3960 = vld [vmem:[%s3781 + $0xc] sm:$0xf]
      %v3961 = vld [vmem:[%s3781 + $0x10] sm:$0xf]
      %v3962 = vld [vmem:[%s3781 + $0x18] sm:$0xf]
      %v3963 = vld [vmem:[%s3781 + $0x1c] sm:$0xf]
      %v3964 = vld [vmem:[%s3781 + $0x24] sm:$0xf]
      %v3965 = vld [vmem:[%s3781 + $0x28] sm:$0xf]
      %v3966 = vld [vmem:[%s3781 + $0x30] sm:$0xf]
      %v3967 = vld [vmem:[%s3781 + $0x34] sm:$0xf]
      %v3968 = vld [vmem:[%s3781 + $0x3c] sm:$0xf]
      %v3969 = vld [vmem:[%s3781 + $0x40] sm:$0xf]
      %v3970 = vld [vmem:[%s3781 + $0x48] sm:$0xf]
      %v3971 = vld [vmem:[%s3781 + $0x4c] sm:$0xf]
      %v3972 = vld [vmem:[%s3781 + $0x54] sm:$0xf]
      %v3973 = vld [vmem:[%s3781 + $0x58] sm:$0xf]
      %v3974 = vld [vmem:[%s3781 + $0x60] sm:$0xf]
      %v3975 = vld [vmem:[%s3781 + $0x64] sm:$0xf]
      %v3976 = vld [vmem:[%s3781 + $0x6c] sm:$0xf]
      %v3977 = vld [vmem:[%s3781 + $0x70] sm:$0xf]
      %v3978 = vld [vmem:[%s3781 + $0x78] sm:$0xf]
      %v3979 = vld [vmem:[%s3781 + $0x7c] sm:$0xf]
      %v3980 = vld [vmem:[%s3781 + $0x84] sm:$0xf]
      %v3981 = vld [vmem:[%s3781 + $0x88] sm:$0xf]
      %v3982 = vld [vmem:[%s3781 + $0x90] sm:$0xf]
      %v3983 = vld [vmem:[%s3781 + $0x94] sm:$0xf]
      %v3984 = vld [vmem:[%s3781 + $0x9c] sm:$0xf]
      %v3985 = vld [vmem:[%s3781 + $0xa0] sm:$0xf]
      %v3986 = vld [vmem:[%s3781 + $0xa8] sm:$0xf]
      %v3987 = vld [vmem:[%s3781 + $0xac] sm:$0xf]
      %v3988 = vld [vmem:[%s3781 + $0xb4] sm:$0xf]
      %v3989 = vld [vmem:[%s3781 + $0xb8] sm:$0xf]
      %v3990 = vld [vmem:[%s3781 + $0x8] sm:$0x1]
      %v3991 = vld [vmem:[%s3781 + $0x14] sm:$0x1]
      %v3992 = vld [vmem:[%s3781 + $0x20] sm:$0x1]
      %v3993 = vld [vmem:[%s3781 + $0x2c] sm:$0x1]
      %v3994 = vld [vmem:[%s3781 + $0x38] sm:$0x1]
      %v3995 = vld [vmem:[%s3781 + $0x44] sm:$0x1]
      %v3996 = vld [vmem:[%s3781 + $0x50] sm:$0x1]
      %v3997 = vld [vmem:[%s3781 + $0x5c] sm:$0x1]
      %v3998 = vld [vmem:[%s3781 + $0x68] sm:$0x1]
      %v3999 = vld [vmem:[%s3781 + $0x74] sm:$0x1]
      %v4000 = vld [vmem:[%s3781 + $0x80] sm:$0x1]
      %v4001 = vld [vmem:[%s3781 + $0x8c] sm:$0x1]
      %v4002 = vld [vmem:[%s3781 + $0x98] sm:$0x1]
      %v4003 = vld [vmem:[%s3781 + $0xa4] sm:$0x1]
      %v4004 = vld [vmem:[%s3781 + $0xb0] sm:$0x1]
      %v4005 = vld [vmem:[%s3781 + $0xbc] sm:$0x1]
      %v4006 = vld [vmem:[%s3781] sm:$0xe]
      %v4007 = vld [vmem:[%s3781 + $0xc] sm:$0xe]
      %v4008 = vld [vmem:[%s3781 + $0x18] sm:$0xe]
      %v4009 = vld [vmem:[%s3781 + $0x24] sm:$0xe]
      %v4010 = vld [vmem:[%s3781 + $0x30] sm:$0xe]
      %v4011 = vld [vmem:[%s3781 + $0x3c] sm:$0xe]
      %v4012 = vld [vmem:[%s3781 + $0x48] sm:$0xe]
      %v4013 = vld [vmem:[%s3781 + $0x54] sm:$0xe]
      %v4014 = vld [vmem:[%s3781 + $0x60] sm:$0xe]
      %v4015 = vld [vmem:[%s3781 + $0x6c] sm:$0xe]
      %v4016 = vld [vmem:[%s3781 + $0x78] sm:$0xe]
      %v4017 = vld [vmem:[%s3781 + $0x84] sm:$0xe]
      %v4018 = vld [vmem:[%s3781 + $0x90] sm:$0xe]
      %v4019 = vld [vmem:[%s3781 + $0x9c] sm:$0xe]
      %v4020 = vld [vmem:[%s3781 + $0xa8] sm:$0xe]
      %v4021 = vld [vmem:[%s3781 + $0xb4] sm:$0xe]
      %s4022 = scalar_lea.vmem [#allocation3], 24
      %v4023 = vld [vmem:[%s4022] sm:$0xf]
      %v4024 = vld [vmem:[%s4022 + $0x4] sm:$0xf]
      %v4025 = vld [vmem:[%s4022 + $0xc] sm:$0xf]
      %v4026 = vld [vmem:[%s4022 + $0x10] sm:$0xf]
      %v4027 = vld [vmem:[%s4022 + $0x18] sm:$0xf]
      %v4028 = vld [vmem:[%s4022 + $0x1c] sm:$0xf]
      %v4029 = vld [vmem:[%s4022 + $0x24] sm:$0xf]
      %v4030 = vld [vmem:[%s4022 + $0x28] sm:$0xf]
      %v4031 = vld [vmem:[%s4022 + $0x30] sm:$0xf]
      %v4032 = vld [vmem:[%s4022 + $0x34] sm:$0xf]
      %v4033 = vld [vmem:[%s4022 + $0x3c] sm:$0xf]
      %v4034 = vld [vmem:[%s4022 + $0x40] sm:$0xf]
      %v4035 = vld [vmem:[%s4022 + $0x48] sm:$0xf]
      %v4036 = vld [vmem:[%s4022 + $0x4c] sm:$0xf]
      %v4037 = vld [vmem:[%s4022 + $0x54] sm:$0xf]
      %v4038 = vld [vmem:[%s4022 + $0x58] sm:$0xf]
      %v4039 = vld [vmem:[%s4022 + $0x60] sm:$0xf]
      %v4040 = vld [vmem:[%s4022 + $0x64] sm:$0xf]
      %v4041 = vld [vmem:[%s4022 + $0x6c] sm:$0xf]
      %v4042 = vld [vmem:[%s4022 + $0x70] sm:$0xf]
      %v4043 = vld [vmem:[%s4022 + $0x78] sm:$0xf]
      %v4044 = vld [vmem:[%s4022 + $0x7c] sm:$0xf]
      %v4045 = vld [vmem:[%s4022 + $0x84] sm:$0xf]
      %v4046 = vld [vmem:[%s4022 + $0x88] sm:$0xf]
      %v4047 = vld [vmem:[%s4022 + $0x90] sm:$0xf]
      %v4048 = vld [vmem:[%s4022 + $0x94] sm:$0xf]
      %v4049 = vld [vmem:[%s4022 + $0x9c] sm:$0xf]
      %v4050 = vld [vmem:[%s4022 + $0xa0] sm:$0xf]
      %v4051 = vld [vmem:[%s4022 + $0xa8] sm:$0xf]
      %v4052 = vld [vmem:[%s4022 + $0xac] sm:$0xf]
      %v4053 = vld [vmem:[%s4022 + $0xb4] sm:$0xf]
      %v4054 = vld [vmem:[%s4022 + $0xb8] sm:$0xf]
      %v4055 = vld [vmem:[%s4022 + $0x8] sm:$0x1]
      %v4056 = vld [vmem:[%s4022 + $0x14] sm:$0x1]
      %v4057 = vld [vmem:[%s4022 + $0x20] sm:$0x1]
      %v4058 = vld [vmem:[%s4022 + $0x2c] sm:$0x1]
      %v4059 = vld [vmem:[%s4022 + $0x38] sm:$0x1]
      %v4060 = vld [vmem:[%s4022 + $0x44] sm:$0x1]
      %v4061 = vld [vmem:[%s4022 + $0x50] sm:$0x1]
      %v4062 = vld [vmem:[%s4022 + $0x5c] sm:$0x1]
      %v4063 = vld [vmem:[%s4022 + $0x68] sm:$0x1]
      %v4064 = vld [vmem:[%s4022 + $0x74] sm:$0x1]
      %v4065 = vld [vmem:[%s4022 + $0x80] sm:$0x1]
      %v4066 = vld [vmem:[%s4022 + $0x8c] sm:$0x1]
      %v4067 = vld [vmem:[%s4022 + $0x98] sm:$0x1]
      %v4068 = vld [vmem:[%s4022 + $0xa4] sm:$0x1]
      %v4069 = vld [vmem:[%s4022 + $0xb0] sm:$0x1]
      %v4070 = vld [vmem:[%s4022 + $0xbc] sm:$0x1]
      %v4071 = vld [vmem:[%s4022] sm:$0xe]
      %v4072 = vld [vmem:[%s4022 + $0xc] sm:$0xe]
      %v4073 = vld [vmem:[%s4022 + $0x18] sm:$0xe]
      %v4074 = vld [vmem:[%s4022 + $0x24] sm:$0xe]
      %v4075 = vld [vmem:[%s4022 + $0x30] sm:$0xe]
      %v4076 = vld [vmem:[%s4022 + $0x3c] sm:$0xe]
      %v4077 = vld [vmem:[%s4022 + $0x48] sm:$0xe]
      %v4078 = vld [vmem:[%s4022 + $0x54] sm:$0xe]
      %v4079 = vld [vmem:[%s4022 + $0x60] sm:$0xe]
      %v4080 = vld [vmem:[%s4022 + $0x6c] sm:$0xe]
      %v4081 = vld [vmem:[%s4022 + $0x78] sm:$0xe]
      %v4082 = vld [vmem:[%s4022 + $0x84] sm:$0xe]
      %v4083 = vld [vmem:[%s4022 + $0x90] sm:$0xe]
      %v4084 = vld [vmem:[%s4022 + $0x9c] sm:$0xe]
      %v4085 = vld [vmem:[%s4022 + $0xa8] sm:$0xe]
      %v4086 = vld [vmem:[%s4022 + $0xb4] sm:$0xe]
      %v4119 = vunpack.c.l.b16 %v3894
      %v4120 = vunpack.c.l.b16 %v3895
      %v4121 = vunpack.c.l.b16 %v3896
      %v4122 = vunpack.c.l.b16 %v3897
      %v4123 = vunpack.c.l.b16 %v3898
      %v4124 = vunpack.c.l.b16 %v3899
      %v4125 = vunpack.c.l.b16 %v3900
      %v4126 = vunpack.c.l.b16 %v3901
      %v4127 = vunpack.c.l.b16 %v3902
      %v4128 = vunpack.c.l.b16 %v3903
      %v4129 = vunpack.c.l.b16 %v3904
      %v4130 = vunpack.c.l.b16 %v3905
      %v4131 = vunpack.c.l.b16 %v3906
      %v4132 = vunpack.c.l.b16 %v3907
      %v4133 = vunpack.c.l.b16 %v3908
      %v4134 = vunpack.c.l.b16 %v3909
      %v4135 = vunpack.c.l.b16 %v3910
      %v4136 = vunpack.c.l.b16 %v3911
      %v4137 = vunpack.c.l.b16 %v3912
      %v4138 = vunpack.c.l.b16 %v3913
      %v4139 = vunpack.c.l.b16 %v3914
      %v4140 = vunpack.c.l.b16 %v3915
      %v4141 = vunpack.c.l.b16 %v3916
      %v4142 = vunpack.c.l.b16 %v3917
      %v4143 = vunpack.c.l.b16 %v3918
      %v4144 = vunpack.c.l.b16 %v3919
      %v4145 = vunpack.c.l.b16 %v3920
      %v4146 = vunpack.c.l.b16 %v3921
      %v4147 = vunpack.c.l.b16 %v3922
      %v4148 = vunpack.c.l.b16 %v3923
      %v4149 = vunpack.c.l.b16 %v3924
      %v4150 = vunpack.c.l.b16 %v3925
      %v4151 = vpack.c.b16 %v4120, %v4119
      %v4152 = vpack.c.b16 %v4122, %v4121
      %v4153 = vpack.c.b16 %v4124, %v4123
      %v4154 = vpack.c.b16 %v4126, %v4125
      %v4155 = vpack.c.b16 %v4128, %v4127
      %v4156 = vpack.c.b16 %v4130, %v4129
      %v4157 = vpack.c.b16 %v4132, %v4131
      %v4158 = vpack.c.b16 %v4134, %v4133
      %v4159 = vpack.c.b16 %v4136, %v4135
      %v4160 = vpack.c.b16 %v4138, %v4137
      %v4161 = vpack.c.b16 %v4140, %v4139
      %v4162 = vpack.c.b16 %v4142, %v4141
      %v4163 = vpack.c.b16 %v4144, %v4143
      %v4164 = vpack.c.b16 %v4146, %v4145
      %v4165 = vpack.c.b16 %v4148, %v4147
      %v4166 = vpack.c.b16 %v4150, %v4149
      %v4183 = vunpack.c.l.b16 %v3926
      %v4184 = vunpack.c.l.b16 %v3927
      %v4185 = vunpack.c.l.b16 %v3928
      %v4186 = vunpack.c.l.b16 %v3929
      %v4187 = vunpack.c.l.b16 %v3930
      %v4188 = vunpack.c.l.b16 %v3931
      %v4189 = vunpack.c.l.b16 %v3932
      %v4190 = vunpack.c.l.b16 %v3933
      %v4191 = vunpack.c.l.b16 %v3934
      %v4192 = vunpack.c.l.b16 %v3935
      %v4193 = vunpack.c.l.b16 %v3936
      %v4194 = vunpack.c.l.b16 %v3937
      %v4195 = vunpack.c.l.b16 %v3938
      %v4196 = vunpack.c.l.b16 %v3939
      %v4197 = vunpack.c.l.b16 %v3940
      %v4198 = vunpack.c.l.b16 %v3941
      %v4199 = vpack.c.b16 %v4183, %v4183
      %v4200 = vpack.c.b16 %v4184, %v4184
      %v4201 = vpack.c.b16 %v4185, %v4185
      %v4202 = vpack.c.b16 %v4186, %v4186
      %v4203 = vpack.c.b16 %v4187, %v4187
      %v4204 = vpack.c.b16 %v4188, %v4188
      %v4205 = vpack.c.b16 %v4189, %v4189
      %v4206 = vpack.c.b16 %v4190, %v4190
      %v4207 = vpack.c.b16 %v4191, %v4191
      %v4208 = vpack.c.b16 %v4192, %v4192
      %v4209 = vpack.c.b16 %v4193, %v4193
      %v4210 = vpack.c.b16 %v4194, %v4194
      %v4211 = vpack.c.b16 %v4195, %v4195
      %v4212 = vpack.c.b16 %v4196, %v4196
      %v4213 = vpack.c.b16 %v4197, %v4197
      %v4214 = vpack.c.b16 %v4198, %v4198
      %v4216 = vshrl.u32 %v4151, 16
      %v4218 = vshll.u32 %v4151, 16
      %v4220 = vrot.slane %v4218, 1
      %v4221 = vor.u32 %v4216, %v4220
      %v4223 = vshll.u32 %v4199, 16
      %v4225 = vrot.slane %v4223, 1
      %v4226 = vsel %vm1130, %v4221, %v4225
      %v4228 = vshrl.u32 %v4152, 16
      %v4230 = vshll.u32 %v4152, 16
      %v4232 = vrot.slane %v4230, 1
      %v4233 = vor.u32 %v4228, %v4232
      %v4235 = vshll.u32 %v4200, 16
      %v4237 = vrot.slane %v4235, 1
      %v4238 = vsel %vm1130, %v4233, %v4237
      %v4240 = vshrl.u32 %v4153, 16
      %v4242 = vshll.u32 %v4153, 16
      %v4244 = vrot.slane %v4242, 1
      %v4245 = vor.u32 %v4240, %v4244
      %v4247 = vshll.u32 %v4201, 16
      %v4249 = vrot.slane %v4247, 1
      %v4250 = vsel %vm1130, %v4245, %v4249
      %v4252 = vshrl.u32 %v4154, 16
      %v4254 = vshll.u32 %v4154, 16
      %v4256 = vrot.slane %v4254, 1
      %v4257 = vor.u32 %v4252, %v4256
      %v4259 = vshll.u32 %v4202, 16
      %v4261 = vrot.slane %v4259, 1
      %v4262 = vsel %vm1130, %v4257, %v4261
      %v4264 = vshrl.u32 %v4155, 16
      %v4266 = vshll.u32 %v4155, 16
      %v4268 = vrot.slane %v4266, 1
      %v4269 = vor.u32 %v4264, %v4268
      %v4271 = vshll.u32 %v4203, 16
      %v4273 = vrot.slane %v4271, 1
      %v4274 = vsel %vm1130, %v4269, %v4273
      %v4276 = vshrl.u32 %v4156, 16
      %v4278 = vshll.u32 %v4156, 16
      %v4280 = vrot.slane %v4278, 1
      %v4281 = vor.u32 %v4276, %v4280
      %v4283 = vshll.u32 %v4204, 16
      %v4285 = vrot.slane %v4283, 1
      %v4286 = vsel %vm1130, %v4281, %v4285
      %v4288 = vshrl.u32 %v4157, 16
      %v4290 = vshll.u32 %v4157, 16
      %v4292 = vrot.slane %v4290, 1
      %v4293 = vor.u32 %v4288, %v4292
      %v4295 = vshll.u32 %v4205, 16
      %v4297 = vrot.slane %v4295, 1
      %v4298 = vsel %vm1130, %v4293, %v4297
      %v4300 = vshrl.u32 %v4158, 16
      %v4302 = vshll.u32 %v4158, 16
      %v4304 = vrot.slane %v4302, 1
      %v4305 = vor.u32 %v4300, %v4304
      %v4307 = vshll.u32 %v4206, 16
      %v4309 = vrot.slane %v4307, 1
      %v4310 = vsel %vm1130, %v4305, %v4309
      %v4312 = vshrl.u32 %v4159, 16
      %v4314 = vshll.u32 %v4159, 16
      %v4316 = vrot.slane %v4314, 1
      %v4317 = vor.u32 %v4312, %v4316
      %v4319 = vshll.u32 %v4207, 16
      %v4321 = vrot.slane %v4319, 1
      %v4322 = vsel %vm1130, %v4317, %v4321
      %v4324 = vshrl.u32 %v4160, 16
      %v4326 = vshll.u32 %v4160, 16
      %v4328 = vrot.slane %v4326, 1
      %v4329 = vor.u32 %v4324, %v4328
      %v4331 = vshll.u32 %v4208, 16
      %v4333 = vrot.slane %v4331, 1
      %v4334 = vsel %vm1130, %v4329, %v4333
      %v4336 = vshrl.u32 %v4161, 16
      %v4338 = vshll.u32 %v4161, 16
      %v4340 = vrot.slane %v4338, 1
      %v4341 = vor.u32 %v4336, %v4340
      %v4343 = vshll.u32 %v4209, 16
      %v4345 = vrot.slane %v4343, 1
      %v4346 = vsel %vm1130, %v4341, %v4345
      %v4348 = vshrl.u32 %v4162, 16
      %v4350 = vshll.u32 %v4162, 16
      %v4352 = vrot.slane %v4350, 1
      %v4353 = vor.u32 %v4348, %v4352
      %v4355 = vshll.u32 %v4210, 16
      %v4357 = vrot.slane %v4355, 1
      %v4358 = vsel %vm1130, %v4353, %v4357
      %v4360 = vshrl.u32 %v4163, 16
      %v4362 = vshll.u32 %v4163, 16
      %v4364 = vrot.slane %v4362, 1
      %v4365 = vor.u32 %v4360, %v4364
      %v4367 = vshll.u32 %v4211, 16
      %v4369 = vrot.slane %v4367, 1
      %v4370 = vsel %vm1130, %v4365, %v4369
      %v4372 = vshrl.u32 %v4164, 16
      %v4374 = vshll.u32 %v4164, 16
      %v4376 = vrot.slane %v4374, 1
      %v4377 = vor.u32 %v4372, %v4376
      %v4379 = vshll.u32 %v4212, 16
      %v4381 = vrot.slane %v4379, 1
      %v4382 = vsel %vm1130, %v4377, %v4381
      %v4384 = vshrl.u32 %v4165, 16
      %v4386 = vshll.u32 %v4165, 16
      %v4388 = vrot.slane %v4386, 1
      %v4389 = vor.u32 %v4384, %v4388
      %v4391 = vshll.u32 %v4213, 16
      %v4393 = vrot.slane %v4391, 1
      %v4394 = vsel %vm1130, %v4389, %v4393
      %v4396 = vshrl.u32 %v4166, 16
      %v4398 = vshll.u32 %v4166, 16
      %v4400 = vrot.slane %v4398, 1
      %v4401 = vor.u32 %v4396, %v4400
      %v4403 = vshll.u32 %v4214, 16
      %v4405 = vrot.slane %v4403, 1
      %v4406 = vsel %vm1130, %v4401, %v4405
      %4407 = vrot.lane.b32.xlu0 %v4226, 32
      %v4408 = vpop.permute.xlu0 %4407
      %4409 = vrot.lane.b32.xlu0 %v4238, 32
      %v4410 = vpop.permute.xlu0 %4409
      %4411 = vrot.lane.b32.xlu0 %v4250, 32
      %v4412 = vpop.permute.xlu0 %4411
      %4413 = vrot.lane.b32.xlu0 %v4262, 32
      %v4414 = vpop.permute.xlu0 %4413
      %4415 = vrot.lane.b32.xlu0 %v4274, 32
      %v4416 = vpop.permute.xlu0 %4415
      %4417 = vrot.lane.b32.xlu0 %v4286, 32
      %v4418 = vpop.permute.xlu0 %4417
      %4419 = vrot.lane.b32.xlu0 %v4298, 32
      %v4420 = vpop.permute.xlu0 %4419
      %4421 = vrot.lane.b32.xlu0 %v4310, 32
      %v4422 = vpop.permute.xlu0 %4421
      %4423 = vrot.lane.b32.xlu0 %v4322, 32
      %v4424 = vpop.permute.xlu0 %4423
      %4425 = vrot.lane.b32.xlu0 %v4334, 32
      %v4426 = vpop.permute.xlu0 %4425
      %4427 = vrot.lane.b32.xlu0 %v4346, 32
      %v4428 = vpop.permute.xlu0 %4427
      %4429 = vrot.lane.b32.xlu0 %v4358, 32
      %v4430 = vpop.permute.xlu0 %4429
      %4431 = vrot.lane.b32.xlu0 %v4370, 32
      %v4432 = vpop.permute.xlu0 %4431
      %4433 = vrot.lane.b32.xlu0 %v4382, 32
      %v4434 = vpop.permute.xlu0 %4433
      %4435 = vrot.lane.b32.xlu0 %v4394, 32
      %v4436 = vpop.permute.xlu0 %4435
      %4437 = vrot.lane.b32.xlu0 %v4406, 32
      %v4438 = vpop.permute.xlu0 %4437
      %v4455 = vunpack.c.l.b16 %v3942
      %v4456 = vunpack.c.l.b16 %v3943
      %v4457 = vunpack.c.l.b16 %v3944
      %v4458 = vunpack.c.l.b16 %v3945
      %v4459 = vunpack.c.l.b16 %v3946
      %v4460 = vunpack.c.l.b16 %v3947
      %v4461 = vunpack.c.l.b16 %v3948
      %v4462 = vunpack.c.l.b16 %v3949
      %v4463 = vunpack.c.l.b16 %v3950
      %v4464 = vunpack.c.l.b16 %v3951
      %v4465 = vunpack.c.l.b16 %v3952
      %v4466 = vunpack.c.l.b16 %v3953
      %v4467 = vunpack.c.l.b16 %v3954
      %v4468 = vunpack.c.l.b16 %v3955
      %v4469 = vunpack.c.l.b16 %v3956
      %v4470 = vunpack.c.l.b16 %v3957
      %v4471 = vpack.c.b16 %v4120, %v4455
      %v4472 = vpack.c.b16 %v4122, %v4456
      %v4473 = vpack.c.b16 %v4124, %v4457
      %v4474 = vpack.c.b16 %v4126, %v4458
      %v4475 = vpack.c.b16 %v4128, %v4459
      %v4476 = vpack.c.b16 %v4130, %v4460
      %v4477 = vpack.c.b16 %v4132, %v4461
      %v4478 = vpack.c.b16 %v4134, %v4462
      %v4479 = vpack.c.b16 %v4136, %v4463
      %v4480 = vpack.c.b16 %v4138, %v4464
      %v4481 = vpack.c.b16 %v4140, %v4465
      %v4482 = vpack.c.b16 %v4142, %v4466
      %v4483 = vpack.c.b16 %v4144, %v4467
      %v4484 = vpack.c.b16 %v4146, %v4468
      %v4485 = vpack.c.b16 %v4148, %v4469
      %v4486 = vpack.c.b16 %v4150, %v4470
      %v4487 = vrot.slane %v4471, 1
      %v4488 = vrot.slane %v4199, 1
      %v4489 = vsel %vm1403, %v4487, %v4488
      %v4490 = vrot.slane %v4472, 1
      %v4491 = vrot.slane %v4200, 1
      %v4492 = vsel %vm1403, %v4490, %v4491
      %v4493 = vrot.slane %v4473, 1
      %v4494 = vrot.slane %v4201, 1
      %v4495 = vsel %vm1403, %v4493, %v4494
      %v4496 = vrot.slane %v4474, 1
      %v4497 = vrot.slane %v4202, 1
      %v4498 = vsel %vm1403, %v4496, %v4497
      %v4499 = vrot.slane %v4475, 1
      %v4500 = vrot.slane %v4203, 1
      %v4501 = vsel %vm1403, %v4499, %v4500
      %v4502 = vrot.slane %v4476, 1
      %v4503 = vrot.slane %v4204, 1
      %v4504 = vsel %vm1403, %v4502, %v4503
      %v4505 = vrot.slane %v4477, 1
      %v4506 = vrot.slane %v4205, 1
      %v4507 = vsel %vm1403, %v4505, %v4506
      %v4508 = vrot.slane %v4478, 1
      %v4509 = vrot.slane %v4206, 1
      %v4510 = vsel %vm1403, %v4508, %v4509
      %v4511 = vrot.slane %v4479, 1
      %v4512 = vrot.slane %v4207, 1
      %v4513 = vsel %vm1403, %v4511, %v4512
      %v4514 = vrot.slane %v4480, 1
      %v4515 = vrot.slane %v4208, 1
      %v4516 = vsel %vm1403, %v4514, %v4515
      %v4517 = vrot.slane %v4481, 1
      %v4518 = vrot.slane %v4209, 1
      %v4519 = vsel %vm1403, %v4517, %v4518
      %v4520 = vrot.slane %v4482, 1
      %v4521 = vrot.slane %v4210, 1
      %v4522 = vsel %vm1403, %v4520, %v4521
      %v4523 = vrot.slane %v4483, 1
      %v4524 = vrot.slane %v4211, 1
      %v4525 = vsel %vm1403, %v4523, %v4524
      %v4526 = vrot.slane %v4484, 1
      %v4527 = vrot.slane %v4212, 1
      %v4528 = vsel %vm1403, %v4526, %v4527
      %v4529 = vrot.slane %v4485, 1
      %v4530 = vrot.slane %v4213, 1
      %v4531 = vsel %vm1403, %v4529, %v4530
      %v4532 = vrot.slane %v4486, 1
      %v4533 = vrot.slane %v4214, 1
      %v4534 = vsel %vm1403, %v4532, %v4533
      %4535 = vrot.lane.b32.xlu0 %v4489, 64
      %v4536 = vpop.permute.xlu0 %4535
      %4537 = vrot.lane.b32.xlu0 %v4492, 64
      %v4538 = vpop.permute.xlu0 %4537
      %4539 = vrot.lane.b32.xlu0 %v4495, 64
      %v4540 = vpop.permute.xlu0 %4539
      %4541 = vrot.lane.b32.xlu0 %v4498, 64
      %v4542 = vpop.permute.xlu0 %4541
      %4543 = vrot.lane.b32.xlu0 %v4501, 64
      %v4544 = vpop.permute.xlu0 %4543
      %4545 = vrot.lane.b32.xlu0 %v4504, 64
      %v4546 = vpop.permute.xlu0 %4545
      %4547 = vrot.lane.b32.xlu0 %v4507, 64
      %v4548 = vpop.permute.xlu0 %4547
      %4549 = vrot.lane.b32.xlu0 %v4510, 64
      %v4550 = vpop.permute.xlu0 %4549
      %4551 = vrot.lane.b32.xlu0 %v4513, 64
      %v4552 = vpop.permute.xlu0 %4551
      %4553 = vrot.lane.b32.xlu0 %v4516, 64
      %v4554 = vpop.permute.xlu0 %4553
      %4555 = vrot.lane.b32.xlu0 %v4519, 64
      %v4556 = vpop.permute.xlu0 %4555
      %4557 = vrot.lane.b32.xlu0 %v4522, 64
      %v4558 = vpop.permute.xlu0 %4557
      %4559 = vrot.lane.b32.xlu0 %v4525, 64
      %v4560 = vpop.permute.xlu0 %4559
      %4561 = vrot.lane.b32.xlu0 %v4528, 64
      %v4562 = vpop.permute.xlu0 %4561
      %4563 = vrot.lane.b32.xlu0 %v4531, 64
      %v4564 = vpop.permute.xlu0 %4563
      %4565 = vrot.lane.b32.xlu0 %v4534, 64
      %v4566 = vpop.permute.xlu0 %4565
      %v4599 = vunpack.c.l.b16 %v3958
      %v4600 = vunpack.c.l.b16 %v3959
      %v4601 = vunpack.c.l.b16 %v3960
      %v4602 = vunpack.c.l.b16 %v3961
      %v4603 = vunpack.c.l.b16 %v3962
      %v4604 = vunpack.c.l.b16 %v3963
      %v4605 = vunpack.c.l.b16 %v3964
      %v4606 = vunpack.c.l.b16 %v3965
      %v4607 = vunpack.c.l.b16 %v3966
      %v4608 = vunpack.c.l.b16 %v3967
      %v4609 = vunpack.c.l.b16 %v3968
      %v4610 = vunpack.c.l.b16 %v3969
      %v4611 = vunpack.c.l.b16 %v3970
      %v4612 = vunpack.c.l.b16 %v3971
      %v4613 = vunpack.c.l.b16 %v3972
      %v4614 = vunpack.c.l.b16 %v3973
      %v4615 = vunpack.c.l.b16 %v3974
      %v4616 = vunpack.c.l.b16 %v3975
      %v4617 = vunpack.c.l.b16 %v3976
      %v4618 = vunpack.c.l.b16 %v3977
      %v4619 = vunpack.c.l.b16 %v3978
      %v4620 = vunpack.c.l.b16 %v3979
      %v4621 = vunpack.c.l.b16 %v3980
      %v4622 = vunpack.c.l.b16 %v3981
      %v4623 = vunpack.c.l.b16 %v3982
      %v4624 = vunpack.c.l.b16 %v3983
      %v4625 = vunpack.c.l.b16 %v3984
      %v4626 = vunpack.c.l.b16 %v3985
      %v4627 = vunpack.c.l.b16 %v3986
      %v4628 = vunpack.c.l.b16 %v3987
      %v4629 = vunpack.c.l.b16 %v3988
      %v4630 = vunpack.c.l.b16 %v3989
      %v4631 = vpack.c.b16 %v4600, %v4599
      %v4632 = vpack.c.b16 %v4602, %v4601
      %v4633 = vpack.c.b16 %v4604, %v4603
      %v4634 = vpack.c.b16 %v4606, %v4605
      %v4635 = vpack.c.b16 %v4608, %v4607
      %v4636 = vpack.c.b16 %v4610, %v4609
      %v4637 = vpack.c.b16 %v4612, %v4611
      %v4638 = vpack.c.b16 %v4614, %v4613
      %v4639 = vpack.c.b16 %v4616, %v4615
      %v4640 = vpack.c.b16 %v4618, %v4617
      %v4641 = vpack.c.b16 %v4620, %v4619
      %v4642 = vpack.c.b16 %v4622, %v4621
      %v4643 = vpack.c.b16 %v4624, %v4623
      %v4644 = vpack.c.b16 %v4626, %v4625
      %v4645 = vpack.c.b16 %v4628, %v4627
      %v4646 = vpack.c.b16 %v4630, %v4629
      %4647 = vrot.lane.b32.xlu0 %v4631, 96
      %v4648 = vpop.permute.xlu0 %4647
      %4649 = vrot.lane.b32.xlu0 %v4632, 96
      %v4650 = vpop.permute.xlu0 %4649
      %4651 = vrot.lane.b32.xlu0 %v4633, 96
      %v4652 = vpop.permute.xlu0 %4651
      %4653 = vrot.lane.b32.xlu0 %v4634, 96
      %v4654 = vpop.permute.xlu0 %4653
      %4655 = vrot.lane.b32.xlu0 %v4635, 96
      %v4656 = vpop.permute.xlu0 %4655
      %4657 = vrot.lane.b32.xlu0 %v4636, 96
      %v4658 = vpop.permute.xlu0 %4657
      %4659 = vrot.lane.b32.xlu0 %v4637, 96
      %v4660 = vpop.permute.xlu0 %4659
      %4661 = vrot.lane.b32.xlu0 %v4638, 96
      %v4662 = vpop.permute.xlu0 %4661
      %4663 = vrot.lane.b32.xlu0 %v4639, 96
      %v4664 = vpop.permute.xlu0 %4663
      %4665 = vrot.lane.b32.xlu0 %v4640, 96
      %v4666 = vpop.permute.xlu0 %4665
      %4667 = vrot.lane.b32.xlu0 %v4641, 96
      %v4668 = vpop.permute.xlu0 %4667
      %4669 = vrot.lane.b32.xlu0 %v4642, 96
      %v4670 = vpop.permute.xlu0 %4669
      %4671 = vrot.lane.b32.xlu0 %v4643, 96
      %v4672 = vpop.permute.xlu0 %4671
      %4673 = vrot.lane.b32.xlu0 %v4644, 96
      %v4674 = vpop.permute.xlu0 %4673
      %4675 = vrot.lane.b32.xlu0 %v4645, 96
      %v4676 = vpop.permute.xlu0 %4675
      %4677 = vrot.lane.b32.xlu0 %v4646, 96
      %v4678 = vpop.permute.xlu0 %4677
      %v4695 = vunpack.c.l.b16 %v3990
      %v4696 = vunpack.c.l.b16 %v3991
      %v4697 = vunpack.c.l.b16 %v3992
      %v4698 = vunpack.c.l.b16 %v3993
      %v4699 = vunpack.c.l.b16 %v3994
      %v4700 = vunpack.c.l.b16 %v3995
      %v4701 = vunpack.c.l.b16 %v3996
      %v4702 = vunpack.c.l.b16 %v3997
      %v4703 = vunpack.c.l.b16 %v3998
      %v4704 = vunpack.c.l.b16 %v3999
      %v4705 = vunpack.c.l.b16 %v4000
      %v4706 = vunpack.c.l.b16 %v4001
      %v4707 = vunpack.c.l.b16 %v4002
      %v4708 = vunpack.c.l.b16 %v4003
      %v4709 = vunpack.c.l.b16 %v4004
      %v4710 = vunpack.c.l.b16 %v4005
      %v4711 = vpack.c.b16 %v4695, %v4695
      %v4712 = vpack.c.b16 %v4696, %v4696
      %v4713 = vpack.c.b16 %v4697, %v4697
      %v4714 = vpack.c.b16 %v4698, %v4698
      %v4715 = vpack.c.b16 %v4699, %v4699
      %v4716 = vpack.c.b16 %v4700, %v4700
      %v4717 = vpack.c.b16 %v4701, %v4701
      %v4718 = vpack.c.b16 %v4702, %v4702
      %v4719 = vpack.c.b16 %v4703, %v4703
      %v4720 = vpack.c.b16 %v4704, %v4704
      %v4721 = vpack.c.b16 %v4705, %v4705
      %v4722 = vpack.c.b16 %v4706, %v4706
      %v4723 = vpack.c.b16 %v4707, %v4707
      %v4724 = vpack.c.b16 %v4708, %v4708
      %v4725 = vpack.c.b16 %v4709, %v4709
      %v4726 = vpack.c.b16 %v4710, %v4710
      %v4728 = vshrl.u32 %v4631, 16
      %v4730 = vshll.u32 %v4631, 16
      %v4732 = vrot.slane %v4730, 1
      %v4733 = vor.u32 %v4728, %v4732
      %v4735 = vshll.u32 %v4711, 16
      %v4737 = vrot.slane %v4735, 1
      %v4738 = vsel %vm1130, %v4733, %v4737
      %v4740 = vshrl.u32 %v4632, 16
      %v4742 = vshll.u32 %v4632, 16
      %v4744 = vrot.slane %v4742, 1
      %v4745 = vor.u32 %v4740, %v4744
      %v4747 = vshll.u32 %v4712, 16
      %v4749 = vrot.slane %v4747, 1
      %v4750 = vsel %vm1130, %v4745, %v4749
      %v4752 = vshrl.u32 %v4633, 16
      %v4754 = vshll.u32 %v4633, 16
      %v4756 = vrot.slane %v4754, 1
      %v4757 = vor.u32 %v4752, %v4756
      %v4759 = vshll.u32 %v4713, 16
      %v4761 = vrot.slane %v4759, 1
      %v4762 = vsel %vm1130, %v4757, %v4761
      %v4764 = vshrl.u32 %v4634, 16
      %v4766 = vshll.u32 %v4634, 16
      %v4768 = vrot.slane %v4766, 1
      %v4769 = vor.u32 %v4764, %v4768
      %v4771 = vshll.u32 %v4714, 16
      %v4773 = vrot.slane %v4771, 1
      %v4774 = vsel %vm1130, %v4769, %v4773
      %v4776 = vshrl.u32 %v4635, 16
      %v4778 = vshll.u32 %v4635, 16
      %v4780 = vrot.slane %v4778, 1
      %v4781 = vor.u32 %v4776, %v4780
      %v4783 = vshll.u32 %v4715, 16
      %v4785 = vrot.slane %v4783, 1
      %v4786 = vsel %vm1130, %v4781, %v4785
      %v4788 = vshrl.u32 %v4636, 16
      %v4790 = vshll.u32 %v4636, 16
      %v4792 = vrot.slane %v4790, 1
      %v4793 = vor.u32 %v4788, %v4792
      %v4795 = vshll.u32 %v4716, 16
      %v4797 = vrot.slane %v4795, 1
      %v4798 = vsel %vm1130, %v4793, %v4797
      %v4800 = vshrl.u32 %v4637, 16
      %v4802 = vshll.u32 %v4637, 16
      %v4804 = vrot.slane %v4802, 1
      %v4805 = vor.u32 %v4800, %v4804
      %v4807 = vshll.u32 %v4717, 16
      %v4809 = vrot.slane %v4807, 1
      %v4810 = vsel %vm1130, %v4805, %v4809
      %v4812 = vshrl.u32 %v4638, 16
      %v4814 = vshll.u32 %v4638, 16
      %v4816 = vrot.slane %v4814, 1
      %v4817 = vor.u32 %v4812, %v4816
      %v4819 = vshll.u32 %v4718, 16
      %v4821 = vrot.slane %v4819, 1
      %v4822 = vsel %vm1130, %v4817, %v4821
      %v4824 = vshrl.u32 %v4639, 16
      %v4826 = vshll.u32 %v4639, 16
      %v4828 = vrot.slane %v4826, 1
      %v4829 = vor.u32 %v4824, %v4828
      %v4831 = vshll.u32 %v4719, 16
      %v4833 = vrot.slane %v4831, 1
      %v4834 = vsel %vm1130, %v4829, %v4833
      %v4836 = vshrl.u32 %v4640, 16
      %v4838 = vshll.u32 %v4640, 16
      %v4840 = vrot.slane %v4838, 1
      %v4841 = vor.u32 %v4836, %v4840
      %v4843 = vshll.u32 %v4720, 16
      %v4845 = vrot.slane %v4843, 1
      %v4846 = vsel %vm1130, %v4841, %v4845
      %v4848 = vshrl.u32 %v4641, 16
      %v4850 = vshll.u32 %v4641, 16
      %v4852 = vrot.slane %v4850, 1
      %v4853 = vor.u32 %v4848, %v4852
      %v4855 = vshll.u32 %v4721, 16
      %v4857 = vrot.slane %v4855, 1
      %v4858 = vsel %vm1130, %v4853, %v4857
      %v4860 = vshrl.u32 %v4642, 16
      %v4862 = vshll.u32 %v4642, 16
      %v4864 = vrot.slane %v4862, 1
      %v4865 = vor.u32 %v4860, %v4864
      %v4867 = vshll.u32 %v4722, 16
      %v4869 = vrot.slane %v4867, 1
      %v4870 = vsel %vm1130, %v4865, %v4869
      %v4872 = vshrl.u32 %v4643, 16
      %v4874 = vshll.u32 %v4643, 16
      %v4876 = vrot.slane %v4874, 1
      %v4877 = vor.u32 %v4872, %v4876
      %v4879 = vshll.u32 %v4723, 16
      %v4881 = vrot.slane %v4879, 1
      %v4882 = vsel %vm1130, %v4877, %v4881
      %v4884 = vshrl.u32 %v4644, 16
      %v4886 = vshll.u32 %v4644, 16
      %v4888 = vrot.slane %v4886, 1
      %v4889 = vor.u32 %v4884, %v4888
      %v4891 = vshll.u32 %v4724, 16
      %v4893 = vrot.slane %v4891, 1
      %v4894 = vsel %vm1130, %v4889, %v4893
      %v4896 = vshrl.u32 %v4645, 16
      %v4898 = vshll.u32 %v4645, 16
      %v4900 = vrot.slane %v4898, 1
      %v4901 = vor.u32 %v4896, %v4900
      %v4903 = vshll.u32 %v4725, 16
      %v4905 = vrot.slane %v4903, 1
      %v4906 = vsel %vm1130, %v4901, %v4905
      %v4908 = vshrl.u32 %v4646, 16
      %v4910 = vshll.u32 %v4646, 16
      %v4912 = vrot.slane %v4910, 1
      %v4913 = vor.u32 %v4908, %v4912
      %v4915 = vshll.u32 %v4726, 16
      %v4917 = vrot.slane %v4915, 1
      %v4918 = vsel %vm1130, %v4913, %v4917
      %v4935 = vunpack.c.l.b16 %v4006
      %v4936 = vunpack.c.l.b16 %v4007
      %v4937 = vunpack.c.l.b16 %v4008
      %v4938 = vunpack.c.l.b16 %v4009
      %v4939 = vunpack.c.l.b16 %v4010
      %v4940 = vunpack.c.l.b16 %v4011
      %v4941 = vunpack.c.l.b16 %v4012
      %v4942 = vunpack.c.l.b16 %v4013
      %v4943 = vunpack.c.l.b16 %v4014
      %v4944 = vunpack.c.l.b16 %v4015
      %v4945 = vunpack.c.l.b16 %v4016
      %v4946 = vunpack.c.l.b16 %v4017
      %v4947 = vunpack.c.l.b16 %v4018
      %v4948 = vunpack.c.l.b16 %v4019
      %v4949 = vunpack.c.l.b16 %v4020
      %v4950 = vunpack.c.l.b16 %v4021
      %v4951 = vpack.c.b16 %v4600, %v4935
      %v4952 = vpack.c.b16 %v4602, %v4936
      %v4953 = vpack.c.b16 %v4604, %v4937
      %v4954 = vpack.c.b16 %v4606, %v4938
      %v4955 = vpack.c.b16 %v4608, %v4939
      %v4956 = vpack.c.b16 %v4610, %v4940
      %v4957 = vpack.c.b16 %v4612, %v4941
      %v4958 = vpack.c.b16 %v4614, %v4942
      %v4959 = vpack.c.b16 %v4616, %v4943
      %v4960 = vpack.c.b16 %v4618, %v4944
      %v4961 = vpack.c.b16 %v4620, %v4945
      %v4962 = vpack.c.b16 %v4622, %v4946
      %v4963 = vpack.c.b16 %v4624, %v4947
      %v4964 = vpack.c.b16 %v4626, %v4948
      %v4965 = vpack.c.b16 %v4628, %v4949
      %v4966 = vpack.c.b16 %v4630, %v4950
      %v4967 = vrot.slane %v4951, 1
      %v4968 = vrot.slane %v4711, 1
      %v4969 = vsel %vm1403, %v4967, %v4968
      %v4970 = vrot.slane %v4952, 1
      %v4971 = vrot.slane %v4712, 1
      %v4972 = vsel %vm1403, %v4970, %v4971
      %v4973 = vrot.slane %v4953, 1
      %v4974 = vrot.slane %v4713, 1
      %v4975 = vsel %vm1403, %v4973, %v4974
      %v4976 = vrot.slane %v4954, 1
      %v4977 = vrot.slane %v4714, 1
      %v4978 = vsel %vm1403, %v4976, %v4977
      %v4979 = vrot.slane %v4955, 1
      %v4980 = vrot.slane %v4715, 1
      %v4981 = vsel %vm1403, %v4979, %v4980
      %v4982 = vrot.slane %v4956, 1
      %v4983 = vrot.slane %v4716, 1
      %v4984 = vsel %vm1403, %v4982, %v4983
      %v4985 = vrot.slane %v4957, 1
      %v4986 = vrot.slane %v4717, 1
      %v4987 = vsel %vm1403, %v4985, %v4986
      %v4988 = vrot.slane %v4958, 1
      %v4989 = vrot.slane %v4718, 1
      %v4990 = vsel %vm1403, %v4988, %v4989
      %v4991 = vrot.slane %v4959, 1
      %v4992 = vrot.slane %v4719, 1
      %v4993 = vsel %vm1403, %v4991, %v4992
      %v4994 = vrot.slane %v4960, 1
      %v4995 = vrot.slane %v4720, 1
      %v4996 = vsel %vm1403, %v4994, %v4995
      %v4997 = vrot.slane %v4961, 1
      %v4998 = vrot.slane %v4721, 1
      %v4999 = vsel %vm1403, %v4997, %v4998
      %v5000 = vrot.slane %v4962, 1
      %v5001 = vrot.slane %v4722, 1
      %v5002 = vsel %vm1403, %v5000, %v5001
      %v5003 = vrot.slane %v4963, 1
      %v5004 = vrot.slane %v4723, 1
      %v5005 = vsel %vm1403, %v5003, %v5004
      %v5006 = vrot.slane %v4964, 1
      %v5007 = vrot.slane %v4724, 1
      %v5008 = vsel %vm1403, %v5006, %v5007
      %v5009 = vrot.slane %v4965, 1
      %v5010 = vrot.slane %v4725, 1
      %v5011 = vsel %vm1403, %v5009, %v5010
      %v5012 = vrot.slane %v4966, 1
      %v5013 = vrot.slane %v4726, 1
      %v5014 = vsel %vm1403, %v5012, %v5013
      %5015 = vrot.lane.b32.xlu0 %v4969, 32
      %v5016 = vpop.permute.xlu0 %5015
      %5017 = vrot.lane.b32.xlu0 %v4972, 32
      %v5018 = vpop.permute.xlu0 %5017
      %5019 = vrot.lane.b32.xlu0 %v4975, 32
      %v5020 = vpop.permute.xlu0 %5019
      %5021 = vrot.lane.b32.xlu0 %v4978, 32
      %v5022 = vpop.permute.xlu0 %5021
      %5023 = vrot.lane.b32.xlu0 %v4981, 32
      %v5024 = vpop.permute.xlu0 %5023
      %5025 = vrot.lane.b32.xlu0 %v4984, 32
      %v5026 = vpop.permute.xlu0 %5025
      %5027 = vrot.lane.b32.xlu0 %v4987, 32
      %v5028 = vpop.permute.xlu0 %5027
      %5029 = vrot.lane.b32.xlu0 %v4990, 32
      %v5030 = vpop.permute.xlu0 %5029
      %5031 = vrot.lane.b32.xlu0 %v4993, 32
      %v5032 = vpop.permute.xlu0 %5031
      %5033 = vrot.lane.b32.xlu0 %v4996, 32
      %v5034 = vpop.permute.xlu0 %5033
      %5035 = vrot.lane.b32.xlu0 %v4999, 32
      %v5036 = vpop.permute.xlu0 %5035
      %5037 = vrot.lane.b32.xlu0 %v5002, 32
      %v5038 = vpop.permute.xlu0 %5037
      %5039 = vrot.lane.b32.xlu0 %v5005, 32
      %v5040 = vpop.permute.xlu0 %5039
      %5041 = vrot.lane.b32.xlu0 %v5008, 32
      %v5042 = vpop.permute.xlu0 %5041
      %5043 = vrot.lane.b32.xlu0 %v5011, 32
      %v5044 = vpop.permute.xlu0 %5043
      %5045 = vrot.lane.b32.xlu0 %v5014, 32
      %v5046 = vpop.permute.xlu0 %5045
      %v5079 = vunpack.c.l.b16 %v4023
      %v5080 = vunpack.c.l.b16 %v4024
      %v5081 = vunpack.c.l.b16 %v4025
      %v5082 = vunpack.c.l.b16 %v4026
      %v5083 = vunpack.c.l.b16 %v4027
      %v5084 = vunpack.c.l.b16 %v4028
      %v5085 = vunpack.c.l.b16 %v4029
      %v5086 = vunpack.c.l.b16 %v4030
      %v5087 = vunpack.c.l.b16 %v4031
      %v5088 = vunpack.c.l.b16 %v4032
      %v5089 = vunpack.c.l.b16 %v4033
      %v5090 = vunpack.c.l.b16 %v4034
      %v5091 = vunpack.c.l.b16 %v4035
      %v5092 = vunpack.c.l.b16 %v4036
      %v5093 = vunpack.c.l.b16 %v4037
      %v5094 = vunpack.c.l.b16 %v4038
      %v5095 = vunpack.c.l.b16 %v4039
      %v5096 = vunpack.c.l.b16 %v4040
      %v5097 = vunpack.c.l.b16 %v4041
      %v5098 = vunpack.c.l.b16 %v4042
      %v5099 = vunpack.c.l.b16 %v4043
      %v5100 = vunpack.c.l.b16 %v4044
      %v5101 = vunpack.c.l.b16 %v4045
      %v5102 = vunpack.c.l.b16 %v4046
      %v5103 = vunpack.c.l.b16 %v4047
      %v5104 = vunpack.c.l.b16 %v4048
      %v5105 = vunpack.c.l.b16 %v4049
      %v5106 = vunpack.c.l.b16 %v4050
      %v5107 = vunpack.c.l.b16 %v4051
      %v5108 = vunpack.c.l.b16 %v4052
      %v5109 = vunpack.c.l.b16 %v4053
      %v5110 = vunpack.c.l.b16 %v4054
      %v5111 = vpack.c.b16 %v5080, %v5079
      %v5112 = vpack.c.b16 %v5082, %v5081
      %v5113 = vpack.c.b16 %v5084, %v5083
      %v5114 = vpack.c.b16 %v5086, %v5085
      %v5115 = vpack.c.b16 %v5088, %v5087
      %v5116 = vpack.c.b16 %v5090, %v5089
      %v5117 = vpack.c.b16 %v5092, %v5091
      %v5118 = vpack.c.b16 %v5094, %v5093
      %v5119 = vpack.c.b16 %v5096, %v5095
      %v5120 = vpack.c.b16 %v5098, %v5097
      %v5121 = vpack.c.b16 %v5100, %v5099
      %v5122 = vpack.c.b16 %v5102, %v5101
      %v5123 = vpack.c.b16 %v5104, %v5103
      %v5124 = vpack.c.b16 %v5106, %v5105
      %v5125 = vpack.c.b16 %v5108, %v5107
      %v5126 = vpack.c.b16 %v5110, %v5109
      %5127 = vrot.lane.b32.xlu0 %v5111, 64
      %v5128 = vpop.permute.xlu0 %5127
      %5129 = vrot.lane.b32.xlu0 %v5112, 64
      %v5130 = vpop.permute.xlu0 %5129
      %5131 = vrot.lane.b32.xlu0 %v5113, 64
      %v5132 = vpop.permute.xlu0 %5131
      %5133 = vrot.lane.b32.xlu0 %v5114, 64
      %v5134 = vpop.permute.xlu0 %5133
      %5135 = vrot.lane.b32.xlu0 %v5115, 64
      %v5136 = vpop.permute.xlu0 %5135
      %5137 = vrot.lane.b32.xlu0 %v5116, 64
      %v5138 = vpop.permute.xlu0 %5137
      %5139 = vrot.lane.b32.xlu0 %v5117, 64
      %v5140 = vpop.permute.xlu0 %5139
      %5141 = vrot.lane.b32.xlu0 %v5118, 64
      %v5142 = vpop.permute.xlu0 %5141
      %5143 = vrot.lane.b32.xlu0 %v5119, 64
      %v5144 = vpop.permute.xlu0 %5143
      %5145 = vrot.lane.b32.xlu0 %v5120, 64
      %v5146 = vpop.permute.xlu0 %5145
      %5147 = vrot.lane.b32.xlu0 %v5121, 64
      %v5148 = vpop.permute.xlu0 %5147
      %5149 = vrot.lane.b32.xlu0 %v5122, 64
      %v5150 = vpop.permute.xlu0 %5149
      %5151 = vrot.lane.b32.xlu0 %v5123, 64
      %v5152 = vpop.permute.xlu0 %5151
      %5153 = vrot.lane.b32.xlu0 %v5124, 64
      %v5154 = vpop.permute.xlu0 %5153
      %5155 = vrot.lane.b32.xlu0 %v5125, 64
      %v5156 = vpop.permute.xlu0 %5155
      %5157 = vrot.lane.b32.xlu0 %v5126, 64
      %v5158 = vpop.permute.xlu0 %5157
      %v5175 = vunpack.c.l.b16 %v4055
      %v5176 = vunpack.c.l.b16 %v4056
      %v5177 = vunpack.c.l.b16 %v4057
      %v5178 = vunpack.c.l.b16 %v4058
      %v5179 = vunpack.c.l.b16 %v4059
      %v5180 = vunpack.c.l.b16 %v4060
      %v5181 = vunpack.c.l.b16 %v4061
      %v5182 = vunpack.c.l.b16 %v4062
      %v5183 = vunpack.c.l.b16 %v4063
      %v5184 = vunpack.c.l.b16 %v4064
      %v5185 = vunpack.c.l.b16 %v4065
      %v5186 = vunpack.c.l.b16 %v4066
      %v5187 = vunpack.c.l.b16 %v4067
      %v5188 = vunpack.c.l.b16 %v4068
      %v5189 = vunpack.c.l.b16 %v4069
      %v5190 = vunpack.c.l.b16 %v4070
      %v5191 = vpack.c.b16 %v5175, %v5175
      %v5192 = vpack.c.b16 %v5176, %v5176
      %v5193 = vpack.c.b16 %v5177, %v5177
      %v5194 = vpack.c.b16 %v5178, %v5178
      %v5195 = vpack.c.b16 %v5179, %v5179
      %v5196 = vpack.c.b16 %v5180, %v5180
      %v5197 = vpack.c.b16 %v5181, %v5181
      %v5198 = vpack.c.b16 %v5182, %v5182
      %v5199 = vpack.c.b16 %v5183, %v5183
      %v5200 = vpack.c.b16 %v5184, %v5184
      %v5201 = vpack.c.b16 %v5185, %v5185
      %v5202 = vpack.c.b16 %v5186, %v5186
      %v5203 = vpack.c.b16 %v5187, %v5187
      %v5204 = vpack.c.b16 %v5188, %v5188
      %v5205 = vpack.c.b16 %v5189, %v5189
      %v5206 = vpack.c.b16 %v5190, %v5190
      %v5208 = vshrl.u32 %v5111, 16
      %v5210 = vshll.u32 %v5111, 16
      %v5212 = vrot.slane %v5210, 1
      %v5213 = vor.u32 %v5208, %v5212
      %v5215 = vshll.u32 %v5191, 16
      %v5217 = vrot.slane %v5215, 1
      %v5218 = vsel %vm1130, %v5213, %v5217
      %v5220 = vshrl.u32 %v5112, 16
      %v5222 = vshll.u32 %v5112, 16
      %v5224 = vrot.slane %v5222, 1
      %v5225 = vor.u32 %v5220, %v5224
      %v5227 = vshll.u32 %v5192, 16
      %v5229 = vrot.slane %v5227, 1
      %v5230 = vsel %vm1130, %v5225, %v5229
      %v5232 = vshrl.u32 %v5113, 16
      %v5234 = vshll.u32 %v5113, 16
      %v5236 = vrot.slane %v5234, 1
      %v5237 = vor.u32 %v5232, %v5236
      %v5239 = vshll.u32 %v5193, 16
      %v5241 = vrot.slane %v5239, 1
      %v5242 = vsel %vm1130, %v5237, %v5241
      %v5244 = vshrl.u32 %v5114, 16
      %v5246 = vshll.u32 %v5114, 16
      %v5248 = vrot.slane %v5246, 1
      %v5249 = vor.u32 %v5244, %v5248
      %v5251 = vshll.u32 %v5194, 16
      %v5253 = vrot.slane %v5251, 1
      %v5254 = vsel %vm1130, %v5249, %v5253
      %v5256 = vshrl.u32 %v5115, 16
      %v5258 = vshll.u32 %v5115, 16
      %v5260 = vrot.slane %v5258, 1
      %v5261 = vor.u32 %v5256, %v5260
      %v5263 = vshll.u32 %v5195, 16
      %v5265 = vrot.slane %v5263, 1
      %v5266 = vsel %vm1130, %v5261, %v5265
      %v5268 = vshrl.u32 %v5116, 16
      %v5270 = vshll.u32 %v5116, 16
      %v5272 = vrot.slane %v5270, 1
      %v5273 = vor.u32 %v5268, %v5272
      %v5275 = vshll.u32 %v5196, 16
      %v5277 = vrot.slane %v5275, 1
      %v5278 = vsel %vm1130, %v5273, %v5277
      %v5280 = vshrl.u32 %v5117, 16
      %v5282 = vshll.u32 %v5117, 16
      %v5284 = vrot.slane %v5282, 1
      %v5285 = vor.u32 %v5280, %v5284
      %v5287 = vshll.u32 %v5197, 16
      %v5289 = vrot.slane %v5287, 1
      %v5290 = vsel %vm1130, %v5285, %v5289
      %v5292 = vshrl.u32 %v5118, 16
      %v5294 = vshll.u32 %v5118, 16
      %v5296 = vrot.slane %v5294, 1
      %v5297 = vor.u32 %v5292, %v5296
      %v5299 = vshll.u32 %v5198, 16
      %v5301 = vrot.slane %v5299, 1
      %v5302 = vsel %vm1130, %v5297, %v5301
      %v5304 = vshrl.u32 %v5119, 16
      %v5306 = vshll.u32 %v5119, 16
      %v5308 = vrot.slane %v5306, 1
      %v5309 = vor.u32 %v5304, %v5308
      %v5311 = vshll.u32 %v5199, 16
      %v5313 = vrot.slane %v5311, 1
      %v5314 = vsel %vm1130, %v5309, %v5313
      %v5316 = vshrl.u32 %v5120, 16
      %v5318 = vshll.u32 %v5120, 16
      %v5320 = vrot.slane %v5318, 1
      %v5321 = vor.u32 %v5316, %v5320
      %v5323 = vshll.u32 %v5200, 16
      %v5325 = vrot.slane %v5323, 1
      %v5326 = vsel %vm1130, %v5321, %v5325
      %v5328 = vshrl.u32 %v5121, 16
      %v5330 = vshll.u32 %v5121, 16
      %v5332 = vrot.slane %v5330, 1
      %v5333 = vor.u32 %v5328, %v5332
      %v5335 = vshll.u32 %v5201, 16
      %v5337 = vrot.slane %v5335, 1
      %v5338 = vsel %vm1130, %v5333, %v5337
      %v5340 = vshrl.u32 %v5122, 16
      %v5342 = vshll.u32 %v5122, 16
      %v5344 = vrot.slane %v5342, 1
      %v5345 = vor.u32 %v5340, %v5344
      %v5347 = vshll.u32 %v5202, 16
      %v5349 = vrot.slane %v5347, 1
      %v5350 = vsel %vm1130, %v5345, %v5349
      %v5352 = vshrl.u32 %v5123, 16
      %v5354 = vshll.u32 %v5123, 16
      %v5356 = vrot.slane %v5354, 1
      %v5357 = vor.u32 %v5352, %v5356
      %v5359 = vshll.u32 %v5203, 16
      %v5361 = vrot.slane %v5359, 1
      %v5362 = vsel %vm1130, %v5357, %v5361
      %v5364 = vshrl.u32 %v5124, 16
      %v5366 = vshll.u32 %v5124, 16
      %v5368 = vrot.slane %v5366, 1
      %v5369 = vor.u32 %v5364, %v5368
      %v5371 = vshll.u32 %v5204, 16
      %v5373 = vrot.slane %v5371, 1
      %v5374 = vsel %vm1130, %v5369, %v5373
      %v5376 = vshrl.u32 %v5125, 16
      %v5378 = vshll.u32 %v5125, 16
      %v5380 = vrot.slane %v5378, 1
      %v5381 = vor.u32 %v5376, %v5380
      %v5383 = vshll.u32 %v5205, 16
      %v5385 = vrot.slane %v5383, 1
      %v5386 = vsel %vm1130, %v5381, %v5385
      %v5388 = vshrl.u32 %v5126, 16
      %v5390 = vshll.u32 %v5126, 16
      %v5392 = vrot.slane %v5390, 1
      %v5393 = vor.u32 %v5388, %v5392
      %v5395 = vshll.u32 %v5206, 16
      %v5397 = vrot.slane %v5395, 1
      %v5398 = vsel %vm1130, %v5393, %v5397
      %5399 = vrot.lane.b32.xlu0 %v5218, 96
      %v5400 = vpop.permute.xlu0 %5399
      %5401 = vrot.lane.b32.xlu0 %v5230, 96
      %v5402 = vpop.permute.xlu0 %5401
      %5403 = vrot.lane.b32.xlu0 %v5242, 96
      %v5404 = vpop.permute.xlu0 %5403
      %5405 = vrot.lane.b32.xlu0 %v5254, 96
      %v5406 = vpop.permute.xlu0 %5405
      %5407 = vrot.lane.b32.xlu0 %v5266, 96
      %v5408 = vpop.permute.xlu0 %5407
      %5409 = vrot.lane.b32.xlu0 %v5278, 96
      %v5410 = vpop.permute.xlu0 %5409
      %5411 = vrot.lane.b32.xlu0 %v5290, 96
      %v5412 = vpop.permute.xlu0 %5411
      %5413 = vrot.lane.b32.xlu0 %v5302, 96
      %v5414 = vpop.permute.xlu0 %5413
      %5415 = vrot.lane.b32.xlu0 %v5314, 96
      %v5416 = vpop.permute.xlu0 %5415
      %5417 = vrot.lane.b32.xlu0 %v5326, 96
      %v5418 = vpop.permute.xlu0 %5417
      %5419 = vrot.lane.b32.xlu0 %v5338, 96
      %v5420 = vpop.permute.xlu0 %5419
      %5421 = vrot.lane.b32.xlu0 %v5350, 96
      %v5422 = vpop.permute.xlu0 %5421
      %5423 = vrot.lane.b32.xlu0 %v5362, 96
      %v5424 = vpop.permute.xlu0 %5423
      %5425 = vrot.lane.b32.xlu0 %v5374, 96
      %v5426 = vpop.permute.xlu0 %5425
      %5427 = vrot.lane.b32.xlu0 %v5386, 96
      %v5428 = vpop.permute.xlu0 %5427
      %5429 = vrot.lane.b32.xlu0 %v5398, 96
      %v5430 = vpop.permute.xlu0 %5429
      %v5447 = vunpack.c.l.b16 %v4071
      %v5448 = vunpack.c.l.b16 %v4072
      %v5449 = vunpack.c.l.b16 %v4073
      %v5450 = vunpack.c.l.b16 %v4074
      %v5451 = vunpack.c.l.b16 %v4075
      %v5452 = vunpack.c.l.b16 %v4076
      %v5453 = vunpack.c.l.b16 %v4077
      %v5454 = vunpack.c.l.b16 %v4078
      %v5455 = vunpack.c.l.b16 %v4079
      %v5456 = vunpack.c.l.b16 %v4080
      %v5457 = vunpack.c.l.b16 %v4081
      %v5458 = vunpack.c.l.b16 %v4082
      %v5459 = vunpack.c.l.b16 %v4083
      %v5460 = vunpack.c.l.b16 %v4084
      %v5461 = vunpack.c.l.b16 %v4085
      %v5462 = vunpack.c.l.b16 %v4086
      %v5463 = vpack.c.b16 %v5080, %v5447
      %v5464 = vpack.c.b16 %v5082, %v5448
      %v5465 = vpack.c.b16 %v5084, %v5449
      %v5466 = vpack.c.b16 %v5086, %v5450
      %v5467 = vpack.c.b16 %v5088, %v5451
      %v5468 = vpack.c.b16 %v5090, %v5452
      %v5469 = vpack.c.b16 %v5092, %v5453
      %v5470 = vpack.c.b16 %v5094, %v5454
      %v5471 = vpack.c.b16 %v5096, %v5455
      %v5472 = vpack.c.b16 %v5098, %v5456
      %v5473 = vpack.c.b16 %v5100, %v5457
      %v5474 = vpack.c.b16 %v5102, %v5458
      %v5475 = vpack.c.b16 %v5104, %v5459
      %v5476 = vpack.c.b16 %v5106, %v5460
      %v5477 = vpack.c.b16 %v5108, %v5461
      %v5478 = vpack.c.b16 %v5110, %v5462
      %v5479 = vrot.slane %v5463, 1
      %v5480 = vrot.slane %v5191, 1
      %v5481 = vsel %vm1403, %v5479, %v5480
      %v5482 = vrot.slane %v5464, 1
      %v5483 = vrot.slane %v5192, 1
      %v5484 = vsel %vm1403, %v5482, %v5483
      %v5485 = vrot.slane %v5465, 1
      %v5486 = vrot.slane %v5193, 1
      %v5487 = vsel %vm1403, %v5485, %v5486
      %v5488 = vrot.slane %v5466, 1
      %v5489 = vrot.slane %v5194, 1
      %v5490 = vsel %vm1403, %v5488, %v5489
      %v5491 = vrot.slane %v5467, 1
      %v5492 = vrot.slane %v5195, 1
      %v5493 = vsel %vm1403, %v5491, %v5492
      %v5494 = vrot.slane %v5468, 1
      %v5495 = vrot.slane %v5196, 1
      %v5496 = vsel %vm1403, %v5494, %v5495
      %v5497 = vrot.slane %v5469, 1
      %v5498 = vrot.slane %v5197, 1
      %v5499 = vsel %vm1403, %v5497, %v5498
      %v5500 = vrot.slane %v5470, 1
      %v5501 = vrot.slane %v5198, 1
      %v5502 = vsel %vm1403, %v5500, %v5501
      %v5503 = vrot.slane %v5471, 1
      %v5504 = vrot.slane %v5199, 1
      %v5505 = vsel %vm1403, %v5503, %v5504
      %v5506 = vrot.slane %v5472, 1
      %v5507 = vrot.slane %v5200, 1
      %v5508 = vsel %vm1403, %v5506, %v5507
      %v5509 = vrot.slane %v5473, 1
      %v5510 = vrot.slane %v5201, 1
      %v5511 = vsel %vm1403, %v5509, %v5510
      %v5512 = vrot.slane %v5474, 1
      %v5513 = vrot.slane %v5202, 1
      %v5514 = vsel %vm1403, %v5512, %v5513
      %v5515 = vrot.slane %v5475, 1
      %v5516 = vrot.slane %v5203, 1
      %v5517 = vsel %vm1403, %v5515, %v5516
      %v5518 = vrot.slane %v5476, 1
      %v5519 = vrot.slane %v5204, 1
      %v5520 = vsel %vm1403, %v5518, %v5519
      %v5521 = vrot.slane %v5477, 1
      %v5522 = vrot.slane %v5205, 1
      %v5523 = vsel %vm1403, %v5521, %v5522
      %v5524 = vrot.slane %v5478, 1
      %v5525 = vrot.slane %v5206, 1
      %v5526 = vsel %vm1403, %v5524, %v5525
      %v5528 = vsel %vm2444, %v4151, %v4408
      %v5530 = vsel %vm2444, %v4152, %v4410
      %v5532 = vsel %vm2444, %v4153, %v4412
      %v5534 = vsel %vm2444, %v4154, %v4414
      %v5536 = vsel %vm2444, %v4155, %v4416
      %v5538 = vsel %vm2444, %v4156, %v4418
      %v5540 = vsel %vm2444, %v4157, %v4420
      %v5542 = vsel %vm2444, %v4158, %v4422
      %v5544 = vsel %vm2444, %v4159, %v4424
      %v5546 = vsel %vm2444, %v4160, %v4426
      %v5548 = vsel %vm2444, %v4161, %v4428
      %v5550 = vsel %vm2444, %v4162, %v4430
      %v5552 = vsel %vm2444, %v4163, %v4432
      %v5554 = vsel %vm2444, %v4164, %v4434
      %v5556 = vsel %vm2444, %v4165, %v4436
      %v5558 = vsel %vm2444, %v4166, %v4438
      %v5560 = vsel %vm2477, %v5528, %v4536
      %v5562 = vsel %vm2477, %v5530, %v4538
      %v5564 = vsel %vm2477, %v5532, %v4540
      %v5566 = vsel %vm2477, %v5534, %v4542
      %v5568 = vsel %vm2477, %v5536, %v4544
      %v5570 = vsel %vm2477, %v5538, %v4546
      %v5572 = vsel %vm2477, %v5540, %v4548
      %v5574 = vsel %vm2477, %v5542, %v4550
      %v5576 = vsel %vm2477, %v5544, %v4552
      %v5578 = vsel %vm2477, %v5546, %v4554
      %v5580 = vsel %vm2477, %v5548, %v4556
      %v5582 = vsel %vm2477, %v5550, %v4558
      %v5584 = vsel %vm2477, %v5552, %v4560
      %v5586 = vsel %vm2477, %v5554, %v4562
      %v5588 = vsel %vm2477, %v5556, %v4564
      %v5590 = vsel %vm2477, %v5558, %v4566
      %v5592 = vsel %vm2510, %v5560, %v4648
      %v5595 = vsel %vm2510, %v5562, %v4650
      %v5598 = vsel %vm2510, %v5564, %v4652
      %v5601 = vsel %vm2510, %v5566, %v4654
      %v5604 = vsel %vm2510, %v5568, %v4656
      %v5607 = vsel %vm2510, %v5570, %v4658
      %v5610 = vsel %vm2510, %v5572, %v4660
      %v5613 = vsel %vm2510, %v5574, %v4662
      %v5616 = vsel %vm2510, %v5576, %v4664
      %v5619 = vsel %vm2510, %v5578, %v4666
      %v5622 = vsel %vm2510, %v5580, %v4668
      %v5625 = vsel %vm2510, %v5582, %v4670
      %v5628 = vsel %vm2510, %v5584, %v4672
      %v5631 = vsel %vm2510, %v5586, %v4674
      %v5634 = vsel %vm2510, %v5588, %v4676
      %v5637 = vsel %vm2510, %v5590, %v4678
      %v5641 = vsel %vm2444, %v4738, %v5016
      %v5644 = vsel %vm2444, %v4750, %v5018
      %v5647 = vsel %vm2444, %v4762, %v5020
      %v5650 = vsel %vm2444, %v4774, %v5022
      %v5653 = vsel %vm2444, %v4786, %v5024
      %v5656 = vsel %vm2444, %v4798, %v5026
      %v5659 = vsel %vm2444, %v4810, %v5028
      %v5662 = vsel %vm2444, %v4822, %v5030
      %v5665 = vsel %vm2444, %v4834, %v5032
      %v5668 = vsel %vm2444, %v4846, %v5034
      %v5671 = vsel %vm2444, %v4858, %v5036
      %v5674 = vsel %vm2444, %v4870, %v5038
      %v5677 = vsel %vm2444, %v4882, %v5040
      %v5680 = vsel %vm2444, %v4894, %v5042
      %v5683 = vsel %vm2444, %v4906, %v5044
      %v5686 = vsel %vm2444, %v4918, %v5046
      %v5688 = vsel %vm2477, %v5641, %v5128
      %v5690 = vsel %vm2477, %v5644, %v5130
      %v5692 = vsel %vm2477, %v5647, %v5132
      %v5694 = vsel %vm2477, %v5650, %v5134
      %v5696 = vsel %vm2477, %v5653, %v5136
      %v5698 = vsel %vm2477, %v5656, %v5138
      %v5700 = vsel %vm2477, %v5659, %v5140
      %v5702 = vsel %vm2477, %v5662, %v5142
      %v5704 = vsel %vm2477, %v5665, %v5144
      %v5706 = vsel %vm2477, %v5668, %v5146
      %v5708 = vsel %vm2477, %v5671, %v5148
      %v5710 = vsel %vm2477, %v5674, %v5150
      %v5712 = vsel %vm2477, %v5677, %v5152
      %v5714 = vsel %vm2477, %v5680, %v5154
      %v5716 = vsel %vm2477, %v5683, %v5156
      %v5718 = vsel %vm2477, %v5686, %v5158
      %v5720 = vsel %vm2510, %v5688, %v5400
      %v5723 = vsel %vm2510, %v5690, %v5402
      %v5726 = vsel %vm2510, %v5692, %v5404
      %v5729 = vsel %vm2510, %v5694, %v5406
      %v5732 = vsel %vm2510, %v5696, %v5408
      %v5735 = vsel %vm2510, %v5698, %v5410
      %v5738 = vsel %vm2510, %v5700, %v5412
      %v5741 = vsel %vm2510, %v5702, %v5414
      %v5744 = vsel %vm2510, %v5704, %v5416
      %v5747 = vsel %vm2510, %v5706, %v5418
      %v5750 = vsel %vm2510, %v5708, %v5420
      %v5753 = vsel %vm2510, %v5710, %v5422
      %v5756 = vsel %vm2510, %v5712, %v5424
      %v5759 = vsel %vm2510, %v5714, %v5426
      %v5762 = vsel %vm2510, %v5716, %v5428
      %v5765 = vsel %vm2510, %v5718, %v5430
      %v5767 = vld [vmem:[%s4] sm:$0xf]
      %v5768 = vld [vmem:[%s4 + $0x4] sm:$0xf]
      %v5769 = vld [vmem:[%s4 + $0x8] sm:$0xf]
      %v5770 = vld [vmem:[%s4 + $0xc] sm:$0xf]
      %v5771 = vld [vmem:[%s4 + $0x10] sm:$0xf]
      %v5772 = vld [vmem:[%s4 + $0x14] sm:$0xf]
      %v5773 = vld [vmem:[%s4 + $0x18] sm:$0xf]
      %v5774 = vld [vmem:[%s4 + $0x1c] sm:$0xf]
      %v5775 = vld [vmem:[%s4 + $0x20] sm:$0xf]
      %v5776 = vld [vmem:[%s4 + $0x24] sm:$0xf]
      %v5777 = vld [vmem:[%s4 + $0x28] sm:$0xf]
      %v5778 = vld [vmem:[%s4 + $0x2c] sm:$0xf]
      %v5779 = vld [vmem:[%s4 + $0x30] sm:$0xf]
      %v5780 = vld [vmem:[%s4 + $0x34] sm:$0xf]
      %v5781 = vld [vmem:[%s4 + $0x38] sm:$0xf]
      %v5782 = vld [vmem:[%s4 + $0x3c] sm:$0xf]
      %v5783 = vld [vmem:[%s4 + $0x40] sm:$0xf]
      %v5784 = vld [vmem:[%s4 + $0x44] sm:$0xf]
      %v5785 = vld [vmem:[%s4 + $0x48] sm:$0xf]
      %v5786 = vld [vmem:[%s4 + $0x4c] sm:$0xf]
      %v5787 = vld [vmem:[%s4 + $0x50] sm:$0xf]
      %v5788 = vld [vmem:[%s4 + $0x54] sm:$0xf]
      %v5789 = vld [vmem:[%s4 + $0x58] sm:$0xf]
      %v5790 = vld [vmem:[%s4 + $0x5c] sm:$0xf]
      %v5791 = vld [vmem:[%s4 + $0x60] sm:$0xf]
      %v5792 = vld [vmem:[%s4 + $0x64] sm:$0xf]
      %v5793 = vld [vmem:[%s4 + $0x68] sm:$0xf]
      %v5794 = vld [vmem:[%s4 + $0x6c] sm:$0xf]
      %v5795 = vld [vmem:[%s4 + $0x70] sm:$0xf]
      %v5796 = vld [vmem:[%s4 + $0x74] sm:$0xf]
      %v5797 = vld [vmem:[%s4 + $0x78] sm:$0xf]
      %v5798 = vld [vmem:[%s4 + $0x7c] sm:$0xf]
      %v5799 = vld [vmem:[%s4 + $0x80] sm:$0xf]
      %v5800 = vld [vmem:[%s4 + $0x84] sm:$0xf]
      %v5801 = vld [vmem:[%s4 + $0x88] sm:$0xf]
      %v5802 = vld [vmem:[%s4 + $0x8c] sm:$0xf]
      %v5839 = vunpack.c.l.b16 %v5767
      %v5840 = vunpack.c.l.b16 %v5768
      %v5841 = vunpack.c.l.b16 %v5769
      %v5842 = vunpack.c.l.b16 %v5770
      %v5843 = vunpack.c.l.b16 %v5771
      %v5844 = vunpack.c.l.b16 %v5772
      %v5845 = vunpack.c.l.b16 %v5773
      %v5846 = vunpack.c.l.b16 %v5774
      %v5847 = vunpack.c.l.b16 %v5775
      %v5848 = vunpack.c.l.b16 %v5776
      %v5849 = vunpack.c.l.b16 %v5777
      %v5850 = vunpack.c.l.b16 %v5778
      %v5851 = vunpack.c.l.b16 %v5779
      %v5852 = vunpack.c.l.b16 %v5780
      %v5853 = vunpack.c.l.b16 %v5781
      %v5854 = vunpack.c.l.b16 %v5782
      %v5855 = vunpack.c.l.b16 %v5783
      %v5856 = vunpack.c.l.b16 %v5784
      %v5857 = vunpack.c.l.b16 %v5785
      %v5858 = vunpack.c.l.b16 %v5786
      %v5859 = vunpack.c.l.b16 %v5787
      %v5860 = vunpack.c.l.b16 %v5788
      %v5861 = vunpack.c.l.b16 %v5789
      %v5862 = vunpack.c.l.b16 %v5790
      %v5863 = vunpack.c.l.b16 %v5791
      %v5864 = vunpack.c.l.b16 %v5792
      %v5865 = vunpack.c.l.b16 %v5793
      %v5866 = vunpack.c.l.b16 %v5794
      %v5867 = vunpack.c.l.b16 %v5795
      %v5868 = vunpack.c.l.b16 %v5796
      %v5869 = vunpack.c.l.b16 %v5797
      %v5870 = vunpack.c.l.b16 %v5798
      %v5871 = vunpack.c.l.b16 %v5799
      %v5872 = vunpack.c.l.b16 %v5800
      %v5873 = vunpack.c.l.b16 %v5801
      %v5874 = vunpack.c.l.b16 %v5802
      %v5875 = vpack.c.b16 %v5840, %v5839
      %v5876 = vpack.c.b16 %v5842, %v5841
      %v5877 = vpack.c.b16 %v5844, %v5843
      %v5878 = vpack.c.b16 %v5846, %v5845
      %v5879 = vpack.c.b16 %v5848, %v5847
      %v5880 = vpack.c.b16 %v5850, %v5849
      %v5881 = vpack.c.b16 %v5852, %v5851
      %v5882 = vpack.c.b16 %v5854, %v5853
      %v5883 = vpack.c.b16 %v5856, %v5855
      %v5884 = vpack.c.b16 %v5858, %v5857
      %v5885 = vpack.c.b16 %v5860, %v5859
      %v5886 = vpack.c.b16 %v5862, %v5861
      %v5887 = vpack.c.b16 %v5864, %v5863
      %v5888 = vpack.c.b16 %v5866, %v5865
      %v5889 = vpack.c.b16 %v5868, %v5867
      %v5890 = vpack.c.b16 %v5870, %v5869
      %v5891 = vpack.c.b16 %v5872, %v5871
      %v5892 = vpack.c.b16 %v5874, %v5873
      %v5912 = vsel %vm2444, %v5481, 0
      %v5915 = vsel %vm2444, %v5484, 0
      %v5918 = vsel %vm2444, %v5487, 0
      %v5921 = vsel %vm2444, %v5490, 0
      %v5924 = vsel %vm2444, %v5493, 0
      %v5927 = vsel %vm2444, %v5496, 0
      %v5930 = vsel %vm2444, %v5499, 0
      %v5933 = vsel %vm2444, %v5502, 0
      %v5936 = vsel %vm2444, %v5505, 0
      %v5939 = vsel %vm2444, %v5508, 0
      %v5942 = vsel %vm2444, %v5511, 0
      %v5945 = vsel %vm2444, %v5514, 0
      %v5948 = vsel %vm2444, %v5517, 0
      %v5951 = vsel %vm2444, %v5520, 0
      %v5954 = vsel %vm2444, %v5523, 0
      %v5957 = vsel %vm2444, %v5526, 0
      %5959 = vmatprep.subr.bf16.mxu0 0
      %5960 = vmatpush1.bf16.msra.mxu0 %v5882
      %5961 = vmatprep.subr.bf16.mxu0 0
      %5962 = vmatpush1.bf16.msra.mxu0 %v5881
      %5963 = vmatprep.subr.bf16.mxu0 0
      %5964 = vmatpush1.bf16.msra.mxu0 %v5880
      %5965 = vmatprep.subr.bf16.mxu0 0
      %5966 = vmatpush1.bf16.msra.mxu0 %v5879
      %5967 = vmatprep.subr.bf16.mxu0 0
      %5968 = vmatpush1.bf16.msra.mxu0 %v5878
      %5969 = vmatprep.subr.bf16.mxu0 0
      %5970 = vmatpush1.bf16.msra.mxu0 %v5877
      %5971 = vmatprep.subr.bf16.mxu0 0
      %5972 = vmatpush1.bf16.msra.mxu0 %v5876
      %5973 = vmatprep.subr.bf16.mxu0 0
      %5974 = vmatpush1.bf16.msra.mxu0 %v5875
      %5975 = vmatprep.subr.bf16.mxu0 0
      %5976 = vmatpush2.bf16.msra.mxu0 %v5890
      %5977 = vmatprep.subr.bf16.mxu0 0
      %5978 = vmatpush2.bf16.msra.mxu0 %v5889
      %5979 = vmatprep.subr.bf16.mxu0 0
      %5980 = vmatpush2.bf16.msra.mxu0 %v5888
      %5981 = vmatprep.subr.bf16.mxu0 0
      %5982 = vmatpush2.bf16.msra.mxu0 %v5887
      %5983 = vmatprep.subr.bf16.mxu0 0
      %5984 = vmatpush2.bf16.msra.mxu0 %v5886
      %5985 = vmatprep.subr.bf16.mxu0 0
      %5986 = vmatpush2.bf16.msra.mxu0 %v5885
      %5987 = vmatprep.subr.bf16.mxu0 0
      %5988 = vmatpush2.bf16.msra.mxu0 %v5884
      %5989 = vmatprep.subr.bf16.mxu0 0
      %5990 = vmatpush2.bf16.msra.mxu0 %v5883
      %5991 = vmatprep.mubr.bf16.mxu0 %v5720
      %5992 = vmatmul.mubr.bf16.gmra.mxu0 %v5592
      %v5993 = vpop.f32.mrf.mxu0
      %v5994 = vadd.f32 0.0, %v5993
      %v5995 = vpop.f32.mrf.mxu0
      %v5996 = vpop.f32.mrf.mxu0
      %v5997 = vadd.f32 0.0, %v5996
      %v5998 = vpop.f32.mrf.mxu0
      %5999 = vmatprep.mubr.bf16.mxu0 %v5723
      %6000 = vmatmul.mubr.bf16.gmra.mxu0 %v5595
      %v6001 = vpop.f32.mrf.mxu0
      %v6002 = vadd.f32 0.0, %v6001
      %v6003 = vpop.f32.mrf.mxu0
      %v6004 = vpop.f32.mrf.mxu0
      %v6005 = vadd.f32 0.0, %v6004
      %v6006 = vpop.f32.mrf.mxu0
      %6007 = vmatprep.mubr.bf16.mxu0 %v5726
      %6008 = vmatmul.mubr.bf16.gmra.mxu0 %v5598
      %v6009 = vpop.f32.mrf.mxu0
      %v6010 = vadd.f32 0.0, %v6009
      %v6011 = vpop.f32.mrf.mxu0
      %v6012 = vpop.f32.mrf.mxu0
      %v6013 = vadd.f32 0.0, %v6012
      %v6014 = vpop.f32.mrf.mxu0
      %6015 = vmatprep.mubr.bf16.mxu0 %v5729
      %6016 = vmatmul.mubr.bf16.gmra.mxu0 %v5601
      %v6017 = vpop.f32.mrf.mxu0
      %v6018 = vadd.f32 0.0, %v6017
      %v6019 = vpop.f32.mrf.mxu0
      %v6020 = vpop.f32.mrf.mxu0
      %v6021 = vadd.f32 0.0, %v6020
      %v6022 = vpop.f32.mrf.mxu0
      %6023 = vmatprep.mubr.bf16.mxu0 %v5732
      %6024 = vmatmul.mubr.bf16.gmra.mxu0 %v5604
      %v6025 = vpop.f32.mrf.mxu0
      %v6026 = vadd.f32 0.0, %v6025
      %v6027 = vpop.f32.mrf.mxu0
      %v6028 = vpop.f32.mrf.mxu0
      %v6029 = vadd.f32 0.0, %v6028
      %v6030 = vpop.f32.mrf.mxu0
      %6031 = vmatprep.mubr.bf16.mxu0 %v5735
      %6032 = vmatmul.mubr.bf16.gmra.mxu0 %v5607
      %v6033 = vpop.f32.mrf.mxu0
      %v6034 = vadd.f32 0.0, %v6033
      %v6035 = vpop.f32.mrf.mxu0
      %v6036 = vpop.f32.mrf.mxu0
      %v6037 = vadd.f32 0.0, %v6036
      %v6038 = vpop.f32.mrf.mxu0
      %6039 = vmatprep.mubr.bf16.mxu0 %v5738
      %6040 = vmatmul.mubr.bf16.gmra.mxu0 %v5610
      %v6041 = vpop.f32.mrf.mxu0
      %v6042 = vadd.f32 0.0, %v6041
      %v6043 = vpop.f32.mrf.mxu0
      %v6044 = vpop.f32.mrf.mxu0
      %v6045 = vadd.f32 0.0, %v6044
      %v6046 = vpop.f32.mrf.mxu0
      %6047 = vmatprep.mubr.bf16.mxu0 %v5741
      %6048 = vmatmul.mubr.bf16.gmra.mxu0 %v5613
      %v6049 = vpop.f32.mrf.mxu0
      %v6050 = vadd.f32 0.0, %v6049
      %v6051 = vpop.f32.mrf.mxu0
      %v6052 = vpop.f32.mrf.mxu0
      %v6053 = vadd.f32 0.0, %v6052
      %v6054 = vpop.f32.mrf.mxu0
      %6055 = vmatprep.mubr.bf16.mxu0 %v5744
      %6056 = vmatmul.mubr.bf16.gmra.mxu0 %v5616
      %v6057 = vpop.f32.mrf.mxu0
      %v6058 = vadd.f32 0.0, %v6057
      %v6059 = vpop.f32.mrf.mxu0
      %v6060 = vpop.f32.mrf.mxu0
      %v6061 = vadd.f32 0.0, %v6060
      %v6062 = vpop.f32.mrf.mxu0
      %6063 = vmatprep.mubr.bf16.mxu0 %v5747
      %6064 = vmatmul.mubr.bf16.gmra.mxu0 %v5619
      %v6065 = vpop.f32.mrf.mxu0
      %v6066 = vadd.f32 0.0, %v6065
      %v6067 = vpop.f32.mrf.mxu0
      %v6068 = vpop.f32.mrf.mxu0
      %v6069 = vadd.f32 0.0, %v6068
      %v6070 = vpop.f32.mrf.mxu0
      %6071 = vmatprep.mubr.bf16.mxu0 %v5750
      %6072 = vmatmul.mubr.bf16.gmra.mxu0 %v5622
      %v6073 = vpop.f32.mrf.mxu0
      %v6074 = vadd.f32 0.0, %v6073
      %v6075 = vpop.f32.mrf.mxu0
      %v6076 = vpop.f32.mrf.mxu0
      %v6077 = vadd.f32 0.0, %v6076
      %v6078 = vpop.f32.mrf.mxu0
      %6079 = vmatprep.mubr.bf16.mxu0 %v5753
      %6080 = vmatmul.mubr.bf16.gmra.mxu0 %v5625
      %v6081 = vpop.f32.mrf.mxu0
      %v6082 = vadd.f32 0.0, %v6081
      %v6083 = vpop.f32.mrf.mxu0
      %v6084 = vpop.f32.mrf.mxu0
      %v6085 = vadd.f32 0.0, %v6084
      %v6086 = vpop.f32.mrf.mxu0
      %6087 = vmatprep.mubr.bf16.mxu0 %v5756
      %6088 = vmatmul.mubr.bf16.gmra.mxu0 %v5628
      %v6089 = vpop.f32.mrf.mxu0
      %v6090 = vadd.f32 0.0, %v6089
      %v6091 = vpop.f32.mrf.mxu0
      %v6092 = vpop.f32.mrf.mxu0
      %v6093 = vadd.f32 0.0, %v6092
      %v6094 = vpop.f32.mrf.mxu0
      %6095 = vmatprep.mubr.bf16.mxu0 %v5759
      %6096 = vmatmul.mubr.bf16.gmra.mxu0 %v5631
      %v6097 = vpop.f32.mrf.mxu0
      %v6098 = vadd.f32 0.0, %v6097
      %v6099 = vpop.f32.mrf.mxu0
      %v6100 = vpop.f32.mrf.mxu0
      %v6101 = vadd.f32 0.0, %v6100
      %v6102 = vpop.f32.mrf.mxu0
      %6103 = vmatprep.mubr.bf16.mxu0 %v5762
      %6104 = vmatmul.mubr.bf16.gmra.mxu0 %v5634
      %v6105 = vpop.f32.mrf.mxu0
      %v6106 = vadd.f32 0.0, %v6105
      %v6107 = vpop.f32.mrf.mxu0
      %v6108 = vpop.f32.mrf.mxu0
      %v6109 = vadd.f32 0.0, %v6108
      %v6110 = vpop.f32.mrf.mxu0
      %6111 = vmatprep.mubr.bf16.mxu0 %v5765
      %6112 = vmatmul.mubr.bf16.gmra.mxu0 %v5637
      %v6113 = vpop.f32.mrf.mxu0
      %v6114 = vadd.f32 0.0, %v6113
      %v6115 = vpop.f32.mrf.mxu0
      %v6116 = vpop.f32.mrf.mxu0
      %v6117 = vadd.f32 0.0, %v6116
      %v6118 = vpop.f32.mrf.mxu0
      %6119 = vdwg.mxu0
      %6120 = vmatprep.subr.bf16.mxu0 0
      %6121 = vmatpush1.bf16.msra.mxu0 0
      %6122 = vmatprep.subr.bf16.mxu0 0
      %6123 = vmatpush1.bf16.msra.mxu0 0
      %6124 = vmatprep.subr.bf16.mxu0 0
      %6125 = vmatpush1.bf16.msra.mxu0 0
      %6126 = vmatprep.subr.bf16.mxu0 0
      %6127 = vmatpush1.bf16.msra.mxu0 0
      %6128 = vmatprep.subr.bf16.mxu0 0
      %6129 = vmatpush1.bf16.msra.mxu0 0
      %6130 = vmatprep.subr.bf16.mxu0 0
      %6131 = vmatpush1.bf16.msra.mxu0 0
      %6132 = vmatprep.subr.bf16.mxu0 0
      %6133 = vmatpush1.bf16.msra.mxu0 %v5892
      %6134 = vmatprep.subr.bf16.mxu0 0
      %6135 = vmatpush1.bf16.msra.mxu0 %v5891
      %6136 = vmatprep.subr.bf16.mxu0 0
      %6137 = vmatpush2.bf16.msra.mxu0 0
      %6138 = vmatprep.subr.bf16.mxu0 0
      %6139 = vmatpush2.bf16.msra.mxu0 0
      %6140 = vmatprep.subr.bf16.mxu0 0
      %6141 = vmatpush2.bf16.msra.mxu0 0
      %6142 = vmatprep.subr.bf16.mxu0 0
      %6143 = vmatpush2.bf16.msra.mxu0 0
      %6144 = vmatprep.subr.bf16.mxu0 0
      %6145 = vmatpush2.bf16.msra.mxu0 0
      %6146 = vmatprep.subr.bf16.mxu0 0
      %6147 = vmatpush2.bf16.msra.mxu0 0
      %6148 = vmatprep.subr.bf16.mxu0 0
      %6149 = vmatpush2.bf16.msra.mxu0 0
      %6150 = vmatprep.subr.bf16.mxu0 0
      %6151 = vmatpush2.bf16.msra.mxu0 0
      %6152 = vmatprep.mubr.bf16.mxu0 0
      %6153 = vmatmul.mubr.bf16.gmra.mxu0 %v5912
      %v6154 = vpop.f32.mrf.mxu0
      %v6155 = vadd.f32 %v5994, %v6154
      %v6156 = vpop.f32.mrf.mxu0
      %v6157 = vpop.f32.mrf.mxu0
      %v6158 = vadd.f32 %v5997, %v6157
      %v6159 = vpop.f32.mrf.mxu0
      %6160 = vmatprep.mubr.bf16.mxu0 0
      %6161 = vmatmul.mubr.bf16.gmra.mxu0 %v5915
      %v6162 = vpop.f32.mrf.mxu0
      %v6163 = vadd.f32 %v6002, %v6162
      %v6164 = vpop.f32.mrf.mxu0
      %v6165 = vpop.f32.mrf.mxu0
      %v6166 = vadd.f32 %v6005, %v6165
      %v6167 = vpop.f32.mrf.mxu0
      %6168 = vmatprep.mubr.bf16.mxu0 0
      %6169 = vmatmul.mubr.bf16.gmra.mxu0 %v5918
      %v6170 = vpop.f32.mrf.mxu0
      %v6171 = vadd.f32 %v6010, %v6170
      %v6172 = vpop.f32.mrf.mxu0
      %v6173 = vpop.f32.mrf.mxu0
      %v6174 = vadd.f32 %v6013, %v6173
      %v6175 = vpop.f32.mrf.mxu0
      %6176 = vmatprep.mubr.bf16.mxu0 0
      %6177 = vmatmul.mubr.bf16.gmra.mxu0 %v5921
      %v6178 = vpop.f32.mrf.mxu0
      %v6179 = vadd.f32 %v6018, %v6178
      %v6180 = vpop.f32.mrf.mxu0
      %v6181 = vpop.f32.mrf.mxu0
      %v6182 = vadd.f32 %v6021, %v6181
      %v6183 = vpop.f32.mrf.mxu0
      %6184 = vmatprep.mubr.bf16.mxu0 0
      %6185 = vmatmul.mubr.bf16.gmra.mxu0 %v5924
      %v6186 = vpop.f32.mrf.mxu0
      %v6187 = vadd.f32 %v6026, %v6186
      %v6188 = vpop.f32.mrf.mxu0
      %v6189 = vpop.f32.mrf.mxu0
      %v6190 = vadd.f32 %v6029, %v6189
      %v6191 = vpop.f32.mrf.mxu0
      %6192 = vmatprep.mubr.bf16.mxu0 0
      %6193 = vmatmul.mubr.bf16.gmra.mxu0 %v5927
      %v6194 = vpop.f32.mrf.mxu0
      %v6195 = vadd.f32 %v6034, %v6194
      %v6196 = vpop.f32.mrf.mxu0
      %v6197 = vpop.f32.mrf.mxu0
      %v6198 = vadd.f32 %v6037, %v6197
      %v6199 = vpop.f32.mrf.mxu0
      %6200 = vmatprep.mubr.bf16.mxu0 0
      %6201 = vmatmul.mubr.bf16.gmra.mxu0 %v5930
      %v6202 = vpop.f32.mrf.mxu0
      %v6203 = vadd.f32 %v6042, %v6202
      %v6204 = vpop.f32.mrf.mxu0
      %v6205 = vpop.f32.mrf.mxu0
      %v6206 = vadd.f32 %v6045, %v6205
      %v6207 = vpop.f32.mrf.mxu0
      %6208 = vmatprep.mubr.bf16.mxu0 0
      %6209 = vmatmul.mubr.bf16.gmra.mxu0 %v5933
      %v6210 = vpop.f32.mrf.mxu0
      %v6211 = vadd.f32 %v6050, %v6210
      %v6212 = vpop.f32.mrf.mxu0
      %v6213 = vpop.f32.mrf.mxu0
      %v6214 = vadd.f32 %v6053, %v6213
      %v6215 = vpop.f32.mrf.mxu0
      %6216 = vmatprep.mubr.bf16.mxu0 0
      %6217 = vmatmul.mubr.bf16.gmra.mxu0 %v5936
      %v6218 = vpop.f32.mrf.mxu0
      %v6219 = vadd.f32 %v6058, %v6218
      %v6220 = vpop.f32.mrf.mxu0
      %v6221 = vpop.f32.mrf.mxu0
      %v6222 = vadd.f32 %v6061, %v6221
      %v6223 = vpop.f32.mrf.mxu0
      %6224 = vmatprep.mubr.bf16.mxu0 0
      %6225 = vmatmul.mubr.bf16.gmra.mxu0 %v5939
      %v6226 = vpop.f32.mrf.mxu0
      %v6227 = vadd.f32 %v6066, %v6226
      %v6228 = vpop.f32.mrf.mxu0
      %v6229 = vpop.f32.mrf.mxu0
      %v6230 = vadd.f32 %v6069, %v6229
      %v6231 = vpop.f32.mrf.mxu0
      %6232 = vmatprep.mubr.bf16.mxu0 0
      %6233 = vmatmul.mubr.bf16.gmra.mxu0 %v5942
      %v6234 = vpop.f32.mrf.mxu0
      %v6235 = vadd.f32 %v6074, %v6234
      %v6236 = vpop.f32.mrf.mxu0
      %v6237 = vpop.f32.mrf.mxu0
      %v6238 = vadd.f32 %v6077, %v6237
      %v6239 = vpop.f32.mrf.mxu0
      %6240 = vmatprep.mubr.bf16.mxu0 0
      %6241 = vmatmul.mubr.bf16.gmra.mxu0 %v5945
      %v6242 = vpop.f32.mrf.mxu0
      %v6243 = vadd.f32 %v6082, %v6242
      %v6244 = vpop.f32.mrf.mxu0
      %v6245 = vpop.f32.mrf.mxu0
      %v6246 = vadd.f32 %v6085, %v6245
      %v6247 = vpop.f32.mrf.mxu0
      %6248 = vmatprep.mubr.bf16.mxu0 0
      %6249 = vmatmul.mubr.bf16.gmra.mxu0 %v5948
      %v6250 = vpop.f32.mrf.mxu0
      %v6251 = vadd.f32 %v6090, %v6250
      %v6252 = vpop.f32.mrf.mxu0
      %v6253 = vpop.f32.mrf.mxu0
      %v6254 = vadd.f32 %v6093, %v6253
      %v6255 = vpop.f32.mrf.mxu0
      %6256 = vmatprep.mubr.bf16.mxu0 0
      %6257 = vmatmul.mubr.bf16.gmra.mxu0 %v5951
      %v6258 = vpop.f32.mrf.mxu0
      %v6259 = vadd.f32 %v6098, %v6258
      %v6260 = vpop.f32.mrf.mxu0
      %v6261 = vpop.f32.mrf.mxu0
      %v6262 = vadd.f32 %v6101, %v6261
      %v6263 = vpop.f32.mrf.mxu0
      %6264 = vmatprep.mubr.bf16.mxu0 0
      %6265 = vmatmul.mubr.bf16.gmra.mxu0 %v5954
      %v6266 = vpop.f32.mrf.mxu0
      %v6267 = vadd.f32 %v6106, %v6266
      %v6268 = vpop.f32.mrf.mxu0
      %v6269 = vpop.f32.mrf.mxu0
      %v6270 = vadd.f32 %v6109, %v6269
      %v6271 = vpop.f32.mrf.mxu0
      %6272 = vmatprep.mubr.bf16.mxu0 0
      %6273 = vmatmul.mubr.bf16.gmra.mxu0 %v5957
      %v6274 = vpop.f32.mrf.mxu0
      %v6275 = vadd.f32 %v6114, %v6274
      %v6276 = vpop.f32.mrf.mxu0
      %v6277 = vpop.f32.mrf.mxu0
      %v6278 = vadd.f32 %v6117, %v6277
      %v6279 = vpop.f32.mrf.mxu0
      %6280 = vdwg.mxu0
      %v6281 = vld [vmem:[%s5] sm:$0x1]
      %v6283 = vlaneseq
      %v6284 = vshrl.u32 %v6283, 7
      %v6285 = vsub.s32 0, %v6284
      %v6286 = vrot.slane %v6281, %v6285
      %v6288 = vmul.f32 %v6155, %v6286
      %v6289 = vmul.f32 %v6158, %v6286
      %v6290 = vmul.f32 %v6163, %v6286
      %v6291 = vmul.f32 %v6166, %v6286
      %v6292 = vmul.f32 %v6171, %v6286
      %v6293 = vmul.f32 %v6174, %v6286
      %v6294 = vmul.f32 %v6179, %v6286
      %v6295 = vmul.f32 %v6182, %v6286
      %v6296 = vmul.f32 %v6187, %v6286
      %v6297 = vmul.f32 %v6190, %v6286
      %v6298 = vmul.f32 %v6195, %v6286
      %v6299 = vmul.f32 %v6198, %v6286
      %v6300 = vmul.f32 %v6203, %v6286
      %v6301 = vmul.f32 %v6206, %v6286
      %v6302 = vmul.f32 %v6211, %v6286
      %v6303 = vmul.f32 %v6214, %v6286
      %v6304 = vmul.f32 %v6219, %v6286
      %v6305 = vmul.f32 %v6222, %v6286
      %v6306 = vmul.f32 %v6227, %v6286
      %v6307 = vmul.f32 %v6230, %v6286
      %v6308 = vmul.f32 %v6235, %v6286
      %v6309 = vmul.f32 %v6238, %v6286
      %v6310 = vmul.f32 %v6243, %v6286
      %v6311 = vmul.f32 %v6246, %v6286
      %v6312 = vmul.f32 %v6251, %v6286
      %v6313 = vmul.f32 %v6254, %v6286
      %v6314 = vmul.f32 %v6259, %v6286
      %v6315 = vmul.f32 %v6262, %v6286
      %v6316 = vmul.f32 %v6267, %v6286
      %v6317 = vmul.f32 %v6270, %v6286
      %v6318 = vmul.f32 %v6275, %v6286
      %v6319 = vmul.f32 %v6278, %v6286
      %v6320 = vld [vmem:[%s6] sm:$0x1]
      %v6322 = vlaneseq
      %v6323 = vshrl.u32 %v6322, 7
      %v6324 = vsub.s32 0, %v6323
      %v6325 = vrot.slane %v6320, %v6324
      %v6327 = vadd.f32 %v6288, %v6325
      %v6328 = vadd.f32 %v6289, %v6325
      %v6329 = vadd.f32 %v6290, %v6325
      %v6330 = vadd.f32 %v6291, %v6325
      %v6331 = vadd.f32 %v6292, %v6325
      %v6332 = vadd.f32 %v6293, %v6325
      %v6333 = vadd.f32 %v6294, %v6325
      %v6334 = vadd.f32 %v6295, %v6325
      %v6335 = vadd.f32 %v6296, %v6325
      %v6336 = vadd.f32 %v6297, %v6325
      %v6337 = vadd.f32 %v6298, %v6325
      %v6338 = vadd.f32 %v6299, %v6325
      %v6339 = vadd.f32 %v6300, %v6325
      %v6340 = vadd.f32 %v6301, %v6325
      %v6341 = vadd.f32 %v6302, %v6325
      %v6342 = vadd.f32 %v6303, %v6325
      %v6343 = vadd.f32 %v6304, %v6325
      %v6344 = vadd.f32 %v6305, %v6325
      %v6345 = vadd.f32 %v6306, %v6325
      %v6346 = vadd.f32 %v6307, %v6325
      %v6347 = vadd.f32 %v6308, %v6325
      %v6348 = vadd.f32 %v6309, %v6325
      %v6349 = vadd.f32 %v6310, %v6325
      %v6350 = vadd.f32 %v6311, %v6325
      %v6351 = vadd.f32 %v6312, %v6325
      %v6352 = vadd.f32 %v6313, %v6325
      %v6353 = vadd.f32 %v6314, %v6325
      %v6354 = vadd.f32 %v6315, %v6325
      %v6355 = vadd.f32 %v6316, %v6325
      %v6356 = vadd.f32 %v6317, %v6325
      %v6357 = vadd.f32 %v6318, %v6325
      %v6358 = vadd.f32 %v6319, %v6325
      %v6359 = vld [vmem:[%s273] sm:$0xf]
      %v6360 = vld [vmem:[%s273 + $0x4] sm:$0xf]
      %v6361 = vld [vmem:[%s273 + $0x8] sm:$0xf]
      %v6362 = vld [vmem:[%s273 + $0xc] sm:$0xf]
      %v6363 = vld [vmem:[%s273 + $0x10] sm:$0xf]
      %v6364 = vld [vmem:[%s273 + $0x14] sm:$0xf]
      %v6365 = vld [vmem:[%s273 + $0x18] sm:$0xf]
      %v6366 = vld [vmem:[%s273 + $0x1c] sm:$0xf]
      %v6367 = vld [vmem:[%s273 + $0x20] sm:$0xf]
      %v6368 = vld [vmem:[%s273 + $0x24] sm:$0xf]
      %v6369 = vld [vmem:[%s273 + $0x28] sm:$0xf]
      %v6370 = vld [vmem:[%s273 + $0x2c] sm:$0xf]
      %v6371 = vld [vmem:[%s273 + $0x30] sm:$0xf]
      %v6372 = vld [vmem:[%s273 + $0x34] sm:$0xf]
      %v6373 = vld [vmem:[%s273 + $0x38] sm:$0xf]
      %v6374 = vld [vmem:[%s273 + $0x3c] sm:$0xf]
      %v6375 = vld [vmem:[%s273 + $0x40] sm:$0xf]
      %v6376 = vld [vmem:[%s273 + $0x44] sm:$0xf]
      %v6377 = vld [vmem:[%s273 + $0x48] sm:$0xf]
      %v6378 = vld [vmem:[%s273 + $0x4c] sm:$0xf]
      %v6379 = vld [vmem:[%s273 + $0x50] sm:$0xf]
      %v6380 = vld [vmem:[%s273 + $0x54] sm:$0xf]
      %v6381 = vld [vmem:[%s273 + $0x58] sm:$0xf]
      %v6382 = vld [vmem:[%s273 + $0x5c] sm:$0xf]
      %v6383 = vld [vmem:[%s273 + $0x60] sm:$0xf]
      %v6384 = vld [vmem:[%s273 + $0x64] sm:$0xf]
      %v6385 = vld [vmem:[%s273 + $0x68] sm:$0xf]
      %v6386 = vld [vmem:[%s273 + $0x6c] sm:$0xf]
      %v6387 = vld [vmem:[%s273 + $0x70] sm:$0xf]
      %v6388 = vld [vmem:[%s273 + $0x74] sm:$0xf]
      %v6389 = vld [vmem:[%s273 + $0x78] sm:$0xf]
      %v6390 = vld [vmem:[%s273 + $0x7c] sm:$0xf]
      %v6391 = vunpack.c.l.bf16 %v6359
      %v6392 = vunpack.c.l.bf16 %v6360
      %v6393 = vunpack.c.l.bf16 %v6361
      %v6394 = vunpack.c.l.bf16 %v6362
      %v6395 = vunpack.c.l.bf16 %v6363
      %v6396 = vunpack.c.l.bf16 %v6364
      %v6397 = vunpack.c.l.bf16 %v6365
      %v6398 = vunpack.c.l.bf16 %v6366
      %v6399 = vunpack.c.l.bf16 %v6367
      %v6400 = vunpack.c.l.bf16 %v6368
      %v6401 = vunpack.c.l.bf16 %v6369
      %v6402 = vunpack.c.l.bf16 %v6370
      %v6403 = vunpack.c.l.bf16 %v6371
      %v6404 = vunpack.c.l.bf16 %v6372
      %v6405 = vunpack.c.l.bf16 %v6373
      %v6406 = vunpack.c.l.bf16 %v6374
      %v6407 = vunpack.c.l.bf16 %v6375
      %v6408 = vunpack.c.l.bf16 %v6376
      %v6409 = vunpack.c.l.bf16 %v6377
      %v6410 = vunpack.c.l.bf16 %v6378
      %v6411 = vunpack.c.l.bf16 %v6379
      %v6412 = vunpack.c.l.bf16 %v6380
      %v6413 = vunpack.c.l.bf16 %v6381
      %v6414 = vunpack.c.l.bf16 %v6382
      %v6415 = vunpack.c.l.bf16 %v6383
      %v6416 = vunpack.c.l.bf16 %v6384
      %v6417 = vunpack.c.l.bf16 %v6385
      %v6418 = vunpack.c.l.bf16 %v6386
      %v6419 = vunpack.c.l.bf16 %v6387
      %v6420 = vunpack.c.l.bf16 %v6388
      %v6421 = vunpack.c.l.bf16 %v6389
      %v6422 = vunpack.c.l.bf16 %v6390
      %v6423 = vadd.f32 %v6327, %v6391
      %v6424 = vadd.f32 %v6328, %v6392
      %v6425 = vadd.f32 %v6329, %v6393
      %v6426 = vadd.f32 %v6330, %v6394
      %v6427 = vadd.f32 %v6331, %v6395
      %v6428 = vadd.f32 %v6332, %v6396
      %v6429 = vadd.f32 %v6333, %v6397
      %v6430 = vadd.f32 %v6334, %v6398
      %v6431 = vadd.f32 %v6335, %v6399
      %v6432 = vadd.f32 %v6336, %v6400
      %v6433 = vadd.f32 %v6337, %v6401
      %v6434 = vadd.f32 %v6338, %v6402
      %v6435 = vadd.f32 %v6339, %v6403
      %v6436 = vadd.f32 %v6340, %v6404
      %v6437 = vadd.f32 %v6341, %v6405
      %v6438 = vadd.f32 %v6342, %v6406
      %v6439 = vadd.f32 %v6343, %v6407
      %v6440 = vadd.f32 %v6344, %v6408
      %v6441 = vadd.f32 %v6345, %v6409
      %v6442 = vadd.f32 %v6346, %v6410
      %v6443 = vadd.f32 %v6347, %v6411
      %v6444 = vadd.f32 %v6348, %v6412
      %v6445 = vadd.f32 %v6349, %v6413
      %v6446 = vadd.f32 %v6350, %v6414
      %v6447 = vadd.f32 %v6351, %v6415
      %v6448 = vadd.f32 %v6352, %v6416
      %v6449 = vadd.f32 %v6353, %v6417
      %v6450 = vadd.f32 %v6354, %v6418
      %v6451 = vadd.f32 %v6355, %v6419
      %v6452 = vadd.f32 %v6356, %v6420
      %v6453 = vadd.f32 %v6357, %v6421
      %v6454 = vadd.f32 %v6358, %v6422
      %v6455 = vmax.f32 %v6423, 0.0
      %v6456 = vmax.f32 %v6424, 0.0
      %v6457 = vmax.f32 %v6425, 0.0
      %v6458 = vmax.f32 %v6426, 0.0
      %v6459 = vmax.f32 %v6427, 0.0
      %v6460 = vmax.f32 %v6428, 0.0
      %v6461 = vmax.f32 %v6429, 0.0
      %v6462 = vmax.f32 %v6430, 0.0
      %v6463 = vmax.f32 %v6431, 0.0
      %v6464 = vmax.f32 %v6432, 0.0
      %v6465 = vmax.f32 %v6433, 0.0
      %v6466 = vmax.f32 %v6434, 0.0
      %v6467 = vmax.f32 %v6435, 0.0
      %v6468 = vmax.f32 %v6436, 0.0
      %v6469 = vmax.f32 %v6437, 0.0
      %v6470 = vmax.f32 %v6438, 0.0
      %v6471 = vmax.f32 %v6439, 0.0
      %v6472 = vmax.f32 %v6440, 0.0
      %v6473 = vmax.f32 %v6441, 0.0
      %v6474 = vmax.f32 %v6442, 0.0
      %v6475 = vmax.f32 %v6443, 0.0
      %v6476 = vmax.f32 %v6444, 0.0
      %v6477 = vmax.f32 %v6445, 0.0
      %v6478 = vmax.f32 %v6446, 0.0
      %v6479 = vmax.f32 %v6447, 0.0
      %v6480 = vmax.f32 %v6448, 0.0
      %v6481 = vmax.f32 %v6449, 0.0
      %v6482 = vmax.f32 %v6450, 0.0
      %v6483 = vmax.f32 %v6451, 0.0
      %v6484 = vmax.f32 %v6452, 0.0
      %v6485 = vmax.f32 %v6453, 0.0
      %v6486 = vmax.f32 %v6454, 0.0
      %v6487 = vpack.c.bf16 %v6456, %v6455
      %v6488 = vpack.c.bf16 %v6458, %v6457
      %v6489 = vpack.c.bf16 %v6460, %v6459
      %v6490 = vpack.c.bf16 %v6462, %v6461
      %v6491 = vpack.c.bf16 %v6464, %v6463
      %v6492 = vpack.c.bf16 %v6466, %v6465
      %v6493 = vpack.c.bf16 %v6468, %v6467
      %v6494 = vpack.c.bf16 %v6470, %v6469
      %v6495 = vpack.c.bf16 %v6472, %v6471
      %v6496 = vpack.c.bf16 %v6474, %v6473
      %v6497 = vpack.c.bf16 %v6476, %v6475
      %v6498 = vpack.c.bf16 %v6478, %v6477
      %v6499 = vpack.c.bf16 %v6480, %v6479
      %v6500 = vpack.c.bf16 %v6482, %v6481
      %v6501 = vpack.c.bf16 %v6484, %v6483
      %v6502 = vpack.c.bf16 %v6486, %v6485
      %v6519 = vunpack.c.l.b16 %v6487
      %v6520 = vunpack.c.h.b16 %v6487
      %v6521 = vunpack.c.l.b16 %v6488
      %v6522 = vunpack.c.h.b16 %v6488
      %v6523 = vunpack.c.l.b16 %v6489
      %v6524 = vunpack.c.h.b16 %v6489
      %v6525 = vunpack.c.l.b16 %v6490
      %v6526 = vunpack.c.h.b16 %v6490
      %v6527 = vunpack.c.l.b16 %v6491
      %v6528 = vunpack.c.h.b16 %v6491
      %v6529 = vunpack.c.l.b16 %v6492
      %v6530 = vunpack.c.h.b16 %v6492
      %v6531 = vunpack.c.l.b16 %v6493
      %v6532 = vunpack.c.h.b16 %v6493
      %v6533 = vunpack.c.l.b16 %v6494
      %v6534 = vunpack.c.h.b16 %v6494
      %v6535 = vunpack.c.l.b16 %v6495
      %v6536 = vunpack.c.h.b16 %v6495
      %v6537 = vunpack.c.l.b16 %v6496
      %v6538 = vunpack.c.h.b16 %v6496
      %v6539 = vunpack.c.l.b16 %v6497
      %v6540 = vunpack.c.h.b16 %v6497
      %v6541 = vunpack.c.l.b16 %v6498
      %v6542 = vunpack.c.h.b16 %v6498
      %v6543 = vunpack.c.l.b16 %v6499
      %v6544 = vunpack.c.h.b16 %v6499
      %v6545 = vunpack.c.l.b16 %v6500
      %v6546 = vunpack.c.h.b16 %v6500
      %v6547 = vunpack.c.l.b16 %v6501
      %v6548 = vunpack.c.h.b16 %v6501
      %v6549 = vunpack.c.l.b16 %v6502
      %v6550 = vunpack.c.h.b16 %v6502
      %v6551 = vpack.c.b16 %v6519, %v6519
      %v6552 = vpack.c.b16 %v6520, %v6520
      %v6553 = vpack.c.b16 %v6521, %v6521
      %v6554 = vpack.c.b16 %v6522, %v6522
      %v6555 = vpack.c.b16 %v6523, %v6523
      %v6556 = vpack.c.b16 %v6524, %v6524
      %v6557 = vpack.c.b16 %v6525, %v6525
      %v6558 = vpack.c.b16 %v6526, %v6526
      %v6559 = vpack.c.b16 %v6527, %v6527
      %v6560 = vpack.c.b16 %v6528, %v6528
      %v6561 = vpack.c.b16 %v6529, %v6529
      %v6562 = vpack.c.b16 %v6530, %v6530
      %v6563 = vpack.c.b16 %v6531, %v6531
      %v6564 = vpack.c.b16 %v6532, %v6532
      %v6565 = vpack.c.b16 %v6533, %v6533
      %v6566 = vpack.c.b16 %v6534, %v6534
      %v6567 = vpack.c.b16 %v6535, %v6535
      %v6568 = vpack.c.b16 %v6536, %v6536
      %v6569 = vpack.c.b16 %v6537, %v6537
      %v6570 = vpack.c.b16 %v6538, %v6538
      %v6571 = vpack.c.b16 %v6539, %v6539
      %v6572 = vpack.c.b16 %v6540, %v6540
      %v6573 = vpack.c.b16 %v6541, %v6541
      %v6574 = vpack.c.b16 %v6542, %v6542
      %v6575 = vpack.c.b16 %v6543, %v6543
      %v6576 = vpack.c.b16 %v6544, %v6544
      %v6577 = vpack.c.b16 %v6545, %v6545
      %v6578 = vpack.c.b16 %v6546, %v6546
      %v6579 = vpack.c.b16 %v6547, %v6547
      %v6580 = vpack.c.b16 %v6548, %v6548
      %v6581 = vpack.c.b16 %v6549, %v6549
      %v6582 = vpack.c.b16 %v6550, %v6550
      %6615 = vst.msk [vmem:[%s278] sm:$0xf] %vm280, %v6551
      %6616 = vst.msk [vmem:[%s278 + $0x4] sm:$0xf] %vm280, %v6552
      %6617 = vst.msk [vmem:[%s278 + $0x8] sm:$0xf] %vm280, %v6553
      %6618 = vst.msk [vmem:[%s278 + $0xc] sm:$0xf] %vm280, %v6554
      %6619 = vst.msk [vmem:[%s278 + $0x10] sm:$0xf] %vm280, %v6555
      %6620 = vst.msk [vmem:[%s278 + $0x14] sm:$0xf] %vm280, %v6556
      %6621 = vst.msk [vmem:[%s278 + $0x18] sm:$0xf] %vm280, %v6557
      %6622 = vst.msk [vmem:[%s278 + $0x1c] sm:$0xf] %vm280, %v6558
      %6623 = vst.msk [vmem:[%s278 + $0x20] sm:$0xf] %vm280, %v6559
      %6624 = vst.msk [vmem:[%s278 + $0x24] sm:$0xf] %vm280, %v6560
      %6625 = vst.msk [vmem:[%s278 + $0x28] sm:$0xf] %vm280, %v6561
      %6626 = vst.msk [vmem:[%s278 + $0x2c] sm:$0xf] %vm280, %v6562
      %6627 = vst.msk [vmem:[%s278 + $0x30] sm:$0xf] %vm280, %v6563
      %6628 = vst.msk [vmem:[%s278 + $0x34] sm:$0xf] %vm280, %v6564
      %6629 = vst.msk [vmem:[%s278 + $0x38] sm:$0xf] %vm280, %v6565
      %6630 = vst.msk [vmem:[%s278 + $0x3c] sm:$0xf] %vm280, %v6566
      %6631 = vst.msk [vmem:[%s278 + $0x40] sm:$0xf] %vm280, %v6567
      %6632 = vst.msk [vmem:[%s278 + $0x44] sm:$0xf] %vm280, %v6568
      %6633 = vst.msk [vmem:[%s278 + $0x48] sm:$0xf] %vm280, %v6569
      %6634 = vst.msk [vmem:[%s278 + $0x4c] sm:$0xf] %vm280, %v6570
      %6635 = vst.msk [vmem:[%s278 + $0x50] sm:$0xf] %vm280, %v6571
      %6636 = vst.msk [vmem:[%s278 + $0x54] sm:$0xf] %vm280, %v6572
      %6637 = vst.msk [vmem:[%s278 + $0x58] sm:$0xf] %vm280, %v6573
      %6638 = vst.msk [vmem:[%s278 + $0x5c] sm:$0xf] %vm280, %v6574
      %6639 = vst.msk [vmem:[%s278 + $0x60] sm:$0xf] %vm280, %v6575
      %6640 = vst.msk [vmem:[%s278 + $0x64] sm:$0xf] %vm280, %v6576
      %6641 = vst.msk [vmem:[%s278 + $0x68] sm:$0xf] %vm280, %v6577
      %6642 = vst.msk [vmem:[%s278 + $0x6c] sm:$0xf] %vm280, %v6578
      %6643 = vst.msk [vmem:[%s278 + $0x70] sm:$0xf] %vm280, %v6579
      %6644 = vst.msk [vmem:[%s278 + $0x74] sm:$0xf] %vm280, %v6580
      %6645 = vst.msk [vmem:[%s278 + $0x78] sm:$0xf] %vm280, %v6581
      %6646 = vst.msk [vmem:[%s278 + $0x7c] sm:$0xf] %vm280, %v6582
      %p6647 = scmp.lt.s32.totalorder %s18, 1
      %s6648 = scalar_select %p6647, %s18, 1
      %s6649 = smul.addr %s6648, 32
      %s6650 = smul.addr %s6649, 4
      %s6651 = scalar_lea.vmem %s7, %s6650
      // Predicated region
      $region49: #{forward.2} parent=47 // pred_check
        %p6652 = pneg %p188
      $region50: #{forward.2} parent=47 // pred_check_branch
        %6654 = sbr.rel (%p6652) target = $region52
      $region51: #{forward.2} parent=47 // pred_region
        _
      $region52: #{forward.2} parent=47 // pred_fallthru
        _
    $region48: #{forward.2} parent=5 // pred_fallthru
      _
    %p6655 = scmp.le.s32.totalorder 2, %s13
    // Predicated region
    $region53: #{forward.2} parent=5 // pred_check
      %p6656 = pneg %p6655
    $region54: #{forward.2} parent=5 // pred_check_branch
      %6658 = sbr.rel (%p6656) target = $region56
    $region55: #{forward.2} parent=5 // pred_region
      %s6659 = ssub.s32 %s13, 2
      // Predicated region
      $region57: #{forward.2} parent=55 // pred_check
        %p6660 = pneg %p194
      $region58: #{forward.2} parent=55 // pred_check_branch
        %6662 = sbr.rel (%p6660) target = $region60
      $region59: #{forward.2} parent=55 // pred_region
        %p6663 = scmp.lt.s32.totalorder %s19, 1
        %s6664 = scalar_select %p6663, %s19, 1
        %s6665 = smul.addr %s6664, 32
        %s6666 = smul.addr %s6665, 4
        %s6667 = scalar_lea.vmem %s7, %s6666
      $region60: #{forward.2} parent=55 // pred_fallthru
        _
    $region56: #{forward.2} parent=5 // pred_fallthru
      _
  $region6: #{forward.2} parent=0 // loop_footer
    %s17 = sadd.s32 1, %s13
  $region7: #{forward.2} parent=0 // loop_footer_branch
    %12 = sbr.rel target = $region3
  $region8: #{forward.2} parent=0 // loop_exit
    _

</llo_original>
